<compile_context>
chip_gen: v6e
topology: v6e:2x2x1
jax: 0.10.0
libtpu: 0.0.40
codegen_flags: <defaults>
</compile_context>

<pallas_src>
import jax
import jax.numpy as jnp
from jax import lax
from jax.experimental import pallas as pl
from jax.experimental.pallas import tpu as pltpu

_VMEM_LIMIT = 32 * 1024 * 1024   # explicit scoped-VMEM budget, valid on v5e / v6e / v7x
_BN_EPS = 1e-5
_SQRT1_2 = 0.7071067811865476
_TAPS = tuple((kh, kw) for kh in range(3) for kw in range(3))   # matches (9, ci, co) weight rows


# ------------------------------- in-kernel helpers -------------------------------

def _erf(x):
    # Abramowitz & Stegun 7.1.26 rational approximation (max abs err ~1.5e-7).
    a1, a2, a3, a4, a5 = 0.254829592, -0.284496736, 1.421413741, -1.453152027, 1.061405429
    p = 0.3275911
    sgn = jnp.where(x < 0.0, -1.0, 1.0)
    ax = jnp.abs(x)
    t = 1.0 / (1.0 + p * ax)
    poly = ((((a5 * t + a4) * t + a3) * t + a2) * t + a1) * t
    return sgn * (1.0 - poly * jnp.exp(-ax * ax))


def _gelu(x):
    return 0.5 * x * (1.0 + _erf(x * _SQRT1_2))


def _channel_stats(y):
    # Per-step partial BN statistics: [sum ; sum-of-squares] over rows, per channel -> (2, C).
    return jnp.concatenate(
        [jnp.sum(y, axis=0, keepdims=True), jnp.sum(y * y, axis=0, keepdims=True)], axis=0)


def _conv3x3_taps(slab_fn, w_ref):
    """3x3 'same' conv as 9 per-tap accumulated MXU matmuls (bf16 operands, f32 accumulation).
    slab_fn(kh, kw) returns the (rows, Cin) bf16 slab of the zero-padded activation shifted by
    the tap offset; no 9x im2col slab or lane concat is ever materialized."""
    acc = None
    for t, (kh, kw) in enumerate(_TAPS):
        part = jnp.dot(slab_fn(kh, kw), w_ref[t], preferred_element_type=jnp.float32)
        acc = part if acc is None else acc + part
    return acc                                            # (rows, Cout) f32


# --------------------------------- Pallas passes ---------------------------------

def _conv1_stats(xpad, wmat, bsz, h, w):
    """Pass A: conv1 of `bsz` pre-padded images + BN1 partial stats.  bf16 y1 output."""
    n, hp, wp, cin = xpad.shape
    cout = wmat.shape[2]
    steps = n // bsz
    rows = bsz * h * w

    def kernel(xp_ref, w_ref, y_ref, st_ref):
        def slab(kh, kw):
            return xp_ref[:, kh:kh + h, kw:kw + w, :].reshape(rows, cin)
        acc = _conv3x3_taps(slab, w_ref)                    # (rows, cout) f32
        st_ref[0] = _channel_stats(acc)                     # stats from f32 accumulator
        y_ref[...] = acc.astype(jnp.bfloat16).reshape(bsz, h * w, cout)

    return pl.pallas_call(
        kernel,
        out_shape=(jax.ShapeDtypeStruct((n, h * w, cout), jnp.bfloat16),
                   jax.ShapeDtypeStruct((steps, 2, cout), jnp.float32)),
        grid_spec=pltpu.PrefetchScalarGridSpec(
            num_scalar_prefetch=0,
            grid=(steps,),
            in_specs=[pl.BlockSpec((bsz, hp, wp, cin), lambda i: (i, 0, 0, 0)),
                      pl.BlockSpec((9, cin, cout), lambda i: (0, 0, 0))],
            out_specs=(pl.BlockSpec((bsz, h * w, cout), lambda i: (i, 0, 0)),
                       pl.BlockSpec((1, 2, cout), lambda i: (i, 0, 0)))),
        compiler_params=pltpu.CompilerParams(
            dimension_semantics=("parallel",), vmem_limit_bytes=_VMEM_LIMIT),
    )(xpad, wmat)


def _bn_gelu_conv2_stats(y1, scale, shift, wmat, bsz, h, w):
    """Pass B: BN1-apply + exact GELU + conv2 + BN2 partial stats, fused per grid step."""
    n = y1.shape[0]
    cin = wmat.shape[1]
    cout = wmat.shape[2]
    steps = n // bsz
    rows = bsz * h * w

    def kernel(y1_ref, s_ref, b_ref, w_ref, y2_ref, st_ref, ap_ref):
        # BN1-apply + GELU in f32 on the bf16 inter-pass block.
        a = _gelu(y1_ref[...].astype(jnp.float32) * s_ref[...] + b_ref[...])   # (bsz, h*w, cin)
        # Halo-only zeroing every step (never gated on program_id: under megacore "parallel"
        # sharding each core owns its own scratch), then overwrite the interior.
        zr = jnp.zeros((bsz, 1, w + 2, cin), ap_ref.dtype)
        zc = jnp.zeros((bsz, h + 2, 1, cin), ap_ref.dtype)
        ap_ref[:, 0:1, :, :] = zr
        ap_ref[:, h + 1:h + 2, :, :] = zr
        ap_ref[:, :, 0:1, :] = zc
        ap_ref[:, :, w + 1:w + 2, :] = zc
        ap_ref[:, 1:h + 1, 1:w + 1, :] = a.astype(jnp.bfloat16).reshape(bsz, h, w, cin)

        def slab(kh, kw):
            return ap_ref[:, kh:kh + h, kw:kw + w, :].reshape(rows, cin)
        acc = _conv3x3_taps(slab, w_ref)                    # (rows, cout) f32
        st_ref[0] = _channel_stats(acc)
        y2_ref[...] = acc.astype(jnp.bfloat16).reshape(bsz, h * w, cout)

    return pl.pallas_call(
        kernel,
        out_shape=(jax.ShapeDtypeStruct((n, h * w, cout), jnp.bfloat16),
                   jax.ShapeDtypeStruct((steps, 2, cout), jnp.float32)),
        grid_spec=pltpu.PrefetchScalarGridSpec(
            num_scalar_prefetch=0,
            grid=(steps,),
            in_specs=[pl.BlockSpec((bsz, h * w, cin), lambda i: (i, 0, 0)),
                      pl.BlockSpec((1, cin), lambda i: (0, 0)),
                      pl.BlockSpec((1, cin), lambda i: (0, 0)),
                      pl.BlockSpec((9, cin, cout), lambda i: (0, 0, 0))],
            out_specs=(pl.BlockSpec((bsz, h * w, cout), lambda i: (i, 0, 0)),
                       pl.BlockSpec((1, 2, cout), lambda i: (i, 0, 0))),
            scratch_shapes=[pltpu.VMEM((bsz, h + 2, w + 2, cin), jnp.bfloat16)]),
        compiler_params=pltpu.CompilerParams(
            dimension_semantics=("parallel",), vmem_limit_bytes=_VMEM_LIMIT),
    )(y1, scale, shift, wmat)


def _bn_gelu_maxpool(y2, scale, shift, bsz, h, w):
    """Pass C: BN2-apply + exact GELU + 2x2/stride-2 max-pool.
    Adjacent W pairs are packed onto the lane axis by a free row-major reshape in the wrapper,
    so the column max is a static lane slice; the row max is a leading-dim reduction."""
    n, _, c = y2.shape
    w_half, h_half = w // 2, h // 2
    steps = n // bsz
    y2r = y2.reshape(n, h, w_half, 2 * c)                   # free reshape, done by XLA
    sc2 = jnp.tile(scale, (1, 2))
    sh2 = jnp.tile(shift, (1, 2))

    def kernel(y_ref, s_ref, b_ref, o_ref):
        a = _gelu(y_ref[...].astype(jnp.float32) * s_ref[...] + b_ref[...])  # (bsz,h,w/2,2c)
        m = jnp.maximum(a[..., :c], a[..., c:])                              # max over W pair
        m = m.reshape(bsz * h, w_half, c)
        m = jnp.max(m.reshape(bsz * h_half, 2, w_half, c), axis=1)           # max over H pair
        o_ref[...] = m.reshape(bsz, h_half, w_half, c)

    return pl.pallas_call(
        kernel,
        out_shape=jax.ShapeDtypeStruct((n, h_half, w_half, c), jnp.float32),
        grid_spec=pltpu.PrefetchScalarGridSpec(
            num_scalar_prefetch=0,
            grid=(steps,),
            in_specs=[pl.BlockSpec((bsz, h, w_half, 2 * c), lambda i: (i, 0, 0, 0)),
                      pl.BlockSpec((1, 2 * c), lambda i: (0, 0)),
                      pl.BlockSpec((1, 2 * c), lambda i: (0, 0))],
            out_specs=pl.BlockSpec((bsz, h_half, w_half, c), lambda i: (i, 0, 0, 0))),
        compiler_params=pltpu.CompilerParams(
            dimension_semantics=("parallel",), vmem_limit_bytes=_VMEM_LIMIT),
    )(y2r, sc2, sh2)


# ----------------------------------- wrapper -----------------------------------

def _pick_images_per_step(n):
    # Batch images per grid step to amortize per-step overhead, but keep the grid >= 2 so both
    # v7x TensorCores get work; the per-step VMEM footprint stays far below v7x's 64 MiB.
    for b in (8, 4, 2):
        if n % b == 0 and n // b >= 2:
            return b
    return 1


def _bn_affine_from_stats(stats, gamma, beta, count):
    # Training-mode BN as an affine form: y_hat = y*scale + shift,
    #   scale = gamma / sqrt(var + eps), shift = beta - mean*scale   (biased variance, eps=1e-5).
    s = jnp.sum(stats[:, 0, :], axis=0)
    ss = jnp.sum(stats[:, 1, :], axis=0)
    mean = s / count
    var = ss / count - mean * mean
    scale = gamma * lax.rsqrt(var + _BN_EPS)
    shift = beta - mean * scale
    return (scale.reshape(1, -1).astype(jnp.float32),
            shift.reshape(1, -1).astype(jnp.float32))


def unet_down_forward(x_nchw, p):
    """UnetDown.forward: ResidualConvBlock(in_c, out_c, is_res=False) -> MaxPool2d(2).
    Takes / returns NCHW like PyTorch; training-mode BatchNorm; exact (erf) GELU."""
    n, cin, h, w = x_nchw.shape
    c1 = p["c1_w"].shape[0]
    c2 = p["c2_w"].shape[0]
    assert h % 2 == 0 and w % 2 == 0
    bsz = _pick_images_per_step(n)

    # NHWC bf16 input, zero-padded once here so pass A needs no scratch / zero-fill.
    x = jnp.transpose(x_nchw, (0, 2, 3, 1)).astype(jnp.bfloat16)
    xpad = jnp.pad(x, ((0, 0), (1, 1), (1, 1), (0, 0)))
    # (tap, ci, co) weight slabs, bf16 MXU operands (accumulation stays f32 in-kernel).
    # Conv biases are dropped: exactly cancelled by training-mode BatchNorm.
    w1 = jnp.transpose(p["c1_w"], (2, 3, 1, 0)).reshape(9, cin, c1).astype(jnp.bfloat16)
    w2 = jnp.transpose(p["c2_w"], (2, 3, 1, 0)).reshape(9, c1, c2).astype(jnp.bfloat16)
    cnt = n * h * w

    y1, st1 = _conv1_stats(xpad, w1, bsz, h, w)                         # conv1 (+stats)
    s1, b1 = _bn_affine_from_stats(st1, p["c1_g"], p["c1_be"], cnt)
    y2, st2 = _bn_gelu_conv2_stats(y1, s1, b1, w2, bsz, h, w)           # BN1+GELU+conv2 (+stats)
    s2, b2 = _bn_affine_from_stats(st2, p["c2_g"], p["c2_be"], cnt)
    out = _bn_gelu_maxpool(y2, s2, b2, bsz, h, w)                       # BN2+GELU+pool
    return jnp.transpose(out, (0, 3, 1, 2))                             # NHWC -> NCHW


# ------------------------------ pure-JAX references ------------------------------

def ref_forward_f32(x_nchw, p):
    """Faithful f32 reference of the PyTorch forward (training-mode BN, exact GELU, conv bias)."""
    y = jnp.transpose(x_nchw, (0, 2, 3, 1)).astype(jnp.float32)
    for cv in ("c1", "c2"):
        wh = jnp.transpose(p[f"{cv}_w"], (2, 3, 1, 0))
        y = lax.conv_general_dilated(
            y, wh, (1, 1), [(1, 1), (1, 1)],
            dimension_numbers=("NHWC", "HWIO", "NHWC"),
            precision=lax.Precision.HIGHEST) + p[f"{cv}_b"]
        mean = jnp.mean(y, axis=(0, 1, 2))
        var = jnp.var(y, axis=(0, 1, 2))
        y = (y - mean) * lax.rsqrt(var + _BN_EPS) * p[f"{cv}_g"] + p[f"{cv}_be"]
        y = jax.nn.gelu(y, approximate=False)
    n, h, w, c = y.shape
    y = jnp.max(y.reshape(n, h // 2, 2, w // 2, 2, c), axis=(2, 4))
    return jnp.transpose(y, (0, 3, 1, 2))


def ref_forward_matched(x_nchw, p):
    """Reference mirroring the kernels' rounding points (bf16 conv operands + bf16 inter-stage
    activations, f32 accumulation/statistics/BN math, bias dropped, same erf polynomial).
    Isolates kernel-structure errors from the deliberate low-precision choices."""
    def q(a):
        return a.astype(jnp.bfloat16).astype(jnp.float32)

    y = q(jnp.transpose(x_nchw, (0, 2, 3, 1)))
    for cv in ("c1", "c2"):
        wh = q(jnp.transpose(p[f"{cv}_w"], (2, 3, 1, 0)))
        y = lax.conv_general_dilated(
            q(y), wh, (1, 1), [(1, 1), (1, 1)],
            dimension_numbers=("NHWC", "HWIO", "NHWC"),
            precision=lax.Precision.HIGHEST)
        mean = jnp.mean(y, axis=(0, 1, 2))
        var = jnp.mean(y * y, axis=(0, 1, 2)) - mean * mean
        scale = p[f"{cv}_g"] * lax.rsqrt(var + _BN_EPS)
        shift = p[f"{cv}_be"] - mean * scale
        y = _gelu(q(y) * scale + shift)
    n, h, w, c = y.shape
    y = jnp.max(y.reshape(n, h // 2, 2, w // 2, 2, c), axis=(2, 4))
    return jnp.transpose(y, (0, 3, 1, 2))


# ------------------------------------- main -------------------------------------

def make_params(key, in_channels, out_channels):
    ks = jax.random.split(key, 8)
    p, i = {}, 0
    for cv, cin in (("c1", in_channels), ("c2", out_channels)):
        p[f"{cv}_w"] = 0.1 * jax.random.normal(ks[i], (out_channels, cin, 3, 3), jnp.float32)
        p[f"{cv}_b"] = 0.1 * jax.random.normal(ks[i + 1], (out_channels,), jnp.float32)
        p[f"{cv}_g"] = 1.0 + 0.1 * jax.random.normal(ks[i + 2], (out_channels,), jnp.float32)
        p[f"{cv}_be"] = 0.1 * jax.random.normal(ks[i + 3], (out_channels,), jnp.float32)
        i += 4
    return p


if __name__ == "__main__":
    key = jax.random.PRNGKey(0)
    kx, kp = jax.random.split(key)

    # UnetDown(in_channels=4, out_channels=8) on a (2, 4, 16, 16) NCHW input.
    n, cin, h, w = 2, 4, 16, 16
    cout = 8
    x = jax.random.normal(kx, (n, cin, h, w), jnp.float32)
    params = make_params(kp, cin, cout)

    out = jax.block_until_ready(jax.jit(unet_down_forward)(x, params))
    assert out.shape == (n, cout, h // 2, w // 2), out.shape

    # 1) Structural check: reference that reproduces the kernels' rounding points.  Residual
    #    mismatch comes only from bf16 rounding-boundary flips on tiny summation-order noise.
    ref_m = jax.block_until_ready(ref_forward_matched(x, params))
    err_m = float(jnp.max(jnp.abs(out - ref_m)))
    assert err_m < 5e-2, f"structural mismatch: max|err|={err_m}"

    # 2) End-to-end check vs pure-f32 PyTorch semantics (conv bias kept, exact erf GELU); the
    #    only deviations are the deliberate bf16 conv operands / inter-pass activations.
    ref_f = jax.block_until_ready(ref_forward_f32(x, params))
    err_f = float(jnp.max(jnp.abs(out - ref_f)))
    rel_f = float(jnp.linalg.norm(out - ref_f) / jnp.linalg.norm(ref_f))
    assert err_f < 1.5e-1 and rel_f < 5e-2, f"semantic mismatch: max|err|={err_f} rel={rel_f}"

    print("KERNEL_OK")
</pallas_src>

<mosaic_0001>
module attributes {stable_mosaic.version = 11 : i64} {
  func.func @kernel(%arg0: i32, %arg1: memref<1x18x18x4xbf16, #tpu.memory_space<vmem>>, %arg2: memref<9x4x8xbf16, #tpu.memory_space<vmem>>, %arg3: memref<1x256x8xbf16, #tpu.memory_space<vmem>>, %arg4: memref<1x2x8xf32, #tpu.memory_space<vmem>>) attributes {dimension_semantics = [#tpu.dimension_semantics<parallel>], iteration_bounds = array<i64: 2>, scalar_prefetch = 0 : i64, scratch_operands = 0 : i64, tpu.core_type = #tpu.core_type<tc>, window_params = [{transform_indices = @transform_0, window_bounds = array<i64: 1, 18, 18, 4>}, {pipeline_mode = #tpu.pipeline_mode<synchronous>, transform_indices = @transform_1, window_bounds = array<i64: 9, 4, 8>}, {transform_indices = @transform_2, window_bounds = array<i64: 1, 256, 8>}, {transform_indices = @transform_3, window_bounds = array<i64: 1, 2, 8>}]} {
    %c0 = arith.constant 0 : index
    %c0_0 = arith.constant 0 : index
    %c0_1 = arith.constant 0 : index
    %c0_2 = arith.constant 0 : index
    %0 = vector.load %arg1[%c0, %c0_0, %c0_1, %c0_2] : memref<1x18x18x4xbf16, #tpu.memory_space<vmem>>, vector<1x16x16x4xbf16>
    %1 = vector.shape_cast %0 : vector<1x16x16x4xbf16> to vector<256x4xbf16>
    %c0_3 = arith.constant 0 : index
    %c0_4 = arith.constant 0 : index
    %c0_5 = arith.constant 0 : index
    %2 = vector.load %arg2[%c0_3, %c0_4, %c0_5] : memref<9x4x8xbf16, #tpu.memory_space<vmem>>, vector<1x4x8xbf16>
    %3 = vector.shape_cast %2 : vector<1x4x8xbf16> to vector<4x8xbf16>
    %cst = arith.constant dense<0.000000e+00> : vector<256x8xf32>
    %4 = tpu.matmul %1, %3, %cst {dimension_numbers = #tpu.dot_dimension_numbers<[1], [0], [0], [1], [0, 0, 1, 1], [], []>} : vector<256x4xbf16>, vector<4x8xbf16>, vector<256x8xf32> -> vector<256x8xf32>
    %c0_6 = arith.constant 0 : index
    %c0_7 = arith.constant 0 : index
    %c1 = arith.constant 1 : index
    %c0_8 = arith.constant 0 : index
    %5 = vector.load %arg1[%c0_6, %c0_7, %c1, %c0_8] : memref<1x18x18x4xbf16, #tpu.memory_space<vmem>>, vector<1x16x16x4xbf16>
    %6 = vector.shape_cast %5 : vector<1x16x16x4xbf16> to vector<256x4xbf16>
    %c1_9 = arith.constant 1 : index
    %c0_10 = arith.constant 0 : index
    %c0_11 = arith.constant 0 : index
    %7 = vector.load %arg2[%c1_9, %c0_10, %c0_11] : memref<9x4x8xbf16, #tpu.memory_space<vmem>>, vector<1x4x8xbf16>
    %8 = vector.shape_cast %7 : vector<1x4x8xbf16> to vector<4x8xbf16>
    %cst_12 = arith.constant dense<0.000000e+00> : vector<256x8xf32>
    %9 = tpu.matmul %6, %8, %cst_12 {dimension_numbers = #tpu.dot_dimension_numbers<[1], [0], [0], [1], [0, 0, 1, 1], [], []>} : vector<256x4xbf16>, vector<4x8xbf16>, vector<256x8xf32> -> vector<256x8xf32>
    %10 = arith.addf %4, %9 : vector<256x8xf32>
    %c0_13 = arith.constant 0 : index
    %c0_14 = arith.constant 0 : index
    %c2 = arith.constant 2 : index
    %c0_15 = arith.constant 0 : index
    %11 = vector.load %arg1[%c0_13, %c0_14, %c2, %c0_15] : memref<1x18x18x4xbf16, #tpu.memory_space<vmem>>, vector<1x16x16x4xbf16>
    %12 = vector.shape_cast %11 : vector<1x16x16x4xbf16> to vector<256x4xbf16>
    %c2_16 = arith.constant 2 : index
    %c0_17 = arith.constant 0 : index
    %c0_18 = arith.constant 0 : index
    %13 = vector.load %arg2[%c2_16, %c0_17, %c0_18] : memref<9x4x8xbf16, #tpu.memory_space<vmem>>, vector<1x4x8xbf16>
    %14 = vector.shape_cast %13 : vector<1x4x8xbf16> to vector<4x8xbf16>
    %cst_19 = arith.constant dense<0.000000e+00> : vector<256x8xf32>
    %15 = tpu.matmul %12, %14, %cst_19 {dimension_numbers = #tpu.dot_dimension_numbers<[1], [0], [0], [1], [0, 0, 1, 1], [], []>} : vector<256x4xbf16>, vector<4x8xbf16>, vector<256x8xf32> -> vector<256x8xf32>
    %16 = arith.addf %10, %15 : vector<256x8xf32>
    %c0_20 = arith.constant 0 : index
    %c1_21 = arith.constant 1 : index
    %c0_22 = arith.constant 0 : index
    %c0_23 = arith.constant 0 : index
    %17 = vector.load %arg1[%c0_20, %c1_21, %c0_22, %c0_23] : memref<1x18x18x4xbf16, #tpu.memory_space<vmem>>, vector<1x16x16x4xbf16>
    %18 = vector.shape_cast %17 : vector<1x16x16x4xbf16> to vector<256x4xbf16>
    %c3 = arith.constant 3 : index
    %c0_24 = arith.constant 0 : index
    %c0_25 = arith.constant 0 : index
    %19 = vector.load %arg2[%c3, %c0_24, %c0_25] : memref<9x4x8xbf16, #tpu.memory_space<vmem>>, vector<1x4x8xbf16>
    %20 = vector.shape_cast %19 : vector<1x4x8xbf16> to vector<4x8xbf16>
    %cst_26 = arith.constant dense<0.000000e+00> : vector<256x8xf32>
    %21 = tpu.matmul %18, %20, %cst_26 {dimension_numbers = #tpu.dot_dimension_numbers<[1], [0], [0], [1], [0, 0, 1, 1], [], []>} : vector<256x4xbf16>, vector<4x8xbf16>, vector<256x8xf32> -> vector<256x8xf32>
    %22 = arith.addf %16, %21 : vector<256x8xf32>
    %c0_27 = arith.constant 0 : index
    %c1_28 = arith.constant 1 : index
    %c1_29 = arith.constant 1 : index
    %c0_30 = arith.constant 0 : index
    %23 = vector.load %arg1[%c0_27, %c1_28, %c1_29, %c0_30] : memref<1x18x18x4xbf16, #tpu.memory_space<vmem>>, vector<1x16x16x4xbf16>
    %24 = vector.shape_cast %23 : vector<1x16x16x4xbf16> to vector<256x4xbf16>
    %c4 = arith.constant 4 : index
    %c0_31 = arith.constant 0 : index
    %c0_32 = arith.constant 0 : index
    %25 = vector.load %arg2[%c4, %c0_31, %c0_32] : memref<9x4x8xbf16, #tpu.memory_space<vmem>>, vector<1x4x8xbf16>
    %26 = vector.shape_cast %25 : vector<1x4x8xbf16> to vector<4x8xbf16>
    %cst_33 = arith.constant dense<0.000000e+00> : vector<256x8xf32>
    %27 = tpu.matmul %24, %26, %cst_33 {dimension_numbers = #tpu.dot_dimension_numbers<[1], [0], [0], [1], [0, 0, 1, 1], [], []>} : vector<256x4xbf16>, vector<4x8xbf16>, vector<256x8xf32> -> vector<256x8xf32>
    %28 = arith.addf %22, %27 : vector<256x8xf32>
    %c0_34 = arith.constant 0 : index
    %c1_35 = arith.constant 1 : index
    %c2_36 = arith.constant 2 : index
    %c0_37 = arith.constant 0 : index
    %29 = vector.load %arg1[%c0_34, %c1_35, %c2_36, %c0_37] : memref<1x18x18x4xbf16, #tpu.memory_space<vmem>>, vector<1x16x16x4xbf16>
    %30 = vector.shape_cast %29 : vector<1x16x16x4xbf16> to vector<256x4xbf16>
    %c5 = arith.constant 5 : index
    %c0_38 = arith.constant 0 : index
    %c0_39 = arith.constant 0 : index
    %31 = vector.load %arg2[%c5, %c0_38, %c0_39] : memref<9x4x8xbf16, #tpu.memory_space<vmem>>, vector<1x4x8xbf16>
    %32 = vector.shape_cast %31 : vector<1x4x8xbf16> to vector<4x8xbf16>
    %cst_40 = arith.constant dense<0.000000e+00> : vector<256x8xf32>
    %33 = tpu.matmul %30, %32, %cst_40 {dimension_numbers = #tpu.dot_dimension_numbers<[1], [0], [0], [1], [0, 0, 1, 1], [], []>} : vector<256x4xbf16>, vector<4x8xbf16>, vector<256x8xf32> -> vector<256x8xf32>
    %34 = arith.addf %28, %33 : vector<256x8xf32>
    %c0_41 = arith.constant 0 : index
    %c2_42 = arith.constant 2 : index
    %c0_43 = arith.constant 0 : index
    %c0_44 = arith.constant 0 : index
    %35 = vector.load %arg1[%c0_41, %c2_42, %c0_43, %c0_44] : memref<1x18x18x4xbf16, #tpu.memory_space<vmem>>, vector<1x16x16x4xbf16>
    %36 = vector.shape_cast %35 : vector<1x16x16x4xbf16> to vector<256x4xbf16>
    %c6 = arith.constant 6 : index
    %c0_45 = arith.constant 0 : index
    %c0_46 = arith.constant 0 : index
    %37 = vector.load %arg2[%c6, %c0_45, %c0_46] : memref<9x4x8xbf16, #tpu.memory_space<vmem>>, vector<1x4x8xbf16>
    %38 = vector.shape_cast %37 : vector<1x4x8xbf16> to vector<4x8xbf16>
    %cst_47 = arith.constant dense<0.000000e+00> : vector<256x8xf32>
    %39 = tpu.matmul %36, %38, %cst_47 {dimension_numbers = #tpu.dot_dimension_numbers<[1], [0], [0], [1], [0, 0, 1, 1], [], []>} : vector<256x4xbf16>, vector<4x8xbf16>, vector<256x8xf32> -> vector<256x8xf32>
    %40 = arith.addf %34, %39 : vector<256x8xf32>
    %c0_48 = arith.constant 0 : index
    %c2_49 = arith.constant 2 : index
    %c1_50 = arith.constant 1 : index
    %c0_51 = arith.constant 0 : index
    %41 = vector.load %arg1[%c0_48, %c2_49, %c1_50, %c0_51] : memref<1x18x18x4xbf16, #tpu.memory_space<vmem>>, vector<1x16x16x4xbf16>
    %42 = vector.shape_cast %41 : vector<1x16x16x4xbf16> to vector<256x4xbf16>
    %c7 = arith.constant 7 : index
    %c0_52 = arith.constant 0 : index
    %c0_53 = arith.constant 0 : index
    %43 = vector.load %arg2[%c7, %c0_52, %c0_53] : memref<9x4x8xbf16, #tpu.memory_space<vmem>>, vector<1x4x8xbf16>
    %44 = vector.shape_cast %43 : vector<1x4x8xbf16> to vector<4x8xbf16>
    %cst_54 = arith.constant dense<0.000000e+00> : vector<256x8xf32>
    %45 = tpu.matmul %42, %44, %cst_54 {dimension_numbers = #tpu.dot_dimension_numbers<[1], [0], [0], [1], [0, 0, 1, 1], [], []>} : vector<256x4xbf16>, vector<4x8xbf16>, vector<256x8xf32> -> vector<256x8xf32>
    %46 = arith.addf %40, %45 : vector<256x8xf32>
    %c0_55 = arith.constant 0 : index
    %c2_56 = arith.constant 2 : index
    %c2_57 = arith.constant 2 : index
    %c0_58 = arith.constant 0 : index
    %47 = vector.load %arg1[%c0_55, %c2_56, %c2_57, %c0_58] : memref<1x18x18x4xbf16, #tpu.memory_space<vmem>>, vector<1x16x16x4xbf16>
    %48 = vector.shape_cast %47 : vector<1x16x16x4xbf16> to vector<256x4xbf16>
    %c8 = arith.constant 8 : index
    %c0_59 = arith.constant 0 : index
    %c0_60 = arith.constant 0 : index
    %49 = vector.load %arg2[%c8, %c0_59, %c0_60] : memref<9x4x8xbf16, #tpu.memory_space<vmem>>, vector<1x4x8xbf16>
    %50 = vector.shape_cast %49 : vector<1x4x8xbf16> to vector<4x8xbf16>
    %cst_61 = arith.constant dense<0.000000e+00> : vector<256x8xf32>
    %51 = tpu.matmul %48, %50, %cst_61 {dimension_numbers = #tpu.dot_dimension_numbers<[1], [0], [0], [1], [0, 0, 1, 1], [], []>} : vector<256x4xbf16>, vector<4x8xbf16>, vector<256x8xf32> -> vector<256x8xf32>
    %52 = arith.addf %46, %51 : vector<256x8xf32>
    %cst_62 = arith.constant dense<0.000000e+00> : vector<8xf32>
    %53 = vector.multi_reduction <add>, %52, %cst_62 [0] : vector<256x8xf32> to vector<8xf32>
    %54 = vector.shape_cast %53 : vector<8xf32> to vector<1x8xf32>
    %55 = arith.mulf %52, %52 : vector<256x8xf32>
    %cst_63 = arith.constant dense<0.000000e+00> : vector<8xf32>
    %56 = vector.multi_reduction <add>, %55, %cst_63 [0] : vector<256x8xf32> to vector<8xf32>
    %57 = vector.shape_cast %56 : vector<8xf32> to vector<1x8xf32>
    %58 = tpu.concatenate %54, %57 in 0 : vector<1x8xf32>, vector<1x8xf32> -> vector<2x8xf32>
    %c0_64 = arith.constant 0 : index
    %c0_65 = arith.constant 0 : index
    %c0_66 = arith.constant 0 : index
    %59 = vector.load %arg4[%c0_64, %c0_65, %c0_66] : memref<1x2x8xf32, #tpu.memory_space<vmem>>, vector<1x2x8xf32>
    %60 = vector.shape_cast %59 : vector<1x2x8xf32> to vector<2x8xf32>
    %61 = vector.shape_cast %58 : vector<2x8xf32> to vector<1x2x8xf32>
    tpu.vector_store %arg4[%c0_64, %c0_65, %c0_66], %61 {strides = array<i32>} : memref<1x2x8xf32, #tpu.memory_space<vmem>>, vector<1x2x8xf32>,
    %62 = arith.truncf %52 : vector<256x8xf32> to vector<256x8xbf16>
    %63 = vector.shape_cast %62 : vector<256x8xbf16> to vector<1x256x8xbf16>
    %c0_67 = arith.constant 0 : index
    %c0_68 = arith.constant 0 : index
    %c0_69 = arith.constant 0 : index
    %64 = vector.load %arg3[%c0_67, %c0_68, %c0_69] : memref<1x256x8xbf16, #tpu.memory_space<vmem>>, vector<1x256x8xbf16>
    tpu.vector_store %arg3[%c0_67, %c0_68, %c0_69], %63 {strides = array<i32>} : memref<1x256x8xbf16, #tpu.memory_space<vmem>>, vector<1x256x8xbf16>,
    return
  }
  func.func @transform_0(%arg0: i32) -> (i32, i32, i32, i32) {
    %c0_i32 = arith.constant 0 : i32
    %c0_i32_0 = arith.constant 0 : i32
    %c0_i32_1 = arith.constant 0 : i32
    %c0_i32_2 = arith.constant 0 : i32
    return %arg0, %c0_i32, %c0_i32_0, %c0_i32_1 : i32, i32, i32, i32
  }
  func.func @transform_1(%arg0: i32) -> (i32, i32, i32) {
    %c0_i32 = arith.constant 0 : i32
    %c0_i32_0 = arith.constant 0 : i32
    %c0_i32_1 = arith.constant 0 : i32
    %c0_i32_2 = arith.constant 0 : i32
    return %c0_i32, %c0_i32_0, %c0_i32_1 : i32, i32, i32
  }
  func.func @transform_2(%arg0: i32) -> (i32, i32, i32) {
    %c0_i32 = arith.constant 0 : i32
    %c0_i32_0 = arith.constant 0 : i32
    %c0_i32_1 = arith.constant 0 : i32
    return %arg0, %c0_i32, %c0_i32_0 : i32, i32, i32
  }
  func.func @transform_3(%arg0: i32) -> (i32, i32, i32) {
    %c0_i32 = arith.constant 0 : i32
    %c0_i32_0 = arith.constant 0 : i32
    %c0_i32_1 = arith.constant 0 : i32
    return %arg0, %c0_i32, %c0_i32_0 : i32, i32, i32
  }
}

module attributes {stable_mosaic.version = 11 : i64} {
  func.func @kernel(%arg0: i32, %arg1: memref<1x256x8xbf16, #tpu.memory_space<vmem>>, %arg2: memref<1x8xf32, #tpu.memory_space<vmem>>, %arg3: memref<1x8xf32, #tpu.memory_space<vmem>>, %arg4: memref<9x8x8xbf16, #tpu.memory_space<vmem>>, %arg5: memref<1x256x8xbf16, #tpu.memory_space<vmem>>, %arg6: memref<1x2x8xf32, #tpu.memory_space<vmem>>, %arg7: memref<1x18x18x8xbf16, #tpu.memory_space<vmem>>) attributes {dimension_semantics = [#tpu.dimension_semantics<parallel>], iteration_bounds = array<i64: 2>, scalar_prefetch = 0 : i64, scratch_operands = 1 : i64, tpu.core_type = #tpu.core_type<tc>, window_params = [{transform_indices = @transform_0, window_bounds = array<i64: 1, 256, 8>}, {pipeline_mode = #tpu.pipeline_mode<synchronous>, transform_indices = @transform_1, window_bounds = array<i64: 1, 8>}, {pipeline_mode = #tpu.pipeline_mode<synchronous>, transform_indices = @transform_2, window_bounds = array<i64: 1, 8>}, {pipeline_mode = #tpu.pipeline_mode<synchronous>, transform_indices = @transform_3, window_bounds = array<i64: 9, 8, 8>}, {transform_indices = @transform_4, window_bounds = array<i64: 1, 256, 8>}, {transform_indices = @transform_5, window_bounds = array<i64: 1, 2, 8>}]} {
    %c0 = arith.constant 0 : index
    %c0_0 = arith.constant 0 : index
    %c0_1 = arith.constant 0 : index
    %0 = vector.load %arg1[%c0, %c0_0, %c0_1] : memref<1x256x8xbf16, #tpu.memory_space<vmem>>, vector<1x256x8xbf16>
    %1 = arith.extf %0 : vector<1x256x8xbf16> to vector<1x256x8xf32>
    %c0_2 = arith.constant 0 : index
    %c0_3 = arith.constant 0 : index
    %2 = vector.load %arg2[%c0_2, %c0_3] : memref<1x8xf32, #tpu.memory_space<vmem>>, vector<1x8xf32>
    %3 = vector.shape_cast %2 : vector<1x8xf32> to vector<1x1x8xf32>
    %4 = vector.broadcast %3 : vector<1x1x8xf32> to vector<1x256x8xf32>
    %5 = arith.mulf %1, %4 : vector<1x256x8xf32>
    %c0_4 = arith.constant 0 : index
    %c0_5 = arith.constant 0 : index
    %6 = vector.load %arg3[%c0_4, %c0_5] : memref<1x8xf32, #tpu.memory_space<vmem>>, vector<1x8xf32>
    %7 = vector.shape_cast %6 : vector<1x8xf32> to vector<1x1x8xf32>
    %8 = vector.broadcast %7 : vector<1x1x8xf32> to vector<1x256x8xf32>
    %9 = arith.addf %5, %8 : vector<1x256x8xf32>
    %cst = arith.constant 5.000000e-01 : f32
    %10 = vector.broadcast %cst : f32 to vector<1x256x8xf32>
    %11 = arith.mulf %10, %9 : vector<1x256x8xf32>
    %cst_6 = arith.constant 0.707106769 : f32
    %12 = vector.broadcast %cst_6 : f32 to vector<1x256x8xf32>
    %13 = arith.mulf %9, %12 : vector<1x256x8xf32>
    %cst_7 = arith.constant 0.000000e+00 : f32
    %14 = vector.broadcast %cst_7 : f32 to vector<1x256x8xf32>
    %15 = arith.cmpf olt, %13, %14 : vector<1x256x8xf32>
    %cst_8 = arith.constant -1.000000e+00 : f32
    %cst_9 = arith.constant 1.000000e+00 : f32
    %16 = vector.broadcast %cst_8 : f32 to vector<1x256x8xf32>
    %17 = vector.broadcast %cst_9 : f32 to vector<1x256x8xf32>
    %18 = arith.select %15, %16, %17 : vector<1x256x8xi1>, vector<1x256x8xf32>
    %19 = math.absf %13 : vector<1x256x8xf32>
    %cst_10 = arith.constant 0.327591091 : f32
    %20 = vector.broadcast %cst_10 : f32 to vector<1x256x8xf32>
    %21 = arith.mulf %20, %19 : vector<1x256x8xf32>
    %cst_11 = arith.constant 1.000000e+00 : f32
    %22 = vector.broadcast %cst_11 : f32 to vector<1x256x8xf32>
    %23 = arith.addf %22, %21 : vector<1x256x8xf32>
    %cst_12 = arith.constant 1.000000e+00 : f32
    %24 = vector.broadcast %cst_12 : f32 to vector<1x256x8xf32>
    %25 = arith.divf %24, %23 : vector<1x256x8xf32>
    %cst_13 = arith.constant 1.06140542 : f32
    %26 = vector.broadcast %cst_13 : f32 to vector<1x256x8xf32>
    %27 = arith.mulf %26, %25 : vector<1x256x8xf32>
    %cst_14 = arith.constant -1.45315206 : f32
    %28 = vector.broadcast %cst_14 : f32 to vector<1x256x8xf32>
    %29 = arith.addf %27, %28 : vector<1x256x8xf32>
    %30 = arith.mulf %29, %25 : vector<1x256x8xf32>
    %cst_15 = arith.constant 1.42141378 : f32
    %31 = vector.broadcast %cst_15 : f32 to vector<1x256x8xf32>
    %32 = arith.addf %30, %31 : vector<1x256x8xf32>
    %33 = arith.mulf %32, %25 : vector<1x256x8xf32>
    %cst_16 = arith.constant -0.284496725 : f32
    %34 = vector.broadcast %cst_16 : f32 to vector<1x256x8xf32>
    %35 = arith.addf %33, %34 : vector<1x256x8xf32>
    %36 = arith.mulf %35, %25 : vector<1x256x8xf32>
    %cst_17 = arith.constant 0.254829586 : f32
    %37 = vector.broadcast %cst_17 : f32 to vector<1x256x8xf32>
    %38 = arith.addf %36, %37 : vector<1x256x8xf32>
    %39 = arith.mulf %38, %25 : vector<1x256x8xf32>
    %cst_18 = arith.constant 0.000000e+00 : f32
    %40 = vector.broadcast %cst_18 : f32 to vector<1x256x8xf32>
    %41 = arith.subf %40, %19 : vector<1x256x8xf32>
    %42 = arith.mulf %41, %19 : vector<1x256x8xf32>
    %43 = math.exp %42 : vector<1x256x8xf32>
    %44 = arith.mulf %39, %43 : vector<1x256x8xf32>
    %cst_19 = arith.constant 1.000000e+00 : f32
    %45 = vector.broadcast %cst_19 : f32 to vector<1x256x8xf32>
    %46 = arith.subf %45, %44 : vector<1x256x8xf32>
    %47 = arith.mulf %18, %46 : vector<1x256x8xf32>
    %cst_20 = arith.constant 1.000000e+00 : f32
    %48 = vector.broadcast %cst_20 : f32 to vector<1x256x8xf32>
    %49 = arith.addf %48, %47 : vector<1x256x8xf32>
    %50 = arith.mulf %11, %49 : vector<1x256x8xf32>
    %cst_21 = arith.constant 0.000000e+00 : bf16
    %51 = vector.broadcast %cst_21 : bf16 to vector<1x1x18x8xbf16>
    %cst_22 = arith.constant 0.000000e+00 : bf16
    %52 = vector.broadcast %cst_22 : bf16 to vector<1x18x1x8xbf16>
    %c0_23 = arith.constant 0 : index
    %c0_24 = arith.constant 0 : index
    %c0_25 = arith.constant 0 : index
    %c0_26 = arith.constant 0 : index
    %53 = vector.load %arg7[%c0_23, %c0_24, %c0_25, %c0_26] : memref<1x18x18x8xbf16, #tpu.memory_space<vmem>>, vector<1x1x18x8xbf16>
    tpu.vector_store %arg7[%c0_23, %c0_24, %c0_25, %c0_26], %51 {strides = array<i32>} : memref<1x18x18x8xbf16, #tpu.memory_space<vmem>>, vector<1x1x18x8xbf16>,
    %c0_27 = arith.constant 0 : index
    %c17 = arith.constant 17 : index
    %c0_28 = arith.constant 0 : index
    %c0_29 = arith.constant 0 : index
    %54 = vector.load %arg7[%c0_27, %c17, %c0_28, %c0_29] : memref<1x18x18x8xbf16, #tpu.memory_space<vmem>>, vector<1x1x18x8xbf16>
    tpu.vector_store %arg7[%c0_27, %c17, %c0_28, %c0_29], %51 {strides = array<i32>} : memref<1x18x18x8xbf16, #tpu.memory_space<vmem>>, vector<1x1x18x8xbf16>,
    %c0_30 = arith.constant 0 : index
    %c0_31 = arith.constant 0 : index
    %c0_32 = arith.constant 0 : index
    %c0_33 = arith.constant 0 : index
    %55 = vector.load %arg7[%c0_30, %c0_31, %c0_32, %c0_33] : memref<1x18x18x8xbf16, #tpu.memory_space<vmem>>, vector<1x18x1x8xbf16>
    tpu.vector_store %arg7[%c0_30, %c0_31, %c0_32, %c0_33], %52 {strides = array<i32>} : memref<1x18x18x8xbf16, #tpu.memory_space<vmem>>, vector<1x18x1x8xbf16>,
    %c0_34 = arith.constant 0 : index
    %c0_35 = arith.constant 0 : index
    %c17_36 = arith.constant 17 : index
    %c0_37 = arith.constant 0 : index
    %56 = vector.load %arg7[%c0_34, %c0_35, %c17_36, %c0_37] : memref<1x18x18x8xbf16, #tpu.memory_space<vmem>>, vector<1x18x1x8xbf16>
    tpu.vector_store %arg7[%c0_34, %c0_35, %c17_36, %c0_37], %52 {strides = array<i32>} : memref<1x18x18x8xbf16, #tpu.memory_space<vmem>>, vector<1x18x1x8xbf16>,
    %57 = arith.truncf %50 : vector<1x256x8xf32> to vector<1x256x8xbf16>
    %58 = vector.shape_cast %57 : vector<1x256x8xbf16> to vector<1x16x16x8xbf16>
    %c0_38 = arith.constant 0 : index
    %c1 = arith.constant 1 : index
    %c1_39 = arith.constant 1 : index
    %c0_40 = arith.constant 0 : index
    %59 = vector.load %arg7[%c0_38, %c1, %c1_39, %c0_40] : memref<1x18x18x8xbf16, #tpu.memory_space<vmem>>, vector<1x16x16x8xbf16>
    tpu.vector_store %arg7[%c0_38, %c1, %c1_39, %c0_40], %58 {strides = array<i32>} : memref<1x18x18x8xbf16, #tpu.memory_space<vmem>>, vector<1x16x16x8xbf16>,
    %c0_41 = arith.constant 0 : index
    %c0_42 = arith.constant 0 : index
    %c0_43 = arith.constant 0 : index
    %c0_44 = arith.constant 0 : index
    %60 = vector.load %arg7[%c0_41, %c0_42, %c0_43, %c0_44] : memref<1x18x18x8xbf16, #tpu.memory_space<vmem>>, vector<1x16x16x8xbf16>
    %61 = vector.shape_cast %60 : vector<1x16x16x8xbf16> to vector<256x8xbf16>
    %c0_45 = arith.constant 0 : index
    %c0_46 = arith.constant 0 : index
    %c0_47 = arith.constant 0 : index
    %62 = vector.load %arg4[%c0_45, %c0_46, %c0_47] : memref<9x8x8xbf16, #tpu.memory_space<vmem>>, vector<1x8x8xbf16>
    %63 = vector.shape_cast %62 : vector<1x8x8xbf16> to vector<8x8xbf16>
    %cst_48 = arith.constant dense<0.000000e+00> : vector<256x8xf32>
    %64 = tpu.matmul %61, %63, %cst_48 {dimension_numbers = #tpu.dot_dimension_numbers<[1], [0], [0], [1], [0, 0, 1, 1], [], []>} : vector<256x8xbf16>, vector<8x8xbf16>, vector<256x8xf32> -> vector<256x8xf32>
    %c0_49 = arith.constant 0 : index
    %c0_50 = arith.constant 0 : index
    %c1_51 = arith.constant 1 : index
    %c0_52 = arith.constant 0 : index
    %65 = vector.load %arg7[%c0_49, %c0_50, %c1_51, %c0_52] : memref<1x18x18x8xbf16, #tpu.memory_space<vmem>>, vector<1x16x16x8xbf16>
    %66 = vector.shape_cast %65 : vector<1x16x16x8xbf16> to vector<256x8xbf16>
    %c1_53 = arith.constant 1 : index
    %c0_54 = arith.constant 0 : index
    %c0_55 = arith.constant 0 : index
    %67 = vector.load %arg4[%c1_53, %c0_54, %c0_55] : memref<9x8x8xbf16, #tpu.memory_space<vmem>>, vector<1x8x8xbf16>
    %68 = vector.shape_cast %67 : vector<1x8x8xbf16> to vector<8x8xbf16>
    %cst_56 = arith.constant dense<0.000000e+00> : vector<256x8xf32>
    %69 = tpu.matmul %66, %68, %cst_56 {dimension_numbers = #tpu.dot_dimension_numbers<[1], [0], [0], [1], [0, 0, 1, 1], [], []>} : vector<256x8xbf16>, vector<8x8xbf16>, vector<256x8xf32> -> vector<256x8xf32>
    %70 = arith.addf %64, %69 : vector<256x8xf32>
    %c0_57 = arith.constant 0 : index
    %c0_58 = arith.constant 0 : index
    %c2 = arith.constant 2 : index
    %c0_59 = arith.constant 0 : index
    %71 = vector.load %arg7[%c0_57, %c0_58, %c2, %c0_59] : memref<1x18x18x8xbf16, #tpu.memory_space<vmem>>, vector<1x16x16x8xbf16>
    %72 = vector.shape_cast %71 : vector<1x16x16x8xbf16> to vector<256x8xbf16>
    %c2_60 = arith.constant 2 : index
    %c0_61 = arith.constant 0 : index
    %c0_62 = arith.constant 0 : index
    %73 = vector.load %arg4[%c2_60, %c0_61, %c0_62] : memref<9x8x8xbf16, #tpu.memory_space<vmem>>, vector<1x8x8xbf16>
    %74 = vector.shape_cast %73 : vector<1x8x8xbf16> to vector<8x8xbf16>
    %cst_63 = arith.constant dense<0.000000e+00> : vector<256x8xf32>
    %75 = tpu.matmul %72, %74, %cst_63 {dimension_numbers = #tpu.dot_dimension_numbers<[1], [0], [0], [1], [0, 0, 1, 1], [], []>} : vector<256x8xbf16>, vector<8x8xbf16>, vector<256x8xf32> -> vector<256x8xf32>
    %76 = arith.addf %70, %75 : vector<256x8xf32>
    %c0_64 = arith.constant 0 : index
    %c1_65 = arith.constant 1 : index
    %c0_66 = arith.constant 0 : index
    %c0_67 = arith.constant 0 : index
    %77 = vector.load %arg7[%c0_64, %c1_65, %c0_66, %c0_67] : memref<1x18x18x8xbf16, #tpu.memory_space<vmem>>, vector<1x16x16x8xbf16>
    %78 = vector.shape_cast %77 : vector<1x16x16x8xbf16> to vector<256x8xbf16>
    %c3 = arith.constant 3 : index
    %c0_68 = arith.constant 0 : index
    %c0_69 = arith.constant 0 : index
    %79 = vector.load %arg4[%c3, %c0_68, %c0_69] : memref<9x8x8xbf16, #tpu.memory_space<vmem>>, vector<1x8x8xbf16>
    %80 = vector.shape_cast %79 : vector<1x8x8xbf16> to vector<8x8xbf16>
    %cst_70 = arith.constant dense<0.000000e+00> : vector<256x8xf32>
    %81 = tpu.matmul %78, %80, %cst_70 {dimension_numbers = #tpu.dot_dimension_numbers<[1], [0], [0], [1], [0, 0, 1, 1], [], []>} : vector<256x8xbf16>, vector<8x8xbf16>, vector<256x8xf32> -> vector<256x8xf32>
    %82 = arith.addf %76, %81 : vector<256x8xf32>
    %c0_71 = arith.constant 0 : index
    %c1_72 = arith.constant 1 : index
    %c1_73 = arith.constant 1 : index
    %c0_74 = arith.constant 0 : index
    %83 = vector.load %arg7[%c0_71, %c1_72, %c1_73, %c0_74] : memref<1x18x18x8xbf16, #tpu.memory_space<vmem>>, vector<1x16x16x8xbf16>
    %84 = vector.shape_cast %83 : vector<1x16x16x8xbf16> to vector<256x8xbf16>
    %c4 = arith.constant 4 : index
    %c0_75 = arith.constant 0 : index
    %c0_76 = arith.constant 0 : index
    %85 = vector.load %arg4[%c4, %c0_75, %c0_76] : memref<9x8x8xbf16, #tpu.memory_space<vmem>>, vector<1x8x8xbf16>
    %86 = vector.shape_cast %85 : vector<1x8x8xbf16> to vector<8x8xbf16>
    %cst_77 = arith.constant dense<0.000000e+00> : vector<256x8xf32>
    %87 = tpu.matmul %84, %86, %cst_77 {dimension_numbers = #tpu.dot_dimension_numbers<[1], [0], [0], [1], [0, 0, 1, 1], [], []>} : vector<256x8xbf16>, vector<8x8xbf16>, vector<256x8xf32> -> vector<256x8xf32>
    %88 = arith.addf %82, %87 : vector<256x8xf32>
    %c0_78 = arith.constant 0 : index
    %c1_79 = arith.constant 1 : index
    %c2_80 = arith.constant 2 : index
    %c0_81 = arith.constant 0 : index
    %89 = vector.load %arg7[%c0_78, %c1_79, %c2_80, %c0_81] : memref<1x18x18x8xbf16, #tpu.memory_space<vmem>>, vector<1x16x16x8xbf16>
    %90 = vector.shape_cast %89 : vector<1x16x16x8xbf16> to vector<256x8xbf16>
    %c5 = arith.constant 5 : index
    %c0_82 = arith.constant 0 : index
    %c0_83 = arith.constant 0 : index
    %91 = vector.load %arg4[%c5, %c0_82, %c0_83] : memref<9x8x8xbf16, #tpu.memory_space<vmem>>, vector<1x8x8xbf16>
    %92 = vector.shape_cast %91 : vector<1x8x8xbf16> to vector<8x8xbf16>
    %cst_84 = arith.constant dense<0.000000e+00> : vector<256x8xf32>
    %93 = tpu.matmul %90, %92, %cst_84 {dimension_numbers = #tpu.dot_dimension_numbers<[1], [0], [0], [1], [0, 0, 1, 1], [], []>} : vector<256x8xbf16>, vector<8x8xbf16>, vector<256x8xf32> -> vector<256x8xf32>
    %94 = arith.addf %88, %93 : vector<256x8xf32>
    %c0_85 = arith.constant 0 : index
    %c2_86 = arith.constant 2 : index
    %c0_87 = arith.constant 0 : index
    %c0_88 = arith.constant 0 : index
    %95 = vector.load %arg7[%c0_85, %c2_86, %c0_87, %c0_88] : memref<1x18x18x8xbf16, #tpu.memory_space<vmem>>, vector<1x16x16x8xbf16>
    %96 = vector.shape_cast %95 : vector<1x16x16x8xbf16> to vector<256x8xbf16>
    %c6 = arith.constant 6 : index
    %c0_89 = arith.constant 0 : index
    %c0_90 = arith.constant 0 : index
    %97 = vector.load %arg4[%c6, %c0_89, %c0_90] : memref<9x8x8xbf16, #tpu.memory_space<vmem>>, vector<1x8x8xbf16>
    %98 = vector.shape_cast %97 : vector<1x8x8xbf16> to vector<8x8xbf16>
    %cst_91 = arith.constant dense<0.000000e+00> : vector<256x8xf32>
    %99 = tpu.matmul %96, %98, %cst_91 {dimension_numbers = #tpu.dot_dimension_numbers<[1], [0], [0], [1], [0, 0, 1, 1], [], []>} : vector<256x8xbf16>, vector<8x8xbf16>, vector<256x8xf32> -> vector<256x8xf32>
    %100 = arith.addf %94, %99 : vector<256x8xf32>
    %c0_92 = arith.constant 0 : index
    %c2_93 = arith.constant 2 : index
    %c1_94 = arith.constant 1 : index
    %c0_95 = arith.constant 0 : index
    %101 = vector.load %arg7[%c0_92, %c2_93, %c1_94, %c0_95] : memref<1x18x18x8xbf16, #tpu.memory_space<vmem>>, vector<1x16x16x8xbf16>
    %102 = vector.shape_cast %101 : vector<1x16x16x8xbf16> to vector<256x8xbf16>
    %c7 = arith.constant 7 : index
    %c0_96 = arith.constant 0 : index
    %c0_97 = arith.constant 0 : index
    %103 = vector.load %arg4[%c7, %c0_96, %c0_97] : memref<9x8x8xbf16, #tpu.memory_space<vmem>>, vector<1x8x8xbf16>
    %104 = vector.shape_cast %103 : vector<1x8x8xbf16> to vector<8x8xbf16>
    %cst_98 = arith.constant dense<0.000000e+00> : vector<256x8xf32>
    %105 = tpu.matmul %102, %104, %cst_98 {dimension_numbers = #tpu.dot_dimension_numbers<[1], [0], [0], [1], [0, 0, 1, 1], [], []>} : vector<256x8xbf16>, vector<8x8xbf16>, vector<256x8xf32> -> vector<256x8xf32>
    %106 = arith.addf %100, %105 : vector<256x8xf32>
    %c0_99 = arith.constant 0 : index
    %c2_100 = arith.constant 2 : index
    %c2_101 = arith.constant 2 : index
    %c0_102 = arith.constant 0 : index
    %107 = vector.load %arg7[%c0_99, %c2_100, %c2_101, %c0_102] : memref<1x18x18x8xbf16, #tpu.memory_space<vmem>>, vector<1x16x16x8xbf16>
    %108 = vector.shape_cast %107 : vector<1x16x16x8xbf16> to vector<256x8xbf16>
    %c8 = arith.constant 8 : index
    %c0_103 = arith.constant 0 : index
    %c0_104 = arith.constant 0 : index
    %109 = vector.load %arg4[%c8, %c0_103, %c0_104] : memref<9x8x8xbf16, #tpu.memory_space<vmem>>, vector<1x8x8xbf16>
    %110 = vector.shape_cast %109 : vector<1x8x8xbf16> to vector<8x8xbf16>
    %cst_105 = arith.constant dense<0.000000e+00> : vector<256x8xf32>
    %111 = tpu.matmul %108, %110, %cst_105 {dimension_numbers = #tpu.dot_dimension_numbers<[1], [0], [0], [1], [0, 0, 1, 1], [], []>} : vector<256x8xbf16>, vector<8x8xbf16>, vector<256x8xf32> -> vector<256x8xf32>
    %112 = arith.addf %106, %111 : vector<256x8xf32>
    %cst_106 = arith.constant dense<0.000000e+00> : vector<8xf32>
    %113 = vector.multi_reduction <add>, %112, %cst_106 [0] : vector<256x8xf32> to vector<8xf32>
    %114 = vector.shape_cast %113 : vector<8xf32> to vector<1x8xf32>
    %115 = arith.mulf %112, %112 : vector<256x8xf32>
    %cst_107 = arith.constant dense<0.000000e+00> : vector<8xf32>
    %116 = vector.multi_reduction <add>, %115, %cst_107 [0] : vector<256x8xf32> to vector<8xf32>
    %117 = vector.shape_cast %116 : vector<8xf32> to vector<1x8xf32>
    %118 = tpu.concatenate %114, %117 in 0 : vector<1x8xf32>, vector<1x8xf32> -> vector<2x8xf32>
    %c0_108 = arith.constant 0 : index
    %c0_109 = arith.constant 0 : index
    %c0_110 = arith.constant 0 : index
    %119 = vector.load %arg6[%c0_108, %c0_109, %c0_110] : memref<1x2x8xf32, #tpu.memory_space<vmem>>, vector<1x2x8xf32>
    %120 = vector.shape_cast %119 : vector<1x2x8xf32> to vector<2x8xf32>
    %121 = vector.shape_cast %118 : vector<2x8xf32> to vector<1x2x8xf32>
    tpu.vector_store %arg6[%c0_108, %c0_109, %c0_110], %121 {strides = array<i32>} : memref<1x2x8xf32, #tpu.memory_space<vmem>>, vector<1x2x8xf32>,
    %122 = arith.truncf %112 : vector<256x8xf32> to vector<256x8xbf16>
    %123 = vector.shape_cast %122 : vector<256x8xbf16> to vector<1x256x8xbf16>
    %c0_111 = arith.constant 0 : index
    %c0_112 = arith.constant 0 : index
    %c0_113 = arith.constant 0 : index
    %124 = vector.load %arg5[%c0_111, %c0_112, %c0_113] : memref<1x256x8xbf16, #tpu.memory_space<vmem>>, vector<1x256x8xbf16>
    tpu.vector_store %arg5[%c0_111, %c0_112, %c0_113], %123 {strides = array<i32>} : memref<1x256x8xbf16, #tpu.memory_space<vmem>>, vector<1x256x8xbf16>,
    return
  }
  func.func @transform_0(%arg0: i32) -> (i32, i32, i32) {
    %c0_i32 = arith.constant 0 : i32
    %c0_i32_0 = arith.constant 0 : i32
    %c0_i32_1 = arith.constant 0 : i32
    return %arg0, %c0_i32, %c0_i32_0 : i32, i32, i32
  }
  func.func @transform_1(%arg0: i32) -> (i32, i32) {
    %c0_i32 = arith.constant 0 : i32
    %c0_i32_0 = arith.constant 0 : i32
    %c0_i32_1 = arith.constant 0 : i32
    return %c0_i32, %c0_i32_0 : i32, i32
  }
  func.func @transform_2(%arg0: i32) -> (i32, i32) {
    %c0_i32 = arith.constant 0 : i32
    %c0_i32_0 = arith.constant 0 : i32
    %c0_i32_1 = arith.constant 0 : i32
    return %c0_i32, %c0_i32_0 : i32, i32
  }
  func.func @transform_3(%arg0: i32) -> (i32, i32, i32) {
    %c0_i32 = arith.constant 0 : i32
    %c0_i32_0 = arith.constant 0 : i32
    %c0_i32_1 = arith.constant 0 : i32
    %c0_i32_2 = arith.constant 0 : i32
    return %c0_i32, %c0_i32_0, %c0_i32_1 : i32, i32, i32
  }
  func.func @transform_4(%arg0: i32) -> (i32, i32, i32) {
    %c0_i32 = arith.constant 0 : i32
    %c0_i32_0 = arith.constant 0 : i32
    %c0_i32_1 = arith.constant 0 : i32
    return %arg0, %c0_i32, %c0_i32_0 : i32, i32, i32
  }
  func.func @transform_5(%arg0: i32) -> (i32, i32, i32) {
    %c0_i32 = arith.constant 0 : i32
    %c0_i32_0 = arith.constant 0 : i32
    %c0_i32_1 = arith.constant 0 : i32
    return %arg0, %c0_i32, %c0_i32_0 : i32, i32, i32
  }
}

module attributes {stable_mosaic.version = 11 : i64} {
  func.func @kernel(%arg0: i32, %arg1: memref<1x16x8x16xbf16, #tpu.memory_space<vmem>>, %arg2: memref<1x16xf32, #tpu.memory_space<vmem>>, %arg3: memref<1x16xf32, #tpu.memory_space<vmem>>, %arg4: memref<1x8x8x8xf32, #tpu.memory_space<vmem>>) attributes {dimension_semantics = [#tpu.dimension_semantics<parallel>], iteration_bounds = array<i64: 2>, scalar_prefetch = 0 : i64, scratch_operands = 0 : i64, tpu.core_type = #tpu.core_type<tc>, window_params = [{transform_indices = @transform_0, window_bounds = array<i64: 1, 16, 8, 16>}, {pipeline_mode = #tpu.pipeline_mode<synchronous>, transform_indices = @transform_1, window_bounds = array<i64: 1, 16>}, {pipeline_mode = #tpu.pipeline_mode<synchronous>, transform_indices = @transform_2, window_bounds = array<i64: 1, 16>}, {transform_indices = @transform_3, window_bounds = array<i64: 1, 8, 8, 8>}]} {
    %c0 = arith.constant 0 : index
    %c0_0 = arith.constant 0 : index
    %c0_1 = arith.constant 0 : index
    %c0_2 = arith.constant 0 : index
    %0 = vector.load %arg1[%c0, %c0_0, %c0_1, %c0_2] : memref<1x16x8x16xbf16, #tpu.memory_space<vmem>>, vector<1x16x8x16xbf16>
    %1 = arith.extf %0 : vector<1x16x8x16xbf16> to vector<1x16x8x16xf32>
    %c0_3 = arith.constant 0 : index
    %c0_4 = arith.constant 0 : index
    %2 = vector.load %arg2[%c0_3, %c0_4] : memref<1x16xf32, #tpu.memory_space<vmem>>, vector<1x16xf32>
    %3 = vector.shape_cast %2 : vector<1x16xf32> to vector<1x1x1x16xf32>
    %4 = vector.broadcast %3 : vector<1x1x1x16xf32> to vector<1x16x8x16xf32>
    %5 = arith.mulf %1, %4 : vector<1x16x8x16xf32>
    %c0_5 = arith.constant 0 : index
    %c0_6 = arith.constant 0 : index
    %6 = vector.load %arg3[%c0_5, %c0_6] : memref<1x16xf32, #tpu.memory_space<vmem>>, vector<1x16xf32>
    %7 = vector.shape_cast %6 : vector<1x16xf32> to vector<1x1x1x16xf32>
    %8 = vector.broadcast %7 : vector<1x1x1x16xf32> to vector<1x16x8x16xf32>
    %9 = arith.addf %5, %8 : vector<1x16x8x16xf32>
    %cst = arith.constant 5.000000e-01 : f32
    %10 = vector.broadcast %cst : f32 to vector<1x16x8x16xf32>
    %11 = arith.mulf %10, %9 : vector<1x16x8x16xf32>
    %cst_7 = arith.constant 0.707106769 : f32
    %12 = vector.broadcast %cst_7 : f32 to vector<1x16x8x16xf32>
    %13 = arith.mulf %9, %12 : vector<1x16x8x16xf32>
    %cst_8 = arith.constant 0.000000e+00 : f32
    %14 = vector.broadcast %cst_8 : f32 to vector<1x16x8x16xf32>
    %15 = arith.cmpf olt, %13, %14 : vector<1x16x8x16xf32>
    %cst_9 = arith.constant -1.000000e+00 : f32
    %cst_10 = arith.constant 1.000000e+00 : f32
    %16 = vector.broadcast %cst_9 : f32 to vector<1x16x8x16xf32>
    %17 = vector.broadcast %cst_10 : f32 to vector<1x16x8x16xf32>
    %18 = arith.select %15, %16, %17 : vector<1x16x8x16xi1>, vector<1x16x8x16xf32>
    %19 = math.absf %13 : vector<1x16x8x16xf32>
    %cst_11 = arith.constant 0.327591091 : f32
    %20 = vector.broadcast %cst_11 : f32 to vector<1x16x8x16xf32>
    %21 = arith.mulf %20, %19 : vector<1x16x8x16xf32>
    %cst_12 = arith.constant 1.000000e+00 : f32
    %22 = vector.broadcast %cst_12 : f32 to vector<1x16x8x16xf32>
    %23 = arith.addf %22, %21 : vector<1x16x8x16xf32>
    %cst_13 = arith.constant 1.000000e+00 : f32
    %24 = vector.broadcast %cst_13 : f32 to vector<1x16x8x16xf32>
    %25 = arith.divf %24, %23 : vector<1x16x8x16xf32>
    %cst_14 = arith.constant 1.06140542 : f32
    %26 = vector.broadcast %cst_14 : f32 to vector<1x16x8x16xf32>
    %27 = arith.mulf %26, %25 : vector<1x16x8x16xf32>
    %cst_15 = arith.constant -1.45315206 : f32
    %28 = vector.broadcast %cst_15 : f32 to vector<1x16x8x16xf32>
    %29 = arith.addf %27, %28 : vector<1x16x8x16xf32>
    %30 = arith.mulf %29, %25 : vector<1x16x8x16xf32>
    %cst_16 = arith.constant 1.42141378 : f32
    %31 = vector.broadcast %cst_16 : f32 to vector<1x16x8x16xf32>
    %32 = arith.addf %30, %31 : vector<1x16x8x16xf32>
    %33 = arith.mulf %32, %25 : vector<1x16x8x16xf32>
    %cst_17 = arith.constant -0.284496725 : f32
    %34 = vector.broadcast %cst_17 : f32 to vector<1x16x8x16xf32>
    %35 = arith.addf %33, %34 : vector<1x16x8x16xf32>
    %36 = arith.mulf %35, %25 : vector<1x16x8x16xf32>
    %cst_18 = arith.constant 0.254829586 : f32
    %37 = vector.broadcast %cst_18 : f32 to vector<1x16x8x16xf32>
    %38 = arith.addf %36, %37 : vector<1x16x8x16xf32>
    %39 = arith.mulf %38, %25 : vector<1x16x8x16xf32>
    %cst_19 = arith.constant 0.000000e+00 : f32
    %40 = vector.broadcast %cst_19 : f32 to vector<1x16x8x16xf32>
    %41 = arith.subf %40, %19 : vector<1x16x8x16xf32>
    %42 = arith.mulf %41, %19 : vector<1x16x8x16xf32>
    %43 = math.exp %42 : vector<1x16x8x16xf32>
    %44 = arith.mulf %39, %43 : vector<1x16x8x16xf32>
    %cst_20 = arith.constant 1.000000e+00 : f32
    %45 = vector.broadcast %cst_20 : f32 to vector<1x16x8x16xf32>
    %46 = arith.subf %45, %44 : vector<1x16x8x16xf32>
    %47 = arith.mulf %18, %46 : vector<1x16x8x16xf32>
    %cst_21 = arith.constant 1.000000e+00 : f32
    %48 = vector.broadcast %cst_21 : f32 to vector<1x16x8x16xf32>
    %49 = arith.addf %48, %47 : vector<1x16x8x16xf32>
    %50 = arith.mulf %11, %49 : vector<1x16x8x16xf32>
    %51 = vector.extract_strided_slice %50 {offsets = [0, 0, 0, 0], sizes = [1, 16, 8, 8], strides = [1, 1, 1, 1]} : vector<1x16x8x16xf32> to vector<1x16x8x8xf32>
    %52 = vector.extract_strided_slice %50 {offsets = [0, 0, 0, 8], sizes = [1, 16, 8, 8], strides = [1, 1, 1, 1]} : vector<1x16x8x16xf32> to vector<1x16x8x8xf32>
    %53 = arith.maximumf %51, %52 : vector<1x16x8x8xf32>
    %54 = vector.shape_cast %53 : vector<1x16x8x8xf32> to vector<16x8x8xf32>
    %55 = vector.shape_cast %54 : vector<16x8x8xf32> to vector<8x2x8x8xf32>
    %cst_22 = arith.constant dense<0xFF800000> : vector<8x8x8xf32>
    %56 = vector.multi_reduction <maximumf>, %55, %cst_22 [1] : vector<8x2x8x8xf32> to vector<8x8x8xf32>
    %57 = vector.shape_cast %56 : vector<8x8x8xf32> to vector<1x8x8x8xf32>
    %c0_23 = arith.constant 0 : index
    %c0_24 = arith.constant 0 : index
    %c0_25 = arith.constant 0 : index
    %c0_26 = arith.constant 0 : index
    %58 = vector.load %arg4[%c0_23, %c0_24, %c0_25, %c0_26] : memref<1x8x8x8xf32, #tpu.memory_space<vmem>>, vector<1x8x8x8xf32>
    tpu.vector_store %arg4[%c0_23, %c0_24, %c0_25, %c0_26], %57 {strides = array<i32>} : memref<1x8x8x8xf32, #tpu.memory_space<vmem>>, vector<1x8x8x8xf32>,
    return
  }
  func.func @transform_0(%arg0: i32) -> (i32, i32, i32, i32) {
    %c0_i32 = arith.constant 0 : i32
    %c0_i32_0 = arith.constant 0 : i32
    %c0_i32_1 = arith.constant 0 : i32
    %c0_i32_2 = arith.constant 0 : i32
    return %arg0, %c0_i32, %c0_i32_0, %c0_i32_1 : i32, i32, i32, i32
  }
  func.func @transform_1(%arg0: i32) -> (i32, i32) {
    %c0_i32 = arith.constant 0 : i32
    %c0_i32_0 = arith.constant 0 : i32
    %c0_i32_1 = arith.constant 0 : i32
    return %c0_i32, %c0_i32_0 : i32, i32
  }
  func.func @transform_2(%arg0: i32) -> (i32, i32) {
    %c0_i32 = arith.constant 0 : i32
    %c0_i32_0 = arith.constant 0 : i32
    %c0_i32_1 = arith.constant 0 : i32
    return %c0_i32, %c0_i32_0 : i32, i32
  }
  func.func @transform_3(%arg0: i32) -> (i32, i32, i32, i32) {
    %c0_i32 = arith.constant 0 : i32
    %c0_i32_0 = arith.constant 0 : i32
    %c0_i32_1 = arith.constant 0 : i32
    %c0_i32_2 = arith.constant 0 : i32
    return %arg0, %c0_i32, %c0_i32_0, %c0_i32_1 : i32, i32, i32, i32
  }
}

</mosaic_0001>

<llo_original>
// kernel: unet_down_forward.5
$region0: #{unet_down_forward.5}
  #allocation0 [shape = 'u32[]', space=smem, size = 0x4, offset = 0x4, fixed_abs, tag = 'smem constant byte address 0x4 - core index']
  #allocation1 [shape = 'u32[144,128]{1,0:T(1,128)}', space=vmem, size = 0x12000, scoped, tag = 'internal scratch']
  %s0 = inlined_call_operand.vmem [shape: bf16[2,16,8,16], index: 0, kind: input, shape index: {}]
  %s1 = inlined_call_operand.vmem [shape: f32[1,16], index: 1, kind: input, shape index: {}]
  %s2 = inlined_call_operand.vmem [shape: f32[1,16], index: 2, kind: input, shape index: {}]
  %s3 = inlined_call_operand.vmem [shape: f32[2,8,8,8], index: 3, kind: output, shape index: {}]
  %s4 = sld [smem:[#allocation0]]
  $region45: #{unet_down_forward.5} parent=0
    _
  %s6 = ssub.s32 1, %s4
  %s7 = scalar_select 0, %s6, %s4
  loop: start=0, step=1, limit=4
  $region2: #{unet_down_forward.5} parent=0 // loop_pre_header
    _
  $region3: #{unet_down_forward.5} parent=0 // loop_header
    %s9 = sphi 0, %s13
    %p10 = scmp.ge.s32.totalorder %s9, 4
    %s19 = sphi 0, %s21
    %s22 = sphi 0, %s19
    %s23 = sphi 0, %s22
    %s39 = sphi 0, %s23
    %s43 = sphi 0, %s43
    %s45 = sphi 0, %s43
    %s46 = sphi 0, %s45
    %s60 = sphi 0, %s46
    %s64 = sphi 0, %s64
    %s66 = sphi 0, %s64
    %s67 = sphi 0, %s66
    %s81 = sphi 0, %s67
    %s87 = sphi 0, %s89
    %s90 = sphi 0, %s87
    %s91 = sphi 0, %s90
    %s107 = sphi 0, %s91
  $region4: #{unet_down_forward.5} parent=0 // loop_header_branch
    %12 = sbr.rel (%p10) target = $region8
  $region5: #{unet_down_forward.5} parent=0 // loop_body
    %s14 = ssub.s32 %s9, 1
    %s15 = ssub.s32 %s9, 2
    %s16 = sadd.s32 %s9, 1
    %s17 = ssub.s32 %s9, %s16
    %p18 = scmp.eq.s32.totalorder %s17, 0
    %s20 = sadd.s32 %s19, 1
    %s21 = scalar_select %p18, %s19, %s20
    %p24 = pneg %p18
    %p25 = scmp.eq.s32.totalorder %s9, 1
    %p26 = por %p24, %p25
    %p27 = scmp.ne.s32.totalorder %s19, %s22
    %p28 = scmp.eq.s32.totalorder %s9, 0
    %p29 = por %p27, %p28
    %p30 = scmp.ne.s32.totalorder %s19, %s22
    %p31 = scmp.eq.s32.totalorder %s14, 1
    %p32 = por %p30, %p31
    %p33 = scmp.ne.s32.totalorder %s22, %s23
    %p34 = scmp.eq.s32.totalorder %s14, 0
    %p35 = por %p33, %p34
    %p36 = scmp.ne.s32.totalorder %s22, %s23
    %p37 = scmp.eq.s32.totalorder %s15, 1
    %p38 = por %p36, %p37
    %p40 = scmp.ne.s32.totalorder %s23, %s39
    %p41 = scmp.eq.s32.totalorder %s15, 0
    %p42 = por %p40, %p41
    %s44 = sadd.s32 %s43, 1
    %p47 = scmp.eq.s32.totalorder %s9, 1
    %p48 = scmp.ne.s32.totalorder %s43, %s45
    %p49 = scmp.eq.s32.totalorder %s9, 0
    %p50 = por %p48, %p49
    %p51 = scmp.ne.s32.totalorder %s43, %s45
    %p52 = scmp.eq.s32.totalorder %s14, 1
    %p53 = por %p51, %p52
    %p54 = scmp.ne.s32.totalorder %s45, %s46
    %p55 = scmp.eq.s32.totalorder %s14, 0
    %p56 = por %p54, %p55
    %p57 = scmp.ne.s32.totalorder %s45, %s46
    %p58 = scmp.eq.s32.totalorder %s15, 1
    %p59 = por %p57, %p58
    %p61 = scmp.ne.s32.totalorder %s46, %s60
    %p62 = scmp.eq.s32.totalorder %s15, 0
    %p63 = por %p61, %p62
    %s65 = sadd.s32 %s64, 1
    %p68 = scmp.eq.s32.totalorder %s9, 1
    %p69 = scmp.ne.s32.totalorder %s64, %s66
    %p70 = scmp.eq.s32.totalorder %s9, 0
    %p71 = por %p69, %p70
    %p72 = scmp.ne.s32.totalorder %s64, %s66
    %p73 = scmp.eq.s32.totalorder %s14, 1
    %p74 = por %p72, %p73
    %p75 = scmp.ne.s32.totalorder %s66, %s67
    %p76 = scmp.eq.s32.totalorder %s14, 0
    %p77 = por %p75, %p76
    %p78 = scmp.ne.s32.totalorder %s66, %s67
    %p79 = scmp.eq.s32.totalorder %s15, 1
    %p80 = por %p78, %p79
    %p82 = scmp.ne.s32.totalorder %s67, %s81
    %p83 = scmp.eq.s32.totalorder %s15, 0
    %p84 = por %p82, %p83
    %s85 = ssub.s32 %s9, %s16
    %p86 = scmp.eq.s32.totalorder %s85, 0
    %s88 = sadd.s32 %s87, 1
    %s89 = scalar_select %p86, %s87, %s88
    %p92 = pneg %p86
    %p93 = scmp.eq.s32.totalorder %s9, 1
    %p94 = por %p92, %p93
    %p95 = scmp.ne.s32.totalorder %s87, %s90
    %p96 = scmp.eq.s32.totalorder %s9, 0
    %p97 = por %p95, %p96
    %p98 = scmp.ne.s32.totalorder %s87, %s90
    %p99 = scmp.eq.s32.totalorder %s14, 1
    %p100 = por %p98, %p99
    %p101 = scmp.ne.s32.totalorder %s90, %s91
    %p102 = scmp.eq.s32.totalorder %s14, 0
    %p103 = por %p101, %p102
    %p104 = scmp.ne.s32.totalorder %s90, %s91
    %p105 = scmp.eq.s32.totalorder %s15, 1
    %p106 = por %p104, %p105
    %p108 = scmp.ne.s32.totalorder %s91, %s107
    %p109 = scmp.eq.s32.totalorder %s15, 0
    %p110 = por %p108, %p109
    %p111 = scmp.le.s32.totalorder 1, %s9
    %p112 = scmp.lt.s32.totalorder %s9, 3
    %p113 = pnand %p111, %p112
    %p114 = pneg %p113
    // Predicated region
    $region9: #{unet_down_forward.5} parent=5 // pred_check
      _
    $region10: #{unet_down_forward.5} parent=5 // pred_check_branch
      %116 = sbr.rel (%p113) target = $region12
    $region11: #{unet_down_forward.5} parent=5 // pred_region
      %s117 = ssub.s32 %s9, 1
      // Predicated region
      $region13: #{unet_down_forward.5} parent=11 // pred_check
        %p118 = pneg %p56
      $region14: #{unet_down_forward.5} parent=11 // pred_check_branch
        %120 = sbr.rel (%p118) target = $region16
      $region15: #{unet_down_forward.5} parent=11 // pred_region
        _
      $region16: #{unet_down_forward.5} parent=11 // pred_fallthru
        _
      // Predicated region
      $region17: #{unet_down_forward.5} parent=11 // pred_check
        %p121 = pneg %p77
      $region18: #{unet_down_forward.5} parent=11 // pred_check_branch
        %123 = sbr.rel (%p121) target = $region20
      $region19: #{unet_down_forward.5} parent=11 // pred_region
        _
      $region20: #{unet_down_forward.5} parent=11 // pred_fallthru
        _
    $region12: #{unet_down_forward.5} parent=5 // pred_fallthru
      _
    %p124 = scmp.lt.s32.totalorder %s9, 2
    // Predicated region
    $region21: #{unet_down_forward.5} parent=5 // pred_check
      %p125 = pneg %p124
    $region22: #{unet_down_forward.5} parent=5 // pred_check_branch
      %127 = sbr.rel (%p125) target = $region24
    $region23: #{unet_down_forward.5} parent=5 // pred_region
      // Predicated region
      $region25: #{unet_down_forward.5} parent=23 // pred_check
        %p128 = pneg %p29
      $region26: #{unet_down_forward.5} parent=23 // pred_check_branch
        %130 = sbr.rel (%p128) target = $region28
      $region27: #{unet_down_forward.5} parent=23 // pred_region
        %p131 = scmp.lt.s32.totalorder %s9, 1
        %s132 = scalar_select %p131, %s9, 1
        %s133 = smul.addr %s132, 16
        %s134 = smul.addr %s133, 4
        %s135 = scalar_lea.vmem %s0, %s134
      $region28: #{unet_down_forward.5} parent=23 // pred_fallthru
        _
    $region24: #{unet_down_forward.5} parent=5 // pred_fallthru
      _
    %p136 = scmp.le.s32.totalorder 1, %s9
    %p137 = scmp.lt.s32.totalorder %s9, 3
    %p138 = pnand %p136, %p137
    %p139 = pneg %p138
    // Predicated region
    $region29: #{unet_down_forward.5} parent=5 // pred_check
      _
    $region30: #{unet_down_forward.5} parent=5 // pred_check_branch
      %141 = sbr.rel (%p138) target = $region32
    $region31: #{unet_down_forward.5} parent=5 // pred_region
      %s142 = ssub.s32 %s9, 1
      %p143 = scmp.lt.s32.totalorder %s14, 1
      %s144 = scalar_select %p143, %s14, 1
      %s145 = smul.addr %s144, 16
      %s146 = smul.addr %s145, 4
      %s147 = scalar_lea.vmem %s0, %s146
      %p148 = pneg %p35
      %p149 = pneg %p32
      %p150 = pneg %p56
      %p151 = pneg %p53
      %p152 = pneg %p77
      %p153 = pneg %p74
      %p154 = pneg %p103
      %p155 = pneg %p100
      %p156 = scmp.lt.s32.totalorder %s14, 1
      %s157 = scalar_select %p156, %s14, 1
      %s158 = smul.addr %s157, 8
      %s159 = smul.addr %s158, 8
      %s160 = scalar_lea.vmem %s3, %s159
      %p161 = scmp.lt.s32.totalorder %s14, 1
      %s162 = scalar_select %p161, %s14, 1
      %s163 = smul.addr %s162, 16
      %s164 = smul.addr %s163, 4
      %s165 = scalar_lea.vmem %s0, %s164
      %p166 = scmp.lt.s32.totalorder %s14, 1
      %s167 = scalar_select %p166, %s14, 1
      %s168 = smul.addr %s167, 8
      %s169 = smul.addr %s168, 8
      %s170 = scalar_lea.vmem %s3, %s169
      %v171 = vld [vmem:[%s165] sm:$0xf]
      %v172 = vld [vmem:[%s165 + $0x4] sm:$0xf]
      %v173 = vld [vmem:[%s165 + $0x8] sm:$0xf]
      %v174 = vld [vmem:[%s165 + $0xc] sm:$0xf]
      %v175 = vld [vmem:[%s165 + $0x10] sm:$0xf]
      %v176 = vld [vmem:[%s165 + $0x14] sm:$0xf]
      %v177 = vld [vmem:[%s165 + $0x18] sm:$0xf]
      %v178 = vld [vmem:[%s165 + $0x1c] sm:$0xf]
      %v179 = vld [vmem:[%s165 + $0x20] sm:$0xf]
      %v180 = vld [vmem:[%s165 + $0x24] sm:$0xf]
      %v181 = vld [vmem:[%s165 + $0x28] sm:$0xf]
      %v182 = vld [vmem:[%s165 + $0x2c] sm:$0xf]
      %v183 = vld [vmem:[%s165 + $0x30] sm:$0xf]
      %v184 = vld [vmem:[%s165 + $0x34] sm:$0xf]
      %v185 = vld [vmem:[%s165 + $0x38] sm:$0xf]
      %v186 = vld [vmem:[%s165 + $0x3c] sm:$0xf]
      %v187 = vunpack.c.l.bf16 %v171
      %v188 = vunpack.c.l.bf16 %v172
      %v189 = vunpack.c.l.bf16 %v173
      %v190 = vunpack.c.l.bf16 %v174
      %v191 = vunpack.c.l.bf16 %v175
      %v192 = vunpack.c.l.bf16 %v176
      %v193 = vunpack.c.l.bf16 %v177
      %v194 = vunpack.c.l.bf16 %v178
      %v195 = vunpack.c.l.bf16 %v179
      %v196 = vunpack.c.l.bf16 %v180
      %v197 = vunpack.c.l.bf16 %v181
      %v198 = vunpack.c.l.bf16 %v182
      %v199 = vunpack.c.l.bf16 %v183
      %v200 = vunpack.c.l.bf16 %v184
      %v201 = vunpack.c.l.bf16 %v185
      %v202 = vunpack.c.l.bf16 %v186
      %v203 = vld [vmem:[%s1] sm:$0x1]
      %v205 = vlaneseq
      %v206 = vshrl.u32 %v205, 7
      %v207 = vsub.s32 0, %v206
      %v208 = vrot.slane %v203, %v207
      %v210 = vmul.f32 %v187, %v208
      %v211 = vmul.f32 %v188, %v208
      %v212 = vmul.f32 %v189, %v208
      %v213 = vmul.f32 %v190, %v208
      %v214 = vmul.f32 %v191, %v208
      %v215 = vmul.f32 %v192, %v208
      %v216 = vmul.f32 %v193, %v208
      %v217 = vmul.f32 %v194, %v208
      %v218 = vmul.f32 %v195, %v208
      %v219 = vmul.f32 %v196, %v208
      %v220 = vmul.f32 %v197, %v208
      %v221 = vmul.f32 %v198, %v208
      %v222 = vmul.f32 %v199, %v208
      %v223 = vmul.f32 %v200, %v208
      %v224 = vmul.f32 %v201, %v208
      %v225 = vmul.f32 %v202, %v208
      %v226 = vld [vmem:[%s2] sm:$0x1]
      %v228 = vlaneseq
      %v229 = vshrl.u32 %v228, 7
      %v230 = vsub.s32 0, %v229
      %v231 = vrot.slane %v226, %v230
      %v233 = vadd.f32 %v210, %v231
      %v234 = vadd.f32 %v211, %v231
      %v235 = vadd.f32 %v212, %v231
      %v236 = vadd.f32 %v213, %v231
      %v237 = vadd.f32 %v214, %v231
      %v238 = vadd.f32 %v215, %v231
      %v239 = vadd.f32 %v216, %v231
      %v240 = vadd.f32 %v217, %v231
      %v241 = vadd.f32 %v218, %v231
      %v242 = vadd.f32 %v219, %v231
      %v243 = vadd.f32 %v220, %v231
      %v244 = vadd.f32 %v221, %v231
      %v245 = vadd.f32 %v222, %v231
      %v246 = vadd.f32 %v223, %v231
      %v247 = vadd.f32 %v224, %v231
      %v248 = vadd.f32 %v225, %v231
      %v249 = vmul.f32 %v233, 0.5
      %v250 = vmul.f32 %v234, 0.5
      %v251 = vmul.f32 %v235, 0.5
      %v252 = vmul.f32 %v236, 0.5
      %v253 = vmul.f32 %v237, 0.5
      %v254 = vmul.f32 %v238, 0.5
      %v255 = vmul.f32 %v239, 0.5
      %v256 = vmul.f32 %v240, 0.5
      %v257 = vmul.f32 %v241, 0.5
      %v258 = vmul.f32 %v242, 0.5
      %v259 = vmul.f32 %v243, 0.5
      %v260 = vmul.f32 %v244, 0.5
      %v261 = vmul.f32 %v245, 0.5
      %v262 = vmul.f32 %v246, 0.5
      %v263 = vmul.f32 %v247, 0.5
      %v264 = vmul.f32 %v248, 0.5
      %v265 = vmul.f32 %v233, 0.70710677
      %v266 = vmul.f32 %v234, 0.70710677
      %v267 = vmul.f32 %v235, 0.70710677
      %v268 = vmul.f32 %v236, 0.70710677
      %v269 = vmul.f32 %v237, 0.70710677
      %v270 = vmul.f32 %v238, 0.70710677
      %v271 = vmul.f32 %v239, 0.70710677
      %v272 = vmul.f32 %v240, 0.70710677
      %v273 = vmul.f32 %v241, 0.70710677
      %v274 = vmul.f32 %v242, 0.70710677
      %v275 = vmul.f32 %v243, 0.70710677
      %v276 = vmul.f32 %v244, 0.70710677
      %v277 = vmul.f32 %v245, 0.70710677
      %v278 = vmul.f32 %v246, 0.70710677
      %v279 = vmul.f32 %v247, 0.70710677
      %v280 = vmul.f32 %v248, 0.70710677
      %vm281 = vcmp.lt.f32.partialorder %v265, 0.0
      %vm282 = vcmp.lt.f32.partialorder %v266, 0.0
      %vm283 = vcmp.lt.f32.partialorder %v267, 0.0
      %vm284 = vcmp.lt.f32.partialorder %v268, 0.0
      %vm285 = vcmp.lt.f32.partialorder %v269, 0.0
      %vm286 = vcmp.lt.f32.partialorder %v270, 0.0
      %vm287 = vcmp.lt.f32.partialorder %v271, 0.0
      %vm288 = vcmp.lt.f32.partialorder %v272, 0.0
      %vm289 = vcmp.lt.f32.partialorder %v273, 0.0
      %vm290 = vcmp.lt.f32.partialorder %v274, 0.0
      %vm291 = vcmp.lt.f32.partialorder %v275, 0.0
      %vm292 = vcmp.lt.f32.partialorder %v276, 0.0
      %vm293 = vcmp.lt.f32.partialorder %v277, 0.0
      %vm294 = vcmp.lt.f32.partialorder %v278, 0.0
      %vm295 = vcmp.lt.f32.partialorder %v279, 0.0
      %vm296 = vcmp.lt.f32.partialorder %v280, 0.0
      %v297 = vsel %vm281, -1.0, 1.0
      %v298 = vsel %vm282, -1.0, 1.0
      %v299 = vsel %vm283, -1.0, 1.0
      %v300 = vsel %vm284, -1.0, 1.0
      %v301 = vsel %vm285, -1.0, 1.0
      %v302 = vsel %vm286, -1.0, 1.0
      %v303 = vsel %vm287, -1.0, 1.0
      %v304 = vsel %vm288, -1.0, 1.0
      %v305 = vsel %vm289, -1.0, 1.0
      %v306 = vsel %vm290, -1.0, 1.0
      %v307 = vsel %vm291, -1.0, 1.0
      %v308 = vsel %vm292, -1.0, 1.0
      %v309 = vsel %vm293, -1.0, 1.0
      %v310 = vsel %vm294, -1.0, 1.0
      %v311 = vsel %vm295, -1.0, 1.0
      %v312 = vsel %vm296, -1.0, 1.0
      %v313 = vand.u32 2147483647, %v265
      %v314 = vand.u32 2147483647, %v266
      %v315 = vand.u32 2147483647, %v267
      %v316 = vand.u32 2147483647, %v268
      %v317 = vand.u32 2147483647, %v269
      %v318 = vand.u32 2147483647, %v270
      %v319 = vand.u32 2147483647, %v271
      %v320 = vand.u32 2147483647, %v272
      %v321 = vand.u32 2147483647, %v273
      %v322 = vand.u32 2147483647, %v274
      %v323 = vand.u32 2147483647, %v275
      %v324 = vand.u32 2147483647, %v276
      %v325 = vand.u32 2147483647, %v277
      %v326 = vand.u32 2147483647, %v278
      %v327 = vand.u32 2147483647, %v279
      %v328 = vand.u32 2147483647, %v280
      %v329 = vmul.f32 %v313, 0.3275911
      %v330 = vmul.f32 %v314, 0.3275911
      %v331 = vmul.f32 %v315, 0.3275911
      %v332 = vmul.f32 %v316, 0.3275911
      %v333 = vmul.f32 %v317, 0.3275911
      %v334 = vmul.f32 %v318, 0.3275911
      %v335 = vmul.f32 %v319, 0.3275911
      %v336 = vmul.f32 %v320, 0.3275911
      %v337 = vmul.f32 %v321, 0.3275911
      %v338 = vmul.f32 %v322, 0.3275911
      %v339 = vmul.f32 %v323, 0.3275911
      %v340 = vmul.f32 %v324, 0.3275911
      %v341 = vmul.f32 %v325, 0.3275911
      %v342 = vmul.f32 %v326, 0.3275911
      %v343 = vmul.f32 %v327, 0.3275911
      %v344 = vmul.f32 %v328, 0.3275911
      %v345 = vadd.f32 %v329, 1.0
      %v346 = vadd.f32 %v330, 1.0
      %v347 = vadd.f32 %v331, 1.0
      %v348 = vadd.f32 %v332, 1.0
      %v349 = vadd.f32 %v333, 1.0
      %v350 = vadd.f32 %v334, 1.0
      %v351 = vadd.f32 %v335, 1.0
      %v352 = vadd.f32 %v336, 1.0
      %v353 = vadd.f32 %v337, 1.0
      %v354 = vadd.f32 %v338, 1.0
      %v355 = vadd.f32 %v339, 1.0
      %v356 = vadd.f32 %v340, 1.0
      %v357 = vadd.f32 %v341, 1.0
      %v358 = vadd.f32 %v342, 1.0
      %v359 = vadd.f32 %v343, 1.0
      %v360 = vadd.f32 %v344, 1.0
      %v361 = vrcp.pop %v345
      %v362 = vmul.f32 1.0, %v361
      %v363 = vrcp.pop %v346
      %v364 = vmul.f32 1.0, %v363
      %v365 = vrcp.pop %v347
      %v366 = vmul.f32 1.0, %v365
      %v367 = vrcp.pop %v348
      %v368 = vmul.f32 1.0, %v367
      %v369 = vrcp.pop %v349
      %v370 = vmul.f32 1.0, %v369
      %v371 = vrcp.pop %v350
      %v372 = vmul.f32 1.0, %v371
      %v373 = vrcp.pop %v351
      %v374 = vmul.f32 1.0, %v373
      %v375 = vrcp.pop %v352
      %v376 = vmul.f32 1.0, %v375
      %v377 = vrcp.pop %v353
      %v378 = vmul.f32 1.0, %v377
      %v379 = vrcp.pop %v354
      %v380 = vmul.f32 1.0, %v379
      %v381 = vrcp.pop %v355
      %v382 = vmul.f32 1.0, %v381
      %v383 = vrcp.pop %v356
      %v384 = vmul.f32 1.0, %v383
      %v385 = vrcp.pop %v357
      %v386 = vmul.f32 1.0, %v385
      %v387 = vrcp.pop %v358
      %v388 = vmul.f32 1.0, %v387
      %v389 = vrcp.pop %v359
      %v390 = vmul.f32 1.0, %v389
      %v391 = vrcp.pop %v360
      %v392 = vmul.f32 1.0, %v391
      %v393 = vmul.f32 %v362, 1.0614054
      %v394 = vmul.f32 %v364, 1.0614054
      %v395 = vmul.f32 %v366, 1.0614054
      %v396 = vmul.f32 %v368, 1.0614054
      %v397 = vmul.f32 %v370, 1.0614054
      %v398 = vmul.f32 %v372, 1.0614054
      %v399 = vmul.f32 %v374, 1.0614054
      %v400 = vmul.f32 %v376, 1.0614054
      %v401 = vmul.f32 %v378, 1.0614054
      %v402 = vmul.f32 %v380, 1.0614054
      %v403 = vmul.f32 %v382, 1.0614054
      %v404 = vmul.f32 %v384, 1.0614054
      %v405 = vmul.f32 %v386, 1.0614054
      %v406 = vmul.f32 %v388, 1.0614054
      %v407 = vmul.f32 %v390, 1.0614054
      %v408 = vmul.f32 %v392, 1.0614054
      %v409 = vadd.f32 %v393, -1.4531521
      %v410 = vadd.f32 %v394, -1.4531521
      %v411 = vadd.f32 %v395, -1.4531521
      %v412 = vadd.f32 %v396, -1.4531521
      %v413 = vadd.f32 %v397, -1.4531521
      %v414 = vadd.f32 %v398, -1.4531521
      %v415 = vadd.f32 %v399, -1.4531521
      %v416 = vadd.f32 %v400, -1.4531521
      %v417 = vadd.f32 %v401, -1.4531521
      %v418 = vadd.f32 %v402, -1.4531521
      %v419 = vadd.f32 %v403, -1.4531521
      %v420 = vadd.f32 %v404, -1.4531521
      %v421 = vadd.f32 %v405, -1.4531521
      %v422 = vadd.f32 %v406, -1.4531521
      %v423 = vadd.f32 %v407, -1.4531521
      %v424 = vadd.f32 %v408, -1.4531521
      %v425 = vmul.f32 %v409, %v362
      %v426 = vmul.f32 %v410, %v364
      %v427 = vmul.f32 %v411, %v366
      %v428 = vmul.f32 %v412, %v368
      %v429 = vmul.f32 %v413, %v370
      %v430 = vmul.f32 %v414, %v372
      %v431 = vmul.f32 %v415, %v374
      %v432 = vmul.f32 %v416, %v376
      %v433 = vmul.f32 %v417, %v378
      %v434 = vmul.f32 %v418, %v380
      %v435 = vmul.f32 %v419, %v382
      %v436 = vmul.f32 %v420, %v384
      %v437 = vmul.f32 %v421, %v386
      %v438 = vmul.f32 %v422, %v388
      %v439 = vmul.f32 %v423, %v390
      %v440 = vmul.f32 %v424, %v392
      %v441 = vadd.f32 %v425, 1.4214138
      %v442 = vadd.f32 %v426, 1.4214138
      %v443 = vadd.f32 %v427, 1.4214138
      %v444 = vadd.f32 %v428, 1.4214138
      %v445 = vadd.f32 %v429, 1.4214138
      %v446 = vadd.f32 %v430, 1.4214138
      %v447 = vadd.f32 %v431, 1.4214138
      %v448 = vadd.f32 %v432, 1.4214138
      %v449 = vadd.f32 %v433, 1.4214138
      %v450 = vadd.f32 %v434, 1.4214138
      %v451 = vadd.f32 %v435, 1.4214138
      %v452 = vadd.f32 %v436, 1.4214138
      %v453 = vadd.f32 %v437, 1.4214138
      %v454 = vadd.f32 %v438, 1.4214138
      %v455 = vadd.f32 %v439, 1.4214138
      %v456 = vadd.f32 %v440, 1.4214138
      %v457 = vmul.f32 %v441, %v362
      %v458 = vmul.f32 %v442, %v364
      %v459 = vmul.f32 %v443, %v366
      %v460 = vmul.f32 %v444, %v368
      %v461 = vmul.f32 %v445, %v370
      %v462 = vmul.f32 %v446, %v372
      %v463 = vmul.f32 %v447, %v374
      %v464 = vmul.f32 %v448, %v376
      %v465 = vmul.f32 %v449, %v378
      %v466 = vmul.f32 %v450, %v380
      %v467 = vmul.f32 %v451, %v382
      %v468 = vmul.f32 %v452, %v384
      %v469 = vmul.f32 %v453, %v386
      %v470 = vmul.f32 %v454, %v388
      %v471 = vmul.f32 %v455, %v390
      %v472 = vmul.f32 %v456, %v392
      %v473 = vadd.f32 %v457, -0.28449672
      %v474 = vadd.f32 %v458, -0.28449672
      %v475 = vadd.f32 %v459, -0.28449672
      %v476 = vadd.f32 %v460, -0.28449672
      %v477 = vadd.f32 %v461, -0.28449672
      %v478 = vadd.f32 %v462, -0.28449672
      %v479 = vadd.f32 %v463, -0.28449672
      %v480 = vadd.f32 %v464, -0.28449672
      %v481 = vadd.f32 %v465, -0.28449672
      %v482 = vadd.f32 %v466, -0.28449672
      %v483 = vadd.f32 %v467, -0.28449672
      %v484 = vadd.f32 %v468, -0.28449672
      %v485 = vadd.f32 %v469, -0.28449672
      %v486 = vadd.f32 %v470, -0.28449672
      %v487 = vadd.f32 %v471, -0.28449672
      %v488 = vadd.f32 %v472, -0.28449672
      %v489 = vmul.f32 %v473, %v362
      %v490 = vmul.f32 %v474, %v364
      %v491 = vmul.f32 %v475, %v366
      %v492 = vmul.f32 %v476, %v368
      %v493 = vmul.f32 %v477, %v370
      %v494 = vmul.f32 %v478, %v372
      %v495 = vmul.f32 %v479, %v374
      %v496 = vmul.f32 %v480, %v376
      %v497 = vmul.f32 %v481, %v378
      %v498 = vmul.f32 %v482, %v380
      %v499 = vmul.f32 %v483, %v382
      %v500 = vmul.f32 %v484, %v384
      %v501 = vmul.f32 %v485, %v386
      %v502 = vmul.f32 %v486, %v388
      %v503 = vmul.f32 %v487, %v390
      %v504 = vmul.f32 %v488, %v392
      %v505 = vadd.f32 %v489, 0.2548296
      %v506 = vadd.f32 %v490, 0.2548296
      %v507 = vadd.f32 %v491, 0.2548296
      %v508 = vadd.f32 %v492, 0.2548296
      %v509 = vadd.f32 %v493, 0.2548296
      %v510 = vadd.f32 %v494, 0.2548296
      %v511 = vadd.f32 %v495, 0.2548296
      %v512 = vadd.f32 %v496, 0.2548296
      %v513 = vadd.f32 %v497, 0.2548296
      %v514 = vadd.f32 %v498, 0.2548296
      %v515 = vadd.f32 %v499, 0.2548296
      %v516 = vadd.f32 %v500, 0.2548296
      %v517 = vadd.f32 %v501, 0.2548296
      %v518 = vadd.f32 %v502, 0.2548296
      %v519 = vadd.f32 %v503, 0.2548296
      %v520 = vadd.f32 %v504, 0.2548296
      %v521 = vmul.f32 %v505, %v362
      %v522 = vmul.f32 %v506, %v364
      %v523 = vmul.f32 %v507, %v366
      %v524 = vmul.f32 %v508, %v368
      %v525 = vmul.f32 %v509, %v370
      %v526 = vmul.f32 %v510, %v372
      %v527 = vmul.f32 %v511, %v374
      %v528 = vmul.f32 %v512, %v376
      %v529 = vmul.f32 %v513, %v378
      %v530 = vmul.f32 %v514, %v380
      %v531 = vmul.f32 %v515, %v382
      %v532 = vmul.f32 %v516, %v384
      %v533 = vmul.f32 %v517, %v386
      %v534 = vmul.f32 %v518, %v388
      %v535 = vmul.f32 %v519, %v390
      %v536 = vmul.f32 %v520, %v392
      %v537 = vsub.f32 0.0, %v313
      %v538 = vsub.f32 0.0, %v314
      %v539 = vsub.f32 0.0, %v315
      %v540 = vsub.f32 0.0, %v316
      %v541 = vsub.f32 0.0, %v317
      %v542 = vsub.f32 0.0, %v318
      %v543 = vsub.f32 0.0, %v319
      %v544 = vsub.f32 0.0, %v320
      %v545 = vsub.f32 0.0, %v321
      %v546 = vsub.f32 0.0, %v322
      %v547 = vsub.f32 0.0, %v323
      %v548 = vsub.f32 0.0, %v324
      %v549 = vsub.f32 0.0, %v325
      %v550 = vsub.f32 0.0, %v326
      %v551 = vsub.f32 0.0, %v327
      %v552 = vsub.f32 0.0, %v328
      %v553 = vmul.f32 %v537, %v313
      %v554 = vmul.f32 %v538, %v314
      %v555 = vmul.f32 %v539, %v315
      %v556 = vmul.f32 %v540, %v316
      %v557 = vmul.f32 %v541, %v317
      %v558 = vmul.f32 %v542, %v318
      %v559 = vmul.f32 %v543, %v319
      %v560 = vmul.f32 %v544, %v320
      %v561 = vmul.f32 %v545, %v321
      %v562 = vmul.f32 %v546, %v322
      %v563 = vmul.f32 %v547, %v323
      %v564 = vmul.f32 %v548, %v324
      %v565 = vmul.f32 %v549, %v325
      %v566 = vmul.f32 %v550, %v326
      %v567 = vmul.f32 %v551, %v327
      %v568 = vmul.f32 %v552, %v328
      %v569 = vmul.f32 %v553, 1.442695
      %v570 = vpow.pop %v569
      %v571 = vmul.f32 %v554, 1.442695
      %v572 = vpow.pop %v571
      %v573 = vmul.f32 %v555, 1.442695
      %v574 = vpow.pop %v573
      %v575 = vmul.f32 %v556, 1.442695
      %v576 = vpow.pop %v575
      %v577 = vmul.f32 %v557, 1.442695
      %v578 = vpow.pop %v577
      %v579 = vmul.f32 %v558, 1.442695
      %v580 = vpow.pop %v579
      %v581 = vmul.f32 %v559, 1.442695
      %v582 = vpow.pop %v581
      %v583 = vmul.f32 %v560, 1.442695
      %v584 = vpow.pop %v583
      %v585 = vmul.f32 %v561, 1.442695
      %v586 = vpow.pop %v585
      %v587 = vmul.f32 %v562, 1.442695
      %v588 = vpow.pop %v587
      %v589 = vmul.f32 %v563, 1.442695
      %v590 = vpow.pop %v589
      %v591 = vmul.f32 %v564, 1.442695
      %v592 = vpow.pop %v591
      %v593 = vmul.f32 %v565, 1.442695
      %v594 = vpow.pop %v593
      %v595 = vmul.f32 %v566, 1.442695
      %v596 = vpow.pop %v595
      %v597 = vmul.f32 %v567, 1.442695
      %v598 = vpow.pop %v597
      %v599 = vmul.f32 %v568, 1.442695
      %v600 = vpow.pop %v599
      %v601 = vmul.f32 %v521, %v570
      %v602 = vmul.f32 %v522, %v572
      %v603 = vmul.f32 %v523, %v574
      %v604 = vmul.f32 %v524, %v576
      %v605 = vmul.f32 %v525, %v578
      %v606 = vmul.f32 %v526, %v580
      %v607 = vmul.f32 %v527, %v582
      %v608 = vmul.f32 %v528, %v584
      %v609 = vmul.f32 %v529, %v586
      %v610 = vmul.f32 %v530, %v588
      %v611 = vmul.f32 %v531, %v590
      %v612 = vmul.f32 %v532, %v592
      %v613 = vmul.f32 %v533, %v594
      %v614 = vmul.f32 %v534, %v596
      %v615 = vmul.f32 %v535, %v598
      %v616 = vmul.f32 %v536, %v600
      %v617 = vsub.f32 1.0, %v601
      %v618 = vsub.f32 1.0, %v602
      %v619 = vsub.f32 1.0, %v603
      %v620 = vsub.f32 1.0, %v604
      %v621 = vsub.f32 1.0, %v605
      %v622 = vsub.f32 1.0, %v606
      %v623 = vsub.f32 1.0, %v607
      %v624 = vsub.f32 1.0, %v608
      %v625 = vsub.f32 1.0, %v609
      %v626 = vsub.f32 1.0, %v610
      %v627 = vsub.f32 1.0, %v611
      %v628 = vsub.f32 1.0, %v612
      %v629 = vsub.f32 1.0, %v613
      %v630 = vsub.f32 1.0, %v614
      %v631 = vsub.f32 1.0, %v615
      %v632 = vsub.f32 1.0, %v616
      %v633 = vmul.f32 %v297, %v617
      %v634 = vmul.f32 %v298, %v618
      %v635 = vmul.f32 %v299, %v619
      %v636 = vmul.f32 %v300, %v620
      %v637 = vmul.f32 %v301, %v621
      %v638 = vmul.f32 %v302, %v622
      %v639 = vmul.f32 %v303, %v623
      %v640 = vmul.f32 %v304, %v624
      %v641 = vmul.f32 %v305, %v625
      %v642 = vmul.f32 %v306, %v626
      %v643 = vmul.f32 %v307, %v627
      %v644 = vmul.f32 %v308, %v628
      %v645 = vmul.f32 %v309, %v629
      %v646 = vmul.f32 %v310, %v630
      %v647 = vmul.f32 %v311, %v631
      %v648 = vmul.f32 %v312, %v632
      %v649 = vadd.f32 %v633, 1.0
      %v650 = vadd.f32 %v634, 1.0
      %v651 = vadd.f32 %v635, 1.0
      %v652 = vadd.f32 %v636, 1.0
      %v653 = vadd.f32 %v637, 1.0
      %v654 = vadd.f32 %v638, 1.0
      %v655 = vadd.f32 %v639, 1.0
      %v656 = vadd.f32 %v640, 1.0
      %v657 = vadd.f32 %v641, 1.0
      %v658 = vadd.f32 %v642, 1.0
      %v659 = vadd.f32 %v643, 1.0
      %v660 = vadd.f32 %v644, 1.0
      %v661 = vadd.f32 %v645, 1.0
      %v662 = vadd.f32 %v646, 1.0
      %v663 = vadd.f32 %v647, 1.0
      %v664 = vadd.f32 %v648, 1.0
      %v665 = vmul.f32 %v249, %v649
      %v666 = vmul.f32 %v250, %v650
      %v667 = vmul.f32 %v251, %v651
      %v668 = vmul.f32 %v252, %v652
      %v669 = vmul.f32 %v253, %v653
      %v670 = vmul.f32 %v254, %v654
      %v671 = vmul.f32 %v255, %v655
      %v672 = vmul.f32 %v256, %v656
      %v673 = vmul.f32 %v257, %v657
      %v674 = vmul.f32 %v258, %v658
      %v675 = vmul.f32 %v259, %v659
      %v676 = vmul.f32 %v260, %v660
      %v677 = vmul.f32 %v261, %v661
      %v678 = vmul.f32 %v262, %v662
      %v679 = vmul.f32 %v263, %v663
      %v680 = vmul.f32 %v264, %v664
      %697 = vrot.lane.b32.xlu0 %v665, 120
      %v698 = vpop.permute.xlu0 %697
      %699 = vrot.lane.b32.xlu0 %v666, 120
      %v700 = vpop.permute.xlu0 %699
      %701 = vrot.lane.b32.xlu0 %v667, 120
      %v702 = vpop.permute.xlu0 %701
      %703 = vrot.lane.b32.xlu0 %v668, 120
      %v704 = vpop.permute.xlu0 %703
      %705 = vrot.lane.b32.xlu0 %v669, 120
      %v706 = vpop.permute.xlu0 %705
      %707 = vrot.lane.b32.xlu0 %v670, 120
      %v708 = vpop.permute.xlu0 %707
      %709 = vrot.lane.b32.xlu0 %v671, 120
      %v710 = vpop.permute.xlu0 %709
      %711 = vrot.lane.b32.xlu0 %v672, 120
      %v712 = vpop.permute.xlu0 %711
      %713 = vrot.lane.b32.xlu0 %v673, 120
      %v714 = vpop.permute.xlu0 %713
      %715 = vrot.lane.b32.xlu0 %v674, 120
      %v716 = vpop.permute.xlu0 %715
      %717 = vrot.lane.b32.xlu0 %v675, 120
      %v718 = vpop.permute.xlu0 %717
      %719 = vrot.lane.b32.xlu0 %v676, 120
      %v720 = vpop.permute.xlu0 %719
      %721 = vrot.lane.b32.xlu0 %v677, 120
      %v722 = vpop.permute.xlu0 %721
      %723 = vrot.lane.b32.xlu0 %v678, 120
      %v724 = vpop.permute.xlu0 %723
      %725 = vrot.lane.b32.xlu0 %v679, 120
      %v726 = vpop.permute.xlu0 %725
      %727 = vrot.lane.b32.xlu0 %v680, 120
      %v728 = vpop.permute.xlu0 %727
      %v745 = vmax.f32 %v665, %v698
      %v746 = vmax.f32 %v666, %v700
      %v747 = vmax.f32 %v667, %v702
      %v748 = vmax.f32 %v668, %v704
      %v749 = vmax.f32 %v669, %v706
      %v750 = vmax.f32 %v670, %v708
      %v751 = vmax.f32 %v671, %v710
      %v752 = vmax.f32 %v672, %v712
      %v753 = vmax.f32 %v673, %v714
      %v754 = vmax.f32 %v674, %v716
      %v755 = vmax.f32 %v675, %v718
      %v756 = vmax.f32 %v676, %v720
      %v757 = vmax.f32 %v677, %v722
      %v758 = vmax.f32 %v678, %v724
      %v759 = vmax.f32 %v679, %v726
      %v760 = vmax.f32 %v680, %v728
      %vm761 = vcmask 64512
      %v762 = vsel %vm761, %v745, -inf
      %v763 = vsel %vm761, %v746, -inf
      %v764 = vmax.f32 %v762, %v763
      %v765 = vsel %vm761, %v747, -inf
      %v766 = vsel %vm761, %v748, -inf
      %v767 = vmax.f32 %v765, %v766
      %v768 = vsel %vm761, %v749, -inf
      %v769 = vsel %vm761, %v750, -inf
      %v770 = vmax.f32 %v768, %v769
      %v771 = vsel %vm761, %v751, -inf
      %v772 = vsel %vm761, %v752, -inf
      %v773 = vmax.f32 %v771, %v772
      %v774 = vsel %vm761, %v753, -inf
      %v775 = vsel %vm761, %v754, -inf
      %v776 = vmax.f32 %v774, %v775
      %v777 = vsel %vm761, %v755, -inf
      %v778 = vsel %vm761, %v756, -inf
      %v779 = vmax.f32 %v777, %v778
      %v780 = vsel %vm761, %v757, -inf
      %v781 = vsel %vm761, %v758, -inf
      %v782 = vmax.f32 %v780, %v781
      %v783 = vsel %vm761, %v759, -inf
      %v784 = vsel %vm761, %v760, -inf
      %v785 = vmax.f32 %v783, %v784
      %786 = vst.msk [vmem:[%s170] sm:$0xff] %vm761, %v764
      %787 = vst.msk [vmem:[%s170 + $0x8] sm:$0xff] %vm761, %v767
      %788 = vst.msk [vmem:[%s170 + $0x10] sm:$0xff] %vm761, %v770
      %789 = vst.msk [vmem:[%s170 + $0x18] sm:$0xff] %vm761, %v773
      %790 = vst.msk [vmem:[%s170 + $0x20] sm:$0xff] %vm761, %v776
      %791 = vst.msk [vmem:[%s170 + $0x28] sm:$0xff] %vm761, %v779
      %792 = vst.msk [vmem:[%s170 + $0x30] sm:$0xff] %vm761, %v782
      %793 = vst.msk [vmem:[%s170 + $0x38] sm:$0xff] %vm761, %v785
      %p794 = scmp.lt.s32.totalorder %s14, 1
      %s795 = scalar_select %p794, %s14, 1
      %s796 = smul.addr %s795, 8
      %s797 = smul.addr %s796, 8
      %s798 = scalar_lea.vmem %s3, %s797
      // Predicated region
      $region33: #{unet_down_forward.5} parent=31 // pred_check
        %p799 = pneg %p100
      $region34: #{unet_down_forward.5} parent=31 // pred_check_branch
        %801 = sbr.rel (%p799) target = $region36
      $region35: #{unet_down_forward.5} parent=31 // pred_region
        _
      $region36: #{unet_down_forward.5} parent=31 // pred_fallthru
        _
    $region32: #{unet_down_forward.5} parent=5 // pred_fallthru
      _
    %p802 = scmp.le.s32.totalorder 2, %s9
    // Predicated region
    $region37: #{unet_down_forward.5} parent=5 // pred_check
      %p803 = pneg %p802
    $region38: #{unet_down_forward.5} parent=5 // pred_check_branch
      %805 = sbr.rel (%p803) target = $region40
    $region39: #{unet_down_forward.5} parent=5 // pred_region
      %s806 = ssub.s32 %s9, 2
      // Predicated region
      $region41: #{unet_down_forward.5} parent=39 // pred_check
        %p807 = pneg %p106
      $region42: #{unet_down_forward.5} parent=39 // pred_check_branch
        %809 = sbr.rel (%p807) target = $region44
      $region43: #{unet_down_forward.5} parent=39 // pred_region
        %p810 = scmp.lt.s32.totalorder %s15, 1
        %s811 = scalar_select %p810, %s15, 1
        %s812 = smul.addr %s811, 8
        %s813 = smul.addr %s812, 8
        %s814 = scalar_lea.vmem %s3, %s813
      $region44: #{unet_down_forward.5} parent=39 // pred_fallthru
        _
    $region40: #{unet_down_forward.5} parent=5 // pred_fallthru
      _
  $region6: #{unet_down_forward.5} parent=0 // loop_footer
    %s13 = sadd.s32 1, %s9
  $region7: #{unet_down_forward.5} parent=0 // loop_footer_branch
    %8 = sbr.rel target = $region3
  $region8: #{unet_down_forward.5} parent=0 // loop_exit
    _

// kernel: unet_down_forward.3
$region0: #{unet_down_forward.3}
  #allocation0 [shape = 'u32[]', space=smem, size = 0x4, offset = 0x4, fixed_abs, tag = 'smem constant byte address 0x4 - core index']
  #allocation1 [shape = 'u32[144,128]{1,0:T(1,128)}', space=vmem, size = 0x12000, scoped, tag = 'internal scratch']
  %s0 = inlined_call_operand.vmem [shape: bf16[2,18,18,4], index: 0, kind: input, shape index: {}]
  %s1 = inlined_call_operand.vmem [shape: bf16[9,4,8], index: 1, kind: input, shape index: {}]
  %s2 = inlined_call_operand.vmem [shape: bf16[2,256,8], index: 2, kind: output, shape index: {0}]
  %s3 = inlined_call_operand.vmem [shape: f32[2,2,8], index: 3, kind: output, shape index: {1}]
  %4 = xla_tuple %s2, %s3
  %s5 = sld [smem:[#allocation0]]
  $region49: #{unet_down_forward.3} parent=0
    _
  %s7 = ssub.s32 1, %s5
  %s8 = scalar_select 0, %s7, %s5
  loop: start=0, step=1, limit=4
  $region2: #{unet_down_forward.3} parent=0 // loop_pre_header
    _
  $region3: #{unet_down_forward.3} parent=0 // loop_header
    %s10 = sphi 0, %s14
    %p11 = scmp.ge.s32.totalorder %s10, 4
    %s20 = sphi 0, %s22
    %s23 = sphi 0, %s20
    %s24 = sphi 0, %s23
    %s40 = sphi 0, %s24
    %s44 = sphi 0, %s44
    %s46 = sphi 0, %s44
    %s47 = sphi 0, %s46
    %s61 = sphi 0, %s47
    %s67 = sphi 0, %s69
    %s70 = sphi 0, %s67
    %s71 = sphi 0, %s70
    %s87 = sphi 0, %s71
    %s93 = sphi 0, %s95
    %s96 = sphi 0, %s93
    %s97 = sphi 0, %s96
    %s113 = sphi 0, %s97
  $region4: #{unet_down_forward.3} parent=0 // loop_header_branch
    %13 = sbr.rel (%p11) target = $region8
  $region5: #{unet_down_forward.3} parent=0 // loop_body
    %s15 = ssub.s32 %s10, 1
    %s16 = ssub.s32 %s10, 2
    %s17 = sadd.s32 %s10, 1
    %s18 = ssub.s32 %s10, %s17
    %p19 = scmp.eq.s32.totalorder %s18, 0
    %s21 = sadd.s32 %s20, 1
    %s22 = scalar_select %p19, %s20, %s21
    %p25 = pneg %p19
    %p26 = scmp.eq.s32.totalorder %s10, 1
    %p27 = por %p25, %p26
    %p28 = scmp.ne.s32.totalorder %s20, %s23
    %p29 = scmp.eq.s32.totalorder %s10, 0
    %p30 = por %p28, %p29
    %p31 = scmp.ne.s32.totalorder %s20, %s23
    %p32 = scmp.eq.s32.totalorder %s15, 1
    %p33 = por %p31, %p32
    %p34 = scmp.ne.s32.totalorder %s23, %s24
    %p35 = scmp.eq.s32.totalorder %s15, 0
    %p36 = por %p34, %p35
    %p37 = scmp.ne.s32.totalorder %s23, %s24
    %p38 = scmp.eq.s32.totalorder %s16, 1
    %p39 = por %p37, %p38
    %p41 = scmp.ne.s32.totalorder %s24, %s40
    %p42 = scmp.eq.s32.totalorder %s16, 0
    %p43 = por %p41, %p42
    %s45 = sadd.s32 %s44, 1
    %p48 = scmp.eq.s32.totalorder %s10, 1
    %p49 = scmp.ne.s32.totalorder %s44, %s46
    %p50 = scmp.eq.s32.totalorder %s10, 0
    %p51 = por %p49, %p50
    %p52 = scmp.ne.s32.totalorder %s44, %s46
    %p53 = scmp.eq.s32.totalorder %s15, 1
    %p54 = por %p52, %p53
    %p55 = scmp.ne.s32.totalorder %s46, %s47
    %p56 = scmp.eq.s32.totalorder %s15, 0
    %p57 = por %p55, %p56
    %p58 = scmp.ne.s32.totalorder %s46, %s47
    %p59 = scmp.eq.s32.totalorder %s16, 1
    %p60 = por %p58, %p59
    %p62 = scmp.ne.s32.totalorder %s47, %s61
    %p63 = scmp.eq.s32.totalorder %s16, 0
    %p64 = por %p62, %p63
    %s65 = ssub.s32 %s10, %s17
    %p66 = scmp.eq.s32.totalorder %s65, 0
    %s68 = sadd.s32 %s67, 1
    %s69 = scalar_select %p66, %s67, %s68
    %p72 = pneg %p66
    %p73 = scmp.eq.s32.totalorder %s10, 1
    %p74 = por %p72, %p73
    %p75 = scmp.ne.s32.totalorder %s67, %s70
    %p76 = scmp.eq.s32.totalorder %s10, 0
    %p77 = por %p75, %p76
    %p78 = scmp.ne.s32.totalorder %s67, %s70
    %p79 = scmp.eq.s32.totalorder %s15, 1
    %p80 = por %p78, %p79
    %p81 = scmp.ne.s32.totalorder %s70, %s71
    %p82 = scmp.eq.s32.totalorder %s15, 0
    %p83 = por %p81, %p82
    %p84 = scmp.ne.s32.totalorder %s70, %s71
    %p85 = scmp.eq.s32.totalorder %s16, 1
    %p86 = por %p84, %p85
    %p88 = scmp.ne.s32.totalorder %s71, %s87
    %p89 = scmp.eq.s32.totalorder %s16, 0
    %p90 = por %p88, %p89
    %s91 = ssub.s32 %s10, %s17
    %p92 = scmp.eq.s32.totalorder %s91, 0
    %s94 = sadd.s32 %s93, 1
    %s95 = scalar_select %p92, %s93, %s94
    %p98 = pneg %p92
    %p99 = scmp.eq.s32.totalorder %s10, 1
    %p100 = por %p98, %p99
    %p101 = scmp.ne.s32.totalorder %s93, %s96
    %p102 = scmp.eq.s32.totalorder %s10, 0
    %p103 = por %p101, %p102
    %p104 = scmp.ne.s32.totalorder %s93, %s96
    %p105 = scmp.eq.s32.totalorder %s15, 1
    %p106 = por %p104, %p105
    %p107 = scmp.ne.s32.totalorder %s96, %s97
    %p108 = scmp.eq.s32.totalorder %s15, 0
    %p109 = por %p107, %p108
    %p110 = scmp.ne.s32.totalorder %s96, %s97
    %p111 = scmp.eq.s32.totalorder %s16, 1
    %p112 = por %p110, %p111
    %p114 = scmp.ne.s32.totalorder %s97, %s113
    %p115 = scmp.eq.s32.totalorder %s16, 0
    %p116 = por %p114, %p115
    %p117 = scmp.le.s32.totalorder 1, %s10
    %p118 = scmp.lt.s32.totalorder %s10, 3
    %p119 = pnand %p117, %p118
    %p120 = pneg %p119
    // Predicated region
    $region9: #{unet_down_forward.3} parent=5 // pred_check
      _
    $region10: #{unet_down_forward.3} parent=5 // pred_check_branch
      %122 = sbr.rel (%p119) target = $region12
    $region11: #{unet_down_forward.3} parent=5 // pred_region
      %s123 = ssub.s32 %s10, 1
      // Predicated region
      $region13: #{unet_down_forward.3} parent=11 // pred_check
        %p124 = pneg %p57
      $region14: #{unet_down_forward.3} parent=11 // pred_check_branch
        %126 = sbr.rel (%p124) target = $region16
      $region15: #{unet_down_forward.3} parent=11 // pred_region
        _
      $region16: #{unet_down_forward.3} parent=11 // pred_fallthru
        _
    $region12: #{unet_down_forward.3} parent=5 // pred_fallthru
      _
    %p127 = scmp.lt.s32.totalorder %s10, 2
    // Predicated region
    $region17: #{unet_down_forward.3} parent=5 // pred_check
      %p128 = pneg %p127
    $region18: #{unet_down_forward.3} parent=5 // pred_check_branch
      %130 = sbr.rel (%p128) target = $region20
    $region19: #{unet_down_forward.3} parent=5 // pred_region
      // Predicated region
      $region21: #{unet_down_forward.3} parent=19 // pred_check
        %p131 = pneg %p30
      $region22: #{unet_down_forward.3} parent=19 // pred_check_branch
        %133 = sbr.rel (%p131) target = $region24
      $region23: #{unet_down_forward.3} parent=19 // pred_region
        %p134 = scmp.lt.s32.totalorder %s10, 1
        %s135 = scalar_select %p134, %s10, 1
        %s136 = smul.addr %s135, 54
        %s137 = smul.addr %s136, 4
        %s138 = scalar_lea.vmem %s0, %s137
      $region24: #{unet_down_forward.3} parent=19 // pred_fallthru
        _
    $region20: #{unet_down_forward.3} parent=5 // pred_fallthru
      _
    %p139 = scmp.le.s32.totalorder 1, %s10
    %p140 = scmp.lt.s32.totalorder %s10, 3
    %p141 = pnand %p139, %p140
    %p142 = pneg %p141
    // Predicated region
    $region25: #{unet_down_forward.3} parent=5 // pred_check
      _
    $region26: #{unet_down_forward.3} parent=5 // pred_check_branch
      %144 = sbr.rel (%p141) target = $region28
    $region27: #{unet_down_forward.3} parent=5 // pred_region
      %s145 = ssub.s32 %s10, 1
      %p146 = scmp.lt.s32.totalorder %s15, 1
      %s147 = scalar_select %p146, %s15, 1
      %s148 = smul.addr %s147, 54
      %s149 = smul.addr %s148, 4
      %s150 = scalar_lea.vmem %s0, %s149
      %p151 = pneg %p36
      %p152 = pneg %p33
      %p153 = pneg %p57
      %p154 = pneg %p54
      %p155 = pneg %p83
      %p156 = pneg %p80
      %p157 = scmp.lt.s32.totalorder %s15, 1
      %s158 = scalar_select %p157, %s15, 1
      %s159 = smul.addr %s158, 32
      %s160 = smul.addr %s159, 4
      %s161 = scalar_lea.vmem %s2, %s160
      %p162 = pneg %p109
      %p163 = pneg %p106
      %p164 = scmp.lt.s32.totalorder %s15, 1
      %s165 = scalar_select %p164, %s15, 1
      %s166 = smul.addr %s165, 2
      %s167 = scalar_lea.vmem %s3, %s166
      %p168 = scmp.lt.s32.totalorder %s15, 1
      %s169 = scalar_select %p168, %s15, 1
      %s170 = smul.addr %s169, 54
      %s171 = smul.addr %s170, 4
      %s172 = scalar_lea.vmem %s0, %s171
      %p173 = scmp.lt.s32.totalorder %s15, 1
      %s174 = scalar_select %p173, %s15, 1
      %s175 = smul.addr %s174, 32
      %s176 = smul.addr %s175, 4
      %s177 = scalar_lea.vmem %s2, %s176
      %p178 = scmp.lt.s32.totalorder %s15, 1
      %s179 = scalar_select %p178, %s15, 1
      %s180 = smul.addr %s179, 2
      %s181 = scalar_lea.vmem %s3, %s180
      %v183 = vld [vmem:[%s172] sm:$0xf]
      %v184 = vld [vmem:[%s172 + $0x4] sm:$0xf]
      %v185 = vld [vmem:[%s172 + $0xc] sm:$0xf]
      %v186 = vld [vmem:[%s172 + $0x10] sm:$0xf]
      %v187 = vld [vmem:[%s172 + $0x18] sm:$0xf]
      %v188 = vld [vmem:[%s172 + $0x1c] sm:$0xf]
      %v189 = vld [vmem:[%s172 + $0x24] sm:$0xf]
      %v190 = vld [vmem:[%s172 + $0x28] sm:$0xf]
      %v191 = vld [vmem:[%s172 + $0x30] sm:$0xf]
      %v192 = vld [vmem:[%s172 + $0x34] sm:$0xf]
      %v193 = vld [vmem:[%s172 + $0x3c] sm:$0xf]
      %v194 = vld [vmem:[%s172 + $0x40] sm:$0xf]
      %v195 = vld [vmem:[%s172 + $0x48] sm:$0xf]
      %v196 = vld [vmem:[%s172 + $0x4c] sm:$0xf]
      %v197 = vld [vmem:[%s172 + $0x54] sm:$0xf]
      %v198 = vld [vmem:[%s172 + $0x58] sm:$0xf]
      %v199 = vld [vmem:[%s172 + $0x60] sm:$0xf]
      %v200 = vld [vmem:[%s172 + $0x64] sm:$0xf]
      %v201 = vld [vmem:[%s172 + $0x6c] sm:$0xf]
      %v202 = vld [vmem:[%s172 + $0x70] sm:$0xf]
      %v203 = vld [vmem:[%s172 + $0x78] sm:$0xf]
      %v204 = vld [vmem:[%s172 + $0x7c] sm:$0xf]
      %v205 = vld [vmem:[%s172 + $0x84] sm:$0xf]
      %v206 = vld [vmem:[%s172 + $0x88] sm:$0xf]
      %v207 = vld [vmem:[%s172 + $0x90] sm:$0xf]
      %v208 = vld [vmem:[%s172 + $0x94] sm:$0xf]
      %v209 = vld [vmem:[%s172 + $0x9c] sm:$0xf]
      %v210 = vld [vmem:[%s172 + $0xa0] sm:$0xf]
      %v211 = vld [vmem:[%s172 + $0xa8] sm:$0xf]
      %v212 = vld [vmem:[%s172 + $0xac] sm:$0xf]
      %v213 = vld [vmem:[%s172 + $0xb4] sm:$0xf]
      %v214 = vld [vmem:[%s172 + $0xb8] sm:$0xf]
      %v215 = vld [vmem:[%s1] sm:$0x3]
      %v216 = vld [vmem:[%s172 + $0x8] sm:$0x1]
      %v217 = vld [vmem:[%s172 + $0x14] sm:$0x1]
      %v218 = vld [vmem:[%s172 + $0x20] sm:$0x1]
      %v219 = vld [vmem:[%s172 + $0x2c] sm:$0x1]
      %v220 = vld [vmem:[%s172 + $0x38] sm:$0x1]
      %v221 = vld [vmem:[%s172 + $0x44] sm:$0x1]
      %v222 = vld [vmem:[%s172 + $0x50] sm:$0x1]
      %v223 = vld [vmem:[%s172 + $0x5c] sm:$0x1]
      %v224 = vld [vmem:[%s172 + $0x68] sm:$0x1]
      %v225 = vld [vmem:[%s172 + $0x74] sm:$0x1]
      %v226 = vld [vmem:[%s172 + $0x80] sm:$0x1]
      %v227 = vld [vmem:[%s172 + $0x8c] sm:$0x1]
      %v228 = vld [vmem:[%s172 + $0x98] sm:$0x1]
      %v229 = vld [vmem:[%s172 + $0xa4] sm:$0x1]
      %v230 = vld [vmem:[%s172 + $0xb0] sm:$0x1]
      %v231 = vld [vmem:[%s172 + $0xbc] sm:$0x1]
      %vm232 = vsmask.f32 3328
      %vm233 = vsmask.f32 7440
      %vm234 = vmor %vm232, %vm233
      %v236 = vshrl.u32 %v183, 16
      %v238 = vrot.slane %v236, 4
      %v239 = vshll.u32 %v183, 16
      %v241 = vrot.slane %v239, 5
      %v242 = vor.u32 %v238, %v241
      %v243 = vrot.slane %v242, 4
      %v245 = vshll.u32 %v184, 16
      %v247 = vrot.slane %v245, 5
      %v248 = vsel %vm234, %v243, %v247
      %v249 = vshrl.u32 %v184, 16
      %v251 = vrot.slane %v249, 4
      %v252 = vor.u32 %v251, %v247
      %v253 = vrot.slane %v252, 4
      %v255 = vshll.u32 %v216, 16
      %v257 = vrot.slane %v255, 5
      %v258 = vsel %vm234, %v253, %v257
      %v260 = vshrl.u32 %v185, 16
      %v262 = vrot.slane %v260, 4
      %v263 = vshll.u32 %v185, 16
      %v265 = vrot.slane %v263, 5
      %v266 = vor.u32 %v262, %v265
      %v267 = vrot.slane %v266, 4
      %v269 = vshll.u32 %v186, 16
      %v271 = vrot.slane %v269, 5
      %v272 = vsel %vm234, %v267, %v271
      %v273 = vshrl.u32 %v186, 16
      %v275 = vrot.slane %v273, 4
      %v276 = vor.u32 %v275, %v271
      %v277 = vrot.slane %v276, 4
      %v279 = vshll.u32 %v217, 16
      %v281 = vrot.slane %v279, 5
      %v282 = vsel %vm234, %v277, %v281
      %v284 = vshrl.u32 %v187, 16
      %v286 = vrot.slane %v284, 4
      %v287 = vshll.u32 %v187, 16
      %v289 = vrot.slane %v287, 5
      %v290 = vor.u32 %v286, %v289
      %v291 = vrot.slane %v290, 4
      %v293 = vshll.u32 %v188, 16
      %v295 = vrot.slane %v293, 5
      %v296 = vsel %vm234, %v291, %v295
      %v297 = vshrl.u32 %v188, 16
      %v299 = vrot.slane %v297, 4
      %v300 = vor.u32 %v299, %v295
      %v301 = vrot.slane %v300, 4
      %v303 = vshll.u32 %v218, 16
      %v305 = vrot.slane %v303, 5
      %v306 = vsel %vm234, %v301, %v305
      %v308 = vshrl.u32 %v189, 16
      %v310 = vrot.slane %v308, 4
      %v311 = vshll.u32 %v189, 16
      %v313 = vrot.slane %v311, 5
      %v314 = vor.u32 %v310, %v313
      %v315 = vrot.slane %v314, 4
      %v317 = vshll.u32 %v190, 16
      %v319 = vrot.slane %v317, 5
      %v320 = vsel %vm234, %v315, %v319
      %v321 = vshrl.u32 %v190, 16
      %v323 = vrot.slane %v321, 4
      %v324 = vor.u32 %v323, %v319
      %v325 = vrot.slane %v324, 4
      %v327 = vshll.u32 %v219, 16
      %v329 = vrot.slane %v327, 5
      %v330 = vsel %vm234, %v325, %v329
      %v332 = vshrl.u32 %v191, 16
      %v334 = vrot.slane %v332, 4
      %v335 = vshll.u32 %v191, 16
      %v337 = vrot.slane %v335, 5
      %v338 = vor.u32 %v334, %v337
      %v339 = vrot.slane %v338, 4
      %v341 = vshll.u32 %v192, 16
      %v343 = vrot.slane %v341, 5
      %v344 = vsel %vm234, %v339, %v343
      %v345 = vshrl.u32 %v192, 16
      %v347 = vrot.slane %v345, 4
      %v348 = vor.u32 %v347, %v343
      %v349 = vrot.slane %v348, 4
      %v351 = vshll.u32 %v220, 16
      %v353 = vrot.slane %v351, 5
      %v354 = vsel %vm234, %v349, %v353
      %v356 = vshrl.u32 %v193, 16
      %v358 = vrot.slane %v356, 4
      %v359 = vshll.u32 %v193, 16
      %v361 = vrot.slane %v359, 5
      %v362 = vor.u32 %v358, %v361
      %v363 = vrot.slane %v362, 4
      %v365 = vshll.u32 %v194, 16
      %v367 = vrot.slane %v365, 5
      %v368 = vsel %vm234, %v363, %v367
      %v369 = vshrl.u32 %v194, 16
      %v371 = vrot.slane %v369, 4
      %v372 = vor.u32 %v371, %v367
      %v373 = vrot.slane %v372, 4
      %v375 = vshll.u32 %v221, 16
      %v377 = vrot.slane %v375, 5
      %v378 = vsel %vm234, %v373, %v377
      %v380 = vshrl.u32 %v195, 16
      %v382 = vrot.slane %v380, 4
      %v383 = vshll.u32 %v195, 16
      %v385 = vrot.slane %v383, 5
      %v386 = vor.u32 %v382, %v385
      %v387 = vrot.slane %v386, 4
      %v389 = vshll.u32 %v196, 16
      %v391 = vrot.slane %v389, 5
      %v392 = vsel %vm234, %v387, %v391
      %v393 = vshrl.u32 %v196, 16
      %v395 = vrot.slane %v393, 4
      %v396 = vor.u32 %v395, %v391
      %v397 = vrot.slane %v396, 4
      %v399 = vshll.u32 %v222, 16
      %v401 = vrot.slane %v399, 5
      %v402 = vsel %vm234, %v397, %v401
      %v404 = vshrl.u32 %v197, 16
      %v406 = vrot.slane %v404, 4
      %v407 = vshll.u32 %v197, 16
      %v409 = vrot.slane %v407, 5
      %v410 = vor.u32 %v406, %v409
      %v411 = vrot.slane %v410, 4
      %v413 = vshll.u32 %v198, 16
      %v415 = vrot.slane %v413, 5
      %v416 = vsel %vm234, %v411, %v415
      %v417 = vshrl.u32 %v198, 16
      %v419 = vrot.slane %v417, 4
      %v420 = vor.u32 %v419, %v415
      %v421 = vrot.slane %v420, 4
      %v423 = vshll.u32 %v223, 16
      %v425 = vrot.slane %v423, 5
      %v426 = vsel %vm234, %v421, %v425
      %v428 = vshrl.u32 %v199, 16
      %v430 = vrot.slane %v428, 4
      %v431 = vshll.u32 %v199, 16
      %v433 = vrot.slane %v431, 5
      %v434 = vor.u32 %v430, %v433
      %v435 = vrot.slane %v434, 4
      %v437 = vshll.u32 %v200, 16
      %v439 = vrot.slane %v437, 5
      %v440 = vsel %vm234, %v435, %v439
      %v441 = vshrl.u32 %v200, 16
      %v443 = vrot.slane %v441, 4
      %v444 = vor.u32 %v443, %v439
      %v445 = vrot.slane %v444, 4
      %v447 = vshll.u32 %v224, 16
      %v449 = vrot.slane %v447, 5
      %v450 = vsel %vm234, %v445, %v449
      %v452 = vshrl.u32 %v201, 16
      %v454 = vrot.slane %v452, 4
      %v455 = vshll.u32 %v201, 16
      %v457 = vrot.slane %v455, 5
      %v458 = vor.u32 %v454, %v457
      %v459 = vrot.slane %v458, 4
      %v461 = vshll.u32 %v202, 16
      %v463 = vrot.slane %v461, 5
      %v464 = vsel %vm234, %v459, %v463
      %v465 = vshrl.u32 %v202, 16
      %v467 = vrot.slane %v465, 4
      %v468 = vor.u32 %v467, %v463
      %v469 = vrot.slane %v468, 4
      %v471 = vshll.u32 %v225, 16
      %v473 = vrot.slane %v471, 5
      %v474 = vsel %vm234, %v469, %v473
      %v476 = vshrl.u32 %v203, 16
      %v478 = vrot.slane %v476, 4
      %v479 = vshll.u32 %v203, 16
      %v481 = vrot.slane %v479, 5
      %v482 = vor.u32 %v478, %v481
      %v483 = vrot.slane %v482, 4
      %v485 = vshll.u32 %v204, 16
      %v487 = vrot.slane %v485, 5
      %v488 = vsel %vm234, %v483, %v487
      %v489 = vshrl.u32 %v204, 16
      %v491 = vrot.slane %v489, 4
      %v492 = vor.u32 %v491, %v487
      %v493 = vrot.slane %v492, 4
      %v495 = vshll.u32 %v226, 16
      %v497 = vrot.slane %v495, 5
      %v498 = vsel %vm234, %v493, %v497
      %v500 = vshrl.u32 %v205, 16
      %v502 = vrot.slane %v500, 4
      %v503 = vshll.u32 %v205, 16
      %v505 = vrot.slane %v503, 5
      %v506 = vor.u32 %v502, %v505
      %v507 = vrot.slane %v506, 4
      %v509 = vshll.u32 %v206, 16
      %v511 = vrot.slane %v509, 5
      %v512 = vsel %vm234, %v507, %v511
      %v513 = vshrl.u32 %v206, 16
      %v515 = vrot.slane %v513, 4
      %v516 = vor.u32 %v515, %v511
      %v517 = vrot.slane %v516, 4
      %v519 = vshll.u32 %v227, 16
      %v521 = vrot.slane %v519, 5
      %v522 = vsel %vm234, %v517, %v521
      %v524 = vshrl.u32 %v207, 16
      %v526 = vrot.slane %v524, 4
      %v527 = vshll.u32 %v207, 16
      %v529 = vrot.slane %v527, 5
      %v530 = vor.u32 %v526, %v529
      %v531 = vrot.slane %v530, 4
      %v533 = vshll.u32 %v208, 16
      %v535 = vrot.slane %v533, 5
      %v536 = vsel %vm234, %v531, %v535
      %v537 = vshrl.u32 %v208, 16
      %v539 = vrot.slane %v537, 4
      %v540 = vor.u32 %v539, %v535
      %v541 = vrot.slane %v540, 4
      %v543 = vshll.u32 %v228, 16
      %v545 = vrot.slane %v543, 5
      %v546 = vsel %vm234, %v541, %v545
      %v548 = vshrl.u32 %v209, 16
      %v550 = vrot.slane %v548, 4
      %v551 = vshll.u32 %v209, 16
      %v553 = vrot.slane %v551, 5
      %v554 = vor.u32 %v550, %v553
      %v555 = vrot.slane %v554, 4
      %v557 = vshll.u32 %v210, 16
      %v559 = vrot.slane %v557, 5
      %v560 = vsel %vm234, %v555, %v559
      %v561 = vshrl.u32 %v210, 16
      %v563 = vrot.slane %v561, 4
      %v564 = vor.u32 %v563, %v559
      %v565 = vrot.slane %v564, 4
      %v567 = vshll.u32 %v229, 16
      %v569 = vrot.slane %v567, 5
      %v570 = vsel %vm234, %v565, %v569
      %v572 = vshrl.u32 %v211, 16
      %v574 = vrot.slane %v572, 4
      %v575 = vshll.u32 %v211, 16
      %v577 = vrot.slane %v575, 5
      %v578 = vor.u32 %v574, %v577
      %v579 = vrot.slane %v578, 4
      %v581 = vshll.u32 %v212, 16
      %v583 = vrot.slane %v581, 5
      %v584 = vsel %vm234, %v579, %v583
      %v585 = vshrl.u32 %v212, 16
      %v587 = vrot.slane %v585, 4
      %v588 = vor.u32 %v587, %v583
      %v589 = vrot.slane %v588, 4
      %v591 = vshll.u32 %v230, 16
      %v593 = vrot.slane %v591, 5
      %v594 = vsel %vm234, %v589, %v593
      %v596 = vshrl.u32 %v213, 16
      %v598 = vrot.slane %v596, 4
      %v599 = vshll.u32 %v213, 16
      %v601 = vrot.slane %v599, 5
      %v602 = vor.u32 %v598, %v601
      %v603 = vrot.slane %v602, 4
      %v605 = vshll.u32 %v214, 16
      %v607 = vrot.slane %v605, 5
      %v608 = vsel %vm234, %v603, %v607
      %v609 = vshrl.u32 %v214, 16
      %v611 = vrot.slane %v609, 4
      %v612 = vor.u32 %v611, %v607
      %v613 = vrot.slane %v612, 4
      %v615 = vshll.u32 %v231, 16
      %v617 = vrot.slane %v615, 5
      %v618 = vsel %vm234, %v613, %v617
      %s619 = scalar_lea.vmem %s1, 2
      %v620 = vld [vmem:[%s619] sm:$0x3]
      %v621 = vunpack.c.l.b16 %v248
      %v622 = vunpack.c.l.b16 %v258
      %v623 = vunpack.c.l.b16 %v272
      %v624 = vunpack.c.l.b16 %v282
      %v625 = vunpack.c.l.b16 %v296
      %v626 = vunpack.c.l.b16 %v306
      %v627 = vunpack.c.l.b16 %v320
      %v628 = vunpack.c.l.b16 %v330
      %v629 = vunpack.c.l.b16 %v344
      %v630 = vunpack.c.l.b16 %v354
      %v631 = vunpack.c.l.b16 %v368
      %v632 = vunpack.c.l.b16 %v378
      %v633 = vunpack.c.l.b16 %v392
      %v634 = vunpack.c.l.b16 %v402
      %v635 = vunpack.c.l.b16 %v416
      %v636 = vunpack.c.l.b16 %v426
      %v637 = vunpack.c.l.b16 %v440
      %v638 = vunpack.c.l.b16 %v450
      %v639 = vunpack.c.l.b16 %v464
      %v640 = vunpack.c.l.b16 %v474
      %v641 = vunpack.c.l.b16 %v488
      %v642 = vunpack.c.l.b16 %v498
      %v643 = vunpack.c.l.b16 %v512
      %v644 = vunpack.c.l.b16 %v522
      %v645 = vunpack.c.l.b16 %v536
      %v646 = vunpack.c.l.b16 %v546
      %v647 = vunpack.c.l.b16 %v560
      %v648 = vunpack.c.l.b16 %v570
      %v649 = vunpack.c.l.b16 %v584
      %v650 = vunpack.c.l.b16 %v594
      %v651 = vunpack.c.l.b16 %v608
      %v652 = vunpack.c.l.b16 %v618
      %v653 = vpack.c.b16 %v622, %v621
      %v654 = vpack.c.b16 %v624, %v623
      %v655 = vpack.c.b16 %v626, %v625
      %v656 = vpack.c.b16 %v628, %v627
      %v657 = vpack.c.b16 %v630, %v629
      %v658 = vpack.c.b16 %v632, %v631
      %v659 = vpack.c.b16 %v634, %v633
      %v660 = vpack.c.b16 %v636, %v635
      %v661 = vpack.c.b16 %v638, %v637
      %v662 = vpack.c.b16 %v640, %v639
      %v663 = vpack.c.b16 %v642, %v641
      %v664 = vpack.c.b16 %v644, %v643
      %v665 = vpack.c.b16 %v646, %v645
      %v666 = vpack.c.b16 %v648, %v647
      %v667 = vpack.c.b16 %v650, %v649
      %v668 = vpack.c.b16 %v652, %v651
      %vm669 = vcmask 31744
      %v671 = vsel %vm669, %v653, 0
      %v674 = vsel %vm669, %v654, 0
      %v677 = vsel %vm669, %v655, 0
      %v680 = vsel %vm669, %v656, 0
      %v683 = vsel %vm669, %v657, 0
      %v686 = vsel %vm669, %v658, 0
      %v689 = vsel %vm669, %v659, 0
      %v692 = vsel %vm669, %v660, 0
      %v695 = vsel %vm669, %v661, 0
      %v698 = vsel %vm669, %v662, 0
      %v701 = vsel %vm669, %v663, 0
      %v704 = vsel %vm669, %v664, 0
      %v707 = vsel %vm669, %v665, 0
      %v710 = vsel %vm669, %v666, 0
      %v713 = vsel %vm669, %v667, 0
      %v716 = vsel %vm669, %v668, 0
      %vm718 = vcmask 1041408
      %v720 = vsel %vm718, %v620, 0
      %722 = vmatprep.subr.bf16.mxu0 0
      %723 = vmatpush1.bf16.msra.mxu0 0
      %724 = vmatprep.subr.bf16.mxu0 0
      %725 = vmatpush1.bf16.msra.mxu0 0
      %726 = vmatprep.subr.bf16.mxu0 0
      %727 = vmatpush1.bf16.msra.mxu0 0
      %728 = vmatprep.subr.bf16.mxu0 0
      %729 = vmatpush1.bf16.msra.mxu0 0
      %730 = vmatprep.subr.bf16.mxu0 0
      %731 = vmatpush1.bf16.msra.mxu0 0
      %732 = vmatprep.subr.bf16.mxu0 0
      %733 = vmatpush1.bf16.msra.mxu0 0
      %734 = vmatprep.subr.bf16.mxu0 0
      %735 = vmatpush1.bf16.msra.mxu0 0
      %736 = vmatprep.subr.bf16.mxu0 0
      %737 = vmatpush1.bf16.msra.mxu0 %v720
      %738 = vmatprep.subr.bf16.mxu0 0
      %739 = vmatpush2.bf16.msra.mxu0 0
      %740 = vmatprep.subr.bf16.mxu0 0
      %741 = vmatpush2.bf16.msra.mxu0 0
      %742 = vmatprep.subr.bf16.mxu0 0
      %743 = vmatpush2.bf16.msra.mxu0 0
      %744 = vmatprep.subr.bf16.mxu0 0
      %745 = vmatpush2.bf16.msra.mxu0 0
      %746 = vmatprep.subr.bf16.mxu0 0
      %747 = vmatpush2.bf16.msra.mxu0 0
      %748 = vmatprep.subr.bf16.mxu0 0
      %749 = vmatpush2.bf16.msra.mxu0 0
      %750 = vmatprep.subr.bf16.mxu0 0
      %751 = vmatpush2.bf16.msra.mxu0 0
      %752 = vmatprep.subr.bf16.mxu0 0
      %753 = vmatpush2.bf16.msra.mxu0 0
      %754 = vmatprep.mubr.bf16.mxu0 0
      %755 = vmatmul.mubr.bf16.gmra.mxu0 %v671
      %v756 = vpop.f32.mrf.mxu0
      %v757 = vadd.f32 0.0, %v756
      %v758 = vpop.f32.mrf.mxu0
      %v759 = vpop.f32.mrf.mxu0
      %v760 = vadd.f32 0.0, %v759
      %v761 = vpop.f32.mrf.mxu0
      %762 = vmatprep.mubr.bf16.mxu0 0
      %763 = vmatmul.mubr.bf16.gmra.mxu0 %v674
      %v764 = vpop.f32.mrf.mxu0
      %v765 = vadd.f32 0.0, %v764
      %v766 = vpop.f32.mrf.mxu0
      %v767 = vpop.f32.mrf.mxu0
      %v768 = vadd.f32 0.0, %v767
      %v769 = vpop.f32.mrf.mxu0
      %770 = vmatprep.mubr.bf16.mxu0 0
      %771 = vmatmul.mubr.bf16.gmra.mxu0 %v677
      %v772 = vpop.f32.mrf.mxu0
      %v773 = vadd.f32 0.0, %v772
      %v774 = vpop.f32.mrf.mxu0
      %v775 = vpop.f32.mrf.mxu0
      %v776 = vadd.f32 0.0, %v775
      %v777 = vpop.f32.mrf.mxu0
      %778 = vmatprep.mubr.bf16.mxu0 0
      %779 = vmatmul.mubr.bf16.gmra.mxu0 %v680
      %v780 = vpop.f32.mrf.mxu0
      %v781 = vadd.f32 0.0, %v780
      %v782 = vpop.f32.mrf.mxu0
      %v783 = vpop.f32.mrf.mxu0
      %v784 = vadd.f32 0.0, %v783
      %v785 = vpop.f32.mrf.mxu0
      %786 = vmatprep.mubr.bf16.mxu0 0
      %787 = vmatmul.mubr.bf16.gmra.mxu0 %v683
      %v788 = vpop.f32.mrf.mxu0
      %v789 = vadd.f32 0.0, %v788
      %v790 = vpop.f32.mrf.mxu0
      %v791 = vpop.f32.mrf.mxu0
      %v792 = vadd.f32 0.0, %v791
      %v793 = vpop.f32.mrf.mxu0
      %794 = vmatprep.mubr.bf16.mxu0 0
      %795 = vmatmul.mubr.bf16.gmra.mxu0 %v686
      %v796 = vpop.f32.mrf.mxu0
      %v797 = vadd.f32 0.0, %v796
      %v798 = vpop.f32.mrf.mxu0
      %v799 = vpop.f32.mrf.mxu0
      %v800 = vadd.f32 0.0, %v799
      %v801 = vpop.f32.mrf.mxu0
      %802 = vmatprep.mubr.bf16.mxu0 0
      %803 = vmatmul.mubr.bf16.gmra.mxu0 %v689
      %v804 = vpop.f32.mrf.mxu0
      %v805 = vadd.f32 0.0, %v804
      %v806 = vpop.f32.mrf.mxu0
      %v807 = vpop.f32.mrf.mxu0
      %v808 = vadd.f32 0.0, %v807
      %v809 = vpop.f32.mrf.mxu0
      %810 = vmatprep.mubr.bf16.mxu0 0
      %811 = vmatmul.mubr.bf16.gmra.mxu0 %v692
      %v812 = vpop.f32.mrf.mxu0
      %v813 = vadd.f32 0.0, %v812
      %v814 = vpop.f32.mrf.mxu0
      %v815 = vpop.f32.mrf.mxu0
      %v816 = vadd.f32 0.0, %v815
      %v817 = vpop.f32.mrf.mxu0
      %818 = vmatprep.mubr.bf16.mxu0 0
      %819 = vmatmul.mubr.bf16.gmra.mxu0 %v695
      %v820 = vpop.f32.mrf.mxu0
      %v821 = vadd.f32 0.0, %v820
      %v822 = vpop.f32.mrf.mxu0
      %v823 = vpop.f32.mrf.mxu0
      %v824 = vadd.f32 0.0, %v823
      %v825 = vpop.f32.mrf.mxu0
      %826 = vmatprep.mubr.bf16.mxu0 0
      %827 = vmatmul.mubr.bf16.gmra.mxu0 %v698
      %v828 = vpop.f32.mrf.mxu0
      %v829 = vadd.f32 0.0, %v828
      %v830 = vpop.f32.mrf.mxu0
      %v831 = vpop.f32.mrf.mxu0
      %v832 = vadd.f32 0.0, %v831
      %v833 = vpop.f32.mrf.mxu0
      %834 = vmatprep.mubr.bf16.mxu0 0
      %835 = vmatmul.mubr.bf16.gmra.mxu0 %v701
      %v836 = vpop.f32.mrf.mxu0
      %v837 = vadd.f32 0.0, %v836
      %v838 = vpop.f32.mrf.mxu0
      %v839 = vpop.f32.mrf.mxu0
      %v840 = vadd.f32 0.0, %v839
      %v841 = vpop.f32.mrf.mxu0
      %842 = vmatprep.mubr.bf16.mxu0 0
      %843 = vmatmul.mubr.bf16.gmra.mxu0 %v704
      %v844 = vpop.f32.mrf.mxu0
      %v845 = vadd.f32 0.0, %v844
      %v846 = vpop.f32.mrf.mxu0
      %v847 = vpop.f32.mrf.mxu0
      %v848 = vadd.f32 0.0, %v847
      %v849 = vpop.f32.mrf.mxu0
      %850 = vmatprep.mubr.bf16.mxu0 0
      %851 = vmatmul.mubr.bf16.gmra.mxu0 %v707
      %v852 = vpop.f32.mrf.mxu0
      %v853 = vadd.f32 0.0, %v852
      %v854 = vpop.f32.mrf.mxu0
      %v855 = vpop.f32.mrf.mxu0
      %v856 = vadd.f32 0.0, %v855
      %v857 = vpop.f32.mrf.mxu0
      %858 = vmatprep.mubr.bf16.mxu0 0
      %859 = vmatmul.mubr.bf16.gmra.mxu0 %v710
      %v860 = vpop.f32.mrf.mxu0
      %v861 = vadd.f32 0.0, %v860
      %v862 = vpop.f32.mrf.mxu0
      %v863 = vpop.f32.mrf.mxu0
      %v864 = vadd.f32 0.0, %v863
      %v865 = vpop.f32.mrf.mxu0
      %866 = vmatprep.mubr.bf16.mxu0 0
      %867 = vmatmul.mubr.bf16.gmra.mxu0 %v713
      %v868 = vpop.f32.mrf.mxu0
      %v869 = vadd.f32 0.0, %v868
      %v870 = vpop.f32.mrf.mxu0
      %v871 = vpop.f32.mrf.mxu0
      %v872 = vadd.f32 0.0, %v871
      %v873 = vpop.f32.mrf.mxu0
      %874 = vmatprep.mubr.bf16.mxu0 0
      %875 = vmatmul.mubr.bf16.gmra.mxu0 %v716
      %v876 = vpop.f32.mrf.mxu0
      %v877 = vadd.f32 0.0, %v876
      %v878 = vpop.f32.mrf.mxu0
      %v879 = vpop.f32.mrf.mxu0
      %v880 = vadd.f32 0.0, %v879
      %v881 = vpop.f32.mrf.mxu0
      %882 = vdwg.mxu0
      %v915 = vunpack.c.l.b16 %v183
      %v916 = vunpack.c.l.b16 %v184
      %v917 = vunpack.c.l.b16 %v185
      %v918 = vunpack.c.l.b16 %v186
      %v919 = vunpack.c.l.b16 %v187
      %v920 = vunpack.c.l.b16 %v188
      %v921 = vunpack.c.l.b16 %v189
      %v922 = vunpack.c.l.b16 %v190
      %v923 = vunpack.c.l.b16 %v191
      %v924 = vunpack.c.l.b16 %v192
      %v925 = vunpack.c.l.b16 %v193
      %v926 = vunpack.c.l.b16 %v194
      %v927 = vunpack.c.l.b16 %v195
      %v928 = vunpack.c.l.b16 %v196
      %v929 = vunpack.c.l.b16 %v197
      %v930 = vunpack.c.l.b16 %v198
      %v931 = vunpack.c.l.b16 %v199
      %v932 = vunpack.c.l.b16 %v200
      %v933 = vunpack.c.l.b16 %v201
      %v934 = vunpack.c.l.b16 %v202
      %v935 = vunpack.c.l.b16 %v203
      %v936 = vunpack.c.l.b16 %v204
      %v937 = vunpack.c.l.b16 %v205
      %v938 = vunpack.c.l.b16 %v206
      %v939 = vunpack.c.l.b16 %v207
      %v940 = vunpack.c.l.b16 %v208
      %v941 = vunpack.c.l.b16 %v209
      %v942 = vunpack.c.l.b16 %v210
      %v943 = vunpack.c.l.b16 %v211
      %v944 = vunpack.c.l.b16 %v212
      %v945 = vunpack.c.l.b16 %v213
      %v946 = vunpack.c.l.b16 %v214
      %v947 = vpack.c.b16 %v916, %v915
      %v948 = vpack.c.b16 %v918, %v917
      %v949 = vpack.c.b16 %v920, %v919
      %v950 = vpack.c.b16 %v922, %v921
      %v951 = vpack.c.b16 %v924, %v923
      %v952 = vpack.c.b16 %v926, %v925
      %v953 = vpack.c.b16 %v928, %v927
      %v954 = vpack.c.b16 %v930, %v929
      %v955 = vpack.c.b16 %v932, %v931
      %v956 = vpack.c.b16 %v934, %v933
      %v957 = vpack.c.b16 %v936, %v935
      %v958 = vpack.c.b16 %v938, %v937
      %v959 = vpack.c.b16 %v940, %v939
      %v960 = vpack.c.b16 %v942, %v941
      %v961 = vpack.c.b16 %v944, %v943
      %v962 = vpack.c.b16 %v946, %v945
      %v964 = vsel %vm669, %v947, 0
      %v967 = vsel %vm669, %v948, 0
      %v970 = vsel %vm669, %v949, 0
      %v973 = vsel %vm669, %v950, 0
      %v976 = vsel %vm669, %v951, 0
      %v979 = vsel %vm669, %v952, 0
      %v982 = vsel %vm669, %v953, 0
      %v985 = vsel %vm669, %v954, 0
      %v988 = vsel %vm669, %v955, 0
      %v991 = vsel %vm669, %v956, 0
      %v994 = vsel %vm669, %v957, 0
      %v997 = vsel %vm669, %v958, 0
      %v1000 = vsel %vm669, %v959, 0
      %v1003 = vsel %vm669, %v960, 0
      %v1006 = vsel %vm669, %v961, 0
      %v1009 = vsel %vm669, %v962, 0
      %v1012 = vsel %vm718, %v215, 0
      %1014 = vmatprep.subr.bf16.mxu0 0
      %1015 = vmatpush1.bf16.msra.mxu0 0
      %1016 = vmatprep.subr.bf16.mxu0 0
      %1017 = vmatpush1.bf16.msra.mxu0 0
      %1018 = vmatprep.subr.bf16.mxu0 0
      %1019 = vmatpush1.bf16.msra.mxu0 0
      %1020 = vmatprep.subr.bf16.mxu0 0
      %1021 = vmatpush1.bf16.msra.mxu0 0
      %1022 = vmatprep.subr.bf16.mxu0 0
      %1023 = vmatpush1.bf16.msra.mxu0 0
      %1024 = vmatprep.subr.bf16.mxu0 0
      %1025 = vmatpush1.bf16.msra.mxu0 0
      %1026 = vmatprep.subr.bf16.mxu0 0
      %1027 = vmatpush1.bf16.msra.mxu0 0
      %1028 = vmatprep.subr.bf16.mxu0 0
      %1029 = vmatpush1.bf16.msra.mxu0 %v1012
      %1030 = vmatprep.subr.bf16.mxu0 0
      %1031 = vmatpush2.bf16.msra.mxu0 0
      %1032 = vmatprep.subr.bf16.mxu0 0
      %1033 = vmatpush2.bf16.msra.mxu0 0
      %1034 = vmatprep.subr.bf16.mxu0 0
      %1035 = vmatpush2.bf16.msra.mxu0 0
      %1036 = vmatprep.subr.bf16.mxu0 0
      %1037 = vmatpush2.bf16.msra.mxu0 0
      %1038 = vmatprep.subr.bf16.mxu0 0
      %1039 = vmatpush2.bf16.msra.mxu0 0
      %1040 = vmatprep.subr.bf16.mxu0 0
      %1041 = vmatpush2.bf16.msra.mxu0 0
      %1042 = vmatprep.subr.bf16.mxu0 0
      %1043 = vmatpush2.bf16.msra.mxu0 0
      %1044 = vmatprep.subr.bf16.mxu0 0
      %1045 = vmatpush2.bf16.msra.mxu0 0
      %1046 = vmatprep.mubr.bf16.mxu0 0
      %1047 = vmatmul.mubr.bf16.gmra.mxu0 %v964
      %v1048 = vpop.f32.mrf.mxu0
      %v1049 = vadd.f32 %v757, %v1048
      %v1050 = vpop.f32.mrf.mxu0
      %v1051 = vpop.f32.mrf.mxu0
      %v1052 = vadd.f32 %v760, %v1051
      %v1053 = vpop.f32.mrf.mxu0
      %1054 = vmatprep.mubr.bf16.mxu0 0
      %1055 = vmatmul.mubr.bf16.gmra.mxu0 %v967
      %v1056 = vpop.f32.mrf.mxu0
      %v1057 = vadd.f32 %v765, %v1056
      %v1058 = vpop.f32.mrf.mxu0
      %v1059 = vpop.f32.mrf.mxu0
      %v1060 = vadd.f32 %v768, %v1059
      %v1061 = vpop.f32.mrf.mxu0
      %1062 = vmatprep.mubr.bf16.mxu0 0
      %1063 = vmatmul.mubr.bf16.gmra.mxu0 %v970
      %v1064 = vpop.f32.mrf.mxu0
      %v1065 = vadd.f32 %v773, %v1064
      %v1066 = vpop.f32.mrf.mxu0
      %v1067 = vpop.f32.mrf.mxu0
      %v1068 = vadd.f32 %v776, %v1067
      %v1069 = vpop.f32.mrf.mxu0
      %1070 = vmatprep.mubr.bf16.mxu0 0
      %1071 = vmatmul.mubr.bf16.gmra.mxu0 %v973
      %v1072 = vpop.f32.mrf.mxu0
      %v1073 = vadd.f32 %v781, %v1072
      %v1074 = vpop.f32.mrf.mxu0
      %v1075 = vpop.f32.mrf.mxu0
      %v1076 = vadd.f32 %v784, %v1075
      %v1077 = vpop.f32.mrf.mxu0
      %1078 = vmatprep.mubr.bf16.mxu0 0
      %1079 = vmatmul.mubr.bf16.gmra.mxu0 %v976
      %v1080 = vpop.f32.mrf.mxu0
      %v1081 = vadd.f32 %v789, %v1080
      %v1082 = vpop.f32.mrf.mxu0
      %v1083 = vpop.f32.mrf.mxu0
      %v1084 = vadd.f32 %v792, %v1083
      %v1085 = vpop.f32.mrf.mxu0
      %1086 = vmatprep.mubr.bf16.mxu0 0
      %1087 = vmatmul.mubr.bf16.gmra.mxu0 %v979
      %v1088 = vpop.f32.mrf.mxu0
      %v1089 = vadd.f32 %v797, %v1088
      %v1090 = vpop.f32.mrf.mxu0
      %v1091 = vpop.f32.mrf.mxu0
      %v1092 = vadd.f32 %v800, %v1091
      %v1093 = vpop.f32.mrf.mxu0
      %1094 = vmatprep.mubr.bf16.mxu0 0
      %1095 = vmatmul.mubr.bf16.gmra.mxu0 %v982
      %v1096 = vpop.f32.mrf.mxu0
      %v1097 = vadd.f32 %v805, %v1096
      %v1098 = vpop.f32.mrf.mxu0
      %v1099 = vpop.f32.mrf.mxu0
      %v1100 = vadd.f32 %v808, %v1099
      %v1101 = vpop.f32.mrf.mxu0
      %1102 = vmatprep.mubr.bf16.mxu0 0
      %1103 = vmatmul.mubr.bf16.gmra.mxu0 %v985
      %v1104 = vpop.f32.mrf.mxu0
      %v1105 = vadd.f32 %v813, %v1104
      %v1106 = vpop.f32.mrf.mxu0
      %v1107 = vpop.f32.mrf.mxu0
      %v1108 = vadd.f32 %v816, %v1107
      %v1109 = vpop.f32.mrf.mxu0
      %1110 = vmatprep.mubr.bf16.mxu0 0
      %1111 = vmatmul.mubr.bf16.gmra.mxu0 %v988
      %v1112 = vpop.f32.mrf.mxu0
      %v1113 = vadd.f32 %v821, %v1112
      %v1114 = vpop.f32.mrf.mxu0
      %v1115 = vpop.f32.mrf.mxu0
      %v1116 = vadd.f32 %v824, %v1115
      %v1117 = vpop.f32.mrf.mxu0
      %1118 = vmatprep.mubr.bf16.mxu0 0
      %1119 = vmatmul.mubr.bf16.gmra.mxu0 %v991
      %v1120 = vpop.f32.mrf.mxu0
      %v1121 = vadd.f32 %v829, %v1120
      %v1122 = vpop.f32.mrf.mxu0
      %v1123 = vpop.f32.mrf.mxu0
      %v1124 = vadd.f32 %v832, %v1123
      %v1125 = vpop.f32.mrf.mxu0
      %1126 = vmatprep.mubr.bf16.mxu0 0
      %1127 = vmatmul.mubr.bf16.gmra.mxu0 %v994
      %v1128 = vpop.f32.mrf.mxu0
      %v1129 = vadd.f32 %v837, %v1128
      %v1130 = vpop.f32.mrf.mxu0
      %v1131 = vpop.f32.mrf.mxu0
      %v1132 = vadd.f32 %v840, %v1131
      %v1133 = vpop.f32.mrf.mxu0
      %1134 = vmatprep.mubr.bf16.mxu0 0
      %1135 = vmatmul.mubr.bf16.gmra.mxu0 %v997
      %v1136 = vpop.f32.mrf.mxu0
      %v1137 = vadd.f32 %v845, %v1136
      %v1138 = vpop.f32.mrf.mxu0
      %v1139 = vpop.f32.mrf.mxu0
      %v1140 = vadd.f32 %v848, %v1139
      %v1141 = vpop.f32.mrf.mxu0
      %1142 = vmatprep.mubr.bf16.mxu0 0
      %1143 = vmatmul.mubr.bf16.gmra.mxu0 %v1000
      %v1144 = vpop.f32.mrf.mxu0
      %v1145 = vadd.f32 %v853, %v1144
      %v1146 = vpop.f32.mrf.mxu0
      %v1147 = vpop.f32.mrf.mxu0
      %v1148 = vadd.f32 %v856, %v1147
      %v1149 = vpop.f32.mrf.mxu0
      %1150 = vmatprep.mubr.bf16.mxu0 0
      %1151 = vmatmul.mubr.bf16.gmra.mxu0 %v1003
      %v1152 = vpop.f32.mrf.mxu0
      %v1153 = vadd.f32 %v861, %v1152
      %v1154 = vpop.f32.mrf.mxu0
      %v1155 = vpop.f32.mrf.mxu0
      %v1156 = vadd.f32 %v864, %v1155
      %v1157 = vpop.f32.mrf.mxu0
      %1158 = vmatprep.mubr.bf16.mxu0 0
      %1159 = vmatmul.mubr.bf16.gmra.mxu0 %v1006
      %v1160 = vpop.f32.mrf.mxu0
      %v1161 = vadd.f32 %v869, %v1160
      %v1162 = vpop.f32.mrf.mxu0
      %v1163 = vpop.f32.mrf.mxu0
      %v1164 = vadd.f32 %v872, %v1163
      %v1165 = vpop.f32.mrf.mxu0
      %1166 = vmatprep.mubr.bf16.mxu0 0
      %1167 = vmatmul.mubr.bf16.gmra.mxu0 %v1009
      %v1168 = vpop.f32.mrf.mxu0
      %v1169 = vadd.f32 %v877, %v1168
      %v1170 = vpop.f32.mrf.mxu0
      %v1171 = vpop.f32.mrf.mxu0
      %v1172 = vadd.f32 %v880, %v1171
      %v1173 = vpop.f32.mrf.mxu0
      %1174 = vdwg.mxu0
      %v1175 = vld [vmem:[%s172] sm:$0xe]
      %v1176 = vld [vmem:[%s172 + $0xc] sm:$0xe]
      %v1177 = vld [vmem:[%s172 + $0x18] sm:$0xe]
      %v1178 = vld [vmem:[%s172 + $0x24] sm:$0xe]
      %v1179 = vld [vmem:[%s172 + $0x30] sm:$0xe]
      %v1180 = vld [vmem:[%s172 + $0x3c] sm:$0xe]
      %v1181 = vld [vmem:[%s172 + $0x48] sm:$0xe]
      %v1182 = vld [vmem:[%s172 + $0x54] sm:$0xe]
      %v1183 = vld [vmem:[%s172 + $0x60] sm:$0xe]
      %v1184 = vld [vmem:[%s172 + $0x6c] sm:$0xe]
      %v1185 = vld [vmem:[%s172 + $0x78] sm:$0xe]
      %v1186 = vld [vmem:[%s172 + $0x84] sm:$0xe]
      %v1187 = vld [vmem:[%s172 + $0x90] sm:$0xe]
      %v1188 = vld [vmem:[%s172 + $0x9c] sm:$0xe]
      %v1189 = vld [vmem:[%s172 + $0xa8] sm:$0xe]
      %v1190 = vld [vmem:[%s172 + $0xb4] sm:$0xe]
      %vm1223 = vcmask 1042432
      %vm1224 = vcmask 1046532
      %vm1225 = vmor %vm1223, %vm1224
      %v1226 = vrot.slane %v1175, 5
      %v1227 = vrot.slane %v1226, 4
      %v1228 = vrot.slane %v184, 5
      %v1229 = vsel %vm1225, %v1227, %v1228
      %v1230 = vrot.slane %v1228, 4
      %v1231 = vrot.slane %v216, 5
      %v1232 = vsel %vm1225, %v1230, %v1231
      %v1233 = vrot.slane %v1176, 5
      %v1234 = vrot.slane %v1233, 4
      %v1235 = vrot.slane %v186, 5
      %v1236 = vsel %vm1225, %v1234, %v1235
      %v1237 = vrot.slane %v1235, 4
      %v1238 = vrot.slane %v217, 5
      %v1239 = vsel %vm1225, %v1237, %v1238
      %v1240 = vrot.slane %v1177, 5
      %v1241 = vrot.slane %v1240, 4
      %v1242 = vrot.slane %v188, 5
      %v1243 = vsel %vm1225, %v1241, %v1242
      %v1244 = vrot.slane %v1242, 4
      %v1245 = vrot.slane %v218, 5
      %v1246 = vsel %vm1225, %v1244, %v1245
      %v1247 = vrot.slane %v1178, 5
      %v1248 = vrot.slane %v1247, 4
      %v1249 = vrot.slane %v190, 5
      %v1250 = vsel %vm1225, %v1248, %v1249
      %v1251 = vrot.slane %v1249, 4
      %v1252 = vrot.slane %v219, 5
      %v1253 = vsel %vm1225, %v1251, %v1252
      %v1254 = vrot.slane %v1179, 5
      %v1255 = vrot.slane %v1254, 4
      %v1256 = vrot.slane %v192, 5
      %v1257 = vsel %vm1225, %v1255, %v1256
      %v1258 = vrot.slane %v1256, 4
      %v1259 = vrot.slane %v220, 5
      %v1260 = vsel %vm1225, %v1258, %v1259
      %v1261 = vrot.slane %v1180, 5
      %v1262 = vrot.slane %v1261, 4
      %v1263 = vrot.slane %v194, 5
      %v1264 = vsel %vm1225, %v1262, %v1263
      %v1265 = vrot.slane %v1263, 4
      %v1266 = vrot.slane %v221, 5
      %v1267 = vsel %vm1225, %v1265, %v1266
      %v1268 = vrot.slane %v1181, 5
      %v1269 = vrot.slane %v1268, 4
      %v1270 = vrot.slane %v196, 5
      %v1271 = vsel %vm1225, %v1269, %v1270
      %v1272 = vrot.slane %v1270, 4
      %v1273 = vrot.slane %v222, 5
      %v1274 = vsel %vm1225, %v1272, %v1273
      %v1275 = vrot.slane %v1182, 5
      %v1276 = vrot.slane %v1275, 4
      %v1277 = vrot.slane %v198, 5
      %v1278 = vsel %vm1225, %v1276, %v1277
      %v1279 = vrot.slane %v1277, 4
      %v1280 = vrot.slane %v223, 5
      %v1281 = vsel %vm1225, %v1279, %v1280
      %v1282 = vrot.slane %v1183, 5
      %v1283 = vrot.slane %v1282, 4
      %v1284 = vrot.slane %v200, 5
      %v1285 = vsel %vm1225, %v1283, %v1284
      %v1286 = vrot.slane %v1284, 4
      %v1287 = vrot.slane %v224, 5
      %v1288 = vsel %vm1225, %v1286, %v1287
      %v1289 = vrot.slane %v1184, 5
      %v1290 = vrot.slane %v1289, 4
      %v1291 = vrot.slane %v202, 5
      %v1292 = vsel %vm1225, %v1290, %v1291
      %v1293 = vrot.slane %v1291, 4
      %v1294 = vrot.slane %v225, 5
      %v1295 = vsel %vm1225, %v1293, %v1294
      %v1296 = vrot.slane %v1185, 5
      %v1297 = vrot.slane %v1296, 4
      %v1298 = vrot.slane %v204, 5
      %v1299 = vsel %vm1225, %v1297, %v1298
      %v1300 = vrot.slane %v1298, 4
      %v1301 = vrot.slane %v226, 5
      %v1302 = vsel %vm1225, %v1300, %v1301
      %v1303 = vrot.slane %v1186, 5
      %v1304 = vrot.slane %v1303, 4
      %v1305 = vrot.slane %v206, 5
      %v1306 = vsel %vm1225, %v1304, %v1305
      %v1307 = vrot.slane %v1305, 4
      %v1308 = vrot.slane %v227, 5
      %v1309 = vsel %vm1225, %v1307, %v1308
      %v1310 = vrot.slane %v1187, 5
      %v1311 = vrot.slane %v1310, 4
      %v1312 = vrot.slane %v208, 5
      %v1313 = vsel %vm1225, %v1311, %v1312
      %v1314 = vrot.slane %v1312, 4
      %v1315 = vrot.slane %v228, 5
      %v1316 = vsel %vm1225, %v1314, %v1315
      %v1317 = vrot.slane %v1188, 5
      %v1318 = vrot.slane %v1317, 4
      %v1319 = vrot.slane %v210, 5
      %v1320 = vsel %vm1225, %v1318, %v1319
      %v1321 = vrot.slane %v1319, 4
      %v1322 = vrot.slane %v229, 5
      %v1323 = vsel %vm1225, %v1321, %v1322
      %v1324 = vrot.slane %v1189, 5
      %v1325 = vrot.slane %v1324, 4
      %v1326 = vrot.slane %v212, 5
      %v1327 = vsel %vm1225, %v1325, %v1326
      %v1328 = vrot.slane %v1326, 4
      %v1329 = vrot.slane %v230, 5
      %v1330 = vsel %vm1225, %v1328, %v1329
      %v1331 = vrot.slane %v1190, 5
      %v1332 = vrot.slane %v1331, 4
      %v1333 = vrot.slane %v214, 5
      %v1334 = vsel %vm1225, %v1332, %v1333
      %v1335 = vrot.slane %v1333, 4
      %v1336 = vrot.slane %v231, 5
      %v1337 = vsel %vm1225, %v1335, %v1336
      %s1338 = scalar_lea.vmem %s1, 4
      %v1339 = vld [vmem:[%s1338] sm:$0x3]
      %v1340 = vunpack.c.l.b16 %v1229
      %v1341 = vunpack.c.l.b16 %v1232
      %v1342 = vunpack.c.l.b16 %v1236
      %v1343 = vunpack.c.l.b16 %v1239
      %v1344 = vunpack.c.l.b16 %v1243
      %v1345 = vunpack.c.l.b16 %v1246
      %v1346 = vunpack.c.l.b16 %v1250
      %v1347 = vunpack.c.l.b16 %v1253
      %v1348 = vunpack.c.l.b16 %v1257
      %v1349 = vunpack.c.l.b16 %v1260
      %v1350 = vunpack.c.l.b16 %v1264
      %v1351 = vunpack.c.l.b16 %v1267
      %v1352 = vunpack.c.l.b16 %v1271
      %v1353 = vunpack.c.l.b16 %v1274
      %v1354 = vunpack.c.l.b16 %v1278
      %v1355 = vunpack.c.l.b16 %v1281
      %v1356 = vunpack.c.l.b16 %v1285
      %v1357 = vunpack.c.l.b16 %v1288
      %v1358 = vunpack.c.l.b16 %v1292
      %v1359 = vunpack.c.l.b16 %v1295
      %v1360 = vunpack.c.l.b16 %v1299
      %v1361 = vunpack.c.l.b16 %v1302
      %v1362 = vunpack.c.l.b16 %v1306
      %v1363 = vunpack.c.l.b16 %v1309
      %v1364 = vunpack.c.l.b16 %v1313
      %v1365 = vunpack.c.l.b16 %v1316
      %v1366 = vunpack.c.l.b16 %v1320
      %v1367 = vunpack.c.l.b16 %v1323
      %v1368 = vunpack.c.l.b16 %v1327
      %v1369 = vunpack.c.l.b16 %v1330
      %v1370 = vunpack.c.l.b16 %v1334
      %v1371 = vunpack.c.l.b16 %v1337
      %v1372 = vpack.c.b16 %v1341, %v1340
      %v1373 = vpack.c.b16 %v1343, %v1342
      %v1374 = vpack.c.b16 %v1345, %v1344
      %v1375 = vpack.c.b16 %v1347, %v1346
      %v1376 = vpack.c.b16 %v1349, %v1348
      %v1377 = vpack.c.b16 %v1351, %v1350
      %v1378 = vpack.c.b16 %v1353, %v1352
      %v1379 = vpack.c.b16 %v1355, %v1354
      %v1380 = vpack.c.b16 %v1357, %v1356
      %v1381 = vpack.c.b16 %v1359, %v1358
      %v1382 = vpack.c.b16 %v1361, %v1360
      %v1383 = vpack.c.b16 %v1363, %v1362
      %v1384 = vpack.c.b16 %v1365, %v1364
      %v1385 = vpack.c.b16 %v1367, %v1366
      %v1386 = vpack.c.b16 %v1369, %v1368
      %v1387 = vpack.c.b16 %v1371, %v1370
      %v1389 = vsel %vm669, %v1372, 0
      %v1392 = vsel %vm669, %v1373, 0
      %v1395 = vsel %vm669, %v1374, 0
      %v1398 = vsel %vm669, %v1375, 0
      %v1401 = vsel %vm669, %v1376, 0
      %v1404 = vsel %vm669, %v1377, 0
      %v1407 = vsel %vm669, %v1378, 0
      %v1410 = vsel %vm669, %v1379, 0
      %v1413 = vsel %vm669, %v1380, 0
      %v1416 = vsel %vm669, %v1381, 0
      %v1419 = vsel %vm669, %v1382, 0
      %v1422 = vsel %vm669, %v1383, 0
      %v1425 = vsel %vm669, %v1384, 0
      %v1428 = vsel %vm669, %v1385, 0
      %v1431 = vsel %vm669, %v1386, 0
      %v1434 = vsel %vm669, %v1387, 0
      %v1437 = vsel %vm718, %v1339, 0
      %1439 = vmatprep.subr.bf16.mxu0 0
      %1440 = vmatpush1.bf16.msra.mxu0 0
      %1441 = vmatprep.subr.bf16.mxu0 0
      %1442 = vmatpush1.bf16.msra.mxu0 0
      %1443 = vmatprep.subr.bf16.mxu0 0
      %1444 = vmatpush1.bf16.msra.mxu0 0
      %1445 = vmatprep.subr.bf16.mxu0 0
      %1446 = vmatpush1.bf16.msra.mxu0 0
      %1447 = vmatprep.subr.bf16.mxu0 0
      %1448 = vmatpush1.bf16.msra.mxu0 0
      %1449 = vmatprep.subr.bf16.mxu0 0
      %1450 = vmatpush1.bf16.msra.mxu0 0
      %1451 = vmatprep.subr.bf16.mxu0 0
      %1452 = vmatpush1.bf16.msra.mxu0 0
      %1453 = vmatprep.subr.bf16.mxu0 0
      %1454 = vmatpush1.bf16.msra.mxu0 %v1437
      %1455 = vmatprep.subr.bf16.mxu0 0
      %1456 = vmatpush2.bf16.msra.mxu0 0
      %1457 = vmatprep.subr.bf16.mxu0 0
      %1458 = vmatpush2.bf16.msra.mxu0 0
      %1459 = vmatprep.subr.bf16.mxu0 0
      %1460 = vmatpush2.bf16.msra.mxu0 0
      %1461 = vmatprep.subr.bf16.mxu0 0
      %1462 = vmatpush2.bf16.msra.mxu0 0
      %1463 = vmatprep.subr.bf16.mxu0 0
      %1464 = vmatpush2.bf16.msra.mxu0 0
      %1465 = vmatprep.subr.bf16.mxu0 0
      %1466 = vmatpush2.bf16.msra.mxu0 0
      %1467 = vmatprep.subr.bf16.mxu0 0
      %1468 = vmatpush2.bf16.msra.mxu0 0
      %1469 = vmatprep.subr.bf16.mxu0 0
      %1470 = vmatpush2.bf16.msra.mxu0 0
      %1471 = vmatprep.mubr.bf16.mxu0 0
      %1472 = vmatmul.mubr.bf16.gmra.mxu0 %v1389
      %v1473 = vpop.f32.mrf.mxu0
      %v1474 = vadd.f32 0.0, %v1473
      %v1475 = vpop.f32.mrf.mxu0
      %v1476 = vpop.f32.mrf.mxu0
      %v1477 = vadd.f32 0.0, %v1476
      %v1478 = vpop.f32.mrf.mxu0
      %1479 = vmatprep.mubr.bf16.mxu0 0
      %1480 = vmatmul.mubr.bf16.gmra.mxu0 %v1392
      %v1481 = vpop.f32.mrf.mxu0
      %v1482 = vadd.f32 0.0, %v1481
      %v1483 = vpop.f32.mrf.mxu0
      %v1484 = vpop.f32.mrf.mxu0
      %v1485 = vadd.f32 0.0, %v1484
      %v1486 = vpop.f32.mrf.mxu0
      %1487 = vmatprep.mubr.bf16.mxu0 0
      %1488 = vmatmul.mubr.bf16.gmra.mxu0 %v1395
      %v1489 = vpop.f32.mrf.mxu0
      %v1490 = vadd.f32 0.0, %v1489
      %v1491 = vpop.f32.mrf.mxu0
      %v1492 = vpop.f32.mrf.mxu0
      %v1493 = vadd.f32 0.0, %v1492
      %v1494 = vpop.f32.mrf.mxu0
      %1495 = vmatprep.mubr.bf16.mxu0 0
      %1496 = vmatmul.mubr.bf16.gmra.mxu0 %v1398
      %v1497 = vpop.f32.mrf.mxu0
      %v1498 = vadd.f32 0.0, %v1497
      %v1499 = vpop.f32.mrf.mxu0
      %v1500 = vpop.f32.mrf.mxu0
      %v1501 = vadd.f32 0.0, %v1500
      %v1502 = vpop.f32.mrf.mxu0
      %1503 = vmatprep.mubr.bf16.mxu0 0
      %1504 = vmatmul.mubr.bf16.gmra.mxu0 %v1401
      %v1505 = vpop.f32.mrf.mxu0
      %v1506 = vadd.f32 0.0, %v1505
      %v1507 = vpop.f32.mrf.mxu0
      %v1508 = vpop.f32.mrf.mxu0
      %v1509 = vadd.f32 0.0, %v1508
      %v1510 = vpop.f32.mrf.mxu0
      %1511 = vmatprep.mubr.bf16.mxu0 0
      %1512 = vmatmul.mubr.bf16.gmra.mxu0 %v1404
      %v1513 = vpop.f32.mrf.mxu0
      %v1514 = vadd.f32 0.0, %v1513
      %v1515 = vpop.f32.mrf.mxu0
      %v1516 = vpop.f32.mrf.mxu0
      %v1517 = vadd.f32 0.0, %v1516
      %v1518 = vpop.f32.mrf.mxu0
      %1519 = vmatprep.mubr.bf16.mxu0 0
      %1520 = vmatmul.mubr.bf16.gmra.mxu0 %v1407
      %v1521 = vpop.f32.mrf.mxu0
      %v1522 = vadd.f32 0.0, %v1521
      %v1523 = vpop.f32.mrf.mxu0
      %v1524 = vpop.f32.mrf.mxu0
      %v1525 = vadd.f32 0.0, %v1524
      %v1526 = vpop.f32.mrf.mxu0
      %1527 = vmatprep.mubr.bf16.mxu0 0
      %1528 = vmatmul.mubr.bf16.gmra.mxu0 %v1410
      %v1529 = vpop.f32.mrf.mxu0
      %v1530 = vadd.f32 0.0, %v1529
      %v1531 = vpop.f32.mrf.mxu0
      %v1532 = vpop.f32.mrf.mxu0
      %v1533 = vadd.f32 0.0, %v1532
      %v1534 = vpop.f32.mrf.mxu0
      %1535 = vmatprep.mubr.bf16.mxu0 0
      %1536 = vmatmul.mubr.bf16.gmra.mxu0 %v1413
      %v1537 = vpop.f32.mrf.mxu0
      %v1538 = vadd.f32 0.0, %v1537
      %v1539 = vpop.f32.mrf.mxu0
      %v1540 = vpop.f32.mrf.mxu0
      %v1541 = vadd.f32 0.0, %v1540
      %v1542 = vpop.f32.mrf.mxu0
      %1543 = vmatprep.mubr.bf16.mxu0 0
      %1544 = vmatmul.mubr.bf16.gmra.mxu0 %v1416
      %v1545 = vpop.f32.mrf.mxu0
      %v1546 = vadd.f32 0.0, %v1545
      %v1547 = vpop.f32.mrf.mxu0
      %v1548 = vpop.f32.mrf.mxu0
      %v1549 = vadd.f32 0.0, %v1548
      %v1550 = vpop.f32.mrf.mxu0
      %1551 = vmatprep.mubr.bf16.mxu0 0
      %1552 = vmatmul.mubr.bf16.gmra.mxu0 %v1419
      %v1553 = vpop.f32.mrf.mxu0
      %v1554 = vadd.f32 0.0, %v1553
      %v1555 = vpop.f32.mrf.mxu0
      %v1556 = vpop.f32.mrf.mxu0
      %v1557 = vadd.f32 0.0, %v1556
      %v1558 = vpop.f32.mrf.mxu0
      %1559 = vmatprep.mubr.bf16.mxu0 0
      %1560 = vmatmul.mubr.bf16.gmra.mxu0 %v1422
      %v1561 = vpop.f32.mrf.mxu0
      %v1562 = vadd.f32 0.0, %v1561
      %v1563 = vpop.f32.mrf.mxu0
      %v1564 = vpop.f32.mrf.mxu0
      %v1565 = vadd.f32 0.0, %v1564
      %v1566 = vpop.f32.mrf.mxu0
      %1567 = vmatprep.mubr.bf16.mxu0 0
      %1568 = vmatmul.mubr.bf16.gmra.mxu0 %v1425
      %v1569 = vpop.f32.mrf.mxu0
      %v1570 = vadd.f32 0.0, %v1569
      %v1571 = vpop.f32.mrf.mxu0
      %v1572 = vpop.f32.mrf.mxu0
      %v1573 = vadd.f32 0.0, %v1572
      %v1574 = vpop.f32.mrf.mxu0
      %1575 = vmatprep.mubr.bf16.mxu0 0
      %1576 = vmatmul.mubr.bf16.gmra.mxu0 %v1428
      %v1577 = vpop.f32.mrf.mxu0
      %v1578 = vadd.f32 0.0, %v1577
      %v1579 = vpop.f32.mrf.mxu0
      %v1580 = vpop.f32.mrf.mxu0
      %v1581 = vadd.f32 0.0, %v1580
      %v1582 = vpop.f32.mrf.mxu0
      %1583 = vmatprep.mubr.bf16.mxu0 0
      %1584 = vmatmul.mubr.bf16.gmra.mxu0 %v1431
      %v1585 = vpop.f32.mrf.mxu0
      %v1586 = vadd.f32 0.0, %v1585
      %v1587 = vpop.f32.mrf.mxu0
      %v1588 = vpop.f32.mrf.mxu0
      %v1589 = vadd.f32 0.0, %v1588
      %v1590 = vpop.f32.mrf.mxu0
      %1591 = vmatprep.mubr.bf16.mxu0 0
      %1592 = vmatmul.mubr.bf16.gmra.mxu0 %v1434
      %v1593 = vpop.f32.mrf.mxu0
      %v1594 = vadd.f32 0.0, %v1593
      %v1595 = vpop.f32.mrf.mxu0
      %v1596 = vpop.f32.mrf.mxu0
      %v1597 = vadd.f32 0.0, %v1596
      %v1598 = vpop.f32.mrf.mxu0
      %1599 = vdwg.mxu0
      %v1600 = vadd.f32 %v1049, %v1474
      %v1601 = vadd.f32 %v1052, %v1477
      %v1602 = vadd.f32 %v1057, %v1482
      %v1603 = vadd.f32 %v1060, %v1485
      %v1604 = vadd.f32 %v1065, %v1490
      %v1605 = vadd.f32 %v1068, %v1493
      %v1606 = vadd.f32 %v1073, %v1498
      %v1607 = vadd.f32 %v1076, %v1501
      %v1608 = vadd.f32 %v1081, %v1506
      %v1609 = vadd.f32 %v1084, %v1509
      %v1610 = vadd.f32 %v1089, %v1514
      %v1611 = vadd.f32 %v1092, %v1517
      %v1612 = vadd.f32 %v1097, %v1522
      %v1613 = vadd.f32 %v1100, %v1525
      %v1614 = vadd.f32 %v1105, %v1530
      %v1615 = vadd.f32 %v1108, %v1533
      %v1616 = vadd.f32 %v1113, %v1538
      %v1617 = vadd.f32 %v1116, %v1541
      %v1618 = vadd.f32 %v1121, %v1546
      %v1619 = vadd.f32 %v1124, %v1549
      %v1620 = vadd.f32 %v1129, %v1554
      %v1621 = vadd.f32 %v1132, %v1557
      %v1622 = vadd.f32 %v1137, %v1562
      %v1623 = vadd.f32 %v1140, %v1565
      %v1624 = vadd.f32 %v1145, %v1570
      %v1625 = vadd.f32 %v1148, %v1573
      %v1626 = vadd.f32 %v1153, %v1578
      %v1627 = vadd.f32 %v1156, %v1581
      %v1628 = vadd.f32 %v1161, %v1586
      %v1629 = vadd.f32 %v1164, %v1589
      %v1630 = vadd.f32 %v1169, %v1594
      %v1631 = vadd.f32 %v1172, %v1597
      %s1632 = scalar_lea.vmem %s172, 12
      %v1633 = vld [vmem:[%s1632] sm:$0xf]
      %v1634 = vld [vmem:[%s1632 + $0x4] sm:$0xf]
      %v1635 = vld [vmem:[%s1632 + $0xc] sm:$0xf]
      %v1636 = vld [vmem:[%s1632 + $0x10] sm:$0xf]
      %v1637 = vld [vmem:[%s1632 + $0x18] sm:$0xf]
      %v1638 = vld [vmem:[%s1632 + $0x1c] sm:$0xf]
      %v1639 = vld [vmem:[%s1632 + $0x24] sm:$0xf]
      %v1640 = vld [vmem:[%s1632 + $0x28] sm:$0xf]
      %v1641 = vld [vmem:[%s1632 + $0x30] sm:$0xf]
      %v1642 = vld [vmem:[%s1632 + $0x34] sm:$0xf]
      %v1643 = vld [vmem:[%s1632 + $0x3c] sm:$0xf]
      %v1644 = vld [vmem:[%s1632 + $0x40] sm:$0xf]
      %v1645 = vld [vmem:[%s1632 + $0x48] sm:$0xf]
      %v1646 = vld [vmem:[%s1632 + $0x4c] sm:$0xf]
      %v1647 = vld [vmem:[%s1632 + $0x54] sm:$0xf]
      %v1648 = vld [vmem:[%s1632 + $0x58] sm:$0xf]
      %v1649 = vld [vmem:[%s1632 + $0x60] sm:$0xf]
      %v1650 = vld [vmem:[%s1632 + $0x64] sm:$0xf]
      %v1651 = vld [vmem:[%s1632 + $0x6c] sm:$0xf]
      %v1652 = vld [vmem:[%s1632 + $0x70] sm:$0xf]
      %v1653 = vld [vmem:[%s1632 + $0x78] sm:$0xf]
      %v1654 = vld [vmem:[%s1632 + $0x7c] sm:$0xf]
      %v1655 = vld [vmem:[%s1632 + $0x84] sm:$0xf]
      %v1656 = vld [vmem:[%s1632 + $0x88] sm:$0xf]
      %v1657 = vld [vmem:[%s1632 + $0x90] sm:$0xf]
      %v1658 = vld [vmem:[%s1632 + $0x94] sm:$0xf]
      %v1659 = vld [vmem:[%s1632 + $0x9c] sm:$0xf]
      %v1660 = vld [vmem:[%s1632 + $0xa0] sm:$0xf]
      %v1661 = vld [vmem:[%s1632 + $0xa8] sm:$0xf]
      %v1662 = vld [vmem:[%s1632 + $0xac] sm:$0xf]
      %v1663 = vld [vmem:[%s1632 + $0xb4] sm:$0xf]
      %v1664 = vld [vmem:[%s1632 + $0xb8] sm:$0xf]
      %s1665 = scalar_lea.vmem %s1, 6
      %v1666 = vld [vmem:[%s1665] sm:$0x3]
      %v1699 = vunpack.c.l.b16 %v1633
      %v1700 = vunpack.c.l.b16 %v1634
      %v1701 = vunpack.c.l.b16 %v1635
      %v1702 = vunpack.c.l.b16 %v1636
      %v1703 = vunpack.c.l.b16 %v1637
      %v1704 = vunpack.c.l.b16 %v1638
      %v1705 = vunpack.c.l.b16 %v1639
      %v1706 = vunpack.c.l.b16 %v1640
      %v1707 = vunpack.c.l.b16 %v1641
      %v1708 = vunpack.c.l.b16 %v1642
      %v1709 = vunpack.c.l.b16 %v1643
      %v1710 = vunpack.c.l.b16 %v1644
      %v1711 = vunpack.c.l.b16 %v1645
      %v1712 = vunpack.c.l.b16 %v1646
      %v1713 = vunpack.c.l.b16 %v1647
      %v1714 = vunpack.c.l.b16 %v1648
      %v1715 = vunpack.c.l.b16 %v1649
      %v1716 = vunpack.c.l.b16 %v1650
      %v1717 = vunpack.c.l.b16 %v1651
      %v1718 = vunpack.c.l.b16 %v1652
      %v1719 = vunpack.c.l.b16 %v1653
      %v1720 = vunpack.c.l.b16 %v1654
      %v1721 = vunpack.c.l.b16 %v1655
      %v1722 = vunpack.c.l.b16 %v1656
      %v1723 = vunpack.c.l.b16 %v1657
      %v1724 = vunpack.c.l.b16 %v1658
      %v1725 = vunpack.c.l.b16 %v1659
      %v1726 = vunpack.c.l.b16 %v1660
      %v1727 = vunpack.c.l.b16 %v1661
      %v1728 = vunpack.c.l.b16 %v1662
      %v1729 = vunpack.c.l.b16 %v1663
      %v1730 = vunpack.c.l.b16 %v1664
      %v1731 = vpack.c.b16 %v1700, %v1699
      %v1732 = vpack.c.b16 %v1702, %v1701
      %v1733 = vpack.c.b16 %v1704, %v1703
      %v1734 = vpack.c.b16 %v1706, %v1705
      %v1735 = vpack.c.b16 %v1708, %v1707
      %v1736 = vpack.c.b16 %v1710, %v1709
      %v1737 = vpack.c.b16 %v1712, %v1711
      %v1738 = vpack.c.b16 %v1714, %v1713
      %v1739 = vpack.c.b16 %v1716, %v1715
      %v1740 = vpack.c.b16 %v1718, %v1717
      %v1741 = vpack.c.b16 %v1720, %v1719
      %v1742 = vpack.c.b16 %v1722, %v1721
      %v1743 = vpack.c.b16 %v1724, %v1723
      %v1744 = vpack.c.b16 %v1726, %v1725
      %v1745 = vpack.c.b16 %v1728, %v1727
      %v1746 = vpack.c.b16 %v1730, %v1729
      %v1748 = vsel %vm669, %v1731, 0
      %v1751 = vsel %vm669, %v1732, 0
      %v1754 = vsel %vm669, %v1733, 0
      %v1757 = vsel %vm669, %v1734, 0
      %v1760 = vsel %vm669, %v1735, 0
      %v1763 = vsel %vm669, %v1736, 0
      %v1766 = vsel %vm669, %v1737, 0
      %v1769 = vsel %vm669, %v1738, 0
      %v1772 = vsel %vm669, %v1739, 0
      %v1775 = vsel %vm669, %v1740, 0
      %v1778 = vsel %vm669, %v1741, 0
      %v1781 = vsel %vm669, %v1742, 0
      %v1784 = vsel %vm669, %v1743, 0
      %v1787 = vsel %vm669, %v1744, 0
      %v1790 = vsel %vm669, %v1745, 0
      %v1793 = vsel %vm669, %v1746, 0
      %v1796 = vsel %vm718, %v1666, 0
      %1798 = vmatprep.subr.bf16.mxu0 0
      %1799 = vmatpush1.bf16.msra.mxu0 0
      %1800 = vmatprep.subr.bf16.mxu0 0
      %1801 = vmatpush1.bf16.msra.mxu0 0
      %1802 = vmatprep.subr.bf16.mxu0 0
      %1803 = vmatpush1.bf16.msra.mxu0 0
      %1804 = vmatprep.subr.bf16.mxu0 0
      %1805 = vmatpush1.bf16.msra.mxu0 0
      %1806 = vmatprep.subr.bf16.mxu0 0
      %1807 = vmatpush1.bf16.msra.mxu0 0
      %1808 = vmatprep.subr.bf16.mxu0 0
      %1809 = vmatpush1.bf16.msra.mxu0 0
      %1810 = vmatprep.subr.bf16.mxu0 0
      %1811 = vmatpush1.bf16.msra.mxu0 0
      %1812 = vmatprep.subr.bf16.mxu0 0
      %1813 = vmatpush1.bf16.msra.mxu0 %v1796
      %1814 = vmatprep.subr.bf16.mxu0 0
      %1815 = vmatpush2.bf16.msra.mxu0 0
      %1816 = vmatprep.subr.bf16.mxu0 0
      %1817 = vmatpush2.bf16.msra.mxu0 0
      %1818 = vmatprep.subr.bf16.mxu0 0
      %1819 = vmatpush2.bf16.msra.mxu0 0
      %1820 = vmatprep.subr.bf16.mxu0 0
      %1821 = vmatpush2.bf16.msra.mxu0 0
      %1822 = vmatprep.subr.bf16.mxu0 0
      %1823 = vmatpush2.bf16.msra.mxu0 0
      %1824 = vmatprep.subr.bf16.mxu0 0
      %1825 = vmatpush2.bf16.msra.mxu0 0
      %1826 = vmatprep.subr.bf16.mxu0 0
      %1827 = vmatpush2.bf16.msra.mxu0 0
      %1828 = vmatprep.subr.bf16.mxu0 0
      %1829 = vmatpush2.bf16.msra.mxu0 0
      %1830 = vmatprep.mubr.bf16.mxu0 0
      %1831 = vmatmul.mubr.bf16.gmra.mxu0 %v1748
      %v1832 = vpop.f32.mrf.mxu0
      %v1833 = vadd.f32 0.0, %v1832
      %v1834 = vpop.f32.mrf.mxu0
      %v1835 = vpop.f32.mrf.mxu0
      %v1836 = vadd.f32 0.0, %v1835
      %v1837 = vpop.f32.mrf.mxu0
      %1838 = vmatprep.mubr.bf16.mxu0 0
      %1839 = vmatmul.mubr.bf16.gmra.mxu0 %v1751
      %v1840 = vpop.f32.mrf.mxu0
      %v1841 = vadd.f32 0.0, %v1840
      %v1842 = vpop.f32.mrf.mxu0
      %v1843 = vpop.f32.mrf.mxu0
      %v1844 = vadd.f32 0.0, %v1843
      %v1845 = vpop.f32.mrf.mxu0
      %1846 = vmatprep.mubr.bf16.mxu0 0
      %1847 = vmatmul.mubr.bf16.gmra.mxu0 %v1754
      %v1848 = vpop.f32.mrf.mxu0
      %v1849 = vadd.f32 0.0, %v1848
      %v1850 = vpop.f32.mrf.mxu0
      %v1851 = vpop.f32.mrf.mxu0
      %v1852 = vadd.f32 0.0, %v1851
      %v1853 = vpop.f32.mrf.mxu0
      %1854 = vmatprep.mubr.bf16.mxu0 0
      %1855 = vmatmul.mubr.bf16.gmra.mxu0 %v1757
      %v1856 = vpop.f32.mrf.mxu0
      %v1857 = vadd.f32 0.0, %v1856
      %v1858 = vpop.f32.mrf.mxu0
      %v1859 = vpop.f32.mrf.mxu0
      %v1860 = vadd.f32 0.0, %v1859
      %v1861 = vpop.f32.mrf.mxu0
      %1862 = vmatprep.mubr.bf16.mxu0 0
      %1863 = vmatmul.mubr.bf16.gmra.mxu0 %v1760
      %v1864 = vpop.f32.mrf.mxu0
      %v1865 = vadd.f32 0.0, %v1864
      %v1866 = vpop.f32.mrf.mxu0
      %v1867 = vpop.f32.mrf.mxu0
      %v1868 = vadd.f32 0.0, %v1867
      %v1869 = vpop.f32.mrf.mxu0
      %1870 = vmatprep.mubr.bf16.mxu0 0
      %1871 = vmatmul.mubr.bf16.gmra.mxu0 %v1763
      %v1872 = vpop.f32.mrf.mxu0
      %v1873 = vadd.f32 0.0, %v1872
      %v1874 = vpop.f32.mrf.mxu0
      %v1875 = vpop.f32.mrf.mxu0
      %v1876 = vadd.f32 0.0, %v1875
      %v1877 = vpop.f32.mrf.mxu0
      %1878 = vmatprep.mubr.bf16.mxu0 0
      %1879 = vmatmul.mubr.bf16.gmra.mxu0 %v1766
      %v1880 = vpop.f32.mrf.mxu0
      %v1881 = vadd.f32 0.0, %v1880
      %v1882 = vpop.f32.mrf.mxu0
      %v1883 = vpop.f32.mrf.mxu0
      %v1884 = vadd.f32 0.0, %v1883
      %v1885 = vpop.f32.mrf.mxu0
      %1886 = vmatprep.mubr.bf16.mxu0 0
      %1887 = vmatmul.mubr.bf16.gmra.mxu0 %v1769
      %v1888 = vpop.f32.mrf.mxu0
      %v1889 = vadd.f32 0.0, %v1888
      %v1890 = vpop.f32.mrf.mxu0
      %v1891 = vpop.f32.mrf.mxu0
      %v1892 = vadd.f32 0.0, %v1891
      %v1893 = vpop.f32.mrf.mxu0
      %1894 = vmatprep.mubr.bf16.mxu0 0
      %1895 = vmatmul.mubr.bf16.gmra.mxu0 %v1772
      %v1896 = vpop.f32.mrf.mxu0
      %v1897 = vadd.f32 0.0, %v1896
      %v1898 = vpop.f32.mrf.mxu0
      %v1899 = vpop.f32.mrf.mxu0
      %v1900 = vadd.f32 0.0, %v1899
      %v1901 = vpop.f32.mrf.mxu0
      %1902 = vmatprep.mubr.bf16.mxu0 0
      %1903 = vmatmul.mubr.bf16.gmra.mxu0 %v1775
      %v1904 = vpop.f32.mrf.mxu0
      %v1905 = vadd.f32 0.0, %v1904
      %v1906 = vpop.f32.mrf.mxu0
      %v1907 = vpop.f32.mrf.mxu0
      %v1908 = vadd.f32 0.0, %v1907
      %v1909 = vpop.f32.mrf.mxu0
      %1910 = vmatprep.mubr.bf16.mxu0 0
      %1911 = vmatmul.mubr.bf16.gmra.mxu0 %v1778
      %v1912 = vpop.f32.mrf.mxu0
      %v1913 = vadd.f32 0.0, %v1912
      %v1914 = vpop.f32.mrf.mxu0
      %v1915 = vpop.f32.mrf.mxu0
      %v1916 = vadd.f32 0.0, %v1915
      %v1917 = vpop.f32.mrf.mxu0
      %1918 = vmatprep.mubr.bf16.mxu0 0
      %1919 = vmatmul.mubr.bf16.gmra.mxu0 %v1781
      %v1920 = vpop.f32.mrf.mxu0
      %v1921 = vadd.f32 0.0, %v1920
      %v1922 = vpop.f32.mrf.mxu0
      %v1923 = vpop.f32.mrf.mxu0
      %v1924 = vadd.f32 0.0, %v1923
      %v1925 = vpop.f32.mrf.mxu0
      %1926 = vmatprep.mubr.bf16.mxu0 0
      %1927 = vmatmul.mubr.bf16.gmra.mxu0 %v1784
      %v1928 = vpop.f32.mrf.mxu0
      %v1929 = vadd.f32 0.0, %v1928
      %v1930 = vpop.f32.mrf.mxu0
      %v1931 = vpop.f32.mrf.mxu0
      %v1932 = vadd.f32 0.0, %v1931
      %v1933 = vpop.f32.mrf.mxu0
      %1934 = vmatprep.mubr.bf16.mxu0 0
      %1935 = vmatmul.mubr.bf16.gmra.mxu0 %v1787
      %v1936 = vpop.f32.mrf.mxu0
      %v1937 = vadd.f32 0.0, %v1936
      %v1938 = vpop.f32.mrf.mxu0
      %v1939 = vpop.f32.mrf.mxu0
      %v1940 = vadd.f32 0.0, %v1939
      %v1941 = vpop.f32.mrf.mxu0
      %1942 = vmatprep.mubr.bf16.mxu0 0
      %1943 = vmatmul.mubr.bf16.gmra.mxu0 %v1790
      %v1944 = vpop.f32.mrf.mxu0
      %v1945 = vadd.f32 0.0, %v1944
      %v1946 = vpop.f32.mrf.mxu0
      %v1947 = vpop.f32.mrf.mxu0
      %v1948 = vadd.f32 0.0, %v1947
      %v1949 = vpop.f32.mrf.mxu0
      %1950 = vmatprep.mubr.bf16.mxu0 0
      %1951 = vmatmul.mubr.bf16.gmra.mxu0 %v1793
      %v1952 = vpop.f32.mrf.mxu0
      %v1953 = vadd.f32 0.0, %v1952
      %v1954 = vpop.f32.mrf.mxu0
      %v1955 = vpop.f32.mrf.mxu0
      %v1956 = vadd.f32 0.0, %v1955
      %v1957 = vpop.f32.mrf.mxu0
      %1958 = vdwg.mxu0
      %v1959 = vadd.f32 %v1600, %v1833
      %v1960 = vadd.f32 %v1601, %v1836
      %v1961 = vadd.f32 %v1602, %v1841
      %v1962 = vadd.f32 %v1603, %v1844
      %v1963 = vadd.f32 %v1604, %v1849
      %v1964 = vadd.f32 %v1605, %v1852
      %v1965 = vadd.f32 %v1606, %v1857
      %v1966 = vadd.f32 %v1607, %v1860
      %v1967 = vadd.f32 %v1608, %v1865
      %v1968 = vadd.f32 %v1609, %v1868
      %v1969 = vadd.f32 %v1610, %v1873
      %v1970 = vadd.f32 %v1611, %v1876
      %v1971 = vadd.f32 %v1612, %v1881
      %v1972 = vadd.f32 %v1613, %v1884
      %v1973 = vadd.f32 %v1614, %v1889
      %v1974 = vadd.f32 %v1615, %v1892
      %v1975 = vadd.f32 %v1616, %v1897
      %v1976 = vadd.f32 %v1617, %v1900
      %v1977 = vadd.f32 %v1618, %v1905
      %v1978 = vadd.f32 %v1619, %v1908
      %v1979 = vadd.f32 %v1620, %v1913
      %v1980 = vadd.f32 %v1621, %v1916
      %v1981 = vadd.f32 %v1622, %v1921
      %v1982 = vadd.f32 %v1623, %v1924
      %v1983 = vadd.f32 %v1624, %v1929
      %v1984 = vadd.f32 %v1625, %v1932
      %v1985 = vadd.f32 %v1626, %v1937
      %v1986 = vadd.f32 %v1627, %v1940
      %v1987 = vadd.f32 %v1628, %v1945
      %v1988 = vadd.f32 %v1629, %v1948
      %v1989 = vadd.f32 %v1630, %v1953
      %v1990 = vadd.f32 %v1631, %v1956
      %v1991 = vld [vmem:[%s1632] sm:$0xf]
      %v1992 = vld [vmem:[%s1632 + $0x4] sm:$0xf]
      %v1993 = vld [vmem:[%s1632 + $0x8] sm:$0x1]
      %v1994 = vld [vmem:[%s1632 + $0xc] sm:$0xf]
      %v1995 = vld [vmem:[%s1632 + $0x10] sm:$0xf]
      %v1996 = vld [vmem:[%s1632 + $0x14] sm:$0x1]
      %v1997 = vld [vmem:[%s1632 + $0x18] sm:$0xf]
      %v1998 = vld [vmem:[%s1632 + $0x1c] sm:$0xf]
      %v1999 = vld [vmem:[%s1632 + $0x20] sm:$0x1]
      %v2000 = vld [vmem:[%s1632 + $0x24] sm:$0xf]
      %v2001 = vld [vmem:[%s1632 + $0x28] sm:$0xf]
      %v2002 = vld [vmem:[%s1632 + $0x2c] sm:$0x1]
      %v2003 = vld [vmem:[%s1632 + $0x30] sm:$0xf]
      %v2004 = vld [vmem:[%s1632 + $0x34] sm:$0xf]
      %v2005 = vld [vmem:[%s1632 + $0x38] sm:$0x1]
      %v2006 = vld [vmem:[%s1632 + $0x3c] sm:$0xf]
      %v2007 = vld [vmem:[%s1632 + $0x40] sm:$0xf]
      %v2008 = vld [vmem:[%s1632 + $0x44] sm:$0x1]
      %v2009 = vld [vmem:[%s1632 + $0x48] sm:$0xf]
      %v2010 = vld [vmem:[%s1632 + $0x4c] sm:$0xf]
      %v2011 = vld [vmem:[%s1632 + $0x50] sm:$0x1]
      %v2012 = vld [vmem:[%s1632 + $0x54] sm:$0xf]
      %v2013 = vld [vmem:[%s1632 + $0x58] sm:$0xf]
      %v2014 = vld [vmem:[%s1632 + $0x5c] sm:$0x1]
      %v2015 = vld [vmem:[%s1632 + $0x60] sm:$0xf]
      %v2016 = vld [vmem:[%s1632 + $0x64] sm:$0xf]
      %v2017 = vld [vmem:[%s1632 + $0x68] sm:$0x1]
      %v2018 = vld [vmem:[%s1632 + $0x6c] sm:$0xf]
      %v2019 = vld [vmem:[%s1632 + $0x70] sm:$0xf]
      %v2020 = vld [vmem:[%s1632 + $0x74] sm:$0x1]
      %v2021 = vld [vmem:[%s1632 + $0x78] sm:$0xf]
      %v2022 = vld [vmem:[%s1632 + $0x7c] sm:$0xf]
      %v2023 = vld [vmem:[%s1632 + $0x80] sm:$0x1]
      %v2024 = vld [vmem:[%s1632 + $0x84] sm:$0xf]
      %v2025 = vld [vmem:[%s1632 + $0x88] sm:$0xf]
      %v2026 = vld [vmem:[%s1632 + $0x8c] sm:$0x1]
      %v2027 = vld [vmem:[%s1632 + $0x90] sm:$0xf]
      %v2028 = vld [vmem:[%s1632 + $0x94] sm:$0xf]
      %v2029 = vld [vmem:[%s1632 + $0x98] sm:$0x1]
      %v2030 = vld [vmem:[%s1632 + $0x9c] sm:$0xf]
      %v2031 = vld [vmem:[%s1632 + $0xa0] sm:$0xf]
      %v2032 = vld [vmem:[%s1632 + $0xa4] sm:$0x1]
      %v2033 = vld [vmem:[%s1632 + $0xa8] sm:$0xf]
      %v2034 = vld [vmem:[%s1632 + $0xac] sm:$0xf]
      %v2035 = vld [vmem:[%s1632 + $0xb0] sm:$0x1]
      %v2036 = vld [vmem:[%s1632 + $0xb4] sm:$0xf]
      %v2037 = vld [vmem:[%s1632 + $0xb8] sm:$0xf]
      %v2038 = vld [vmem:[%s1632 + $0xbc] sm:$0x1]
      %v2040 = vshrl.u32 %v1991, 16
      %v2042 = vrot.slane %v2040, 4
      %v2043 = vshll.u32 %v1991, 16
      %v2045 = vrot.slane %v2043, 5
      %v2046 = vor.u32 %v2042, %v2045
      %v2047 = vrot.slane %v2046, 4
      %v2049 = vshll.u32 %v1992, 16
      %v2051 = vrot.slane %v2049, 5
      %v2052 = vsel %vm234, %v2047, %v2051
      %v2053 = vshrl.u32 %v1992, 16
      %v2055 = vrot.slane %v2053, 4
      %v2056 = vor.u32 %v2055, %v2051
      %v2057 = vrot.slane %v2056, 4
      %v2059 = vshll.u32 %v1993, 16
      %v2061 = vrot.slane %v2059, 5
      %v2062 = vsel %vm234, %v2057, %v2061
      %v2064 = vshrl.u32 %v1994, 16
      %v2066 = vrot.slane %v2064, 4
      %v2067 = vshll.u32 %v1994, 16
      %v2069 = vrot.slane %v2067, 5
      %v2070 = vor.u32 %v2066, %v2069
      %v2071 = vrot.slane %v2070, 4
      %v2073 = vshll.u32 %v1995, 16
      %v2075 = vrot.slane %v2073, 5
      %v2076 = vsel %vm234, %v2071, %v2075
      %v2077 = vshrl.u32 %v1995, 16
      %v2079 = vrot.slane %v2077, 4
      %v2080 = vor.u32 %v2079, %v2075
      %v2081 = vrot.slane %v2080, 4
      %v2083 = vshll.u32 %v1996, 16
      %v2085 = vrot.slane %v2083, 5
      %v2086 = vsel %vm234, %v2081, %v2085
      %v2088 = vshrl.u32 %v1997, 16
      %v2090 = vrot.slane %v2088, 4
      %v2091 = vshll.u32 %v1997, 16
      %v2093 = vrot.slane %v2091, 5
      %v2094 = vor.u32 %v2090, %v2093
      %v2095 = vrot.slane %v2094, 4
      %v2097 = vshll.u32 %v1998, 16
      %v2099 = vrot.slane %v2097, 5
      %v2100 = vsel %vm234, %v2095, %v2099
      %v2101 = vshrl.u32 %v1998, 16
      %v2103 = vrot.slane %v2101, 4
      %v2104 = vor.u32 %v2103, %v2099
      %v2105 = vrot.slane %v2104, 4
      %v2107 = vshll.u32 %v1999, 16
      %v2109 = vrot.slane %v2107, 5
      %v2110 = vsel %vm234, %v2105, %v2109
      %v2112 = vshrl.u32 %v2000, 16
      %v2114 = vrot.slane %v2112, 4
      %v2115 = vshll.u32 %v2000, 16
      %v2117 = vrot.slane %v2115, 5
      %v2118 = vor.u32 %v2114, %v2117
      %v2119 = vrot.slane %v2118, 4
      %v2121 = vshll.u32 %v2001, 16
      %v2123 = vrot.slane %v2121, 5
      %v2124 = vsel %vm234, %v2119, %v2123
      %v2125 = vshrl.u32 %v2001, 16
      %v2127 = vrot.slane %v2125, 4
      %v2128 = vor.u32 %v2127, %v2123
      %v2129 = vrot.slane %v2128, 4
      %v2131 = vshll.u32 %v2002, 16
      %v2133 = vrot.slane %v2131, 5
      %v2134 = vsel %vm234, %v2129, %v2133
      %v2136 = vshrl.u32 %v2003, 16
      %v2138 = vrot.slane %v2136, 4
      %v2139 = vshll.u32 %v2003, 16
      %v2141 = vrot.slane %v2139, 5
      %v2142 = vor.u32 %v2138, %v2141
      %v2143 = vrot.slane %v2142, 4
      %v2145 = vshll.u32 %v2004, 16
      %v2147 = vrot.slane %v2145, 5
      %v2148 = vsel %vm234, %v2143, %v2147
      %v2149 = vshrl.u32 %v2004, 16
      %v2151 = vrot.slane %v2149, 4
      %v2152 = vor.u32 %v2151, %v2147
      %v2153 = vrot.slane %v2152, 4
      %v2155 = vshll.u32 %v2005, 16
      %v2157 = vrot.slane %v2155, 5
      %v2158 = vsel %vm234, %v2153, %v2157
      %v2160 = vshrl.u32 %v2006, 16
      %v2162 = vrot.slane %v2160, 4
      %v2163 = vshll.u32 %v2006, 16
      %v2165 = vrot.slane %v2163, 5
      %v2166 = vor.u32 %v2162, %v2165
      %v2167 = vrot.slane %v2166, 4
      %v2169 = vshll.u32 %v2007, 16
      %v2171 = vrot.slane %v2169, 5
      %v2172 = vsel %vm234, %v2167, %v2171
      %v2173 = vshrl.u32 %v2007, 16
      %v2175 = vrot.slane %v2173, 4
      %v2176 = vor.u32 %v2175, %v2171
      %v2177 = vrot.slane %v2176, 4
      %v2179 = vshll.u32 %v2008, 16
      %v2181 = vrot.slane %v2179, 5
      %v2182 = vsel %vm234, %v2177, %v2181
      %v2184 = vshrl.u32 %v2009, 16
      %v2186 = vrot.slane %v2184, 4
      %v2187 = vshll.u32 %v2009, 16
      %v2189 = vrot.slane %v2187, 5
      %v2190 = vor.u32 %v2186, %v2189
      %v2191 = vrot.slane %v2190, 4
      %v2193 = vshll.u32 %v2010, 16
      %v2195 = vrot.slane %v2193, 5
      %v2196 = vsel %vm234, %v2191, %v2195
      %v2197 = vshrl.u32 %v2010, 16
      %v2199 = vrot.slane %v2197, 4
      %v2200 = vor.u32 %v2199, %v2195
      %v2201 = vrot.slane %v2200, 4
      %v2203 = vshll.u32 %v2011, 16
      %v2205 = vrot.slane %v2203, 5
      %v2206 = vsel %vm234, %v2201, %v2205
      %v2208 = vshrl.u32 %v2012, 16
      %v2210 = vrot.slane %v2208, 4
      %v2211 = vshll.u32 %v2012, 16
      %v2213 = vrot.slane %v2211, 5
      %v2214 = vor.u32 %v2210, %v2213
      %v2215 = vrot.slane %v2214, 4
      %v2217 = vshll.u32 %v2013, 16
      %v2219 = vrot.slane %v2217, 5
      %v2220 = vsel %vm234, %v2215, %v2219
      %v2221 = vshrl.u32 %v2013, 16
      %v2223 = vrot.slane %v2221, 4
      %v2224 = vor.u32 %v2223, %v2219
      %v2225 = vrot.slane %v2224, 4
      %v2227 = vshll.u32 %v2014, 16
      %v2229 = vrot.slane %v2227, 5
      %v2230 = vsel %vm234, %v2225, %v2229
      %v2232 = vshrl.u32 %v2015, 16
      %v2234 = vrot.slane %v2232, 4
      %v2235 = vshll.u32 %v2015, 16
      %v2237 = vrot.slane %v2235, 5
      %v2238 = vor.u32 %v2234, %v2237
      %v2239 = vrot.slane %v2238, 4
      %v2241 = vshll.u32 %v2016, 16
      %v2243 = vrot.slane %v2241, 5
      %v2244 = vsel %vm234, %v2239, %v2243
      %v2245 = vshrl.u32 %v2016, 16
      %v2247 = vrot.slane %v2245, 4
      %v2248 = vor.u32 %v2247, %v2243
      %v2249 = vrot.slane %v2248, 4
      %v2251 = vshll.u32 %v2017, 16
      %v2253 = vrot.slane %v2251, 5
      %v2254 = vsel %vm234, %v2249, %v2253
      %v2256 = vshrl.u32 %v2018, 16
      %v2258 = vrot.slane %v2256, 4
      %v2259 = vshll.u32 %v2018, 16
      %v2261 = vrot.slane %v2259, 5
      %v2262 = vor.u32 %v2258, %v2261
      %v2263 = vrot.slane %v2262, 4
      %v2265 = vshll.u32 %v2019, 16
      %v2267 = vrot.slane %v2265, 5
      %v2268 = vsel %vm234, %v2263, %v2267
      %v2269 = vshrl.u32 %v2019, 16
      %v2271 = vrot.slane %v2269, 4
      %v2272 = vor.u32 %v2271, %v2267
      %v2273 = vrot.slane %v2272, 4
      %v2275 = vshll.u32 %v2020, 16
      %v2277 = vrot.slane %v2275, 5
      %v2278 = vsel %vm234, %v2273, %v2277
      %v2280 = vshrl.u32 %v2021, 16
      %v2282 = vrot.slane %v2280, 4
      %v2283 = vshll.u32 %v2021, 16
      %v2285 = vrot.slane %v2283, 5
      %v2286 = vor.u32 %v2282, %v2285
      %v2287 = vrot.slane %v2286, 4
      %v2289 = vshll.u32 %v2022, 16
      %v2291 = vrot.slane %v2289, 5
      %v2292 = vsel %vm234, %v2287, %v2291
      %v2293 = vshrl.u32 %v2022, 16
      %v2295 = vrot.slane %v2293, 4
      %v2296 = vor.u32 %v2295, %v2291
      %v2297 = vrot.slane %v2296, 4
      %v2299 = vshll.u32 %v2023, 16
      %v2301 = vrot.slane %v2299, 5
      %v2302 = vsel %vm234, %v2297, %v2301
      %v2304 = vshrl.u32 %v2024, 16
      %v2306 = vrot.slane %v2304, 4
      %v2307 = vshll.u32 %v2024, 16
      %v2309 = vrot.slane %v2307, 5
      %v2310 = vor.u32 %v2306, %v2309
      %v2311 = vrot.slane %v2310, 4
      %v2313 = vshll.u32 %v2025, 16
      %v2315 = vrot.slane %v2313, 5
      %v2316 = vsel %vm234, %v2311, %v2315
      %v2317 = vshrl.u32 %v2025, 16
      %v2319 = vrot.slane %v2317, 4
      %v2320 = vor.u32 %v2319, %v2315
      %v2321 = vrot.slane %v2320, 4
      %v2323 = vshll.u32 %v2026, 16
      %v2325 = vrot.slane %v2323, 5
      %v2326 = vsel %vm234, %v2321, %v2325
      %v2328 = vshrl.u32 %v2027, 16
      %v2330 = vrot.slane %v2328, 4
      %v2331 = vshll.u32 %v2027, 16
      %v2333 = vrot.slane %v2331, 5
      %v2334 = vor.u32 %v2330, %v2333
      %v2335 = vrot.slane %v2334, 4
      %v2337 = vshll.u32 %v2028, 16
      %v2339 = vrot.slane %v2337, 5
      %v2340 = vsel %vm234, %v2335, %v2339
      %v2341 = vshrl.u32 %v2028, 16
      %v2343 = vrot.slane %v2341, 4
      %v2344 = vor.u32 %v2343, %v2339
      %v2345 = vrot.slane %v2344, 4
      %v2347 = vshll.u32 %v2029, 16
      %v2349 = vrot.slane %v2347, 5
      %v2350 = vsel %vm234, %v2345, %v2349
      %v2352 = vshrl.u32 %v2030, 16
      %v2354 = vrot.slane %v2352, 4
      %v2355 = vshll.u32 %v2030, 16
      %v2357 = vrot.slane %v2355, 5
      %v2358 = vor.u32 %v2354, %v2357
      %v2359 = vrot.slane %v2358, 4
      %v2361 = vshll.u32 %v2031, 16
      %v2363 = vrot.slane %v2361, 5
      %v2364 = vsel %vm234, %v2359, %v2363
      %v2365 = vshrl.u32 %v2031, 16
      %v2367 = vrot.slane %v2365, 4
      %v2368 = vor.u32 %v2367, %v2363
      %v2369 = vrot.slane %v2368, 4
      %v2371 = vshll.u32 %v2032, 16
      %v2373 = vrot.slane %v2371, 5
      %v2374 = vsel %vm234, %v2369, %v2373
      %v2376 = vshrl.u32 %v2033, 16
      %v2378 = vrot.slane %v2376, 4
      %v2379 = vshll.u32 %v2033, 16
      %v2381 = vrot.slane %v2379, 5
      %v2382 = vor.u32 %v2378, %v2381
      %v2383 = vrot.slane %v2382, 4
      %v2385 = vshll.u32 %v2034, 16
      %v2387 = vrot.slane %v2385, 5
      %v2388 = vsel %vm234, %v2383, %v2387
      %v2389 = vshrl.u32 %v2034, 16
      %v2391 = vrot.slane %v2389, 4
      %v2392 = vor.u32 %v2391, %v2387
      %v2393 = vrot.slane %v2392, 4
      %v2395 = vshll.u32 %v2035, 16
      %v2397 = vrot.slane %v2395, 5
      %v2398 = vsel %vm234, %v2393, %v2397
      %v2400 = vshrl.u32 %v2036, 16
      %v2402 = vrot.slane %v2400, 4
      %v2403 = vshll.u32 %v2036, 16
      %v2405 = vrot.slane %v2403, 5
      %v2406 = vor.u32 %v2402, %v2405
      %v2407 = vrot.slane %v2406, 4
      %v2409 = vshll.u32 %v2037, 16
      %v2411 = vrot.slane %v2409, 5
      %v2412 = vsel %vm234, %v2407, %v2411
      %v2413 = vshrl.u32 %v2037, 16
      %v2415 = vrot.slane %v2413, 4
      %v2416 = vor.u32 %v2415, %v2411
      %v2417 = vrot.slane %v2416, 4
      %v2419 = vshll.u32 %v2038, 16
      %v2421 = vrot.slane %v2419, 5
      %v2422 = vsel %vm234, %v2417, %v2421
      %s2423 = scalar_lea.vmem %s1, 8
      %v2424 = vld [vmem:[%s2423] sm:$0x3]
      %v2425 = vunpack.c.l.b16 %v2052
      %v2426 = vunpack.c.l.b16 %v2062
      %v2427 = vunpack.c.l.b16 %v2076
      %v2428 = vunpack.c.l.b16 %v2086
      %v2429 = vunpack.c.l.b16 %v2100
      %v2430 = vunpack.c.l.b16 %v2110
      %v2431 = vunpack.c.l.b16 %v2124
      %v2432 = vunpack.c.l.b16 %v2134
      %v2433 = vunpack.c.l.b16 %v2148
      %v2434 = vunpack.c.l.b16 %v2158
      %v2435 = vunpack.c.l.b16 %v2172
      %v2436 = vunpack.c.l.b16 %v2182
      %v2437 = vunpack.c.l.b16 %v2196
      %v2438 = vunpack.c.l.b16 %v2206
      %v2439 = vunpack.c.l.b16 %v2220
      %v2440 = vunpack.c.l.b16 %v2230
      %v2441 = vunpack.c.l.b16 %v2244
      %v2442 = vunpack.c.l.b16 %v2254
      %v2443 = vunpack.c.l.b16 %v2268
      %v2444 = vunpack.c.l.b16 %v2278
      %v2445 = vunpack.c.l.b16 %v2292
      %v2446 = vunpack.c.l.b16 %v2302
      %v2447 = vunpack.c.l.b16 %v2316
      %v2448 = vunpack.c.l.b16 %v2326
      %v2449 = vunpack.c.l.b16 %v2340
      %v2450 = vunpack.c.l.b16 %v2350
      %v2451 = vunpack.c.l.b16 %v2364
      %v2452 = vunpack.c.l.b16 %v2374
      %v2453 = vunpack.c.l.b16 %v2388
      %v2454 = vunpack.c.l.b16 %v2398
      %v2455 = vunpack.c.l.b16 %v2412
      %v2456 = vunpack.c.l.b16 %v2422
      %v2457 = vpack.c.b16 %v2426, %v2425
      %v2458 = vpack.c.b16 %v2428, %v2427
      %v2459 = vpack.c.b16 %v2430, %v2429
      %v2460 = vpack.c.b16 %v2432, %v2431
      %v2461 = vpack.c.b16 %v2434, %v2433
      %v2462 = vpack.c.b16 %v2436, %v2435
      %v2463 = vpack.c.b16 %v2438, %v2437
      %v2464 = vpack.c.b16 %v2440, %v2439
      %v2465 = vpack.c.b16 %v2442, %v2441
      %v2466 = vpack.c.b16 %v2444, %v2443
      %v2467 = vpack.c.b16 %v2446, %v2445
      %v2468 = vpack.c.b16 %v2448, %v2447
      %v2469 = vpack.c.b16 %v2450, %v2449
      %v2470 = vpack.c.b16 %v2452, %v2451
      %v2471 = vpack.c.b16 %v2454, %v2453
      %v2472 = vpack.c.b16 %v2456, %v2455
      %v2474 = vsel %vm669, %v2457, 0
      %v2477 = vsel %vm669, %v2458, 0
      %v2480 = vsel %vm669, %v2459, 0
      %v2483 = vsel %vm669, %v2460, 0
      %v2486 = vsel %vm669, %v2461, 0
      %v2489 = vsel %vm669, %v2462, 0
      %v2492 = vsel %vm669, %v2463, 0
      %v2495 = vsel %vm669, %v2464, 0
      %v2498 = vsel %vm669, %v2465, 0
      %v2501 = vsel %vm669, %v2466, 0
      %v2504 = vsel %vm669, %v2467, 0
      %v2507 = vsel %vm669, %v2468, 0
      %v2510 = vsel %vm669, %v2469, 0
      %v2513 = vsel %vm669, %v2470, 0
      %v2516 = vsel %vm669, %v2471, 0
      %v2519 = vsel %vm669, %v2472, 0
      %v2522 = vsel %vm718, %v2424, 0
      %2524 = vmatprep.subr.bf16.mxu0 0
      %2525 = vmatpush1.bf16.msra.mxu0 0
      %2526 = vmatprep.subr.bf16.mxu0 0
      %2527 = vmatpush1.bf16.msra.mxu0 0
      %2528 = vmatprep.subr.bf16.mxu0 0
      %2529 = vmatpush1.bf16.msra.mxu0 0
      %2530 = vmatprep.subr.bf16.mxu0 0
      %2531 = vmatpush1.bf16.msra.mxu0 0
      %2532 = vmatprep.subr.bf16.mxu0 0
      %2533 = vmatpush1.bf16.msra.mxu0 0
      %2534 = vmatprep.subr.bf16.mxu0 0
      %2535 = vmatpush1.bf16.msra.mxu0 0
      %2536 = vmatprep.subr.bf16.mxu0 0
      %2537 = vmatpush1.bf16.msra.mxu0 0
      %2538 = vmatprep.subr.bf16.mxu0 0
      %2539 = vmatpush1.bf16.msra.mxu0 %v2522
      %2540 = vmatprep.subr.bf16.mxu0 0
      %2541 = vmatpush2.bf16.msra.mxu0 0
      %2542 = vmatprep.subr.bf16.mxu0 0
      %2543 = vmatpush2.bf16.msra.mxu0 0
      %2544 = vmatprep.subr.bf16.mxu0 0
      %2545 = vmatpush2.bf16.msra.mxu0 0
      %2546 = vmatprep.subr.bf16.mxu0 0
      %2547 = vmatpush2.bf16.msra.mxu0 0
      %2548 = vmatprep.subr.bf16.mxu0 0
      %2549 = vmatpush2.bf16.msra.mxu0 0
      %2550 = vmatprep.subr.bf16.mxu0 0
      %2551 = vmatpush2.bf16.msra.mxu0 0
      %2552 = vmatprep.subr.bf16.mxu0 0
      %2553 = vmatpush2.bf16.msra.mxu0 0
      %2554 = vmatprep.subr.bf16.mxu0 0
      %2555 = vmatpush2.bf16.msra.mxu0 0
      %2556 = vmatprep.mubr.bf16.mxu0 0
      %2557 = vmatmul.mubr.bf16.gmra.mxu0 %v2474
      %v2558 = vpop.f32.mrf.mxu0
      %v2559 = vadd.f32 0.0, %v2558
      %v2560 = vpop.f32.mrf.mxu0
      %v2561 = vpop.f32.mrf.mxu0
      %v2562 = vadd.f32 0.0, %v2561
      %v2563 = vpop.f32.mrf.mxu0
      %2564 = vmatprep.mubr.bf16.mxu0 0
      %2565 = vmatmul.mubr.bf16.gmra.mxu0 %v2477
      %v2566 = vpop.f32.mrf.mxu0
      %v2567 = vadd.f32 0.0, %v2566
      %v2568 = vpop.f32.mrf.mxu0
      %v2569 = vpop.f32.mrf.mxu0
      %v2570 = vadd.f32 0.0, %v2569
      %v2571 = vpop.f32.mrf.mxu0
      %2572 = vmatprep.mubr.bf16.mxu0 0
      %2573 = vmatmul.mubr.bf16.gmra.mxu0 %v2480
      %v2574 = vpop.f32.mrf.mxu0
      %v2575 = vadd.f32 0.0, %v2574
      %v2576 = vpop.f32.mrf.mxu0
      %v2577 = vpop.f32.mrf.mxu0
      %v2578 = vadd.f32 0.0, %v2577
      %v2579 = vpop.f32.mrf.mxu0
      %2580 = vmatprep.mubr.bf16.mxu0 0
      %2581 = vmatmul.mubr.bf16.gmra.mxu0 %v2483
      %v2582 = vpop.f32.mrf.mxu0
      %v2583 = vadd.f32 0.0, %v2582
      %v2584 = vpop.f32.mrf.mxu0
      %v2585 = vpop.f32.mrf.mxu0
      %v2586 = vadd.f32 0.0, %v2585
      %v2587 = vpop.f32.mrf.mxu0
      %2588 = vmatprep.mubr.bf16.mxu0 0
      %2589 = vmatmul.mubr.bf16.gmra.mxu0 %v2486
      %v2590 = vpop.f32.mrf.mxu0
      %v2591 = vadd.f32 0.0, %v2590
      %v2592 = vpop.f32.mrf.mxu0
      %v2593 = vpop.f32.mrf.mxu0
      %v2594 = vadd.f32 0.0, %v2593
      %v2595 = vpop.f32.mrf.mxu0
      %2596 = vmatprep.mubr.bf16.mxu0 0
      %2597 = vmatmul.mubr.bf16.gmra.mxu0 %v2489
      %v2598 = vpop.f32.mrf.mxu0
      %v2599 = vadd.f32 0.0, %v2598
      %v2600 = vpop.f32.mrf.mxu0
      %v2601 = vpop.f32.mrf.mxu0
      %v2602 = vadd.f32 0.0, %v2601
      %v2603 = vpop.f32.mrf.mxu0
      %2604 = vmatprep.mubr.bf16.mxu0 0
      %2605 = vmatmul.mubr.bf16.gmra.mxu0 %v2492
      %v2606 = vpop.f32.mrf.mxu0
      %v2607 = vadd.f32 0.0, %v2606
      %v2608 = vpop.f32.mrf.mxu0
      %v2609 = vpop.f32.mrf.mxu0
      %v2610 = vadd.f32 0.0, %v2609
      %v2611 = vpop.f32.mrf.mxu0
      %2612 = vmatprep.mubr.bf16.mxu0 0
      %2613 = vmatmul.mubr.bf16.gmra.mxu0 %v2495
      %v2614 = vpop.f32.mrf.mxu0
      %v2615 = vadd.f32 0.0, %v2614
      %v2616 = vpop.f32.mrf.mxu0
      %v2617 = vpop.f32.mrf.mxu0
      %v2618 = vadd.f32 0.0, %v2617
      %v2619 = vpop.f32.mrf.mxu0
      %2620 = vmatprep.mubr.bf16.mxu0 0
      %2621 = vmatmul.mubr.bf16.gmra.mxu0 %v2498
      %v2622 = vpop.f32.mrf.mxu0
      %v2623 = vadd.f32 0.0, %v2622
      %v2624 = vpop.f32.mrf.mxu0
      %v2625 = vpop.f32.mrf.mxu0
      %v2626 = vadd.f32 0.0, %v2625
      %v2627 = vpop.f32.mrf.mxu0
      %2628 = vmatprep.mubr.bf16.mxu0 0
      %2629 = vmatmul.mubr.bf16.gmra.mxu0 %v2501
      %v2630 = vpop.f32.mrf.mxu0
      %v2631 = vadd.f32 0.0, %v2630
      %v2632 = vpop.f32.mrf.mxu0
      %v2633 = vpop.f32.mrf.mxu0
      %v2634 = vadd.f32 0.0, %v2633
      %v2635 = vpop.f32.mrf.mxu0
      %2636 = vmatprep.mubr.bf16.mxu0 0
      %2637 = vmatmul.mubr.bf16.gmra.mxu0 %v2504
      %v2638 = vpop.f32.mrf.mxu0
      %v2639 = vadd.f32 0.0, %v2638
      %v2640 = vpop.f32.mrf.mxu0
      %v2641 = vpop.f32.mrf.mxu0
      %v2642 = vadd.f32 0.0, %v2641
      %v2643 = vpop.f32.mrf.mxu0
      %2644 = vmatprep.mubr.bf16.mxu0 0
      %2645 = vmatmul.mubr.bf16.gmra.mxu0 %v2507
      %v2646 = vpop.f32.mrf.mxu0
      %v2647 = vadd.f32 0.0, %v2646
      %v2648 = vpop.f32.mrf.mxu0
      %v2649 = vpop.f32.mrf.mxu0
      %v2650 = vadd.f32 0.0, %v2649
      %v2651 = vpop.f32.mrf.mxu0
      %2652 = vmatprep.mubr.bf16.mxu0 0
      %2653 = vmatmul.mubr.bf16.gmra.mxu0 %v2510
      %v2654 = vpop.f32.mrf.mxu0
      %v2655 = vadd.f32 0.0, %v2654
      %v2656 = vpop.f32.mrf.mxu0
      %v2657 = vpop.f32.mrf.mxu0
      %v2658 = vadd.f32 0.0, %v2657
      %v2659 = vpop.f32.mrf.mxu0
      %2660 = vmatprep.mubr.bf16.mxu0 0
      %2661 = vmatmul.mubr.bf16.gmra.mxu0 %v2513
      %v2662 = vpop.f32.mrf.mxu0
      %v2663 = vadd.f32 0.0, %v2662
      %v2664 = vpop.f32.mrf.mxu0
      %v2665 = vpop.f32.mrf.mxu0
      %v2666 = vadd.f32 0.0, %v2665
      %v2667 = vpop.f32.mrf.mxu0
      %2668 = vmatprep.mubr.bf16.mxu0 0
      %2669 = vmatmul.mubr.bf16.gmra.mxu0 %v2516
      %v2670 = vpop.f32.mrf.mxu0
      %v2671 = vadd.f32 0.0, %v2670
      %v2672 = vpop.f32.mrf.mxu0
      %v2673 = vpop.f32.mrf.mxu0
      %v2674 = vadd.f32 0.0, %v2673
      %v2675 = vpop.f32.mrf.mxu0
      %2676 = vmatprep.mubr.bf16.mxu0 0
      %2677 = vmatmul.mubr.bf16.gmra.mxu0 %v2519
      %v2678 = vpop.f32.mrf.mxu0
      %v2679 = vadd.f32 0.0, %v2678
      %v2680 = vpop.f32.mrf.mxu0
      %v2681 = vpop.f32.mrf.mxu0
      %v2682 = vadd.f32 0.0, %v2681
      %v2683 = vpop.f32.mrf.mxu0
      %2684 = vdwg.mxu0
      %v2685 = vadd.f32 %v1959, %v2559
      %v2686 = vadd.f32 %v1960, %v2562
      %v2687 = vadd.f32 %v1961, %v2567
      %v2688 = vadd.f32 %v1962, %v2570
      %v2689 = vadd.f32 %v1963, %v2575
      %v2690 = vadd.f32 %v1964, %v2578
      %v2691 = vadd.f32 %v1965, %v2583
      %v2692 = vadd.f32 %v1966, %v2586
      %v2693 = vadd.f32 %v1967, %v2591
      %v2694 = vadd.f32 %v1968, %v2594
      %v2695 = vadd.f32 %v1969, %v2599
      %v2696 = vadd.f32 %v1970, %v2602
      %v2697 = vadd.f32 %v1971, %v2607
      %v2698 = vadd.f32 %v1972, %v2610
      %v2699 = vadd.f32 %v1973, %v2615
      %v2700 = vadd.f32 %v1974, %v2618
      %v2701 = vadd.f32 %v1975, %v2623
      %v2702 = vadd.f32 %v1976, %v2626
      %v2703 = vadd.f32 %v1977, %v2631
      %v2704 = vadd.f32 %v1978, %v2634
      %v2705 = vadd.f32 %v1979, %v2639
      %v2706 = vadd.f32 %v1980, %v2642
      %v2707 = vadd.f32 %v1981, %v2647
      %v2708 = vadd.f32 %v1982, %v2650
      %v2709 = vadd.f32 %v1983, %v2655
      %v2710 = vadd.f32 %v1984, %v2658
      %v2711 = vadd.f32 %v1985, %v2663
      %v2712 = vadd.f32 %v1986, %v2666
      %v2713 = vadd.f32 %v1987, %v2671
      %v2714 = vadd.f32 %v1988, %v2674
      %v2715 = vadd.f32 %v1989, %v2679
      %v2716 = vadd.f32 %v1990, %v2682
      %v2717 = vld [vmem:[%s1632] sm:$0xe]
      %v2718 = vld [vmem:[%s1632 + $0xc] sm:$0xe]
      %v2719 = vld [vmem:[%s1632 + $0x18] sm:$0xe]
      %v2720 = vld [vmem:[%s1632 + $0x24] sm:$0xe]
      %v2721 = vld [vmem:[%s1632 + $0x30] sm:$0xe]
      %v2722 = vld [vmem:[%s1632 + $0x3c] sm:$0xe]
      %v2723 = vld [vmem:[%s1632 + $0x48] sm:$0xe]
      %v2724 = vld [vmem:[%s1632 + $0x54] sm:$0xe]
      %v2725 = vld [vmem:[%s1632 + $0x60] sm:$0xe]
      %v2726 = vld [vmem:[%s1632 + $0x6c] sm:$0xe]
      %v2727 = vld [vmem:[%s1632 + $0x78] sm:$0xe]
      %v2728 = vld [vmem:[%s1632 + $0x84] sm:$0xe]
      %v2729 = vld [vmem:[%s1632 + $0x90] sm:$0xe]
      %v2730 = vld [vmem:[%s1632 + $0x9c] sm:$0xe]
      %v2731 = vld [vmem:[%s1632 + $0xa8] sm:$0xe]
      %v2732 = vld [vmem:[%s1632 + $0xb4] sm:$0xe]
      %v2781 = vrot.slane %v2717, 5
      %v2782 = vrot.slane %v2781, 4
      %v2783 = vrot.slane %v1992, 5
      %v2784 = vsel %vm1225, %v2782, %v2783
      %v2785 = vrot.slane %v2783, 4
      %v2786 = vrot.slane %v1993, 5
      %v2787 = vsel %vm1225, %v2785, %v2786
      %v2788 = vrot.slane %v2718, 5
      %v2789 = vrot.slane %v2788, 4
      %v2790 = vrot.slane %v1995, 5
      %v2791 = vsel %vm1225, %v2789, %v2790
      %v2792 = vrot.slane %v2790, 4
      %v2793 = vrot.slane %v1996, 5
      %v2794 = vsel %vm1225, %v2792, %v2793
      %v2795 = vrot.slane %v2719, 5
      %v2796 = vrot.slane %v2795, 4
      %v2797 = vrot.slane %v1998, 5
      %v2798 = vsel %vm1225, %v2796, %v2797
      %v2799 = vrot.slane %v2797, 4
      %v2800 = vrot.slane %v1999, 5
      %v2801 = vsel %vm1225, %v2799, %v2800
      %v2802 = vrot.slane %v2720, 5
      %v2803 = vrot.slane %v2802, 4
      %v2804 = vrot.slane %v2001, 5
      %v2805 = vsel %vm1225, %v2803, %v2804
      %v2806 = vrot.slane %v2804, 4
      %v2807 = vrot.slane %v2002, 5
      %v2808 = vsel %vm1225, %v2806, %v2807
      %v2809 = vrot.slane %v2721, 5
      %v2810 = vrot.slane %v2809, 4
      %v2811 = vrot.slane %v2004, 5
      %v2812 = vsel %vm1225, %v2810, %v2811
      %v2813 = vrot.slane %v2811, 4
      %v2814 = vrot.slane %v2005, 5
      %v2815 = vsel %vm1225, %v2813, %v2814
      %v2816 = vrot.slane %v2722, 5
      %v2817 = vrot.slane %v2816, 4
      %v2818 = vrot.slane %v2007, 5
      %v2819 = vsel %vm1225, %v2817, %v2818
      %v2820 = vrot.slane %v2818, 4
      %v2821 = vrot.slane %v2008, 5
      %v2822 = vsel %vm1225, %v2820, %v2821
      %v2823 = vrot.slane %v2723, 5
      %v2824 = vrot.slane %v2823, 4
      %v2825 = vrot.slane %v2010, 5
      %v2826 = vsel %vm1225, %v2824, %v2825
      %v2827 = vrot.slane %v2825, 4
      %v2828 = vrot.slane %v2011, 5
      %v2829 = vsel %vm1225, %v2827, %v2828
      %v2830 = vrot.slane %v2724, 5
      %v2831 = vrot.slane %v2830, 4
      %v2832 = vrot.slane %v2013, 5
      %v2833 = vsel %vm1225, %v2831, %v2832
      %v2834 = vrot.slane %v2832, 4
      %v2835 = vrot.slane %v2014, 5
      %v2836 = vsel %vm1225, %v2834, %v2835
      %v2837 = vrot.slane %v2725, 5
      %v2838 = vrot.slane %v2837, 4
      %v2839 = vrot.slane %v2016, 5
      %v2840 = vsel %vm1225, %v2838, %v2839
      %v2841 = vrot.slane %v2839, 4
      %v2842 = vrot.slane %v2017, 5
      %v2843 = vsel %vm1225, %v2841, %v2842
      %v2844 = vrot.slane %v2726, 5
      %v2845 = vrot.slane %v2844, 4
      %v2846 = vrot.slane %v2019, 5
      %v2847 = vsel %vm1225, %v2845, %v2846
      %v2848 = vrot.slane %v2846, 4
      %v2849 = vrot.slane %v2020, 5
      %v2850 = vsel %vm1225, %v2848, %v2849
      %v2851 = vrot.slane %v2727, 5
      %v2852 = vrot.slane %v2851, 4
      %v2853 = vrot.slane %v2022, 5
      %v2854 = vsel %vm1225, %v2852, %v2853
      %v2855 = vrot.slane %v2853, 4
      %v2856 = vrot.slane %v2023, 5
      %v2857 = vsel %vm1225, %v2855, %v2856
      %v2858 = vrot.slane %v2728, 5
      %v2859 = vrot.slane %v2858, 4
      %v2860 = vrot.slane %v2025, 5
      %v2861 = vsel %vm1225, %v2859, %v2860
      %v2862 = vrot.slane %v2860, 4
      %v2863 = vrot.slane %v2026, 5
      %v2864 = vsel %vm1225, %v2862, %v2863
      %v2865 = vrot.slane %v2729, 5
      %v2866 = vrot.slane %v2865, 4
      %v2867 = vrot.slane %v2028, 5
      %v2868 = vsel %vm1225, %v2866, %v2867
      %v2869 = vrot.slane %v2867, 4
      %v2870 = vrot.slane %v2029, 5
      %v2871 = vsel %vm1225, %v2869, %v2870
      %v2872 = vrot.slane %v2730, 5
      %v2873 = vrot.slane %v2872, 4
      %v2874 = vrot.slane %v2031, 5
      %v2875 = vsel %vm1225, %v2873, %v2874
      %v2876 = vrot.slane %v2874, 4
      %v2877 = vrot.slane %v2032, 5
      %v2878 = vsel %vm1225, %v2876, %v2877
      %v2879 = vrot.slane %v2731, 5
      %v2880 = vrot.slane %v2879, 4
      %v2881 = vrot.slane %v2034, 5
      %v2882 = vsel %vm1225, %v2880, %v2881
      %v2883 = vrot.slane %v2881, 4
      %v2884 = vrot.slane %v2035, 5
      %v2885 = vsel %vm1225, %v2883, %v2884
      %v2886 = vrot.slane %v2732, 5
      %v2887 = vrot.slane %v2886, 4
      %v2888 = vrot.slane %v2037, 5
      %v2889 = vsel %vm1225, %v2887, %v2888
      %v2890 = vrot.slane %v2888, 4
      %v2891 = vrot.slane %v2038, 5
      %v2892 = vsel %vm1225, %v2890, %v2891
      %s2893 = scalar_lea.vmem %s1, 10
      %v2894 = vld [vmem:[%s2893] sm:$0x3]
      %v2895 = vunpack.c.l.b16 %v2784
      %v2896 = vunpack.c.l.b16 %v2787
      %v2897 = vunpack.c.l.b16 %v2791
      %v2898 = vunpack.c.l.b16 %v2794
      %v2899 = vunpack.c.l.b16 %v2798
      %v2900 = vunpack.c.l.b16 %v2801
      %v2901 = vunpack.c.l.b16 %v2805
      %v2902 = vunpack.c.l.b16 %v2808
      %v2903 = vunpack.c.l.b16 %v2812
      %v2904 = vunpack.c.l.b16 %v2815
      %v2905 = vunpack.c.l.b16 %v2819
      %v2906 = vunpack.c.l.b16 %v2822
      %v2907 = vunpack.c.l.b16 %v2826
      %v2908 = vunpack.c.l.b16 %v2829
      %v2909 = vunpack.c.l.b16 %v2833
      %v2910 = vunpack.c.l.b16 %v2836
      %v2911 = vunpack.c.l.b16 %v2840
      %v2912 = vunpack.c.l.b16 %v2843
      %v2913 = vunpack.c.l.b16 %v2847
      %v2914 = vunpack.c.l.b16 %v2850
      %v2915 = vunpack.c.l.b16 %v2854
      %v2916 = vunpack.c.l.b16 %v2857
      %v2917 = vunpack.c.l.b16 %v2861
      %v2918 = vunpack.c.l.b16 %v2864
      %v2919 = vunpack.c.l.b16 %v2868
      %v2920 = vunpack.c.l.b16 %v2871
      %v2921 = vunpack.c.l.b16 %v2875
      %v2922 = vunpack.c.l.b16 %v2878
      %v2923 = vunpack.c.l.b16 %v2882
      %v2924 = vunpack.c.l.b16 %v2885
      %v2925 = vunpack.c.l.b16 %v2889
      %v2926 = vunpack.c.l.b16 %v2892
      %v2927 = vpack.c.b16 %v2896, %v2895
      %v2928 = vpack.c.b16 %v2898, %v2897
      %v2929 = vpack.c.b16 %v2900, %v2899
      %v2930 = vpack.c.b16 %v2902, %v2901
      %v2931 = vpack.c.b16 %v2904, %v2903
      %v2932 = vpack.c.b16 %v2906, %v2905
      %v2933 = vpack.c.b16 %v2908, %v2907
      %v2934 = vpack.c.b16 %v2910, %v2909
      %v2935 = vpack.c.b16 %v2912, %v2911
      %v2936 = vpack.c.b16 %v2914, %v2913
      %v2937 = vpack.c.b16 %v2916, %v2915
      %v2938 = vpack.c.b16 %v2918, %v2917
      %v2939 = vpack.c.b16 %v2920, %v2919
      %v2940 = vpack.c.b16 %v2922, %v2921
      %v2941 = vpack.c.b16 %v2924, %v2923
      %v2942 = vpack.c.b16 %v2926, %v2925
      %v2944 = vsel %vm669, %v2927, 0
      %v2947 = vsel %vm669, %v2928, 0
      %v2950 = vsel %vm669, %v2929, 0
      %v2953 = vsel %vm669, %v2930, 0
      %v2956 = vsel %vm669, %v2931, 0
      %v2959 = vsel %vm669, %v2932, 0
      %v2962 = vsel %vm669, %v2933, 0
      %v2965 = vsel %vm669, %v2934, 0
      %v2968 = vsel %vm669, %v2935, 0
      %v2971 = vsel %vm669, %v2936, 0
      %v2974 = vsel %vm669, %v2937, 0
      %v2977 = vsel %vm669, %v2938, 0
      %v2980 = vsel %vm669, %v2939, 0
      %v2983 = vsel %vm669, %v2940, 0
      %v2986 = vsel %vm669, %v2941, 0
      %v2989 = vsel %vm669, %v2942, 0
      %v2992 = vsel %vm718, %v2894, 0
      %2994 = vmatprep.subr.bf16.mxu0 0
      %2995 = vmatpush1.bf16.msra.mxu0 0
      %2996 = vmatprep.subr.bf16.mxu0 0
      %2997 = vmatpush1.bf16.msra.mxu0 0
      %2998 = vmatprep.subr.bf16.mxu0 0
      %2999 = vmatpush1.bf16.msra.mxu0 0
      %3000 = vmatprep.subr.bf16.mxu0 0
      %3001 = vmatpush1.bf16.msra.mxu0 0
      %3002 = vmatprep.subr.bf16.mxu0 0
      %3003 = vmatpush1.bf16.msra.mxu0 0
      %3004 = vmatprep.subr.bf16.mxu0 0
      %3005 = vmatpush1.bf16.msra.mxu0 0
      %3006 = vmatprep.subr.bf16.mxu0 0
      %3007 = vmatpush1.bf16.msra.mxu0 0
      %3008 = vmatprep.subr.bf16.mxu0 0
      %3009 = vmatpush1.bf16.msra.mxu0 %v2992
      %3010 = vmatprep.subr.bf16.mxu0 0
      %3011 = vmatpush2.bf16.msra.mxu0 0
      %3012 = vmatprep.subr.bf16.mxu0 0
      %3013 = vmatpush2.bf16.msra.mxu0 0
      %3014 = vmatprep.subr.bf16.mxu0 0
      %3015 = vmatpush2.bf16.msra.mxu0 0
      %3016 = vmatprep.subr.bf16.mxu0 0
      %3017 = vmatpush2.bf16.msra.mxu0 0
      %3018 = vmatprep.subr.bf16.mxu0 0
      %3019 = vmatpush2.bf16.msra.mxu0 0
      %3020 = vmatprep.subr.bf16.mxu0 0
      %3021 = vmatpush2.bf16.msra.mxu0 0
      %3022 = vmatprep.subr.bf16.mxu0 0
      %3023 = vmatpush2.bf16.msra.mxu0 0
      %3024 = vmatprep.subr.bf16.mxu0 0
      %3025 = vmatpush2.bf16.msra.mxu0 0
      %3026 = vmatprep.mubr.bf16.mxu0 0
      %3027 = vmatmul.mubr.bf16.gmra.mxu0 %v2944
      %v3028 = vpop.f32.mrf.mxu0
      %v3029 = vadd.f32 0.0, %v3028
      %v3030 = vpop.f32.mrf.mxu0
      %v3031 = vpop.f32.mrf.mxu0
      %v3032 = vadd.f32 0.0, %v3031
      %v3033 = vpop.f32.mrf.mxu0
      %3034 = vmatprep.mubr.bf16.mxu0 0
      %3035 = vmatmul.mubr.bf16.gmra.mxu0 %v2947
      %v3036 = vpop.f32.mrf.mxu0
      %v3037 = vadd.f32 0.0, %v3036
      %v3038 = vpop.f32.mrf.mxu0
      %v3039 = vpop.f32.mrf.mxu0
      %v3040 = vadd.f32 0.0, %v3039
      %v3041 = vpop.f32.mrf.mxu0
      %3042 = vmatprep.mubr.bf16.mxu0 0
      %3043 = vmatmul.mubr.bf16.gmra.mxu0 %v2950
      %v3044 = vpop.f32.mrf.mxu0
      %v3045 = vadd.f32 0.0, %v3044
      %v3046 = vpop.f32.mrf.mxu0
      %v3047 = vpop.f32.mrf.mxu0
      %v3048 = vadd.f32 0.0, %v3047
      %v3049 = vpop.f32.mrf.mxu0
      %3050 = vmatprep.mubr.bf16.mxu0 0
      %3051 = vmatmul.mubr.bf16.gmra.mxu0 %v2953
      %v3052 = vpop.f32.mrf.mxu0
      %v3053 = vadd.f32 0.0, %v3052
      %v3054 = vpop.f32.mrf.mxu0
      %v3055 = vpop.f32.mrf.mxu0
      %v3056 = vadd.f32 0.0, %v3055
      %v3057 = vpop.f32.mrf.mxu0
      %3058 = vmatprep.mubr.bf16.mxu0 0
      %3059 = vmatmul.mubr.bf16.gmra.mxu0 %v2956
      %v3060 = vpop.f32.mrf.mxu0
      %v3061 = vadd.f32 0.0, %v3060
      %v3062 = vpop.f32.mrf.mxu0
      %v3063 = vpop.f32.mrf.mxu0
      %v3064 = vadd.f32 0.0, %v3063
      %v3065 = vpop.f32.mrf.mxu0
      %3066 = vmatprep.mubr.bf16.mxu0 0
      %3067 = vmatmul.mubr.bf16.gmra.mxu0 %v2959
      %v3068 = vpop.f32.mrf.mxu0
      %v3069 = vadd.f32 0.0, %v3068
      %v3070 = vpop.f32.mrf.mxu0
      %v3071 = vpop.f32.mrf.mxu0
      %v3072 = vadd.f32 0.0, %v3071
      %v3073 = vpop.f32.mrf.mxu0
      %3074 = vmatprep.mubr.bf16.mxu0 0
      %3075 = vmatmul.mubr.bf16.gmra.mxu0 %v2962
      %v3076 = vpop.f32.mrf.mxu0
      %v3077 = vadd.f32 0.0, %v3076
      %v3078 = vpop.f32.mrf.mxu0
      %v3079 = vpop.f32.mrf.mxu0
      %v3080 = vadd.f32 0.0, %v3079
      %v3081 = vpop.f32.mrf.mxu0
      %3082 = vmatprep.mubr.bf16.mxu0 0
      %3083 = vmatmul.mubr.bf16.gmra.mxu0 %v2965
      %v3084 = vpop.f32.mrf.mxu0
      %v3085 = vadd.f32 0.0, %v3084
      %v3086 = vpop.f32.mrf.mxu0
      %v3087 = vpop.f32.mrf.mxu0
      %v3088 = vadd.f32 0.0, %v3087
      %v3089 = vpop.f32.mrf.mxu0
      %3090 = vmatprep.mubr.bf16.mxu0 0
      %3091 = vmatmul.mubr.bf16.gmra.mxu0 %v2968
      %v3092 = vpop.f32.mrf.mxu0
      %v3093 = vadd.f32 0.0, %v3092
      %v3094 = vpop.f32.mrf.mxu0
      %v3095 = vpop.f32.mrf.mxu0
      %v3096 = vadd.f32 0.0, %v3095
      %v3097 = vpop.f32.mrf.mxu0
      %3098 = vmatprep.mubr.bf16.mxu0 0
      %3099 = vmatmul.mubr.bf16.gmra.mxu0 %v2971
      %v3100 = vpop.f32.mrf.mxu0
      %v3101 = vadd.f32 0.0, %v3100
      %v3102 = vpop.f32.mrf.mxu0
      %v3103 = vpop.f32.mrf.mxu0
      %v3104 = vadd.f32 0.0, %v3103
      %v3105 = vpop.f32.mrf.mxu0
      %3106 = vmatprep.mubr.bf16.mxu0 0
      %3107 = vmatmul.mubr.bf16.gmra.mxu0 %v2974
      %v3108 = vpop.f32.mrf.mxu0
      %v3109 = vadd.f32 0.0, %v3108
      %v3110 = vpop.f32.mrf.mxu0
      %v3111 = vpop.f32.mrf.mxu0
      %v3112 = vadd.f32 0.0, %v3111
      %v3113 = vpop.f32.mrf.mxu0
      %3114 = vmatprep.mubr.bf16.mxu0 0
      %3115 = vmatmul.mubr.bf16.gmra.mxu0 %v2977
      %v3116 = vpop.f32.mrf.mxu0
      %v3117 = vadd.f32 0.0, %v3116
      %v3118 = vpop.f32.mrf.mxu0
      %v3119 = vpop.f32.mrf.mxu0
      %v3120 = vadd.f32 0.0, %v3119
      %v3121 = vpop.f32.mrf.mxu0
      %3122 = vmatprep.mubr.bf16.mxu0 0
      %3123 = vmatmul.mubr.bf16.gmra.mxu0 %v2980
      %v3124 = vpop.f32.mrf.mxu0
      %v3125 = vadd.f32 0.0, %v3124
      %v3126 = vpop.f32.mrf.mxu0
      %v3127 = vpop.f32.mrf.mxu0
      %v3128 = vadd.f32 0.0, %v3127
      %v3129 = vpop.f32.mrf.mxu0
      %3130 = vmatprep.mubr.bf16.mxu0 0
      %3131 = vmatmul.mubr.bf16.gmra.mxu0 %v2983
      %v3132 = vpop.f32.mrf.mxu0
      %v3133 = vadd.f32 0.0, %v3132
      %v3134 = vpop.f32.mrf.mxu0
      %v3135 = vpop.f32.mrf.mxu0
      %v3136 = vadd.f32 0.0, %v3135
      %v3137 = vpop.f32.mrf.mxu0
      %3138 = vmatprep.mubr.bf16.mxu0 0
      %3139 = vmatmul.mubr.bf16.gmra.mxu0 %v2986
      %v3140 = vpop.f32.mrf.mxu0
      %v3141 = vadd.f32 0.0, %v3140
      %v3142 = vpop.f32.mrf.mxu0
      %v3143 = vpop.f32.mrf.mxu0
      %v3144 = vadd.f32 0.0, %v3143
      %v3145 = vpop.f32.mrf.mxu0
      %3146 = vmatprep.mubr.bf16.mxu0 0
      %3147 = vmatmul.mubr.bf16.gmra.mxu0 %v2989
      %v3148 = vpop.f32.mrf.mxu0
      %v3149 = vadd.f32 0.0, %v3148
      %v3150 = vpop.f32.mrf.mxu0
      %v3151 = vpop.f32.mrf.mxu0
      %v3152 = vadd.f32 0.0, %v3151
      %v3153 = vpop.f32.mrf.mxu0
      %3154 = vdwg.mxu0
      %v3155 = vadd.f32 %v2685, %v3029
      %v3156 = vadd.f32 %v2686, %v3032
      %v3157 = vadd.f32 %v2687, %v3037
      %v3158 = vadd.f32 %v2688, %v3040
      %v3159 = vadd.f32 %v2689, %v3045
      %v3160 = vadd.f32 %v2690, %v3048
      %v3161 = vadd.f32 %v2691, %v3053
      %v3162 = vadd.f32 %v2692, %v3056
      %v3163 = vadd.f32 %v2693, %v3061
      %v3164 = vadd.f32 %v2694, %v3064
      %v3165 = vadd.f32 %v2695, %v3069
      %v3166 = vadd.f32 %v2696, %v3072
      %v3167 = vadd.f32 %v2697, %v3077
      %v3168 = vadd.f32 %v2698, %v3080
      %v3169 = vadd.f32 %v2699, %v3085
      %v3170 = vadd.f32 %v2700, %v3088
      %v3171 = vadd.f32 %v2701, %v3093
      %v3172 = vadd.f32 %v2702, %v3096
      %v3173 = vadd.f32 %v2703, %v3101
      %v3174 = vadd.f32 %v2704, %v3104
      %v3175 = vadd.f32 %v2705, %v3109
      %v3176 = vadd.f32 %v2706, %v3112
      %v3177 = vadd.f32 %v2707, %v3117
      %v3178 = vadd.f32 %v2708, %v3120
      %v3179 = vadd.f32 %v2709, %v3125
      %v3180 = vadd.f32 %v2710, %v3128
      %v3181 = vadd.f32 %v2711, %v3133
      %v3182 = vadd.f32 %v2712, %v3136
      %v3183 = vadd.f32 %v2713, %v3141
      %v3184 = vadd.f32 %v2714, %v3144
      %v3185 = vadd.f32 %v2715, %v3149
      %v3186 = vadd.f32 %v2716, %v3152
      %s3187 = scalar_lea.vmem %s172, 24
      %v3188 = vld [vmem:[%s3187] sm:$0xf]
      %v3189 = vld [vmem:[%s3187 + $0x4] sm:$0xf]
      %v3190 = vld [vmem:[%s3187 + $0xc] sm:$0xf]
      %v3191 = vld [vmem:[%s3187 + $0x10] sm:$0xf]
      %v3192 = vld [vmem:[%s3187 + $0x18] sm:$0xf]
      %v3193 = vld [vmem:[%s3187 + $0x1c] sm:$0xf]
      %v3194 = vld [vmem:[%s3187 + $0x24] sm:$0xf]
      %v3195 = vld [vmem:[%s3187 + $0x28] sm:$0xf]
      %v3196 = vld [vmem:[%s3187 + $0x30] sm:$0xf]
      %v3197 = vld [vmem:[%s3187 + $0x34] sm:$0xf]
      %v3198 = vld [vmem:[%s3187 + $0x3c] sm:$0xf]
      %v3199 = vld [vmem:[%s3187 + $0x40] sm:$0xf]
      %v3200 = vld [vmem:[%s3187 + $0x48] sm:$0xf]
      %v3201 = vld [vmem:[%s3187 + $0x4c] sm:$0xf]
      %v3202 = vld [vmem:[%s3187 + $0x54] sm:$0xf]
      %v3203 = vld [vmem:[%s3187 + $0x58] sm:$0xf]
      %v3204 = vld [vmem:[%s3187 + $0x60] sm:$0xf]
      %v3205 = vld [vmem:[%s3187 + $0x64] sm:$0xf]
      %v3206 = vld [vmem:[%s3187 + $0x6c] sm:$0xf]
      %v3207 = vld [vmem:[%s3187 + $0x70] sm:$0xf]
      %v3208 = vld [vmem:[%s3187 + $0x78] sm:$0xf]
      %v3209 = vld [vmem:[%s3187 + $0x7c] sm:$0xf]
      %v3210 = vld [vmem:[%s3187 + $0x84] sm:$0xf]
      %v3211 = vld [vmem:[%s3187 + $0x88] sm:$0xf]
      %v3212 = vld [vmem:[%s3187 + $0x90] sm:$0xf]
      %v3213 = vld [vmem:[%s3187 + $0x94] sm:$0xf]
      %v3214 = vld [vmem:[%s3187 + $0x9c] sm:$0xf]
      %v3215 = vld [vmem:[%s3187 + $0xa0] sm:$0xf]
      %v3216 = vld [vmem:[%s3187 + $0xa8] sm:$0xf]
      %v3217 = vld [vmem:[%s3187 + $0xac] sm:$0xf]
      %v3218 = vld [vmem:[%s3187 + $0xb4] sm:$0xf]
      %v3219 = vld [vmem:[%s3187 + $0xb8] sm:$0xf]
      %s3220 = scalar_lea.vmem %s1, 12
      %v3221 = vld [vmem:[%s3220] sm:$0x3]
      %v3254 = vunpack.c.l.b16 %v3188
      %v3255 = vunpack.c.l.b16 %v3189
      %v3256 = vunpack.c.l.b16 %v3190
      %v3257 = vunpack.c.l.b16 %v3191
      %v3258 = vunpack.c.l.b16 %v3192
      %v3259 = vunpack.c.l.b16 %v3193
      %v3260 = vunpack.c.l.b16 %v3194
      %v3261 = vunpack.c.l.b16 %v3195
      %v3262 = vunpack.c.l.b16 %v3196
      %v3263 = vunpack.c.l.b16 %v3197
      %v3264 = vunpack.c.l.b16 %v3198
      %v3265 = vunpack.c.l.b16 %v3199
      %v3266 = vunpack.c.l.b16 %v3200
      %v3267 = vunpack.c.l.b16 %v3201
      %v3268 = vunpack.c.l.b16 %v3202
      %v3269 = vunpack.c.l.b16 %v3203
      %v3270 = vunpack.c.l.b16 %v3204
      %v3271 = vunpack.c.l.b16 %v3205
      %v3272 = vunpack.c.l.b16 %v3206
      %v3273 = vunpack.c.l.b16 %v3207
      %v3274 = vunpack.c.l.b16 %v3208
      %v3275 = vunpack.c.l.b16 %v3209
      %v3276 = vunpack.c.l.b16 %v3210
      %v3277 = vunpack.c.l.b16 %v3211
      %v3278 = vunpack.c.l.b16 %v3212
      %v3279 = vunpack.c.l.b16 %v3213
      %v3280 = vunpack.c.l.b16 %v3214
      %v3281 = vunpack.c.l.b16 %v3215
      %v3282 = vunpack.c.l.b16 %v3216
      %v3283 = vunpack.c.l.b16 %v3217
      %v3284 = vunpack.c.l.b16 %v3218
      %v3285 = vunpack.c.l.b16 %v3219
      %v3286 = vpack.c.b16 %v3255, %v3254
      %v3287 = vpack.c.b16 %v3257, %v3256
      %v3288 = vpack.c.b16 %v3259, %v3258
      %v3289 = vpack.c.b16 %v3261, %v3260
      %v3290 = vpack.c.b16 %v3263, %v3262
      %v3291 = vpack.c.b16 %v3265, %v3264
      %v3292 = vpack.c.b16 %v3267, %v3266
      %v3293 = vpack.c.b16 %v3269, %v3268
      %v3294 = vpack.c.b16 %v3271, %v3270
      %v3295 = vpack.c.b16 %v3273, %v3272
      %v3296 = vpack.c.b16 %v3275, %v3274
      %v3297 = vpack.c.b16 %v3277, %v3276
      %v3298 = vpack.c.b16 %v3279, %v3278
      %v3299 = vpack.c.b16 %v3281, %v3280
      %v3300 = vpack.c.b16 %v3283, %v3282
      %v3301 = vpack.c.b16 %v3285, %v3284
      %v3303 = vsel %vm669, %v3286, 0
      %v3306 = vsel %vm669, %v3287, 0
      %v3309 = vsel %vm669, %v3288, 0
      %v3312 = vsel %vm669, %v3289, 0
      %v3315 = vsel %vm669, %v3290, 0
      %v3318 = vsel %vm669, %v3291, 0
      %v3321 = vsel %vm669, %v3292, 0
      %v3324 = vsel %vm669, %v3293, 0
      %v3327 = vsel %vm669, %v3294, 0
      %v3330 = vsel %vm669, %v3295, 0
      %v3333 = vsel %vm669, %v3296, 0
      %v3336 = vsel %vm669, %v3297, 0
      %v3339 = vsel %vm669, %v3298, 0
      %v3342 = vsel %vm669, %v3299, 0
      %v3345 = vsel %vm669, %v3300, 0
      %v3348 = vsel %vm669, %v3301, 0
      %v3351 = vsel %vm718, %v3221, 0
      %3353 = vmatprep.subr.bf16.mxu0 0
      %3354 = vmatpush1.bf16.msra.mxu0 0
      %3355 = vmatprep.subr.bf16.mxu0 0
      %3356 = vmatpush1.bf16.msra.mxu0 0
      %3357 = vmatprep.subr.bf16.mxu0 0
      %3358 = vmatpush1.bf16.msra.mxu0 0
      %3359 = vmatprep.subr.bf16.mxu0 0
      %3360 = vmatpush1.bf16.msra.mxu0 0
      %3361 = vmatprep.subr.bf16.mxu0 0
      %3362 = vmatpush1.bf16.msra.mxu0 0
      %3363 = vmatprep.subr.bf16.mxu0 0
      %3364 = vmatpush1.bf16.msra.mxu0 0
      %3365 = vmatprep.subr.bf16.mxu0 0
      %3366 = vmatpush1.bf16.msra.mxu0 0
      %3367 = vmatprep.subr.bf16.mxu0 0
      %3368 = vmatpush1.bf16.msra.mxu0 %v3351
      %3369 = vmatprep.subr.bf16.mxu0 0
      %3370 = vmatpush2.bf16.msra.mxu0 0
      %3371 = vmatprep.subr.bf16.mxu0 0
      %3372 = vmatpush2.bf16.msra.mxu0 0
      %3373 = vmatprep.subr.bf16.mxu0 0
      %3374 = vmatpush2.bf16.msra.mxu0 0
      %3375 = vmatprep.subr.bf16.mxu0 0
      %3376 = vmatpush2.bf16.msra.mxu0 0
      %3377 = vmatprep.subr.bf16.mxu0 0
      %3378 = vmatpush2.bf16.msra.mxu0 0
      %3379 = vmatprep.subr.bf16.mxu0 0
      %3380 = vmatpush2.bf16.msra.mxu0 0
      %3381 = vmatprep.subr.bf16.mxu0 0
      %3382 = vmatpush2.bf16.msra.mxu0 0
      %3383 = vmatprep.subr.bf16.mxu0 0
      %3384 = vmatpush2.bf16.msra.mxu0 0
      %3385 = vmatprep.mubr.bf16.mxu0 0
      %3386 = vmatmul.mubr.bf16.gmra.mxu0 %v3303
      %v3387 = vpop.f32.mrf.mxu0
      %v3388 = vadd.f32 0.0, %v3387
      %v3389 = vpop.f32.mrf.mxu0
      %v3390 = vpop.f32.mrf.mxu0
      %v3391 = vadd.f32 0.0, %v3390
      %v3392 = vpop.f32.mrf.mxu0
      %3393 = vmatprep.mubr.bf16.mxu0 0
      %3394 = vmatmul.mubr.bf16.gmra.mxu0 %v3306
      %v3395 = vpop.f32.mrf.mxu0
      %v3396 = vadd.f32 0.0, %v3395
      %v3397 = vpop.f32.mrf.mxu0
      %v3398 = vpop.f32.mrf.mxu0
      %v3399 = vadd.f32 0.0, %v3398
      %v3400 = vpop.f32.mrf.mxu0
      %3401 = vmatprep.mubr.bf16.mxu0 0
      %3402 = vmatmul.mubr.bf16.gmra.mxu0 %v3309
      %v3403 = vpop.f32.mrf.mxu0
      %v3404 = vadd.f32 0.0, %v3403
      %v3405 = vpop.f32.mrf.mxu0
      %v3406 = vpop.f32.mrf.mxu0
      %v3407 = vadd.f32 0.0, %v3406
      %v3408 = vpop.f32.mrf.mxu0
      %3409 = vmatprep.mubr.bf16.mxu0 0
      %3410 = vmatmul.mubr.bf16.gmra.mxu0 %v3312
      %v3411 = vpop.f32.mrf.mxu0
      %v3412 = vadd.f32 0.0, %v3411
      %v3413 = vpop.f32.mrf.mxu0
      %v3414 = vpop.f32.mrf.mxu0
      %v3415 = vadd.f32 0.0, %v3414
      %v3416 = vpop.f32.mrf.mxu0
      %3417 = vmatprep.mubr.bf16.mxu0 0
      %3418 = vmatmul.mubr.bf16.gmra.mxu0 %v3315
      %v3419 = vpop.f32.mrf.mxu0
      %v3420 = vadd.f32 0.0, %v3419
      %v3421 = vpop.f32.mrf.mxu0
      %v3422 = vpop.f32.mrf.mxu0
      %v3423 = vadd.f32 0.0, %v3422
      %v3424 = vpop.f32.mrf.mxu0
      %3425 = vmatprep.mubr.bf16.mxu0 0
      %3426 = vmatmul.mubr.bf16.gmra.mxu0 %v3318
      %v3427 = vpop.f32.mrf.mxu0
      %v3428 = vadd.f32 0.0, %v3427
      %v3429 = vpop.f32.mrf.mxu0
      %v3430 = vpop.f32.mrf.mxu0
      %v3431 = vadd.f32 0.0, %v3430
      %v3432 = vpop.f32.mrf.mxu0
      %3433 = vmatprep.mubr.bf16.mxu0 0
      %3434 = vmatmul.mubr.bf16.gmra.mxu0 %v3321
      %v3435 = vpop.f32.mrf.mxu0
      %v3436 = vadd.f32 0.0, %v3435
      %v3437 = vpop.f32.mrf.mxu0
      %v3438 = vpop.f32.mrf.mxu0
      %v3439 = vadd.f32 0.0, %v3438
      %v3440 = vpop.f32.mrf.mxu0
      %3441 = vmatprep.mubr.bf16.mxu0 0
      %3442 = vmatmul.mubr.bf16.gmra.mxu0 %v3324
      %v3443 = vpop.f32.mrf.mxu0
      %v3444 = vadd.f32 0.0, %v3443
      %v3445 = vpop.f32.mrf.mxu0
      %v3446 = vpop.f32.mrf.mxu0
      %v3447 = vadd.f32 0.0, %v3446
      %v3448 = vpop.f32.mrf.mxu0
      %3449 = vmatprep.mubr.bf16.mxu0 0
      %3450 = vmatmul.mubr.bf16.gmra.mxu0 %v3327
      %v3451 = vpop.f32.mrf.mxu0
      %v3452 = vadd.f32 0.0, %v3451
      %v3453 = vpop.f32.mrf.mxu0
      %v3454 = vpop.f32.mrf.mxu0
      %v3455 = vadd.f32 0.0, %v3454
      %v3456 = vpop.f32.mrf.mxu0
      %3457 = vmatprep.mubr.bf16.mxu0 0
      %3458 = vmatmul.mubr.bf16.gmra.mxu0 %v3330
      %v3459 = vpop.f32.mrf.mxu0
      %v3460 = vadd.f32 0.0, %v3459
      %v3461 = vpop.f32.mrf.mxu0
      %v3462 = vpop.f32.mrf.mxu0
      %v3463 = vadd.f32 0.0, %v3462
      %v3464 = vpop.f32.mrf.mxu0
      %3465 = vmatprep.mubr.bf16.mxu0 0
      %3466 = vmatmul.mubr.bf16.gmra.mxu0 %v3333
      %v3467 = vpop.f32.mrf.mxu0
      %v3468 = vadd.f32 0.0, %v3467
      %v3469 = vpop.f32.mrf.mxu0
      %v3470 = vpop.f32.mrf.mxu0
      %v3471 = vadd.f32 0.0, %v3470
      %v3472 = vpop.f32.mrf.mxu0
      %3473 = vmatprep.mubr.bf16.mxu0 0
      %3474 = vmatmul.mubr.bf16.gmra.mxu0 %v3336
      %v3475 = vpop.f32.mrf.mxu0
      %v3476 = vadd.f32 0.0, %v3475
      %v3477 = vpop.f32.mrf.mxu0
      %v3478 = vpop.f32.mrf.mxu0
      %v3479 = vadd.f32 0.0, %v3478
      %v3480 = vpop.f32.mrf.mxu0
      %3481 = vmatprep.mubr.bf16.mxu0 0
      %3482 = vmatmul.mubr.bf16.gmra.mxu0 %v3339
      %v3483 = vpop.f32.mrf.mxu0
      %v3484 = vadd.f32 0.0, %v3483
      %v3485 = vpop.f32.mrf.mxu0
      %v3486 = vpop.f32.mrf.mxu0
      %v3487 = vadd.f32 0.0, %v3486
      %v3488 = vpop.f32.mrf.mxu0
      %3489 = vmatprep.mubr.bf16.mxu0 0
      %3490 = vmatmul.mubr.bf16.gmra.mxu0 %v3342
      %v3491 = vpop.f32.mrf.mxu0
      %v3492 = vadd.f32 0.0, %v3491
      %v3493 = vpop.f32.mrf.mxu0
      %v3494 = vpop.f32.mrf.mxu0
      %v3495 = vadd.f32 0.0, %v3494
      %v3496 = vpop.f32.mrf.mxu0
      %3497 = vmatprep.mubr.bf16.mxu0 0
      %3498 = vmatmul.mubr.bf16.gmra.mxu0 %v3345
      %v3499 = vpop.f32.mrf.mxu0
      %v3500 = vadd.f32 0.0, %v3499
      %v3501 = vpop.f32.mrf.mxu0
      %v3502 = vpop.f32.mrf.mxu0
      %v3503 = vadd.f32 0.0, %v3502
      %v3504 = vpop.f32.mrf.mxu0
      %3505 = vmatprep.mubr.bf16.mxu0 0
      %3506 = vmatmul.mubr.bf16.gmra.mxu0 %v3348
      %v3507 = vpop.f32.mrf.mxu0
      %v3508 = vadd.f32 0.0, %v3507
      %v3509 = vpop.f32.mrf.mxu0
      %v3510 = vpop.f32.mrf.mxu0
      %v3511 = vadd.f32 0.0, %v3510
      %v3512 = vpop.f32.mrf.mxu0
      %3513 = vdwg.mxu0
      %v3514 = vadd.f32 %v3155, %v3388
      %v3515 = vadd.f32 %v3156, %v3391
      %v3516 = vadd.f32 %v3157, %v3396
      %v3517 = vadd.f32 %v3158, %v3399
      %v3518 = vadd.f32 %v3159, %v3404
      %v3519 = vadd.f32 %v3160, %v3407
      %v3520 = vadd.f32 %v3161, %v3412
      %v3521 = vadd.f32 %v3162, %v3415
      %v3522 = vadd.f32 %v3163, %v3420
      %v3523 = vadd.f32 %v3164, %v3423
      %v3524 = vadd.f32 %v3165, %v3428
      %v3525 = vadd.f32 %v3166, %v3431
      %v3526 = vadd.f32 %v3167, %v3436
      %v3527 = vadd.f32 %v3168, %v3439
      %v3528 = vadd.f32 %v3169, %v3444
      %v3529 = vadd.f32 %v3170, %v3447
      %v3530 = vadd.f32 %v3171, %v3452
      %v3531 = vadd.f32 %v3172, %v3455
      %v3532 = vadd.f32 %v3173, %v3460
      %v3533 = vadd.f32 %v3174, %v3463
      %v3534 = vadd.f32 %v3175, %v3468
      %v3535 = vadd.f32 %v3176, %v3471
      %v3536 = vadd.f32 %v3177, %v3476
      %v3537 = vadd.f32 %v3178, %v3479
      %v3538 = vadd.f32 %v3179, %v3484
      %v3539 = vadd.f32 %v3180, %v3487
      %v3540 = vadd.f32 %v3181, %v3492
      %v3541 = vadd.f32 %v3182, %v3495
      %v3542 = vadd.f32 %v3183, %v3500
      %v3543 = vadd.f32 %v3184, %v3503
      %v3544 = vadd.f32 %v3185, %v3508
      %v3545 = vadd.f32 %v3186, %v3511
      %v3546 = vld [vmem:[%s3187] sm:$0xf]
      %v3547 = vld [vmem:[%s3187 + $0x4] sm:$0xf]
      %v3548 = vld [vmem:[%s3187 + $0x8] sm:$0x1]
      %v3549 = vld [vmem:[%s3187 + $0xc] sm:$0xf]
      %v3550 = vld [vmem:[%s3187 + $0x10] sm:$0xf]
      %v3551 = vld [vmem:[%s3187 + $0x14] sm:$0x1]
      %v3552 = vld [vmem:[%s3187 + $0x18] sm:$0xf]
      %v3553 = vld [vmem:[%s3187 + $0x1c] sm:$0xf]
      %v3554 = vld [vmem:[%s3187 + $0x20] sm:$0x1]
      %v3555 = vld [vmem:[%s3187 + $0x24] sm:$0xf]
      %v3556 = vld [vmem:[%s3187 + $0x28] sm:$0xf]
      %v3557 = vld [vmem:[%s3187 + $0x2c] sm:$0x1]
      %v3558 = vld [vmem:[%s3187 + $0x30] sm:$0xf]
      %v3559 = vld [vmem:[%s3187 + $0x34] sm:$0xf]
      %v3560 = vld [vmem:[%s3187 + $0x38] sm:$0x1]
      %v3561 = vld [vmem:[%s3187 + $0x3c] sm:$0xf]
      %v3562 = vld [vmem:[%s3187 + $0x40] sm:$0xf]
      %v3563 = vld [vmem:[%s3187 + $0x44] sm:$0x1]
      %v3564 = vld [vmem:[%s3187 + $0x48] sm:$0xf]
      %v3565 = vld [vmem:[%s3187 + $0x4c] sm:$0xf]
      %v3566 = vld [vmem:[%s3187 + $0x50] sm:$0x1]
      %v3567 = vld [vmem:[%s3187 + $0x54] sm:$0xf]
      %v3568 = vld [vmem:[%s3187 + $0x58] sm:$0xf]
      %v3569 = vld [vmem:[%s3187 + $0x5c] sm:$0x1]
      %v3570 = vld [vmem:[%s3187 + $0x60] sm:$0xf]
      %v3571 = vld [vmem:[%s3187 + $0x64] sm:$0xf]
      %v3572 = vld [vmem:[%s3187 + $0x68] sm:$0x1]
      %v3573 = vld [vmem:[%s3187 + $0x6c] sm:$0xf]
      %v3574 = vld [vmem:[%s3187 + $0x70] sm:$0xf]
      %v3575 = vld [vmem:[%s3187 + $0x74] sm:$0x1]
      %v3576 = vld [vmem:[%s3187 + $0x78] sm:$0xf]
      %v3577 = vld [vmem:[%s3187 + $0x7c] sm:$0xf]
      %v3578 = vld [vmem:[%s3187 + $0x80] sm:$0x1]
      %v3579 = vld [vmem:[%s3187 + $0x84] sm:$0xf]
      %v3580 = vld [vmem:[%s3187 + $0x88] sm:$0xf]
      %v3581 = vld [vmem:[%s3187 + $0x8c] sm:$0x1]
      %v3582 = vld [vmem:[%s3187 + $0x90] sm:$0xf]
      %v3583 = vld [vmem:[%s3187 + $0x94] sm:$0xf]
      %v3584 = vld [vmem:[%s3187 + $0x98] sm:$0x1]
      %v3585 = vld [vmem:[%s3187 + $0x9c] sm:$0xf]
      %v3586 = vld [vmem:[%s3187 + $0xa0] sm:$0xf]
      %v3587 = vld [vmem:[%s3187 + $0xa4] sm:$0x1]
      %v3588 = vld [vmem:[%s3187 + $0xa8] sm:$0xf]
      %v3589 = vld [vmem:[%s3187 + $0xac] sm:$0xf]
      %v3590 = vld [vmem:[%s3187 + $0xb0] sm:$0x1]
      %v3591 = vld [vmem:[%s3187 + $0xb4] sm:$0xf]
      %v3592 = vld [vmem:[%s3187 + $0xb8] sm:$0xf]
      %v3593 = vld [vmem:[%s3187 + $0xbc] sm:$0x1]
      %v3595 = vshrl.u32 %v3546, 16
      %v3597 = vrot.slane %v3595, 4
      %v3598 = vshll.u32 %v3546, 16
      %v3600 = vrot.slane %v3598, 5
      %v3601 = vor.u32 %v3597, %v3600
      %v3602 = vrot.slane %v3601, 4
      %v3604 = vshll.u32 %v3547, 16
      %v3606 = vrot.slane %v3604, 5
      %v3607 = vsel %vm234, %v3602, %v3606
      %v3608 = vshrl.u32 %v3547, 16
      %v3610 = vrot.slane %v3608, 4
      %v3611 = vor.u32 %v3610, %v3606
      %v3612 = vrot.slane %v3611, 4
      %v3614 = vshll.u32 %v3548, 16
      %v3616 = vrot.slane %v3614, 5
      %v3617 = vsel %vm234, %v3612, %v3616
      %v3619 = vshrl.u32 %v3549, 16
      %v3621 = vrot.slane %v3619, 4
      %v3622 = vshll.u32 %v3549, 16
      %v3624 = vrot.slane %v3622, 5
      %v3625 = vor.u32 %v3621, %v3624
      %v3626 = vrot.slane %v3625, 4
      %v3628 = vshll.u32 %v3550, 16
      %v3630 = vrot.slane %v3628, 5
      %v3631 = vsel %vm234, %v3626, %v3630
      %v3632 = vshrl.u32 %v3550, 16
      %v3634 = vrot.slane %v3632, 4
      %v3635 = vor.u32 %v3634, %v3630
      %v3636 = vrot.slane %v3635, 4
      %v3638 = vshll.u32 %v3551, 16
      %v3640 = vrot.slane %v3638, 5
      %v3641 = vsel %vm234, %v3636, %v3640
      %v3643 = vshrl.u32 %v3552, 16
      %v3645 = vrot.slane %v3643, 4
      %v3646 = vshll.u32 %v3552, 16
      %v3648 = vrot.slane %v3646, 5
      %v3649 = vor.u32 %v3645, %v3648
      %v3650 = vrot.slane %v3649, 4
      %v3652 = vshll.u32 %v3553, 16
      %v3654 = vrot.slane %v3652, 5
      %v3655 = vsel %vm234, %v3650, %v3654
      %v3656 = vshrl.u32 %v3553, 16
      %v3658 = vrot.slane %v3656, 4
      %v3659 = vor.u32 %v3658, %v3654
      %v3660 = vrot.slane %v3659, 4
      %v3662 = vshll.u32 %v3554, 16
      %v3664 = vrot.slane %v3662, 5
      %v3665 = vsel %vm234, %v3660, %v3664
      %v3667 = vshrl.u32 %v3555, 16
      %v3669 = vrot.slane %v3667, 4
      %v3670 = vshll.u32 %v3555, 16
      %v3672 = vrot.slane %v3670, 5
      %v3673 = vor.u32 %v3669, %v3672
      %v3674 = vrot.slane %v3673, 4
      %v3676 = vshll.u32 %v3556, 16
      %v3678 = vrot.slane %v3676, 5
      %v3679 = vsel %vm234, %v3674, %v3678
      %v3680 = vshrl.u32 %v3556, 16
      %v3682 = vrot.slane %v3680, 4
      %v3683 = vor.u32 %v3682, %v3678
      %v3684 = vrot.slane %v3683, 4
      %v3686 = vshll.u32 %v3557, 16
      %v3688 = vrot.slane %v3686, 5
      %v3689 = vsel %vm234, %v3684, %v3688
      %v3691 = vshrl.u32 %v3558, 16
      %v3693 = vrot.slane %v3691, 4
      %v3694 = vshll.u32 %v3558, 16
      %v3696 = vrot.slane %v3694, 5
      %v3697 = vor.u32 %v3693, %v3696
      %v3698 = vrot.slane %v3697, 4
      %v3700 = vshll.u32 %v3559, 16
      %v3702 = vrot.slane %v3700, 5
      %v3703 = vsel %vm234, %v3698, %v3702
      %v3704 = vshrl.u32 %v3559, 16
      %v3706 = vrot.slane %v3704, 4
      %v3707 = vor.u32 %v3706, %v3702
      %v3708 = vrot.slane %v3707, 4
      %v3710 = vshll.u32 %v3560, 16
      %v3712 = vrot.slane %v3710, 5
      %v3713 = vsel %vm234, %v3708, %v3712
      %v3715 = vshrl.u32 %v3561, 16
      %v3717 = vrot.slane %v3715, 4
      %v3718 = vshll.u32 %v3561, 16
      %v3720 = vrot.slane %v3718, 5
      %v3721 = vor.u32 %v3717, %v3720
      %v3722 = vrot.slane %v3721, 4
      %v3724 = vshll.u32 %v3562, 16
      %v3726 = vrot.slane %v3724, 5
      %v3727 = vsel %vm234, %v3722, %v3726
      %v3728 = vshrl.u32 %v3562, 16
      %v3730 = vrot.slane %v3728, 4
      %v3731 = vor.u32 %v3730, %v3726
      %v3732 = vrot.slane %v3731, 4
      %v3734 = vshll.u32 %v3563, 16
      %v3736 = vrot.slane %v3734, 5
      %v3737 = vsel %vm234, %v3732, %v3736
      %v3739 = vshrl.u32 %v3564, 16
      %v3741 = vrot.slane %v3739, 4
      %v3742 = vshll.u32 %v3564, 16
      %v3744 = vrot.slane %v3742, 5
      %v3745 = vor.u32 %v3741, %v3744
      %v3746 = vrot.slane %v3745, 4
      %v3748 = vshll.u32 %v3565, 16
      %v3750 = vrot.slane %v3748, 5
      %v3751 = vsel %vm234, %v3746, %v3750
      %v3752 = vshrl.u32 %v3565, 16
      %v3754 = vrot.slane %v3752, 4
      %v3755 = vor.u32 %v3754, %v3750
      %v3756 = vrot.slane %v3755, 4
      %v3758 = vshll.u32 %v3566, 16
      %v3760 = vrot.slane %v3758, 5
      %v3761 = vsel %vm234, %v3756, %v3760
      %v3763 = vshrl.u32 %v3567, 16
      %v3765 = vrot.slane %v3763, 4
      %v3766 = vshll.u32 %v3567, 16
      %v3768 = vrot.slane %v3766, 5
      %v3769 = vor.u32 %v3765, %v3768
      %v3770 = vrot.slane %v3769, 4
      %v3772 = vshll.u32 %v3568, 16
      %v3774 = vrot.slane %v3772, 5
      %v3775 = vsel %vm234, %v3770, %v3774
      %v3776 = vshrl.u32 %v3568, 16
      %v3778 = vrot.slane %v3776, 4
      %v3779 = vor.u32 %v3778, %v3774
      %v3780 = vrot.slane %v3779, 4
      %v3782 = vshll.u32 %v3569, 16
      %v3784 = vrot.slane %v3782, 5
      %v3785 = vsel %vm234, %v3780, %v3784
      %v3787 = vshrl.u32 %v3570, 16
      %v3789 = vrot.slane %v3787, 4
      %v3790 = vshll.u32 %v3570, 16
      %v3792 = vrot.slane %v3790, 5
      %v3793 = vor.u32 %v3789, %v3792
      %v3794 = vrot.slane %v3793, 4
      %v3796 = vshll.u32 %v3571, 16
      %v3798 = vrot.slane %v3796, 5
      %v3799 = vsel %vm234, %v3794, %v3798
      %v3800 = vshrl.u32 %v3571, 16
      %v3802 = vrot.slane %v3800, 4
      %v3803 = vor.u32 %v3802, %v3798
      %v3804 = vrot.slane %v3803, 4
      %v3806 = vshll.u32 %v3572, 16
      %v3808 = vrot.slane %v3806, 5
      %v3809 = vsel %vm234, %v3804, %v3808
      %v3811 = vshrl.u32 %v3573, 16
      %v3813 = vrot.slane %v3811, 4
      %v3814 = vshll.u32 %v3573, 16
      %v3816 = vrot.slane %v3814, 5
      %v3817 = vor.u32 %v3813, %v3816
      %v3818 = vrot.slane %v3817, 4
      %v3820 = vshll.u32 %v3574, 16
      %v3822 = vrot.slane %v3820, 5
      %v3823 = vsel %vm234, %v3818, %v3822
      %v3824 = vshrl.u32 %v3574, 16
      %v3826 = vrot.slane %v3824, 4
      %v3827 = vor.u32 %v3826, %v3822
      %v3828 = vrot.slane %v3827, 4
      %v3830 = vshll.u32 %v3575, 16
      %v3832 = vrot.slane %v3830, 5
      %v3833 = vsel %vm234, %v3828, %v3832
      %v3835 = vshrl.u32 %v3576, 16
      %v3837 = vrot.slane %v3835, 4
      %v3838 = vshll.u32 %v3576, 16
      %v3840 = vrot.slane %v3838, 5
      %v3841 = vor.u32 %v3837, %v3840
      %v3842 = vrot.slane %v3841, 4
      %v3844 = vshll.u32 %v3577, 16
      %v3846 = vrot.slane %v3844, 5
      %v3847 = vsel %vm234, %v3842, %v3846
      %v3848 = vshrl.u32 %v3577, 16
      %v3850 = vrot.slane %v3848, 4
      %v3851 = vor.u32 %v3850, %v3846
      %v3852 = vrot.slane %v3851, 4
      %v3854 = vshll.u32 %v3578, 16
      %v3856 = vrot.slane %v3854, 5
      %v3857 = vsel %vm234, %v3852, %v3856
      %v3859 = vshrl.u32 %v3579, 16
      %v3861 = vrot.slane %v3859, 4
      %v3862 = vshll.u32 %v3579, 16
      %v3864 = vrot.slane %v3862, 5
      %v3865 = vor.u32 %v3861, %v3864
      %v3866 = vrot.slane %v3865, 4
      %v3868 = vshll.u32 %v3580, 16
      %v3870 = vrot.slane %v3868, 5
      %v3871 = vsel %vm234, %v3866, %v3870
      %v3872 = vshrl.u32 %v3580, 16
      %v3874 = vrot.slane %v3872, 4
      %v3875 = vor.u32 %v3874, %v3870
      %v3876 = vrot.slane %v3875, 4
      %v3878 = vshll.u32 %v3581, 16
      %v3880 = vrot.slane %v3878, 5
      %v3881 = vsel %vm234, %v3876, %v3880
      %v3883 = vshrl.u32 %v3582, 16
      %v3885 = vrot.slane %v3883, 4
      %v3886 = vshll.u32 %v3582, 16
      %v3888 = vrot.slane %v3886, 5
      %v3889 = vor.u32 %v3885, %v3888
      %v3890 = vrot.slane %v3889, 4
      %v3892 = vshll.u32 %v3583, 16
      %v3894 = vrot.slane %v3892, 5
      %v3895 = vsel %vm234, %v3890, %v3894
      %v3896 = vshrl.u32 %v3583, 16
      %v3898 = vrot.slane %v3896, 4
      %v3899 = vor.u32 %v3898, %v3894
      %v3900 = vrot.slane %v3899, 4
      %v3902 = vshll.u32 %v3584, 16
      %v3904 = vrot.slane %v3902, 5
      %v3905 = vsel %vm234, %v3900, %v3904
      %v3907 = vshrl.u32 %v3585, 16
      %v3909 = vrot.slane %v3907, 4
      %v3910 = vshll.u32 %v3585, 16
      %v3912 = vrot.slane %v3910, 5
      %v3913 = vor.u32 %v3909, %v3912
      %v3914 = vrot.slane %v3913, 4
      %v3916 = vshll.u32 %v3586, 16
      %v3918 = vrot.slane %v3916, 5
      %v3919 = vsel %vm234, %v3914, %v3918
      %v3920 = vshrl.u32 %v3586, 16
      %v3922 = vrot.slane %v3920, 4
      %v3923 = vor.u32 %v3922, %v3918
      %v3924 = vrot.slane %v3923, 4
      %v3926 = vshll.u32 %v3587, 16
      %v3928 = vrot.slane %v3926, 5
      %v3929 = vsel %vm234, %v3924, %v3928
      %v3931 = vshrl.u32 %v3588, 16
      %v3933 = vrot.slane %v3931, 4
      %v3934 = vshll.u32 %v3588, 16
      %v3936 = vrot.slane %v3934, 5
      %v3937 = vor.u32 %v3933, %v3936
      %v3938 = vrot.slane %v3937, 4
      %v3940 = vshll.u32 %v3589, 16
      %v3942 = vrot.slane %v3940, 5
      %v3943 = vsel %vm234, %v3938, %v3942
      %v3944 = vshrl.u32 %v3589, 16
      %v3946 = vrot.slane %v3944, 4
      %v3947 = vor.u32 %v3946, %v3942
      %v3948 = vrot.slane %v3947, 4
      %v3950 = vshll.u32 %v3590, 16
      %v3952 = vrot.slane %v3950, 5
      %v3953 = vsel %vm234, %v3948, %v3952
      %v3955 = vshrl.u32 %v3591, 16
      %v3957 = vrot.slane %v3955, 4
      %v3958 = vshll.u32 %v3591, 16
      %v3960 = vrot.slane %v3958, 5
      %v3961 = vor.u32 %v3957, %v3960
      %v3962 = vrot.slane %v3961, 4
      %v3964 = vshll.u32 %v3592, 16
      %v3966 = vrot.slane %v3964, 5
      %v3967 = vsel %vm234, %v3962, %v3966
      %v3968 = vshrl.u32 %v3592, 16
      %v3970 = vrot.slane %v3968, 4
      %v3971 = vor.u32 %v3970, %v3966
      %v3972 = vrot.slane %v3971, 4
      %v3974 = vshll.u32 %v3593, 16
      %v3976 = vrot.slane %v3974, 5
      %v3977 = vsel %vm234, %v3972, %v3976
      %s3978 = scalar_lea.vmem %s1, 14
      %v3979 = vld [vmem:[%s3978] sm:$0x3]
      %v3980 = vunpack.c.l.b16 %v3607
      %v3981 = vunpack.c.l.b16 %v3617
      %v3982 = vunpack.c.l.b16 %v3631
      %v3983 = vunpack.c.l.b16 %v3641
      %v3984 = vunpack.c.l.b16 %v3655
      %v3985 = vunpack.c.l.b16 %v3665
      %v3986 = vunpack.c.l.b16 %v3679
      %v3987 = vunpack.c.l.b16 %v3689
      %v3988 = vunpack.c.l.b16 %v3703
      %v3989 = vunpack.c.l.b16 %v3713
      %v3990 = vunpack.c.l.b16 %v3727
      %v3991 = vunpack.c.l.b16 %v3737
      %v3992 = vunpack.c.l.b16 %v3751
      %v3993 = vunpack.c.l.b16 %v3761
      %v3994 = vunpack.c.l.b16 %v3775
      %v3995 = vunpack.c.l.b16 %v3785
      %v3996 = vunpack.c.l.b16 %v3799
      %v3997 = vunpack.c.l.b16 %v3809
      %v3998 = vunpack.c.l.b16 %v3823
      %v3999 = vunpack.c.l.b16 %v3833
      %v4000 = vunpack.c.l.b16 %v3847
      %v4001 = vunpack.c.l.b16 %v3857
      %v4002 = vunpack.c.l.b16 %v3871
      %v4003 = vunpack.c.l.b16 %v3881
      %v4004 = vunpack.c.l.b16 %v3895
      %v4005 = vunpack.c.l.b16 %v3905
      %v4006 = vunpack.c.l.b16 %v3919
      %v4007 = vunpack.c.l.b16 %v3929
      %v4008 = vunpack.c.l.b16 %v3943
      %v4009 = vunpack.c.l.b16 %v3953
      %v4010 = vunpack.c.l.b16 %v3967
      %v4011 = vunpack.c.l.b16 %v3977
      %v4012 = vpack.c.b16 %v3981, %v3980
      %v4013 = vpack.c.b16 %v3983, %v3982
      %v4014 = vpack.c.b16 %v3985, %v3984
      %v4015 = vpack.c.b16 %v3987, %v3986
      %v4016 = vpack.c.b16 %v3989, %v3988
      %v4017 = vpack.c.b16 %v3991, %v3990
      %v4018 = vpack.c.b16 %v3993, %v3992
      %v4019 = vpack.c.b16 %v3995, %v3994
      %v4020 = vpack.c.b16 %v3997, %v3996
      %v4021 = vpack.c.b16 %v3999, %v3998
      %v4022 = vpack.c.b16 %v4001, %v4000
      %v4023 = vpack.c.b16 %v4003, %v4002
      %v4024 = vpack.c.b16 %v4005, %v4004
      %v4025 = vpack.c.b16 %v4007, %v4006
      %v4026 = vpack.c.b16 %v4009, %v4008
      %v4027 = vpack.c.b16 %v4011, %v4010
      %v4029 = vsel %vm669, %v4012, 0
      %v4032 = vsel %vm669, %v4013, 0
      %v4035 = vsel %vm669, %v4014, 0
      %v4038 = vsel %vm669, %v4015, 0
      %v4041 = vsel %vm669, %v4016, 0
      %v4044 = vsel %vm669, %v4017, 0
      %v4047 = vsel %vm669, %v4018, 0
      %v4050 = vsel %vm669, %v4019, 0
      %v4053 = vsel %vm669, %v4020, 0
      %v4056 = vsel %vm669, %v4021, 0
      %v4059 = vsel %vm669, %v4022, 0
      %v4062 = vsel %vm669, %v4023, 0
      %v4065 = vsel %vm669, %v4024, 0
      %v4068 = vsel %vm669, %v4025, 0
      %v4071 = vsel %vm669, %v4026, 0
      %v4074 = vsel %vm669, %v4027, 0
      %v4077 = vsel %vm718, %v3979, 0
      %4079 = vmatprep.subr.bf16.mxu0 0
      %4080 = vmatpush1.bf16.msra.mxu0 0
      %4081 = vmatprep.subr.bf16.mxu0 0
      %4082 = vmatpush1.bf16.msra.mxu0 0
      %4083 = vmatprep.subr.bf16.mxu0 0
      %4084 = vmatpush1.bf16.msra.mxu0 0
      %4085 = vmatprep.subr.bf16.mxu0 0
      %4086 = vmatpush1.bf16.msra.mxu0 0
      %4087 = vmatprep.subr.bf16.mxu0 0
      %4088 = vmatpush1.bf16.msra.mxu0 0
      %4089 = vmatprep.subr.bf16.mxu0 0
      %4090 = vmatpush1.bf16.msra.mxu0 0
      %4091 = vmatprep.subr.bf16.mxu0 0
      %4092 = vmatpush1.bf16.msra.mxu0 0
      %4093 = vmatprep.subr.bf16.mxu0 0
      %4094 = vmatpush1.bf16.msra.mxu0 %v4077
      %4095 = vmatprep.subr.bf16.mxu0 0
      %4096 = vmatpush2.bf16.msra.mxu0 0
      %4097 = vmatprep.subr.bf16.mxu0 0
      %4098 = vmatpush2.bf16.msra.mxu0 0
      %4099 = vmatprep.subr.bf16.mxu0 0
      %4100 = vmatpush2.bf16.msra.mxu0 0
      %4101 = vmatprep.subr.bf16.mxu0 0
      %4102 = vmatpush2.bf16.msra.mxu0 0
      %4103 = vmatprep.subr.bf16.mxu0 0
      %4104 = vmatpush2.bf16.msra.mxu0 0
      %4105 = vmatprep.subr.bf16.mxu0 0
      %4106 = vmatpush2.bf16.msra.mxu0 0
      %4107 = vmatprep.subr.bf16.mxu0 0
      %4108 = vmatpush2.bf16.msra.mxu0 0
      %4109 = vmatprep.subr.bf16.mxu0 0
      %4110 = vmatpush2.bf16.msra.mxu0 0
      %4111 = vmatprep.mubr.bf16.mxu0 0
      %4112 = vmatmul.mubr.bf16.gmra.mxu0 %v4029
      %v4113 = vpop.f32.mrf.mxu0
      %v4114 = vadd.f32 0.0, %v4113
      %v4115 = vpop.f32.mrf.mxu0
      %v4116 = vpop.f32.mrf.mxu0
      %v4117 = vadd.f32 0.0, %v4116
      %v4118 = vpop.f32.mrf.mxu0
      %4119 = vmatprep.mubr.bf16.mxu0 0
      %4120 = vmatmul.mubr.bf16.gmra.mxu0 %v4032
      %v4121 = vpop.f32.mrf.mxu0
      %v4122 = vadd.f32 0.0, %v4121
      %v4123 = vpop.f32.mrf.mxu0
      %v4124 = vpop.f32.mrf.mxu0
      %v4125 = vadd.f32 0.0, %v4124
      %v4126 = vpop.f32.mrf.mxu0
      %4127 = vmatprep.mubr.bf16.mxu0 0
      %4128 = vmatmul.mubr.bf16.gmra.mxu0 %v4035
      %v4129 = vpop.f32.mrf.mxu0
      %v4130 = vadd.f32 0.0, %v4129
      %v4131 = vpop.f32.mrf.mxu0
      %v4132 = vpop.f32.mrf.mxu0
      %v4133 = vadd.f32 0.0, %v4132
      %v4134 = vpop.f32.mrf.mxu0
      %4135 = vmatprep.mubr.bf16.mxu0 0
      %4136 = vmatmul.mubr.bf16.gmra.mxu0 %v4038
      %v4137 = vpop.f32.mrf.mxu0
      %v4138 = vadd.f32 0.0, %v4137
      %v4139 = vpop.f32.mrf.mxu0
      %v4140 = vpop.f32.mrf.mxu0
      %v4141 = vadd.f32 0.0, %v4140
      %v4142 = vpop.f32.mrf.mxu0
      %4143 = vmatprep.mubr.bf16.mxu0 0
      %4144 = vmatmul.mubr.bf16.gmra.mxu0 %v4041
      %v4145 = vpop.f32.mrf.mxu0
      %v4146 = vadd.f32 0.0, %v4145
      %v4147 = vpop.f32.mrf.mxu0
      %v4148 = vpop.f32.mrf.mxu0
      %v4149 = vadd.f32 0.0, %v4148
      %v4150 = vpop.f32.mrf.mxu0
      %4151 = vmatprep.mubr.bf16.mxu0 0
      %4152 = vmatmul.mubr.bf16.gmra.mxu0 %v4044
      %v4153 = vpop.f32.mrf.mxu0
      %v4154 = vadd.f32 0.0, %v4153
      %v4155 = vpop.f32.mrf.mxu0
      %v4156 = vpop.f32.mrf.mxu0
      %v4157 = vadd.f32 0.0, %v4156
      %v4158 = vpop.f32.mrf.mxu0
      %4159 = vmatprep.mubr.bf16.mxu0 0
      %4160 = vmatmul.mubr.bf16.gmra.mxu0 %v4047
      %v4161 = vpop.f32.mrf.mxu0
      %v4162 = vadd.f32 0.0, %v4161
      %v4163 = vpop.f32.mrf.mxu0
      %v4164 = vpop.f32.mrf.mxu0
      %v4165 = vadd.f32 0.0, %v4164
      %v4166 = vpop.f32.mrf.mxu0
      %4167 = vmatprep.mubr.bf16.mxu0 0
      %4168 = vmatmul.mubr.bf16.gmra.mxu0 %v4050
      %v4169 = vpop.f32.mrf.mxu0
      %v4170 = vadd.f32 0.0, %v4169
      %v4171 = vpop.f32.mrf.mxu0
      %v4172 = vpop.f32.mrf.mxu0
      %v4173 = vadd.f32 0.0, %v4172
      %v4174 = vpop.f32.mrf.mxu0
      %4175 = vmatprep.mubr.bf16.mxu0 0
      %4176 = vmatmul.mubr.bf16.gmra.mxu0 %v4053
      %v4177 = vpop.f32.mrf.mxu0
      %v4178 = vadd.f32 0.0, %v4177
      %v4179 = vpop.f32.mrf.mxu0
      %v4180 = vpop.f32.mrf.mxu0
      %v4181 = vadd.f32 0.0, %v4180
      %v4182 = vpop.f32.mrf.mxu0
      %4183 = vmatprep.mubr.bf16.mxu0 0
      %4184 = vmatmul.mubr.bf16.gmra.mxu0 %v4056
      %v4185 = vpop.f32.mrf.mxu0
      %v4186 = vadd.f32 0.0, %v4185
      %v4187 = vpop.f32.mrf.mxu0
      %v4188 = vpop.f32.mrf.mxu0
      %v4189 = vadd.f32 0.0, %v4188
      %v4190 = vpop.f32.mrf.mxu0
      %4191 = vmatprep.mubr.bf16.mxu0 0
      %4192 = vmatmul.mubr.bf16.gmra.mxu0 %v4059
      %v4193 = vpop.f32.mrf.mxu0
      %v4194 = vadd.f32 0.0, %v4193
      %v4195 = vpop.f32.mrf.mxu0
      %v4196 = vpop.f32.mrf.mxu0
      %v4197 = vadd.f32 0.0, %v4196
      %v4198 = vpop.f32.mrf.mxu0
      %4199 = vmatprep.mubr.bf16.mxu0 0
      %4200 = vmatmul.mubr.bf16.gmra.mxu0 %v4062
      %v4201 = vpop.f32.mrf.mxu0
      %v4202 = vadd.f32 0.0, %v4201
      %v4203 = vpop.f32.mrf.mxu0
      %v4204 = vpop.f32.mrf.mxu0
      %v4205 = vadd.f32 0.0, %v4204
      %v4206 = vpop.f32.mrf.mxu0
      %4207 = vmatprep.mubr.bf16.mxu0 0
      %4208 = vmatmul.mubr.bf16.gmra.mxu0 %v4065
      %v4209 = vpop.f32.mrf.mxu0
      %v4210 = vadd.f32 0.0, %v4209
      %v4211 = vpop.f32.mrf.mxu0
      %v4212 = vpop.f32.mrf.mxu0
      %v4213 = vadd.f32 0.0, %v4212
      %v4214 = vpop.f32.mrf.mxu0
      %4215 = vmatprep.mubr.bf16.mxu0 0
      %4216 = vmatmul.mubr.bf16.gmra.mxu0 %v4068
      %v4217 = vpop.f32.mrf.mxu0
      %v4218 = vadd.f32 0.0, %v4217
      %v4219 = vpop.f32.mrf.mxu0
      %v4220 = vpop.f32.mrf.mxu0
      %v4221 = vadd.f32 0.0, %v4220
      %v4222 = vpop.f32.mrf.mxu0
      %4223 = vmatprep.mubr.bf16.mxu0 0
      %4224 = vmatmul.mubr.bf16.gmra.mxu0 %v4071
      %v4225 = vpop.f32.mrf.mxu0
      %v4226 = vadd.f32 0.0, %v4225
      %v4227 = vpop.f32.mrf.mxu0
      %v4228 = vpop.f32.mrf.mxu0
      %v4229 = vadd.f32 0.0, %v4228
      %v4230 = vpop.f32.mrf.mxu0
      %4231 = vmatprep.mubr.bf16.mxu0 0
      %4232 = vmatmul.mubr.bf16.gmra.mxu0 %v4074
      %v4233 = vpop.f32.mrf.mxu0
      %v4234 = vadd.f32 0.0, %v4233
      %v4235 = vpop.f32.mrf.mxu0
      %v4236 = vpop.f32.mrf.mxu0
      %v4237 = vadd.f32 0.0, %v4236
      %v4238 = vpop.f32.mrf.mxu0
      %4239 = vdwg.mxu0
      %v4240 = vadd.f32 %v3514, %v4114
      %v4241 = vadd.f32 %v3515, %v4117
      %v4242 = vadd.f32 %v3516, %v4122
      %v4243 = vadd.f32 %v3517, %v4125
      %v4244 = vadd.f32 %v3518, %v4130
      %v4245 = vadd.f32 %v3519, %v4133
      %v4246 = vadd.f32 %v3520, %v4138
      %v4247 = vadd.f32 %v3521, %v4141
      %v4248 = vadd.f32 %v3522, %v4146
      %v4249 = vadd.f32 %v3523, %v4149
      %v4250 = vadd.f32 %v3524, %v4154
      %v4251 = vadd.f32 %v3525, %v4157
      %v4252 = vadd.f32 %v3526, %v4162
      %v4253 = vadd.f32 %v3527, %v4165
      %v4254 = vadd.f32 %v3528, %v4170
      %v4255 = vadd.f32 %v3529, %v4173
      %v4256 = vadd.f32 %v3530, %v4178
      %v4257 = vadd.f32 %v3531, %v4181
      %v4258 = vadd.f32 %v3532, %v4186
      %v4259 = vadd.f32 %v3533, %v4189
      %v4260 = vadd.f32 %v3534, %v4194
      %v4261 = vadd.f32 %v3535, %v4197
      %v4262 = vadd.f32 %v3536, %v4202
      %v4263 = vadd.f32 %v3537, %v4205
      %v4264 = vadd.f32 %v3538, %v4210
      %v4265 = vadd.f32 %v3539, %v4213
      %v4266 = vadd.f32 %v3540, %v4218
      %v4267 = vadd.f32 %v3541, %v4221
      %v4268 = vadd.f32 %v3542, %v4226
      %v4269 = vadd.f32 %v3543, %v4229
      %v4270 = vadd.f32 %v3544, %v4234
      %v4271 = vadd.f32 %v3545, %v4237
      %v4272 = vld [vmem:[%s3187] sm:$0xe]
      %v4273 = vld [vmem:[%s3187 + $0xc] sm:$0xe]
      %v4274 = vld [vmem:[%s3187 + $0x18] sm:$0xe]
      %v4275 = vld [vmem:[%s3187 + $0x24] sm:$0xe]
      %v4276 = vld [vmem:[%s3187 + $0x30] sm:$0xe]
      %v4277 = vld [vmem:[%s3187 + $0x3c] sm:$0xe]
      %v4278 = vld [vmem:[%s3187 + $0x48] sm:$0xe]
      %v4279 = vld [vmem:[%s3187 + $0x54] sm:$0xe]
      %v4280 = vld [vmem:[%s3187 + $0x60] sm:$0xe]
      %v4281 = vld [vmem:[%s3187 + $0x6c] sm:$0xe]
      %v4282 = vld [vmem:[%s3187 + $0x78] sm:$0xe]
      %v4283 = vld [vmem:[%s3187 + $0x84] sm:$0xe]
      %v4284 = vld [vmem:[%s3187 + $0x90] sm:$0xe]
      %v4285 = vld [vmem:[%s3187 + $0x9c] sm:$0xe]
      %v4286 = vld [vmem:[%s3187 + $0xa8] sm:$0xe]
      %v4287 = vld [vmem:[%s3187 + $0xb4] sm:$0xe]
      %v4336 = vrot.slane %v4272, 5
      %v4337 = vrot.slane %v4336, 4
      %v4338 = vrot.slane %v3547, 5
      %v4339 = vsel %vm1225, %v4337, %v4338
      %v4340 = vrot.slane %v4338, 4
      %v4341 = vrot.slane %v3548, 5
      %v4342 = vsel %vm1225, %v4340, %v4341
      %v4343 = vrot.slane %v4273, 5
      %v4344 = vrot.slane %v4343, 4
      %v4345 = vrot.slane %v3550, 5
      %v4346 = vsel %vm1225, %v4344, %v4345
      %v4347 = vrot.slane %v4345, 4
      %v4348 = vrot.slane %v3551, 5
      %v4349 = vsel %vm1225, %v4347, %v4348
      %v4350 = vrot.slane %v4274, 5
      %v4351 = vrot.slane %v4350, 4
      %v4352 = vrot.slane %v3553, 5
      %v4353 = vsel %vm1225, %v4351, %v4352
      %v4354 = vrot.slane %v4352, 4
      %v4355 = vrot.slane %v3554, 5
      %v4356 = vsel %vm1225, %v4354, %v4355
      %v4357 = vrot.slane %v4275, 5
      %v4358 = vrot.slane %v4357, 4
      %v4359 = vrot.slane %v3556, 5
      %v4360 = vsel %vm1225, %v4358, %v4359
      %v4361 = vrot.slane %v4359, 4
      %v4362 = vrot.slane %v3557, 5
      %v4363 = vsel %vm1225, %v4361, %v4362
      %v4364 = vrot.slane %v4276, 5
      %v4365 = vrot.slane %v4364, 4
      %v4366 = vrot.slane %v3559, 5
      %v4367 = vsel %vm1225, %v4365, %v4366
      %v4368 = vrot.slane %v4366, 4
      %v4369 = vrot.slane %v3560, 5
      %v4370 = vsel %vm1225, %v4368, %v4369
      %v4371 = vrot.slane %v4277, 5
      %v4372 = vrot.slane %v4371, 4
      %v4373 = vrot.slane %v3562, 5
      %v4374 = vsel %vm1225, %v4372, %v4373
      %v4375 = vrot.slane %v4373, 4
      %v4376 = vrot.slane %v3563, 5
      %v4377 = vsel %vm1225, %v4375, %v4376
      %v4378 = vrot.slane %v4278, 5
      %v4379 = vrot.slane %v4378, 4
      %v4380 = vrot.slane %v3565, 5
      %v4381 = vsel %vm1225, %v4379, %v4380
      %v4382 = vrot.slane %v4380, 4
      %v4383 = vrot.slane %v3566, 5
      %v4384 = vsel %vm1225, %v4382, %v4383
      %v4385 = vrot.slane %v4279, 5
      %v4386 = vrot.slane %v4385, 4
      %v4387 = vrot.slane %v3568, 5
      %v4388 = vsel %vm1225, %v4386, %v4387
      %v4389 = vrot.slane %v4387, 4
      %v4390 = vrot.slane %v3569, 5
      %v4391 = vsel %vm1225, %v4389, %v4390
      %v4392 = vrot.slane %v4280, 5
      %v4393 = vrot.slane %v4392, 4
      %v4394 = vrot.slane %v3571, 5
      %v4395 = vsel %vm1225, %v4393, %v4394
      %v4396 = vrot.slane %v4394, 4
      %v4397 = vrot.slane %v3572, 5
      %v4398 = vsel %vm1225, %v4396, %v4397
      %v4399 = vrot.slane %v4281, 5
      %v4400 = vrot.slane %v4399, 4
      %v4401 = vrot.slane %v3574, 5
      %v4402 = vsel %vm1225, %v4400, %v4401
      %v4403 = vrot.slane %v4401, 4
      %v4404 = vrot.slane %v3575, 5
      %v4405 = vsel %vm1225, %v4403, %v4404
      %v4406 = vrot.slane %v4282, 5
      %v4407 = vrot.slane %v4406, 4
      %v4408 = vrot.slane %v3577, 5
      %v4409 = vsel %vm1225, %v4407, %v4408
      %v4410 = vrot.slane %v4408, 4
      %v4411 = vrot.slane %v3578, 5
      %v4412 = vsel %vm1225, %v4410, %v4411
      %v4413 = vrot.slane %v4283, 5
      %v4414 = vrot.slane %v4413, 4
      %v4415 = vrot.slane %v3580, 5
      %v4416 = vsel %vm1225, %v4414, %v4415
      %v4417 = vrot.slane %v4415, 4
      %v4418 = vrot.slane %v3581, 5
      %v4419 = vsel %vm1225, %v4417, %v4418
      %v4420 = vrot.slane %v4284, 5
      %v4421 = vrot.slane %v4420, 4
      %v4422 = vrot.slane %v3583, 5
      %v4423 = vsel %vm1225, %v4421, %v4422
      %v4424 = vrot.slane %v4422, 4
      %v4425 = vrot.slane %v3584, 5
      %v4426 = vsel %vm1225, %v4424, %v4425
      %v4427 = vrot.slane %v4285, 5
      %v4428 = vrot.slane %v4427, 4
      %v4429 = vrot.slane %v3586, 5
      %v4430 = vsel %vm1225, %v4428, %v4429
      %v4431 = vrot.slane %v4429, 4
      %v4432 = vrot.slane %v3587, 5
      %v4433 = vsel %vm1225, %v4431, %v4432
      %v4434 = vrot.slane %v4286, 5
      %v4435 = vrot.slane %v4434, 4
      %v4436 = vrot.slane %v3589, 5
      %v4437 = vsel %vm1225, %v4435, %v4436
      %v4438 = vrot.slane %v4436, 4
      %v4439 = vrot.slane %v3590, 5
      %v4440 = vsel %vm1225, %v4438, %v4439
      %v4441 = vrot.slane %v4287, 5
      %v4442 = vrot.slane %v4441, 4
      %v4443 = vrot.slane %v3592, 5
      %v4444 = vsel %vm1225, %v4442, %v4443
      %v4445 = vrot.slane %v4443, 4
      %v4446 = vrot.slane %v3593, 5
      %v4447 = vsel %vm1225, %v4445, %v4446
      %s4448 = scalar_lea.vmem %s1, 16
      %v4449 = vld [vmem:[%s4448] sm:$0x3]
      %v4450 = vunpack.c.l.b16 %v4339
      %v4451 = vunpack.c.l.b16 %v4342
      %v4452 = vunpack.c.l.b16 %v4346
      %v4453 = vunpack.c.l.b16 %v4349
      %v4454 = vunpack.c.l.b16 %v4353
      %v4455 = vunpack.c.l.b16 %v4356
      %v4456 = vunpack.c.l.b16 %v4360
      %v4457 = vunpack.c.l.b16 %v4363
      %v4458 = vunpack.c.l.b16 %v4367
      %v4459 = vunpack.c.l.b16 %v4370
      %v4460 = vunpack.c.l.b16 %v4374
      %v4461 = vunpack.c.l.b16 %v4377
      %v4462 = vunpack.c.l.b16 %v4381
      %v4463 = vunpack.c.l.b16 %v4384
      %v4464 = vunpack.c.l.b16 %v4388
      %v4465 = vunpack.c.l.b16 %v4391
      %v4466 = vunpack.c.l.b16 %v4395
      %v4467 = vunpack.c.l.b16 %v4398
      %v4468 = vunpack.c.l.b16 %v4402
      %v4469 = vunpack.c.l.b16 %v4405
      %v4470 = vunpack.c.l.b16 %v4409
      %v4471 = vunpack.c.l.b16 %v4412
      %v4472 = vunpack.c.l.b16 %v4416
      %v4473 = vunpack.c.l.b16 %v4419
      %v4474 = vunpack.c.l.b16 %v4423
      %v4475 = vunpack.c.l.b16 %v4426
      %v4476 = vunpack.c.l.b16 %v4430
      %v4477 = vunpack.c.l.b16 %v4433
      %v4478 = vunpack.c.l.b16 %v4437
      %v4479 = vunpack.c.l.b16 %v4440
      %v4480 = vunpack.c.l.b16 %v4444
      %v4481 = vunpack.c.l.b16 %v4447
      %v4482 = vpack.c.b16 %v4451, %v4450
      %v4483 = vpack.c.b16 %v4453, %v4452
      %v4484 = vpack.c.b16 %v4455, %v4454
      %v4485 = vpack.c.b16 %v4457, %v4456
      %v4486 = vpack.c.b16 %v4459, %v4458
      %v4487 = vpack.c.b16 %v4461, %v4460
      %v4488 = vpack.c.b16 %v4463, %v4462
      %v4489 = vpack.c.b16 %v4465, %v4464
      %v4490 = vpack.c.b16 %v4467, %v4466
      %v4491 = vpack.c.b16 %v4469, %v4468
      %v4492 = vpack.c.b16 %v4471, %v4470
      %v4493 = vpack.c.b16 %v4473, %v4472
      %v4494 = vpack.c.b16 %v4475, %v4474
      %v4495 = vpack.c.b16 %v4477, %v4476
      %v4496 = vpack.c.b16 %v4479, %v4478
      %v4497 = vpack.c.b16 %v4481, %v4480
      %v4499 = vsel %vm669, %v4482, 0
      %v4502 = vsel %vm669, %v4483, 0
      %v4505 = vsel %vm669, %v4484, 0
      %v4508 = vsel %vm669, %v4485, 0
      %v4511 = vsel %vm669, %v4486, 0
      %v4514 = vsel %vm669, %v4487, 0
      %v4517 = vsel %vm669, %v4488, 0
      %v4520 = vsel %vm669, %v4489, 0
      %v4523 = vsel %vm669, %v4490, 0
      %v4526 = vsel %vm669, %v4491, 0
      %v4529 = vsel %vm669, %v4492, 0
      %v4532 = vsel %vm669, %v4493, 0
      %v4535 = vsel %vm669, %v4494, 0
      %v4538 = vsel %vm669, %v4495, 0
      %v4541 = vsel %vm669, %v4496, 0
      %v4544 = vsel %vm669, %v4497, 0
      %v4547 = vsel %vm718, %v4449, 0
      %4549 = vmatprep.subr.bf16.mxu0 0
      %4550 = vmatpush1.bf16.msra.mxu0 0
      %4551 = vmatprep.subr.bf16.mxu0 0
      %4552 = vmatpush1.bf16.msra.mxu0 0
      %4553 = vmatprep.subr.bf16.mxu0 0
      %4554 = vmatpush1.bf16.msra.mxu0 0
      %4555 = vmatprep.subr.bf16.mxu0 0
      %4556 = vmatpush1.bf16.msra.mxu0 0
      %4557 = vmatprep.subr.bf16.mxu0 0
      %4558 = vmatpush1.bf16.msra.mxu0 0
      %4559 = vmatprep.subr.bf16.mxu0 0
      %4560 = vmatpush1.bf16.msra.mxu0 0
      %4561 = vmatprep.subr.bf16.mxu0 0
      %4562 = vmatpush1.bf16.msra.mxu0 0
      %4563 = vmatprep.subr.bf16.mxu0 0
      %4564 = vmatpush1.bf16.msra.mxu0 %v4547
      %4565 = vmatprep.subr.bf16.mxu0 0
      %4566 = vmatpush2.bf16.msra.mxu0 0
      %4567 = vmatprep.subr.bf16.mxu0 0
      %4568 = vmatpush2.bf16.msra.mxu0 0
      %4569 = vmatprep.subr.bf16.mxu0 0
      %4570 = vmatpush2.bf16.msra.mxu0 0
      %4571 = vmatprep.subr.bf16.mxu0 0
      %4572 = vmatpush2.bf16.msra.mxu0 0
      %4573 = vmatprep.subr.bf16.mxu0 0
      %4574 = vmatpush2.bf16.msra.mxu0 0
      %4575 = vmatprep.subr.bf16.mxu0 0
      %4576 = vmatpush2.bf16.msra.mxu0 0
      %4577 = vmatprep.subr.bf16.mxu0 0
      %4578 = vmatpush2.bf16.msra.mxu0 0
      %4579 = vmatprep.subr.bf16.mxu0 0
      %4580 = vmatpush2.bf16.msra.mxu0 0
      %4581 = vmatprep.mubr.bf16.mxu0 0
      %4582 = vmatmul.mubr.bf16.gmra.mxu0 %v4499
      %v4583 = vpop.f32.mrf.mxu0
      %v4584 = vadd.f32 0.0, %v4583
      %v4585 = vpop.f32.mrf.mxu0
      %v4586 = vpop.f32.mrf.mxu0
      %v4587 = vadd.f32 0.0, %v4586
      %v4588 = vpop.f32.mrf.mxu0
      %4589 = vmatprep.mubr.bf16.mxu0 0
      %4590 = vmatmul.mubr.bf16.gmra.mxu0 %v4502
      %v4591 = vpop.f32.mrf.mxu0
      %v4592 = vadd.f32 0.0, %v4591
      %v4593 = vpop.f32.mrf.mxu0
      %v4594 = vpop.f32.mrf.mxu0
      %v4595 = vadd.f32 0.0, %v4594
      %v4596 = vpop.f32.mrf.mxu0
      %4597 = vmatprep.mubr.bf16.mxu0 0
      %4598 = vmatmul.mubr.bf16.gmra.mxu0 %v4505
      %v4599 = vpop.f32.mrf.mxu0
      %v4600 = vadd.f32 0.0, %v4599
      %v4601 = vpop.f32.mrf.mxu0
      %v4602 = vpop.f32.mrf.mxu0
      %v4603 = vadd.f32 0.0, %v4602
      %v4604 = vpop.f32.mrf.mxu0
      %4605 = vmatprep.mubr.bf16.mxu0 0
      %4606 = vmatmul.mubr.bf16.gmra.mxu0 %v4508
      %v4607 = vpop.f32.mrf.mxu0
      %v4608 = vadd.f32 0.0, %v4607
      %v4609 = vpop.f32.mrf.mxu0
      %v4610 = vpop.f32.mrf.mxu0
      %v4611 = vadd.f32 0.0, %v4610
      %v4612 = vpop.f32.mrf.mxu0
      %4613 = vmatprep.mubr.bf16.mxu0 0
      %4614 = vmatmul.mubr.bf16.gmra.mxu0 %v4511
      %v4615 = vpop.f32.mrf.mxu0
      %v4616 = vadd.f32 0.0, %v4615
      %v4617 = vpop.f32.mrf.mxu0
      %v4618 = vpop.f32.mrf.mxu0
      %v4619 = vadd.f32 0.0, %v4618
      %v4620 = vpop.f32.mrf.mxu0
      %4621 = vmatprep.mubr.bf16.mxu0 0
      %4622 = vmatmul.mubr.bf16.gmra.mxu0 %v4514
      %v4623 = vpop.f32.mrf.mxu0
      %v4624 = vadd.f32 0.0, %v4623
      %v4625 = vpop.f32.mrf.mxu0
      %v4626 = vpop.f32.mrf.mxu0
      %v4627 = vadd.f32 0.0, %v4626
      %v4628 = vpop.f32.mrf.mxu0
      %4629 = vmatprep.mubr.bf16.mxu0 0
      %4630 = vmatmul.mubr.bf16.gmra.mxu0 %v4517
      %v4631 = vpop.f32.mrf.mxu0
      %v4632 = vadd.f32 0.0, %v4631
      %v4633 = vpop.f32.mrf.mxu0
      %v4634 = vpop.f32.mrf.mxu0
      %v4635 = vadd.f32 0.0, %v4634
      %v4636 = vpop.f32.mrf.mxu0
      %4637 = vmatprep.mubr.bf16.mxu0 0
      %4638 = vmatmul.mubr.bf16.gmra.mxu0 %v4520
      %v4639 = vpop.f32.mrf.mxu0
      %v4640 = vadd.f32 0.0, %v4639
      %v4641 = vpop.f32.mrf.mxu0
      %v4642 = vpop.f32.mrf.mxu0
      %v4643 = vadd.f32 0.0, %v4642
      %v4644 = vpop.f32.mrf.mxu0
      %4645 = vmatprep.mubr.bf16.mxu0 0
      %4646 = vmatmul.mubr.bf16.gmra.mxu0 %v4523
      %v4647 = vpop.f32.mrf.mxu0
      %v4648 = vadd.f32 0.0, %v4647
      %v4649 = vpop.f32.mrf.mxu0
      %v4650 = vpop.f32.mrf.mxu0
      %v4651 = vadd.f32 0.0, %v4650
      %v4652 = vpop.f32.mrf.mxu0
      %4653 = vmatprep.mubr.bf16.mxu0 0
      %4654 = vmatmul.mubr.bf16.gmra.mxu0 %v4526
      %v4655 = vpop.f32.mrf.mxu0
      %v4656 = vadd.f32 0.0, %v4655
      %v4657 = vpop.f32.mrf.mxu0
      %v4658 = vpop.f32.mrf.mxu0
      %v4659 = vadd.f32 0.0, %v4658
      %v4660 = vpop.f32.mrf.mxu0
      %4661 = vmatprep.mubr.bf16.mxu0 0
      %4662 = vmatmul.mubr.bf16.gmra.mxu0 %v4529
      %v4663 = vpop.f32.mrf.mxu0
      %v4664 = vadd.f32 0.0, %v4663
      %v4665 = vpop.f32.mrf.mxu0
      %v4666 = vpop.f32.mrf.mxu0
      %v4667 = vadd.f32 0.0, %v4666
      %v4668 = vpop.f32.mrf.mxu0
      %4669 = vmatprep.mubr.bf16.mxu0 0
      %4670 = vmatmul.mubr.bf16.gmra.mxu0 %v4532
      %v4671 = vpop.f32.mrf.mxu0
      %v4672 = vadd.f32 0.0, %v4671
      %v4673 = vpop.f32.mrf.mxu0
      %v4674 = vpop.f32.mrf.mxu0
      %v4675 = vadd.f32 0.0, %v4674
      %v4676 = vpop.f32.mrf.mxu0
      %4677 = vmatprep.mubr.bf16.mxu0 0
      %4678 = vmatmul.mubr.bf16.gmra.mxu0 %v4535
      %v4679 = vpop.f32.mrf.mxu0
      %v4680 = vadd.f32 0.0, %v4679
      %v4681 = vpop.f32.mrf.mxu0
      %v4682 = vpop.f32.mrf.mxu0
      %v4683 = vadd.f32 0.0, %v4682
      %v4684 = vpop.f32.mrf.mxu0
      %4685 = vmatprep.mubr.bf16.mxu0 0
      %4686 = vmatmul.mubr.bf16.gmra.mxu0 %v4538
      %v4687 = vpop.f32.mrf.mxu0
      %v4688 = vadd.f32 0.0, %v4687
      %v4689 = vpop.f32.mrf.mxu0
      %v4690 = vpop.f32.mrf.mxu0
      %v4691 = vadd.f32 0.0, %v4690
      %v4692 = vpop.f32.mrf.mxu0
      %4693 = vmatprep.mubr.bf16.mxu0 0
      %4694 = vmatmul.mubr.bf16.gmra.mxu0 %v4541
      %v4695 = vpop.f32.mrf.mxu0
      %v4696 = vadd.f32 0.0, %v4695
      %v4697 = vpop.f32.mrf.mxu0
      %v4698 = vpop.f32.mrf.mxu0
      %v4699 = vadd.f32 0.0, %v4698
      %v4700 = vpop.f32.mrf.mxu0
      %4701 = vmatprep.mubr.bf16.mxu0 0
      %4702 = vmatmul.mubr.bf16.gmra.mxu0 %v4544
      %v4703 = vpop.f32.mrf.mxu0
      %v4704 = vadd.f32 0.0, %v4703
      %v4705 = vpop.f32.mrf.mxu0
      %v4706 = vpop.f32.mrf.mxu0
      %v4707 = vadd.f32 0.0, %v4706
      %v4708 = vpop.f32.mrf.mxu0
      %4709 = vdwg.mxu0
      %v4710 = vadd.f32 %v4240, %v4584
      %v4711 = vadd.f32 %v4241, %v4587
      %v4712 = vadd.f32 %v4242, %v4592
      %v4713 = vadd.f32 %v4243, %v4595
      %v4714 = vadd.f32 %v4244, %v4600
      %v4715 = vadd.f32 %v4245, %v4603
      %v4716 = vadd.f32 %v4246, %v4608
      %v4717 = vadd.f32 %v4247, %v4611
      %v4718 = vadd.f32 %v4248, %v4616
      %v4719 = vadd.f32 %v4249, %v4619
      %v4720 = vadd.f32 %v4250, %v4624
      %v4721 = vadd.f32 %v4251, %v4627
      %v4722 = vadd.f32 %v4252, %v4632
      %v4723 = vadd.f32 %v4253, %v4635
      %v4724 = vadd.f32 %v4254, %v4640
      %v4725 = vadd.f32 %v4255, %v4643
      %v4726 = vadd.f32 %v4256, %v4648
      %v4727 = vadd.f32 %v4257, %v4651
      %v4728 = vadd.f32 %v4258, %v4656
      %v4729 = vadd.f32 %v4259, %v4659
      %v4730 = vadd.f32 %v4260, %v4664
      %v4731 = vadd.f32 %v4261, %v4667
      %v4732 = vadd.f32 %v4262, %v4672
      %v4733 = vadd.f32 %v4263, %v4675
      %v4734 = vadd.f32 %v4264, %v4680
      %v4735 = vadd.f32 %v4265, %v4683
      %v4736 = vadd.f32 %v4266, %v4688
      %v4737 = vadd.f32 %v4267, %v4691
      %v4738 = vadd.f32 %v4268, %v4696
      %v4739 = vadd.f32 %v4269, %v4699
      %v4740 = vadd.f32 %v4270, %v4704
      %v4741 = vadd.f32 %v4271, %v4707
      %vm4742 = vcmask 64512
      %v4743 = vsel %vm4742, %v4710, 0.0
      %v4744 = vsel %vm4742, %v4711, 0.0
      %v4745 = vadd.f32 %v4743, %v4744
      %v4746 = vsel %vm4742, %v4712, 0.0
      %v4747 = vadd.f32 %v4745, %v4746
      %v4748 = vsel %vm4742, %v4713, 0.0
      %v4749 = vadd.f32 %v4747, %v4748
      %v4750 = vsel %vm4742, %v4714, 0.0
      %v4751 = vadd.f32 %v4749, %v4750
      %v4752 = vsel %vm4742, %v4715, 0.0
      %v4753 = vadd.f32 %v4751, %v4752
      %v4754 = vsel %vm4742, %v4716, 0.0
      %v4755 = vadd.f32 %v4753, %v4754
      %v4756 = vsel %vm4742, %v4717, 0.0
      %v4757 = vadd.f32 %v4755, %v4756
      %v4758 = vsel %vm4742, %v4718, 0.0
      %v4759 = vadd.f32 %v4757, %v4758
      %v4760 = vsel %vm4742, %v4719, 0.0
      %v4761 = vadd.f32 %v4759, %v4760
      %v4762 = vsel %vm4742, %v4720, 0.0
      %v4763 = vadd.f32 %v4761, %v4762
      %v4764 = vsel %vm4742, %v4721, 0.0
      %v4765 = vadd.f32 %v4763, %v4764
      %v4766 = vsel %vm4742, %v4722, 0.0
      %v4767 = vadd.f32 %v4765, %v4766
      %v4768 = vsel %vm4742, %v4723, 0.0
      %v4769 = vadd.f32 %v4767, %v4768
      %v4770 = vsel %vm4742, %v4724, 0.0
      %v4771 = vadd.f32 %v4769, %v4770
      %v4772 = vsel %vm4742, %v4725, 0.0
      %v4773 = vadd.f32 %v4771, %v4772
      %v4774 = vsel %vm4742, %v4726, 0.0
      %v4775 = vadd.f32 %v4773, %v4774
      %v4776 = vsel %vm4742, %v4727, 0.0
      %v4777 = vadd.f32 %v4775, %v4776
      %v4778 = vsel %vm4742, %v4728, 0.0
      %v4779 = vadd.f32 %v4777, %v4778
      %v4780 = vsel %vm4742, %v4729, 0.0
      %v4781 = vadd.f32 %v4779, %v4780
      %v4782 = vsel %vm4742, %v4730, 0.0
      %v4783 = vadd.f32 %v4781, %v4782
      %v4784 = vsel %vm4742, %v4731, 0.0
      %v4785 = vadd.f32 %v4783, %v4784
      %v4786 = vsel %vm4742, %v4732, 0.0
      %v4787 = vadd.f32 %v4785, %v4786
      %v4788 = vsel %vm4742, %v4733, 0.0
      %v4789 = vadd.f32 %v4787, %v4788
      %v4790 = vsel %vm4742, %v4734, 0.0
      %v4791 = vadd.f32 %v4789, %v4790
      %v4792 = vsel %vm4742, %v4735, 0.0
      %v4793 = vadd.f32 %v4791, %v4792
      %v4794 = vsel %vm4742, %v4736, 0.0
      %v4795 = vadd.f32 %v4793, %v4794
      %v4796 = vsel %vm4742, %v4737, 0.0
      %v4797 = vadd.f32 %v4795, %v4796
      %v4798 = vsel %vm4742, %v4738, 0.0
      %v4799 = vadd.f32 %v4797, %v4798
      %v4800 = vsel %vm4742, %v4739, 0.0
      %v4801 = vadd.f32 %v4799, %v4800
      %v4802 = vsel %vm4742, %v4740, 0.0
      %v4803 = vadd.f32 %v4801, %v4802
      %v4804 = vsel %vm4742, %v4741, 0.0
      %v4805 = vadd.f32 %v4803, %v4804
      %v4806 = vrot.slane %v4805, 4
      %v4807 = vadd.f32 %v4805, %v4806
      %v4808 = vrot.slane %v4807, 2
      %v4809 = vadd.f32 %v4807, %v4808
      %v4810 = vrot.slane %v4809, 1
      %v4811 = vadd.f32 %v4809, %v4810
      %v4812 = vmul.f32 %v4710, %v4710
      %v4813 = vmul.f32 %v4711, %v4711
      %v4814 = vmul.f32 %v4712, %v4712
      %v4815 = vmul.f32 %v4713, %v4713
      %v4816 = vmul.f32 %v4714, %v4714
      %v4817 = vmul.f32 %v4715, %v4715
      %v4818 = vmul.f32 %v4716, %v4716
      %v4819 = vmul.f32 %v4717, %v4717
      %v4820 = vmul.f32 %v4718, %v4718
      %v4821 = vmul.f32 %v4719, %v4719
      %v4822 = vmul.f32 %v4720, %v4720
      %v4823 = vmul.f32 %v4721, %v4721
      %v4824 = vmul.f32 %v4722, %v4722
      %v4825 = vmul.f32 %v4723, %v4723
      %v4826 = vmul.f32 %v4724, %v4724
      %v4827 = vmul.f32 %v4725, %v4725
      %v4828 = vmul.f32 %v4726, %v4726
      %v4829 = vmul.f32 %v4727, %v4727
      %v4830 = vmul.f32 %v4728, %v4728
      %v4831 = vmul.f32 %v4729, %v4729
      %v4832 = vmul.f32 %v4730, %v4730
      %v4833 = vmul.f32 %v4731, %v4731
      %v4834 = vmul.f32 %v4732, %v4732
      %v4835 = vmul.f32 %v4733, %v4733
      %v4836 = vmul.f32 %v4734, %v4734
      %v4837 = vmul.f32 %v4735, %v4735
      %v4838 = vmul.f32 %v4736, %v4736
      %v4839 = vmul.f32 %v4737, %v4737
      %v4840 = vmul.f32 %v4738, %v4738
      %v4841 = vmul.f32 %v4739, %v4739
      %v4842 = vmul.f32 %v4740, %v4740
      %v4843 = vmul.f32 %v4741, %v4741
      %v4844 = vsel %vm4742, %v4812, 0.0
      %v4845 = vsel %vm4742, %v4813, 0.0
      %v4846 = vadd.f32 %v4844, %v4845
      %v4847 = vsel %vm4742, %v4814, 0.0
      %v4848 = vadd.f32 %v4846, %v4847
      %v4849 = vsel %vm4742, %v4815, 0.0
      %v4850 = vadd.f32 %v4848, %v4849
      %v4851 = vsel %vm4742, %v4816, 0.0
      %v4852 = vadd.f32 %v4850, %v4851
      %v4853 = vsel %vm4742, %v4817, 0.0
      %v4854 = vadd.f32 %v4852, %v4853
      %v4855 = vsel %vm4742, %v4818, 0.0
      %v4856 = vadd.f32 %v4854, %v4855
      %v4857 = vsel %vm4742, %v4819, 0.0
      %v4858 = vadd.f32 %v4856, %v4857
      %v4859 = vsel %vm4742, %v4820, 0.0
      %v4860 = vadd.f32 %v4858, %v4859
      %v4861 = vsel %vm4742, %v4821, 0.0
      %v4862 = vadd.f32 %v4860, %v4861
      %v4863 = vsel %vm4742, %v4822, 0.0
      %v4864 = vadd.f32 %v4862, %v4863
      %v4865 = vsel %vm4742, %v4823, 0.0
      %v4866 = vadd.f32 %v4864, %v4865
      %v4867 = vsel %vm4742, %v4824, 0.0
      %v4868 = vadd.f32 %v4866, %v4867
      %v4869 = vsel %vm4742, %v4825, 0.0
      %v4870 = vadd.f32 %v4868, %v4869
      %v4871 = vsel %vm4742, %v4826, 0.0
      %v4872 = vadd.f32 %v4870, %v4871
      %v4873 = vsel %vm4742, %v4827, 0.0
      %v4874 = vadd.f32 %v4872, %v4873
      %v4875 = vsel %vm4742, %v4828, 0.0
      %v4876 = vadd.f32 %v4874, %v4875
      %v4877 = vsel %vm4742, %v4829, 0.0
      %v4878 = vadd.f32 %v4876, %v4877
      %v4879 = vsel %vm4742, %v4830, 0.0
      %v4880 = vadd.f32 %v4878, %v4879
      %v4881 = vsel %vm4742, %v4831, 0.0
      %v4882 = vadd.f32 %v4880, %v4881
      %v4883 = vsel %vm4742, %v4832, 0.0
      %v4884 = vadd.f32 %v4882, %v4883
      %v4885 = vsel %vm4742, %v4833, 0.0
      %v4886 = vadd.f32 %v4884, %v4885
      %v4887 = vsel %vm4742, %v4834, 0.0
      %v4888 = vadd.f32 %v4886, %v4887
      %v4889 = vsel %vm4742, %v4835, 0.0
      %v4890 = vadd.f32 %v4888, %v4889
      %v4891 = vsel %vm4742, %v4836, 0.0
      %v4892 = vadd.f32 %v4890, %v4891
      %v4893 = vsel %vm4742, %v4837, 0.0
      %v4894 = vadd.f32 %v4892, %v4893
      %v4895 = vsel %vm4742, %v4838, 0.0
      %v4896 = vadd.f32 %v4894, %v4895
      %v4897 = vsel %vm4742, %v4839, 0.0
      %v4898 = vadd.f32 %v4896, %v4897
      %v4899 = vsel %vm4742, %v4840, 0.0
      %v4900 = vadd.f32 %v4898, %v4899
      %v4901 = vsel %vm4742, %v4841, 0.0
      %v4902 = vadd.f32 %v4900, %v4901
      %v4903 = vsel %vm4742, %v4842, 0.0
      %v4904 = vadd.f32 %v4902, %v4903
      %v4905 = vsel %vm4742, %v4843, 0.0
      %v4906 = vadd.f32 %v4904, %v4905
      %v4907 = vrot.slane %v4906, 4
      %v4908 = vadd.f32 %v4906, %v4907
      %v4909 = vrot.slane %v4908, 2
      %v4910 = vadd.f32 %v4908, %v4909
      %v4911 = vrot.slane %v4910, 1
      %v4912 = vadd.f32 %v4910, %v4911
      %vm4913 = vcmask 1040384
      %v4914 = vsel %vm4913, %v4811, %v4912
      %vm4915 = vcmask 58368
      %4916 = vst.msk [vmem:[%s181] sm:$0x3] %vm4915, %v4914
      %v4917 = vpack.c.bf16 %v4711, %v4710
      %v4918 = vpack.c.bf16 %v4713, %v4712
      %v4919 = vpack.c.bf16 %v4715, %v4714
      %v4920 = vpack.c.bf16 %v4717, %v4716
      %v4921 = vpack.c.bf16 %v4719, %v4718
      %v4922 = vpack.c.bf16 %v4721, %v4720
      %v4923 = vpack.c.bf16 %v4723, %v4722
      %v4924 = vpack.c.bf16 %v4725, %v4724
      %v4925 = vpack.c.bf16 %v4727, %v4726
      %v4926 = vpack.c.bf16 %v4729, %v4728
      %v4927 = vpack.c.bf16 %v4731, %v4730
      %v4928 = vpack.c.bf16 %v4733, %v4732
      %v4929 = vpack.c.bf16 %v4735, %v4734
      %v4930 = vpack.c.bf16 %v4737, %v4736
      %v4931 = vpack.c.bf16 %v4739, %v4738
      %v4932 = vpack.c.bf16 %v4741, %v4740
      %v4949 = vunpack.c.l.b16 %v4917
      %v4950 = vunpack.c.h.b16 %v4917
      %v4951 = vunpack.c.l.b16 %v4918
      %v4952 = vunpack.c.h.b16 %v4918
      %v4953 = vunpack.c.l.b16 %v4919
      %v4954 = vunpack.c.h.b16 %v4919
      %v4955 = vunpack.c.l.b16 %v4920
      %v4956 = vunpack.c.h.b16 %v4920
      %v4957 = vunpack.c.l.b16 %v4921
      %v4958 = vunpack.c.h.b16 %v4921
      %v4959 = vunpack.c.l.b16 %v4922
      %v4960 = vunpack.c.h.b16 %v4922
      %v4961 = vunpack.c.l.b16 %v4923
      %v4962 = vunpack.c.h.b16 %v4923
      %v4963 = vunpack.c.l.b16 %v4924
      %v4964 = vunpack.c.h.b16 %v4924
      %v4965 = vunpack.c.l.b16 %v4925
      %v4966 = vunpack.c.h.b16 %v4925
      %v4967 = vunpack.c.l.b16 %v4926
      %v4968 = vunpack.c.h.b16 %v4926
      %v4969 = vunpack.c.l.b16 %v4927
      %v4970 = vunpack.c.h.b16 %v4927
      %v4971 = vunpack.c.l.b16 %v4928
      %v4972 = vunpack.c.h.b16 %v4928
      %v4973 = vunpack.c.l.b16 %v4929
      %v4974 = vunpack.c.h.b16 %v4929
      %v4975 = vunpack.c.l.b16 %v4930
      %v4976 = vunpack.c.h.b16 %v4930
      %v4977 = vunpack.c.l.b16 %v4931
      %v4978 = vunpack.c.h.b16 %v4931
      %v4979 = vunpack.c.l.b16 %v4932
      %v4980 = vunpack.c.h.b16 %v4932
      %v4981 = vpack.c.b16 %v4949, %v4949
      %v4982 = vpack.c.b16 %v4950, %v4950
      %v4983 = vpack.c.b16 %v4951, %v4951
      %v4984 = vpack.c.b16 %v4952, %v4952
      %v4985 = vpack.c.b16 %v4953, %v4953
      %v4986 = vpack.c.b16 %v4954, %v4954
      %v4987 = vpack.c.b16 %v4955, %v4955
      %v4988 = vpack.c.b16 %v4956, %v4956
      %v4989 = vpack.c.b16 %v4957, %v4957
      %v4990 = vpack.c.b16 %v4958, %v4958
      %v4991 = vpack.c.b16 %v4959, %v4959
      %v4992 = vpack.c.b16 %v4960, %v4960
      %v4993 = vpack.c.b16 %v4961, %v4961
      %v4994 = vpack.c.b16 %v4962, %v4962
      %v4995 = vpack.c.b16 %v4963, %v4963
      %v4996 = vpack.c.b16 %v4964, %v4964
      %v4997 = vpack.c.b16 %v4965, %v4965
      %v4998 = vpack.c.b16 %v4966, %v4966
      %v4999 = vpack.c.b16 %v4967, %v4967
      %v5000 = vpack.c.b16 %v4968, %v4968
      %v5001 = vpack.c.b16 %v4969, %v4969
      %v5002 = vpack.c.b16 %v4970, %v4970
      %v5003 = vpack.c.b16 %v4971, %v4971
      %v5004 = vpack.c.b16 %v4972, %v4972
      %v5005 = vpack.c.b16 %v4973, %v4973
      %v5006 = vpack.c.b16 %v4974, %v4974
      %v5007 = vpack.c.b16 %v4975, %v4975
      %v5008 = vpack.c.b16 %v4976, %v4976
      %v5009 = vpack.c.b16 %v4977, %v4977
      %v5010 = vpack.c.b16 %v4978, %v4978
      %v5011 = vpack.c.b16 %v4979, %v4979
      %v5012 = vpack.c.b16 %v4980, %v4980
      %vm5045 = vcmask 60416
      %5046 = vst.msk [vmem:[%s177] sm:$0xf] %vm5045, %v4981
      %5047 = vst.msk [vmem:[%s177 + $0x4] sm:$0xf] %vm5045, %v4982
      %5048 = vst.msk [vmem:[%s177 + $0x8] sm:$0xf] %vm5045, %v4983
      %5049 = vst.msk [vmem:[%s177 + $0xc] sm:$0xf] %vm5045, %v4984
      %5050 = vst.msk [vmem:[%s177 + $0x10] sm:$0xf] %vm5045, %v4985
      %5051 = vst.msk [vmem:[%s177 + $0x14] sm:$0xf] %vm5045, %v4986
      %5052 = vst.msk [vmem:[%s177 + $0x18] sm:$0xf] %vm5045, %v4987
      %5053 = vst.msk [vmem:[%s177 + $0x1c] sm:$0xf] %vm5045, %v4988
      %5054 = vst.msk [vmem:[%s177 + $0x20] sm:$0xf] %vm5045, %v4989
      %5055 = vst.msk [vmem:[%s177 + $0x24] sm:$0xf] %vm5045, %v4990
      %5056 = vst.msk [vmem:[%s177 + $0x28] sm:$0xf] %vm5045, %v4991
      %5057 = vst.msk [vmem:[%s177 + $0x2c] sm:$0xf] %vm5045, %v4992
      %5058 = vst.msk [vmem:[%s177 + $0x30] sm:$0xf] %vm5045, %v4993
      %5059 = vst.msk [vmem:[%s177 + $0x34] sm:$0xf] %vm5045, %v4994
      %5060 = vst.msk [vmem:[%s177 + $0x38] sm:$0xf] %vm5045, %v4995
      %5061 = vst.msk [vmem:[%s177 + $0x3c] sm:$0xf] %vm5045, %v4996
      %5062 = vst.msk [vmem:[%s177 + $0x40] sm:$0xf] %vm5045, %v4997
      %5063 = vst.msk [vmem:[%s177 + $0x44] sm:$0xf] %vm5045, %v4998
      %5064 = vst.msk [vmem:[%s177 + $0x48] sm:$0xf] %vm5045, %v4999
      %5065 = vst.msk [vmem:[%s177 + $0x4c] sm:$0xf] %vm5045, %v5000
      %5066 = vst.msk [vmem:[%s177 + $0x50] sm:$0xf] %vm5045, %v5001
      %5067 = vst.msk [vmem:[%s177 + $0x54] sm:$0xf] %vm5045, %v5002
      %5068 = vst.msk [vmem:[%s177 + $0x58] sm:$0xf] %vm5045, %v5003
      %5069 = vst.msk [vmem:[%s177 + $0x5c] sm:$0xf] %vm5045, %v5004
      %5070 = vst.msk [vmem:[%s177 + $0x60] sm:$0xf] %vm5045, %v5005
      %5071 = vst.msk [vmem:[%s177 + $0x64] sm:$0xf] %vm5045, %v5006
      %5072 = vst.msk [vmem:[%s177 + $0x68] sm:$0xf] %vm5045, %v5007
      %5073 = vst.msk [vmem:[%s177 + $0x6c] sm:$0xf] %vm5045, %v5008
      %5074 = vst.msk [vmem:[%s177 + $0x70] sm:$0xf] %vm5045, %v5009
      %5075 = vst.msk [vmem:[%s177 + $0x74] sm:$0xf] %vm5045, %v5010
      %5076 = vst.msk [vmem:[%s177 + $0x78] sm:$0xf] %vm5045, %v5011
      %5077 = vst.msk [vmem:[%s177 + $0x7c] sm:$0xf] %vm5045, %v5012
      %p5078 = scmp.lt.s32.totalorder %s15, 1
      %s5079 = scalar_select %p5078, %s15, 1
      %s5080 = smul.addr %s5079, 32
      %s5081 = smul.addr %s5080, 4
      %s5082 = scalar_lea.vmem %s2, %s5081
      %p5083 = scmp.lt.s32.totalorder %s15, 1
      %s5084 = scalar_select %p5083, %s15, 1
      %s5085 = smul.addr %s5084, 2
      %s5086 = scalar_lea.vmem %s3, %s5085
      // Predicated region
      $region29: #{unet_down_forward.3} parent=27 // pred_check
        %p5087 = pneg %p80
      $region30: #{unet_down_forward.3} parent=27 // pred_check_branch
        %5089 = sbr.rel (%p5087) target = $region32
      $region31: #{unet_down_forward.3} parent=27 // pred_region
        _
      $region32: #{unet_down_forward.3} parent=27 // pred_fallthru
        _
      // Predicated region
      $region33: #{unet_down_forward.3} parent=27 // pred_check
        %p5090 = pneg %p106
      $region34: #{unet_down_forward.3} parent=27 // pred_check_branch
        %5092 = sbr.rel (%p5090) target = $region36
      $region35: #{unet_down_forward.3} parent=27 // pred_region
        _
      $region36: #{unet_down_forward.3} parent=27 // pred_fallthru
        _
    $region28: #{unet_down_forward.3} parent=5 // pred_fallthru
      _
    %p5093 = scmp.le.s32.totalorder 2, %s10
    // Predicated region
    $region37: #{unet_down_forward.3} parent=5 // pred_check
      %p5094 = pneg %p5093
    $region38: #{unet_down_forward.3} parent=5 // pred_check_branch
      %5096 = sbr.rel (%p5094) target = $region40
    $region39: #{unet_down_forward.3} parent=5 // pred_region
      %s5097 = ssub.s32 %s10, 2
      // Predicated region
      $region41: #{unet_down_forward.3} parent=39 // pred_check
        %p5098 = pneg %p86
      $region42: #{unet_down_forward.3} parent=39 // pred_check_branch
        %5100 = sbr.rel (%p5098) target = $region44
      $region43: #{unet_down_forward.3} parent=39 // pred_region
        %p5101 = scmp.lt.s32.totalorder %s16, 1
        %s5102 = scalar_select %p5101, %s16, 1
        %s5103 = smul.addr %s5102, 32
        %s5104 = smul.addr %s5103, 4
        %s5105 = scalar_lea.vmem %s2, %s5104
      $region44: #{unet_down_forward.3} parent=39 // pred_fallthru
        _
      // Predicated region
      $region45: #{unet_down_forward.3} parent=39 // pred_check
        %p5106 = pneg %p112
      $region46: #{unet_down_forward.3} parent=39 // pred_check_branch
        %5108 = sbr.rel (%p5106) target = $region48
      $region47: #{unet_down_forward.3} parent=39 // pred_region
        %p5109 = scmp.lt.s32.totalorder %s16, 1
        %s5110 = scalar_select %p5109, %s16, 1
        %s5111 = smul.addr %s5110, 2
        %s5112 = scalar_lea.vmem %s3, %s5111
      $region48: #{unet_down_forward.3} parent=39 // pred_fallthru
        _
    $region40: #{unet_down_forward.3} parent=5 // pred_fallthru
      _
  $region6: #{unet_down_forward.3} parent=0 // loop_footer
    %s14 = sadd.s32 1, %s10
  $region7: #{unet_down_forward.3} parent=0 // loop_footer_branch
    %9 = sbr.rel target = $region3
  $region8: #{unet_down_forward.3} parent=0 // loop_exit
    _

// kernel: unet_down_forward.4
$region0: #{unet_down_forward.4}
  #allocation0 [shape = 'u32[]', space=smem, size = 0x4, offset = 0x4, fixed_abs, tag = 'smem constant byte address 0x4 - core index']
  #allocation1 [shape = 'u32[144,128]{1,0:T(1,128)}', space=vmem, size = 0x12000, scoped, tag = 'internal scratch']
  #allocation2 [shape = 'bf16[1,18,18,8]{3,2,1,0:T(8,128)(2,1)}', space=vmem, size = 0x1b000, scoped, tag = 'scratch operand']
  %s0 = inlined_call_operand.vmem [shape: bf16[2,256,8], index: 0, kind: input, shape index: {}]
  %s1 = inlined_call_operand.vmem [shape: f32[1,8], index: 1, kind: input, shape index: {}]
  %s2 = inlined_call_operand.vmem [shape: f32[1,8], index: 2, kind: input, shape index: {}]
  %s3 = inlined_call_operand.vmem [shape: bf16[9,8,8], index: 3, kind: input, shape index: {}]
  %s4 = inlined_call_operand.vmem [shape: bf16[2,256,8], index: 4, kind: output, shape index: {0}]
  %s5 = inlined_call_operand.vmem [shape: f32[2,2,8], index: 5, kind: output, shape index: {1}]
  %6 = xla_tuple %s4, %s5
  %s7 = sld [smem:[#allocation0]]
  $region57: #{unet_down_forward.4} parent=0
    _
  %s9 = ssub.s32 1, %s7
  %s10 = scalar_select 0, %s9, %s7
  loop: start=0, step=1, limit=4
  $region2: #{unet_down_forward.4} parent=0 // loop_pre_header
    _
  $region3: #{unet_down_forward.4} parent=0 // loop_header
    %s12 = sphi 0, %s16
    %p13 = scmp.ge.s32.totalorder %s12, 4
    %s22 = sphi 0, %s24
    %s25 = sphi 0, %s22
    %s26 = sphi 0, %s25
    %s42 = sphi 0, %s26
    %s46 = sphi 0, %s46
    %s48 = sphi 0, %s46
    %s49 = sphi 0, %s48
    %s63 = sphi 0, %s49
    %s67 = sphi 0, %s67
    %s69 = sphi 0, %s67
    %s70 = sphi 0, %s69
    %s84 = sphi 0, %s70
    %s88 = sphi 0, %s88
    %s90 = sphi 0, %s88
    %s91 = sphi 0, %s90
    %s105 = sphi 0, %s91
    %s111 = sphi 0, %s113
    %s114 = sphi 0, %s111
    %s115 = sphi 0, %s114
    %s131 = sphi 0, %s115
    %s137 = sphi 0, %s139
    %s140 = sphi 0, %s137
    %s141 = sphi 0, %s140
    %s157 = sphi 0, %s141
  $region4: #{unet_down_forward.4} parent=0 // loop_header_branch
    %15 = sbr.rel (%p13) target = $region8
  $region5: #{unet_down_forward.4} parent=0 // loop_body
    %s17 = ssub.s32 %s12, 1
    %s18 = ssub.s32 %s12, 2
    %s19 = sadd.s32 %s12, 1
    %s20 = ssub.s32 %s12, %s19
    %p21 = scmp.eq.s32.totalorder %s20, 0
    %s23 = sadd.s32 %s22, 1
    %s24 = scalar_select %p21, %s22, %s23
    %p27 = pneg %p21
    %p28 = scmp.eq.s32.totalorder %s12, 1
    %p29 = por %p27, %p28
    %p30 = scmp.ne.s32.totalorder %s22, %s25
    %p31 = scmp.eq.s32.totalorder %s12, 0
    %p32 = por %p30, %p31
    %p33 = scmp.ne.s32.totalorder %s22, %s25
    %p34 = scmp.eq.s32.totalorder %s17, 1
    %p35 = por %p33, %p34
    %p36 = scmp.ne.s32.totalorder %s25, %s26
    %p37 = scmp.eq.s32.totalorder %s17, 0
    %p38 = por %p36, %p37
    %p39 = scmp.ne.s32.totalorder %s25, %s26
    %p40 = scmp.eq.s32.totalorder %s18, 1
    %p41 = por %p39, %p40
    %p43 = scmp.ne.s32.totalorder %s26, %s42
    %p44 = scmp.eq.s32.totalorder %s18, 0
    %p45 = por %p43, %p44
    %s47 = sadd.s32 %s46, 1
    %p50 = scmp.eq.s32.totalorder %s12, 1
    %p51 = scmp.ne.s32.totalorder %s46, %s48
    %p52 = scmp.eq.s32.totalorder %s12, 0
    %p53 = por %p51, %p52
    %p54 = scmp.ne.s32.totalorder %s46, %s48
    %p55 = scmp.eq.s32.totalorder %s17, 1
    %p56 = por %p54, %p55
    %p57 = scmp.ne.s32.totalorder %s48, %s49
    %p58 = scmp.eq.s32.totalorder %s17, 0
    %p59 = por %p57, %p58
    %p60 = scmp.ne.s32.totalorder %s48, %s49
    %p61 = scmp.eq.s32.totalorder %s18, 1
    %p62 = por %p60, %p61
    %p64 = scmp.ne.s32.totalorder %s49, %s63
    %p65 = scmp.eq.s32.totalorder %s18, 0
    %p66 = por %p64, %p65
    %s68 = sadd.s32 %s67, 1
    %p71 = scmp.eq.s32.totalorder %s12, 1
    %p72 = scmp.ne.s32.totalorder %s67, %s69
    %p73 = scmp.eq.s32.totalorder %s12, 0
    %p74 = por %p72, %p73
    %p75 = scmp.ne.s32.totalorder %s67, %s69
    %p76 = scmp.eq.s32.totalorder %s17, 1
    %p77 = por %p75, %p76
    %p78 = scmp.ne.s32.totalorder %s69, %s70
    %p79 = scmp.eq.s32.totalorder %s17, 0
    %p80 = por %p78, %p79
    %p81 = scmp.ne.s32.totalorder %s69, %s70
    %p82 = scmp.eq.s32.totalorder %s18, 1
    %p83 = por %p81, %p82
    %p85 = scmp.ne.s32.totalorder %s70, %s84
    %p86 = scmp.eq.s32.totalorder %s18, 0
    %p87 = por %p85, %p86
    %s89 = sadd.s32 %s88, 1
    %p92 = scmp.eq.s32.totalorder %s12, 1
    %p93 = scmp.ne.s32.totalorder %s88, %s90
    %p94 = scmp.eq.s32.totalorder %s12, 0
    %p95 = por %p93, %p94
    %p96 = scmp.ne.s32.totalorder %s88, %s90
    %p97 = scmp.eq.s32.totalorder %s17, 1
    %p98 = por %p96, %p97
    %p99 = scmp.ne.s32.totalorder %s90, %s91
    %p100 = scmp.eq.s32.totalorder %s17, 0
    %p101 = por %p99, %p100
    %p102 = scmp.ne.s32.totalorder %s90, %s91
    %p103 = scmp.eq.s32.totalorder %s18, 1
    %p104 = por %p102, %p103
    %p106 = scmp.ne.s32.totalorder %s91, %s105
    %p107 = scmp.eq.s32.totalorder %s18, 0
    %p108 = por %p106, %p107
    %s109 = ssub.s32 %s12, %s19
    %p110 = scmp.eq.s32.totalorder %s109, 0
    %s112 = sadd.s32 %s111, 1
    %s113 = scalar_select %p110, %s111, %s112
    %p116 = pneg %p110
    %p117 = scmp.eq.s32.totalorder %s12, 1
    %p118 = por %p116, %p117
    %p119 = scmp.ne.s32.totalorder %s111, %s114
    %p120 = scmp.eq.s32.totalorder %s12, 0
    %p121 = por %p119, %p120
    %p122 = scmp.ne.s32.totalorder %s111, %s114
    %p123 = scmp.eq.s32.totalorder %s17, 1
    %p124 = por %p122, %p123
    %p125 = scmp.ne.s32.totalorder %s114, %s115
    %p126 = scmp.eq.s32.totalorder %s17, 0
    %p127 = por %p125, %p126
    %p128 = scmp.ne.s32.totalorder %s114, %s115
    %p129 = scmp.eq.s32.totalorder %s18, 1
    %p130 = por %p128, %p129
    %p132 = scmp.ne.s32.totalorder %s115, %s131
    %p133 = scmp.eq.s32.totalorder %s18, 0
    %p134 = por %p132, %p133
    %s135 = ssub.s32 %s12, %s19
    %p136 = scmp.eq.s32.totalorder %s135, 0
    %s138 = sadd.s32 %s137, 1
    %s139 = scalar_select %p136, %s137, %s138
    %p142 = pneg %p136
    %p143 = scmp.eq.s32.totalorder %s12, 1
    %p144 = por %p142, %p143
    %p145 = scmp.ne.s32.totalorder %s137, %s140
    %p146 = scmp.eq.s32.totalorder %s12, 0
    %p147 = por %p145, %p146
    %p148 = scmp.ne.s32.totalorder %s137, %s140
    %p149 = scmp.eq.s32.totalorder %s17, 1
    %p150 = por %p148, %p149
    %p151 = scmp.ne.s32.totalorder %s140, %s141
    %p152 = scmp.eq.s32.totalorder %s17, 0
    %p153 = por %p151, %p152
    %p154 = scmp.ne.s32.totalorder %s140, %s141
    %p155 = scmp.eq.s32.totalorder %s18, 1
    %p156 = por %p154, %p155
    %p158 = scmp.ne.s32.totalorder %s141, %s157
    %p159 = scmp.eq.s32.totalorder %s18, 0
    %p160 = por %p158, %p159
    %p161 = scmp.le.s32.totalorder 1, %s12
    %p162 = scmp.lt.s32.totalorder %s12, 3
    %p163 = pnand %p161, %p162
    %p164 = pneg %p163
    // Predicated region
    $region9: #{unet_down_forward.4} parent=5 // pred_check
      _
    $region10: #{unet_down_forward.4} parent=5 // pred_check_branch
      %166 = sbr.rel (%p163) target = $region12
    $region11: #{unet_down_forward.4} parent=5 // pred_region
      %s167 = ssub.s32 %s12, 1
      // Predicated region
      $region13: #{unet_down_forward.4} parent=11 // pred_check
        %p168 = pneg %p59
      $region14: #{unet_down_forward.4} parent=11 // pred_check_branch
        %170 = sbr.rel (%p168) target = $region16
      $region15: #{unet_down_forward.4} parent=11 // pred_region
        _
      $region16: #{unet_down_forward.4} parent=11 // pred_fallthru
        _
      // Predicated region
      $region17: #{unet_down_forward.4} parent=11 // pred_check
        %p171 = pneg %p80
      $region18: #{unet_down_forward.4} parent=11 // pred_check_branch
        %173 = sbr.rel (%p171) target = $region20
      $region19: #{unet_down_forward.4} parent=11 // pred_region
        _
      $region20: #{unet_down_forward.4} parent=11 // pred_fallthru
        _
      // Predicated region
      $region21: #{unet_down_forward.4} parent=11 // pred_check
        %p174 = pneg %p101
      $region22: #{unet_down_forward.4} parent=11 // pred_check_branch
        %176 = sbr.rel (%p174) target = $region24
      $region23: #{unet_down_forward.4} parent=11 // pred_region
        _
      $region24: #{unet_down_forward.4} parent=11 // pred_fallthru
        _
    $region12: #{unet_down_forward.4} parent=5 // pred_fallthru
      _
    %p177 = scmp.lt.s32.totalorder %s12, 2
    // Predicated region
    $region25: #{unet_down_forward.4} parent=5 // pred_check
      %p178 = pneg %p177
    $region26: #{unet_down_forward.4} parent=5 // pred_check_branch
      %180 = sbr.rel (%p178) target = $region28
    $region27: #{unet_down_forward.4} parent=5 // pred_region
      // Predicated region
      $region29: #{unet_down_forward.4} parent=27 // pred_check
        %p181 = pneg %p32
      $region30: #{unet_down_forward.4} parent=27 // pred_check_branch
        %183 = sbr.rel (%p181) target = $region32
      $region31: #{unet_down_forward.4} parent=27 // pred_region
        %p184 = scmp.lt.s32.totalorder %s12, 1
        %s185 = scalar_select %p184, %s12, 1
        %s186 = smul.addr %s185, 32
        %s187 = smul.addr %s186, 4
        %s188 = scalar_lea.vmem %s0, %s187
      $region32: #{unet_down_forward.4} parent=27 // pred_fallthru
        _
    $region28: #{unet_down_forward.4} parent=5 // pred_fallthru
      _
    %p189 = scmp.le.s32.totalorder 1, %s12
    %p190 = scmp.lt.s32.totalorder %s12, 3
    %p191 = pnand %p189, %p190
    %p192 = pneg %p191
    // Predicated region
    $region33: #{unet_down_forward.4} parent=5 // pred_check
      _
    $region34: #{unet_down_forward.4} parent=5 // pred_check_branch
      %194 = sbr.rel (%p191) target = $region36
    $region35: #{unet_down_forward.4} parent=5 // pred_region
      %s195 = ssub.s32 %s12, 1
      %p196 = scmp.lt.s32.totalorder %s17, 1
      %s197 = scalar_select %p196, %s17, 1
      %s198 = smul.addr %s197, 32
      %s199 = smul.addr %s198, 4
      %s200 = scalar_lea.vmem %s0, %s199
      %p201 = pneg %p38
      %p202 = pneg %p35
      %p203 = pneg %p59
      %p204 = pneg %p56
      %p205 = pneg %p80
      %p206 = pneg %p77
      %p207 = pneg %p101
      %p208 = pneg %p98
      %p209 = pneg %p127
      %p210 = pneg %p124
      %p211 = scmp.lt.s32.totalorder %s17, 1
      %s212 = scalar_select %p211, %s17, 1
      %s213 = smul.addr %s212, 32
      %s214 = smul.addr %s213, 4
      %s215 = scalar_lea.vmem %s4, %s214
      %p216 = pneg %p153
      %p217 = pneg %p150
      %p218 = scmp.lt.s32.totalorder %s17, 1
      %s219 = scalar_select %p218, %s17, 1
      %s220 = smul.addr %s219, 2
      %s221 = scalar_lea.vmem %s5, %s220
      %p222 = scmp.lt.s32.totalorder %s17, 1
      %s223 = scalar_select %p222, %s17, 1
      %s224 = smul.addr %s223, 32
      %s225 = smul.addr %s224, 4
      %s226 = scalar_lea.vmem %s0, %s225
      %p227 = scmp.lt.s32.totalorder %s17, 1
      %s228 = scalar_select %p227, %s17, 1
      %s229 = smul.addr %s228, 32
      %s230 = smul.addr %s229, 4
      %s231 = scalar_lea.vmem %s4, %s230
      %p232 = scmp.lt.s32.totalorder %s17, 1
      %s233 = scalar_select %p232, %s17, 1
      %s234 = smul.addr %s233, 2
      %s235 = scalar_lea.vmem %s5, %s234
      %v237 = vld [vmem:[%s226] sm:$0xf]
      %v238 = vld [vmem:[%s226 + $0x4] sm:$0xf]
      %v239 = vld [vmem:[%s226 + $0x8] sm:$0xf]
      %v240 = vld [vmem:[%s226 + $0xc] sm:$0xf]
      %v241 = vld [vmem:[%s226 + $0x10] sm:$0xf]
      %v242 = vld [vmem:[%s226 + $0x14] sm:$0xf]
      %v243 = vld [vmem:[%s226 + $0x18] sm:$0xf]
      %v244 = vld [vmem:[%s226 + $0x1c] sm:$0xf]
      %v245 = vld [vmem:[%s226 + $0x20] sm:$0xf]
      %v246 = vld [vmem:[%s226 + $0x24] sm:$0xf]
      %v247 = vld [vmem:[%s226 + $0x28] sm:$0xf]
      %v248 = vld [vmem:[%s226 + $0x2c] sm:$0xf]
      %v249 = vld [vmem:[%s226 + $0x30] sm:$0xf]
      %v250 = vld [vmem:[%s226 + $0x34] sm:$0xf]
      %v251 = vld [vmem:[%s226 + $0x38] sm:$0xf]
      %v252 = vld [vmem:[%s226 + $0x3c] sm:$0xf]
      %v253 = vld [vmem:[%s226 + $0x40] sm:$0xf]
      %v254 = vld [vmem:[%s226 + $0x44] sm:$0xf]
      %v255 = vld [vmem:[%s226 + $0x48] sm:$0xf]
      %v256 = vld [vmem:[%s226 + $0x4c] sm:$0xf]
      %v257 = vld [vmem:[%s226 + $0x50] sm:$0xf]
      %v258 = vld [vmem:[%s226 + $0x54] sm:$0xf]
      %v259 = vld [vmem:[%s226 + $0x58] sm:$0xf]
      %v260 = vld [vmem:[%s226 + $0x5c] sm:$0xf]
      %v261 = vld [vmem:[%s226 + $0x60] sm:$0xf]
      %v262 = vld [vmem:[%s226 + $0x64] sm:$0xf]
      %v263 = vld [vmem:[%s226 + $0x68] sm:$0xf]
      %v264 = vld [vmem:[%s226 + $0x6c] sm:$0xf]
      %v265 = vld [vmem:[%s226 + $0x70] sm:$0xf]
      %v266 = vld [vmem:[%s226 + $0x74] sm:$0xf]
      %v267 = vld [vmem:[%s226 + $0x78] sm:$0xf]
      %v268 = vld [vmem:[%s226 + $0x7c] sm:$0xf]
      %v269 = vunpack.c.l.bf16 %v237
      %v270 = vunpack.c.l.bf16 %v238
      %v271 = vunpack.c.l.bf16 %v239
      %v272 = vunpack.c.l.bf16 %v240
      %v273 = vunpack.c.l.bf16 %v241
      %v274 = vunpack.c.l.bf16 %v242
      %v275 = vunpack.c.l.bf16 %v243
      %v276 = vunpack.c.l.bf16 %v244
      %v277 = vunpack.c.l.bf16 %v245
      %v278 = vunpack.c.l.bf16 %v246
      %v279 = vunpack.c.l.bf16 %v247
      %v280 = vunpack.c.l.bf16 %v248
      %v281 = vunpack.c.l.bf16 %v249
      %v282 = vunpack.c.l.bf16 %v250
      %v283 = vunpack.c.l.bf16 %v251
      %v284 = vunpack.c.l.bf16 %v252
      %v285 = vunpack.c.l.bf16 %v253
      %v286 = vunpack.c.l.bf16 %v254
      %v287 = vunpack.c.l.bf16 %v255
      %v288 = vunpack.c.l.bf16 %v256
      %v289 = vunpack.c.l.bf16 %v257
      %v290 = vunpack.c.l.bf16 %v258
      %v291 = vunpack.c.l.bf16 %v259
      %v292 = vunpack.c.l.bf16 %v260
      %v293 = vunpack.c.l.bf16 %v261
      %v294 = vunpack.c.l.bf16 %v262
      %v295 = vunpack.c.l.bf16 %v263
      %v296 = vunpack.c.l.bf16 %v264
      %v297 = vunpack.c.l.bf16 %v265
      %v298 = vunpack.c.l.bf16 %v266
      %v299 = vunpack.c.l.bf16 %v267
      %v300 = vunpack.c.l.bf16 %v268
      %v301 = vld [vmem:[%s1] sm:$0x1]
      %v303 = vlaneseq
      %v304 = vshrl.u32 %v303, 7
      %v305 = vsub.s32 0, %v304
      %v306 = vrot.slane %v301, %v305
      %v308 = vmul.f32 %v269, %v306
      %v309 = vmul.f32 %v270, %v306
      %v310 = vmul.f32 %v271, %v306
      %v311 = vmul.f32 %v272, %v306
      %v312 = vmul.f32 %v273, %v306
      %v313 = vmul.f32 %v274, %v306
      %v314 = vmul.f32 %v275, %v306
      %v315 = vmul.f32 %v276, %v306
      %v316 = vmul.f32 %v277, %v306
      %v317 = vmul.f32 %v278, %v306
      %v318 = vmul.f32 %v279, %v306
      %v319 = vmul.f32 %v280, %v306
      %v320 = vmul.f32 %v281, %v306
      %v321 = vmul.f32 %v282, %v306
      %v322 = vmul.f32 %v283, %v306
      %v323 = vmul.f32 %v284, %v306
      %v324 = vmul.f32 %v285, %v306
      %v325 = vmul.f32 %v286, %v306
      %v326 = vmul.f32 %v287, %v306
      %v327 = vmul.f32 %v288, %v306
      %v328 = vmul.f32 %v289, %v306
      %v329 = vmul.f32 %v290, %v306
      %v330 = vmul.f32 %v291, %v306
      %v331 = vmul.f32 %v292, %v306
      %v332 = vmul.f32 %v293, %v306
      %v333 = vmul.f32 %v294, %v306
      %v334 = vmul.f32 %v295, %v306
      %v335 = vmul.f32 %v296, %v306
      %v336 = vmul.f32 %v297, %v306
      %v337 = vmul.f32 %v298, %v306
      %v338 = vmul.f32 %v299, %v306
      %v339 = vmul.f32 %v300, %v306
      %v340 = vld [vmem:[%s2] sm:$0x1]
      %v342 = vlaneseq
      %v343 = vshrl.u32 %v342, 7
      %v344 = vsub.s32 0, %v343
      %v345 = vrot.slane %v340, %v344
      %v347 = vadd.f32 %v308, %v345
      %v348 = vadd.f32 %v309, %v345
      %v349 = vadd.f32 %v310, %v345
      %v350 = vadd.f32 %v311, %v345
      %v351 = vadd.f32 %v312, %v345
      %v352 = vadd.f32 %v313, %v345
      %v353 = vadd.f32 %v314, %v345
      %v354 = vadd.f32 %v315, %v345
      %v355 = vadd.f32 %v316, %v345
      %v356 = vadd.f32 %v317, %v345
      %v357 = vadd.f32 %v318, %v345
      %v358 = vadd.f32 %v319, %v345
      %v359 = vadd.f32 %v320, %v345
      %v360 = vadd.f32 %v321, %v345
      %v361 = vadd.f32 %v322, %v345
      %v362 = vadd.f32 %v323, %v345
      %v363 = vadd.f32 %v324, %v345
      %v364 = vadd.f32 %v325, %v345
      %v365 = vadd.f32 %v326, %v345
      %v366 = vadd.f32 %v327, %v345
      %v367 = vadd.f32 %v328, %v345
      %v368 = vadd.f32 %v329, %v345
      %v369 = vadd.f32 %v330, %v345
      %v370 = vadd.f32 %v331, %v345
      %v371 = vadd.f32 %v332, %v345
      %v372 = vadd.f32 %v333, %v345
      %v373 = vadd.f32 %v334, %v345
      %v374 = vadd.f32 %v335, %v345
      %v375 = vadd.f32 %v336, %v345
      %v376 = vadd.f32 %v337, %v345
      %v377 = vadd.f32 %v338, %v345
      %v378 = vadd.f32 %v339, %v345
      %v379 = vmul.f32 %v347, 0.5
      %v380 = vmul.f32 %v348, 0.5
      %v381 = vmul.f32 %v349, 0.5
      %v382 = vmul.f32 %v350, 0.5
      %v383 = vmul.f32 %v351, 0.5
      %v384 = vmul.f32 %v352, 0.5
      %v385 = vmul.f32 %v353, 0.5
      %v386 = vmul.f32 %v354, 0.5
      %v387 = vmul.f32 %v355, 0.5
      %v388 = vmul.f32 %v356, 0.5
      %v389 = vmul.f32 %v357, 0.5
      %v390 = vmul.f32 %v358, 0.5
      %v391 = vmul.f32 %v359, 0.5
      %v392 = vmul.f32 %v360, 0.5
      %v393 = vmul.f32 %v361, 0.5
      %v394 = vmul.f32 %v362, 0.5
      %v395 = vmul.f32 %v363, 0.5
      %v396 = vmul.f32 %v364, 0.5
      %v397 = vmul.f32 %v365, 0.5
      %v398 = vmul.f32 %v366, 0.5
      %v399 = vmul.f32 %v367, 0.5
      %v400 = vmul.f32 %v368, 0.5
      %v401 = vmul.f32 %v369, 0.5
      %v402 = vmul.f32 %v370, 0.5
      %v403 = vmul.f32 %v371, 0.5
      %v404 = vmul.f32 %v372, 0.5
      %v405 = vmul.f32 %v373, 0.5
      %v406 = vmul.f32 %v374, 0.5
      %v407 = vmul.f32 %v375, 0.5
      %v408 = vmul.f32 %v376, 0.5
      %v409 = vmul.f32 %v377, 0.5
      %v410 = vmul.f32 %v378, 0.5
      %v411 = vmul.f32 %v347, 0.70710677
      %v412 = vmul.f32 %v348, 0.70710677
      %v413 = vmul.f32 %v349, 0.70710677
      %v414 = vmul.f32 %v350, 0.70710677
      %v415 = vmul.f32 %v351, 0.70710677
      %v416 = vmul.f32 %v352, 0.70710677
      %v417 = vmul.f32 %v353, 0.70710677
      %v418 = vmul.f32 %v354, 0.70710677
      %v419 = vmul.f32 %v355, 0.70710677
      %v420 = vmul.f32 %v356, 0.70710677
      %v421 = vmul.f32 %v357, 0.70710677
      %v422 = vmul.f32 %v358, 0.70710677
      %v423 = vmul.f32 %v359, 0.70710677
      %v424 = vmul.f32 %v360, 0.70710677
      %v425 = vmul.f32 %v361, 0.70710677
      %v426 = vmul.f32 %v362, 0.70710677
      %v427 = vmul.f32 %v363, 0.70710677
      %v428 = vmul.f32 %v364, 0.70710677
      %v429 = vmul.f32 %v365, 0.70710677
      %v430 = vmul.f32 %v366, 0.70710677
      %v431 = vmul.f32 %v367, 0.70710677
      %v432 = vmul.f32 %v368, 0.70710677
      %v433 = vmul.f32 %v369, 0.70710677
      %v434 = vmul.f32 %v370, 0.70710677
      %v435 = vmul.f32 %v371, 0.70710677
      %v436 = vmul.f32 %v372, 0.70710677
      %v437 = vmul.f32 %v373, 0.70710677
      %v438 = vmul.f32 %v374, 0.70710677
      %v439 = vmul.f32 %v375, 0.70710677
      %v440 = vmul.f32 %v376, 0.70710677
      %v441 = vmul.f32 %v377, 0.70710677
      %v442 = vmul.f32 %v378, 0.70710677
      %vm443 = vcmp.lt.f32.partialorder %v411, 0.0
      %vm444 = vcmp.lt.f32.partialorder %v412, 0.0
      %vm445 = vcmp.lt.f32.partialorder %v413, 0.0
      %vm446 = vcmp.lt.f32.partialorder %v414, 0.0
      %vm447 = vcmp.lt.f32.partialorder %v415, 0.0
      %vm448 = vcmp.lt.f32.partialorder %v416, 0.0
      %vm449 = vcmp.lt.f32.partialorder %v417, 0.0
      %vm450 = vcmp.lt.f32.partialorder %v418, 0.0
      %vm451 = vcmp.lt.f32.partialorder %v419, 0.0
      %vm452 = vcmp.lt.f32.partialorder %v420, 0.0
      %vm453 = vcmp.lt.f32.partialorder %v421, 0.0
      %vm454 = vcmp.lt.f32.partialorder %v422, 0.0
      %vm455 = vcmp.lt.f32.partialorder %v423, 0.0
      %vm456 = vcmp.lt.f32.partialorder %v424, 0.0
      %vm457 = vcmp.lt.f32.partialorder %v425, 0.0
      %vm458 = vcmp.lt.f32.partialorder %v426, 0.0
      %vm459 = vcmp.lt.f32.partialorder %v427, 0.0
      %vm460 = vcmp.lt.f32.partialorder %v428, 0.0
      %vm461 = vcmp.lt.f32.partialorder %v429, 0.0
      %vm462 = vcmp.lt.f32.partialorder %v430, 0.0
      %vm463 = vcmp.lt.f32.partialorder %v431, 0.0
      %vm464 = vcmp.lt.f32.partialorder %v432, 0.0
      %vm465 = vcmp.lt.f32.partialorder %v433, 0.0
      %vm466 = vcmp.lt.f32.partialorder %v434, 0.0
      %vm467 = vcmp.lt.f32.partialorder %v435, 0.0
      %vm468 = vcmp.lt.f32.partialorder %v436, 0.0
      %vm469 = vcmp.lt.f32.partialorder %v437, 0.0
      %vm470 = vcmp.lt.f32.partialorder %v438, 0.0
      %vm471 = vcmp.lt.f32.partialorder %v439, 0.0
      %vm472 = vcmp.lt.f32.partialorder %v440, 0.0
      %vm473 = vcmp.lt.f32.partialorder %v441, 0.0
      %vm474 = vcmp.lt.f32.partialorder %v442, 0.0
      %v475 = vsel %vm443, -1.0, 1.0
      %v476 = vsel %vm444, -1.0, 1.0
      %v477 = vsel %vm445, -1.0, 1.0
      %v478 = vsel %vm446, -1.0, 1.0
      %v479 = vsel %vm447, -1.0, 1.0
      %v480 = vsel %vm448, -1.0, 1.0
      %v481 = vsel %vm449, -1.0, 1.0
      %v482 = vsel %vm450, -1.0, 1.0
      %v483 = vsel %vm451, -1.0, 1.0
      %v484 = vsel %vm452, -1.0, 1.0
      %v485 = vsel %vm453, -1.0, 1.0
      %v486 = vsel %vm454, -1.0, 1.0
      %v487 = vsel %vm455, -1.0, 1.0
      %v488 = vsel %vm456, -1.0, 1.0
      %v489 = vsel %vm457, -1.0, 1.0
      %v490 = vsel %vm458, -1.0, 1.0
      %v491 = vsel %vm459, -1.0, 1.0
      %v492 = vsel %vm460, -1.0, 1.0
      %v493 = vsel %vm461, -1.0, 1.0
      %v494 = vsel %vm462, -1.0, 1.0
      %v495 = vsel %vm463, -1.0, 1.0
      %v496 = vsel %vm464, -1.0, 1.0
      %v497 = vsel %vm465, -1.0, 1.0
      %v498 = vsel %vm466, -1.0, 1.0
      %v499 = vsel %vm467, -1.0, 1.0
      %v500 = vsel %vm468, -1.0, 1.0
      %v501 = vsel %vm469, -1.0, 1.0
      %v502 = vsel %vm470, -1.0, 1.0
      %v503 = vsel %vm471, -1.0, 1.0
      %v504 = vsel %vm472, -1.0, 1.0
      %v505 = vsel %vm473, -1.0, 1.0
      %v506 = vsel %vm474, -1.0, 1.0
      %v507 = vand.u32 2147483647, %v411
      %v508 = vand.u32 2147483647, %v412
      %v509 = vand.u32 2147483647, %v413
      %v510 = vand.u32 2147483647, %v414
      %v511 = vand.u32 2147483647, %v415
      %v512 = vand.u32 2147483647, %v416
      %v513 = vand.u32 2147483647, %v417
      %v514 = vand.u32 2147483647, %v418
      %v515 = vand.u32 2147483647, %v419
      %v516 = vand.u32 2147483647, %v420
      %v517 = vand.u32 2147483647, %v421
      %v518 = vand.u32 2147483647, %v422
      %v519 = vand.u32 2147483647, %v423
      %v520 = vand.u32 2147483647, %v424
      %v521 = vand.u32 2147483647, %v425
      %v522 = vand.u32 2147483647, %v426
      %v523 = vand.u32 2147483647, %v427
      %v524 = vand.u32 2147483647, %v428
      %v525 = vand.u32 2147483647, %v429
      %v526 = vand.u32 2147483647, %v430
      %v527 = vand.u32 2147483647, %v431
      %v528 = vand.u32 2147483647, %v432
      %v529 = vand.u32 2147483647, %v433
      %v530 = vand.u32 2147483647, %v434
      %v531 = vand.u32 2147483647, %v435
      %v532 = vand.u32 2147483647, %v436
      %v533 = vand.u32 2147483647, %v437
      %v534 = vand.u32 2147483647, %v438
      %v535 = vand.u32 2147483647, %v439
      %v536 = vand.u32 2147483647, %v440
      %v537 = vand.u32 2147483647, %v441
      %v538 = vand.u32 2147483647, %v442
      %v539 = vmul.f32 %v507, 0.3275911
      %v540 = vmul.f32 %v508, 0.3275911
      %v541 = vmul.f32 %v509, 0.3275911
      %v542 = vmul.f32 %v510, 0.3275911
      %v543 = vmul.f32 %v511, 0.3275911
      %v544 = vmul.f32 %v512, 0.3275911
      %v545 = vmul.f32 %v513, 0.3275911
      %v546 = vmul.f32 %v514, 0.3275911
      %v547 = vmul.f32 %v515, 0.3275911
      %v548 = vmul.f32 %v516, 0.3275911
      %v549 = vmul.f32 %v517, 0.3275911
      %v550 = vmul.f32 %v518, 0.3275911
      %v551 = vmul.f32 %v519, 0.3275911
      %v552 = vmul.f32 %v520, 0.3275911
      %v553 = vmul.f32 %v521, 0.3275911
      %v554 = vmul.f32 %v522, 0.3275911
      %v555 = vmul.f32 %v523, 0.3275911
      %v556 = vmul.f32 %v524, 0.3275911
      %v557 = vmul.f32 %v525, 0.3275911
      %v558 = vmul.f32 %v526, 0.3275911
      %v559 = vmul.f32 %v527, 0.3275911
      %v560 = vmul.f32 %v528, 0.3275911
      %v561 = vmul.f32 %v529, 0.3275911
      %v562 = vmul.f32 %v530, 0.3275911
      %v563 = vmul.f32 %v531, 0.3275911
      %v564 = vmul.f32 %v532, 0.3275911
      %v565 = vmul.f32 %v533, 0.3275911
      %v566 = vmul.f32 %v534, 0.3275911
      %v567 = vmul.f32 %v535, 0.3275911
      %v568 = vmul.f32 %v536, 0.3275911
      %v569 = vmul.f32 %v537, 0.3275911
      %v570 = vmul.f32 %v538, 0.3275911
      %v571 = vadd.f32 %v539, 1.0
      %v572 = vadd.f32 %v540, 1.0
      %v573 = vadd.f32 %v541, 1.0
      %v574 = vadd.f32 %v542, 1.0
      %v575 = vadd.f32 %v543, 1.0
      %v576 = vadd.f32 %v544, 1.0
      %v577 = vadd.f32 %v545, 1.0
      %v578 = vadd.f32 %v546, 1.0
      %v579 = vadd.f32 %v547, 1.0
      %v580 = vadd.f32 %v548, 1.0
      %v581 = vadd.f32 %v549, 1.0
      %v582 = vadd.f32 %v550, 1.0
      %v583 = vadd.f32 %v551, 1.0
      %v584 = vadd.f32 %v552, 1.0
      %v585 = vadd.f32 %v553, 1.0
      %v586 = vadd.f32 %v554, 1.0
      %v587 = vadd.f32 %v555, 1.0
      %v588 = vadd.f32 %v556, 1.0
      %v589 = vadd.f32 %v557, 1.0
      %v590 = vadd.f32 %v558, 1.0
      %v591 = vadd.f32 %v559, 1.0
      %v592 = vadd.f32 %v560, 1.0
      %v593 = vadd.f32 %v561, 1.0
      %v594 = vadd.f32 %v562, 1.0
      %v595 = vadd.f32 %v563, 1.0
      %v596 = vadd.f32 %v564, 1.0
      %v597 = vadd.f32 %v565, 1.0
      %v598 = vadd.f32 %v566, 1.0
      %v599 = vadd.f32 %v567, 1.0
      %v600 = vadd.f32 %v568, 1.0
      %v601 = vadd.f32 %v569, 1.0
      %v602 = vadd.f32 %v570, 1.0
      %v603 = vrcp.pop %v571
      %v604 = vmul.f32 1.0, %v603
      %v605 = vrcp.pop %v572
      %v606 = vmul.f32 1.0, %v605
      %v607 = vrcp.pop %v573
      %v608 = vmul.f32 1.0, %v607
      %v609 = vrcp.pop %v574
      %v610 = vmul.f32 1.0, %v609
      %v611 = vrcp.pop %v575
      %v612 = vmul.f32 1.0, %v611
      %v613 = vrcp.pop %v576
      %v614 = vmul.f32 1.0, %v613
      %v615 = vrcp.pop %v577
      %v616 = vmul.f32 1.0, %v615
      %v617 = vrcp.pop %v578
      %v618 = vmul.f32 1.0, %v617
      %v619 = vrcp.pop %v579
      %v620 = vmul.f32 1.0, %v619
      %v621 = vrcp.pop %v580
      %v622 = vmul.f32 1.0, %v621
      %v623 = vrcp.pop %v581
      %v624 = vmul.f32 1.0, %v623
      %v625 = vrcp.pop %v582
      %v626 = vmul.f32 1.0, %v625
      %v627 = vrcp.pop %v583
      %v628 = vmul.f32 1.0, %v627
      %v629 = vrcp.pop %v584
      %v630 = vmul.f32 1.0, %v629
      %v631 = vrcp.pop %v585
      %v632 = vmul.f32 1.0, %v631
      %v633 = vrcp.pop %v586
      %v634 = vmul.f32 1.0, %v633
      %v635 = vrcp.pop %v587
      %v636 = vmul.f32 1.0, %v635
      %v637 = vrcp.pop %v588
      %v638 = vmul.f32 1.0, %v637
      %v639 = vrcp.pop %v589
      %v640 = vmul.f32 1.0, %v639
      %v641 = vrcp.pop %v590
      %v642 = vmul.f32 1.0, %v641
      %v643 = vrcp.pop %v591
      %v644 = vmul.f32 1.0, %v643
      %v645 = vrcp.pop %v592
      %v646 = vmul.f32 1.0, %v645
      %v647 = vrcp.pop %v593
      %v648 = vmul.f32 1.0, %v647
      %v649 = vrcp.pop %v594
      %v650 = vmul.f32 1.0, %v649
      %v651 = vrcp.pop %v595
      %v652 = vmul.f32 1.0, %v651
      %v653 = vrcp.pop %v596
      %v654 = vmul.f32 1.0, %v653
      %v655 = vrcp.pop %v597
      %v656 = vmul.f32 1.0, %v655
      %v657 = vrcp.pop %v598
      %v658 = vmul.f32 1.0, %v657
      %v659 = vrcp.pop %v599
      %v660 = vmul.f32 1.0, %v659
      %v661 = vrcp.pop %v600
      %v662 = vmul.f32 1.0, %v661
      %v663 = vrcp.pop %v601
      %v664 = vmul.f32 1.0, %v663
      %v665 = vrcp.pop %v602
      %v666 = vmul.f32 1.0, %v665
      %v667 = vmul.f32 %v604, 1.0614054
      %v668 = vmul.f32 %v606, 1.0614054
      %v669 = vmul.f32 %v608, 1.0614054
      %v670 = vmul.f32 %v610, 1.0614054
      %v671 = vmul.f32 %v612, 1.0614054
      %v672 = vmul.f32 %v614, 1.0614054
      %v673 = vmul.f32 %v616, 1.0614054
      %v674 = vmul.f32 %v618, 1.0614054
      %v675 = vmul.f32 %v620, 1.0614054
      %v676 = vmul.f32 %v622, 1.0614054
      %v677 = vmul.f32 %v624, 1.0614054
      %v678 = vmul.f32 %v626, 1.0614054
      %v679 = vmul.f32 %v628, 1.0614054
      %v680 = vmul.f32 %v630, 1.0614054
      %v681 = vmul.f32 %v632, 1.0614054
      %v682 = vmul.f32 %v634, 1.0614054
      %v683 = vmul.f32 %v636, 1.0614054
      %v684 = vmul.f32 %v638, 1.0614054
      %v685 = vmul.f32 %v640, 1.0614054
      %v686 = vmul.f32 %v642, 1.0614054
      %v687 = vmul.f32 %v644, 1.0614054
      %v688 = vmul.f32 %v646, 1.0614054
      %v689 = vmul.f32 %v648, 1.0614054
      %v690 = vmul.f32 %v650, 1.0614054
      %v691 = vmul.f32 %v652, 1.0614054
      %v692 = vmul.f32 %v654, 1.0614054
      %v693 = vmul.f32 %v656, 1.0614054
      %v694 = vmul.f32 %v658, 1.0614054
      %v695 = vmul.f32 %v660, 1.0614054
      %v696 = vmul.f32 %v662, 1.0614054
      %v697 = vmul.f32 %v664, 1.0614054
      %v698 = vmul.f32 %v666, 1.0614054
      %v699 = vadd.f32 %v667, -1.4531521
      %v700 = vadd.f32 %v668, -1.4531521
      %v701 = vadd.f32 %v669, -1.4531521
      %v702 = vadd.f32 %v670, -1.4531521
      %v703 = vadd.f32 %v671, -1.4531521
      %v704 = vadd.f32 %v672, -1.4531521
      %v705 = vadd.f32 %v673, -1.4531521
      %v706 = vadd.f32 %v674, -1.4531521
      %v707 = vadd.f32 %v675, -1.4531521
      %v708 = vadd.f32 %v676, -1.4531521
      %v709 = vadd.f32 %v677, -1.4531521
      %v710 = vadd.f32 %v678, -1.4531521
      %v711 = vadd.f32 %v679, -1.4531521
      %v712 = vadd.f32 %v680, -1.4531521
      %v713 = vadd.f32 %v681, -1.4531521
      %v714 = vadd.f32 %v682, -1.4531521
      %v715 = vadd.f32 %v683, -1.4531521
      %v716 = vadd.f32 %v684, -1.4531521
      %v717 = vadd.f32 %v685, -1.4531521
      %v718 = vadd.f32 %v686, -1.4531521
      %v719 = vadd.f32 %v687, -1.4531521
      %v720 = vadd.f32 %v688, -1.4531521
      %v721 = vadd.f32 %v689, -1.4531521
      %v722 = vadd.f32 %v690, -1.4531521
      %v723 = vadd.f32 %v691, -1.4531521
      %v724 = vadd.f32 %v692, -1.4531521
      %v725 = vadd.f32 %v693, -1.4531521
      %v726 = vadd.f32 %v694, -1.4531521
      %v727 = vadd.f32 %v695, -1.4531521
      %v728 = vadd.f32 %v696, -1.4531521
      %v729 = vadd.f32 %v697, -1.4531521
      %v730 = vadd.f32 %v698, -1.4531521
      %v731 = vmul.f32 %v699, %v604
      %v732 = vmul.f32 %v700, %v606
      %v733 = vmul.f32 %v701, %v608
      %v734 = vmul.f32 %v702, %v610
      %v735 = vmul.f32 %v703, %v612
      %v736 = vmul.f32 %v704, %v614
      %v737 = vmul.f32 %v705, %v616
      %v738 = vmul.f32 %v706, %v618
      %v739 = vmul.f32 %v707, %v620
      %v740 = vmul.f32 %v708, %v622
      %v741 = vmul.f32 %v709, %v624
      %v742 = vmul.f32 %v710, %v626
      %v743 = vmul.f32 %v711, %v628
      %v744 = vmul.f32 %v712, %v630
      %v745 = vmul.f32 %v713, %v632
      %v746 = vmul.f32 %v714, %v634
      %v747 = vmul.f32 %v715, %v636
      %v748 = vmul.f32 %v716, %v638
      %v749 = vmul.f32 %v717, %v640
      %v750 = vmul.f32 %v718, %v642
      %v751 = vmul.f32 %v719, %v644
      %v752 = vmul.f32 %v720, %v646
      %v753 = vmul.f32 %v721, %v648
      %v754 = vmul.f32 %v722, %v650
      %v755 = vmul.f32 %v723, %v652
      %v756 = vmul.f32 %v724, %v654
      %v757 = vmul.f32 %v725, %v656
      %v758 = vmul.f32 %v726, %v658
      %v759 = vmul.f32 %v727, %v660
      %v760 = vmul.f32 %v728, %v662
      %v761 = vmul.f32 %v729, %v664
      %v762 = vmul.f32 %v730, %v666
      %v763 = vadd.f32 %v731, 1.4214138
      %v764 = vadd.f32 %v732, 1.4214138
      %v765 = vadd.f32 %v733, 1.4214138
      %v766 = vadd.f32 %v734, 1.4214138
      %v767 = vadd.f32 %v735, 1.4214138
      %v768 = vadd.f32 %v736, 1.4214138
      %v769 = vadd.f32 %v737, 1.4214138
      %v770 = vadd.f32 %v738, 1.4214138
      %v771 = vadd.f32 %v739, 1.4214138
      %v772 = vadd.f32 %v740, 1.4214138
      %v773 = vadd.f32 %v741, 1.4214138
      %v774 = vadd.f32 %v742, 1.4214138
      %v775 = vadd.f32 %v743, 1.4214138
      %v776 = vadd.f32 %v744, 1.4214138
      %v777 = vadd.f32 %v745, 1.4214138
      %v778 = vadd.f32 %v746, 1.4214138
      %v779 = vadd.f32 %v747, 1.4214138
      %v780 = vadd.f32 %v748, 1.4214138
      %v781 = vadd.f32 %v749, 1.4214138
      %v782 = vadd.f32 %v750, 1.4214138
      %v783 = vadd.f32 %v751, 1.4214138
      %v784 = vadd.f32 %v752, 1.4214138
      %v785 = vadd.f32 %v753, 1.4214138
      %v786 = vadd.f32 %v754, 1.4214138
      %v787 = vadd.f32 %v755, 1.4214138
      %v788 = vadd.f32 %v756, 1.4214138
      %v789 = vadd.f32 %v757, 1.4214138
      %v790 = vadd.f32 %v758, 1.4214138
      %v791 = vadd.f32 %v759, 1.4214138
      %v792 = vadd.f32 %v760, 1.4214138
      %v793 = vadd.f32 %v761, 1.4214138
      %v794 = vadd.f32 %v762, 1.4214138
      %v795 = vmul.f32 %v763, %v604
      %v796 = vmul.f32 %v764, %v606
      %v797 = vmul.f32 %v765, %v608
      %v798 = vmul.f32 %v766, %v610
      %v799 = vmul.f32 %v767, %v612
      %v800 = vmul.f32 %v768, %v614
      %v801 = vmul.f32 %v769, %v616
      %v802 = vmul.f32 %v770, %v618
      %v803 = vmul.f32 %v771, %v620
      %v804 = vmul.f32 %v772, %v622
      %v805 = vmul.f32 %v773, %v624
      %v806 = vmul.f32 %v774, %v626
      %v807 = vmul.f32 %v775, %v628
      %v808 = vmul.f32 %v776, %v630
      %v809 = vmul.f32 %v777, %v632
      %v810 = vmul.f32 %v778, %v634
      %v811 = vmul.f32 %v779, %v636
      %v812 = vmul.f32 %v780, %v638
      %v813 = vmul.f32 %v781, %v640
      %v814 = vmul.f32 %v782, %v642
      %v815 = vmul.f32 %v783, %v644
      %v816 = vmul.f32 %v784, %v646
      %v817 = vmul.f32 %v785, %v648
      %v818 = vmul.f32 %v786, %v650
      %v819 = vmul.f32 %v787, %v652
      %v820 = vmul.f32 %v788, %v654
      %v821 = vmul.f32 %v789, %v656
      %v822 = vmul.f32 %v790, %v658
      %v823 = vmul.f32 %v791, %v660
      %v824 = vmul.f32 %v792, %v662
      %v825 = vmul.f32 %v793, %v664
      %v826 = vmul.f32 %v794, %v666
      %v827 = vadd.f32 %v795, -0.28449672
      %v828 = vadd.f32 %v796, -0.28449672
      %v829 = vadd.f32 %v797, -0.28449672
      %v830 = vadd.f32 %v798, -0.28449672
      %v831 = vadd.f32 %v799, -0.28449672
      %v832 = vadd.f32 %v800, -0.28449672
      %v833 = vadd.f32 %v801, -0.28449672
      %v834 = vadd.f32 %v802, -0.28449672
      %v835 = vadd.f32 %v803, -0.28449672
      %v836 = vadd.f32 %v804, -0.28449672
      %v837 = vadd.f32 %v805, -0.28449672
      %v838 = vadd.f32 %v806, -0.28449672
      %v839 = vadd.f32 %v807, -0.28449672
      %v840 = vadd.f32 %v808, -0.28449672
      %v841 = vadd.f32 %v809, -0.28449672
      %v842 = vadd.f32 %v810, -0.28449672
      %v843 = vadd.f32 %v811, -0.28449672
      %v844 = vadd.f32 %v812, -0.28449672
      %v845 = vadd.f32 %v813, -0.28449672
      %v846 = vadd.f32 %v814, -0.28449672
      %v847 = vadd.f32 %v815, -0.28449672
      %v848 = vadd.f32 %v816, -0.28449672
      %v849 = vadd.f32 %v817, -0.28449672
      %v850 = vadd.f32 %v818, -0.28449672
      %v851 = vadd.f32 %v819, -0.28449672
      %v852 = vadd.f32 %v820, -0.28449672
      %v853 = vadd.f32 %v821, -0.28449672
      %v854 = vadd.f32 %v822, -0.28449672
      %v855 = vadd.f32 %v823, -0.28449672
      %v856 = vadd.f32 %v824, -0.28449672
      %v857 = vadd.f32 %v825, -0.28449672
      %v858 = vadd.f32 %v826, -0.28449672
      %v859 = vmul.f32 %v827, %v604
      %v860 = vmul.f32 %v828, %v606
      %v861 = vmul.f32 %v829, %v608
      %v862 = vmul.f32 %v830, %v610
      %v863 = vmul.f32 %v831, %v612
      %v864 = vmul.f32 %v832, %v614
      %v865 = vmul.f32 %v833, %v616
      %v866 = vmul.f32 %v834, %v618
      %v867 = vmul.f32 %v835, %v620
      %v868 = vmul.f32 %v836, %v622
      %v869 = vmul.f32 %v837, %v624
      %v870 = vmul.f32 %v838, %v626
      %v871 = vmul.f32 %v839, %v628
      %v872 = vmul.f32 %v840, %v630
      %v873 = vmul.f32 %v841, %v632
      %v874 = vmul.f32 %v842, %v634
      %v875 = vmul.f32 %v843, %v636
      %v876 = vmul.f32 %v844, %v638
      %v877 = vmul.f32 %v845, %v640
      %v878 = vmul.f32 %v846, %v642
      %v879 = vmul.f32 %v847, %v644
      %v880 = vmul.f32 %v848, %v646
      %v881 = vmul.f32 %v849, %v648
      %v882 = vmul.f32 %v850, %v650
      %v883 = vmul.f32 %v851, %v652
      %v884 = vmul.f32 %v852, %v654
      %v885 = vmul.f32 %v853, %v656
      %v886 = vmul.f32 %v854, %v658
      %v887 = vmul.f32 %v855, %v660
      %v888 = vmul.f32 %v856, %v662
      %v889 = vmul.f32 %v857, %v664
      %v890 = vmul.f32 %v858, %v666
      %v891 = vadd.f32 %v859, 0.2548296
      %v892 = vadd.f32 %v860, 0.2548296
      %v893 = vadd.f32 %v861, 0.2548296
      %v894 = vadd.f32 %v862, 0.2548296
      %v895 = vadd.f32 %v863, 0.2548296
      %v896 = vadd.f32 %v864, 0.2548296
      %v897 = vadd.f32 %v865, 0.2548296
      %v898 = vadd.f32 %v866, 0.2548296
      %v899 = vadd.f32 %v867, 0.2548296
      %v900 = vadd.f32 %v868, 0.2548296
      %v901 = vadd.f32 %v869, 0.2548296
      %v902 = vadd.f32 %v870, 0.2548296
      %v903 = vadd.f32 %v871, 0.2548296
      %v904 = vadd.f32 %v872, 0.2548296
      %v905 = vadd.f32 %v873, 0.2548296
      %v906 = vadd.f32 %v874, 0.2548296
      %v907 = vadd.f32 %v875, 0.2548296
      %v908 = vadd.f32 %v876, 0.2548296
      %v909 = vadd.f32 %v877, 0.2548296
      %v910 = vadd.f32 %v878, 0.2548296
      %v911 = vadd.f32 %v879, 0.2548296
      %v912 = vadd.f32 %v880, 0.2548296
      %v913 = vadd.f32 %v881, 0.2548296
      %v914 = vadd.f32 %v882, 0.2548296
      %v915 = vadd.f32 %v883, 0.2548296
      %v916 = vadd.f32 %v884, 0.2548296
      %v917 = vadd.f32 %v885, 0.2548296
      %v918 = vadd.f32 %v886, 0.2548296
      %v919 = vadd.f32 %v887, 0.2548296
      %v920 = vadd.f32 %v888, 0.2548296
      %v921 = vadd.f32 %v889, 0.2548296
      %v922 = vadd.f32 %v890, 0.2548296
      %v923 = vmul.f32 %v891, %v604
      %v924 = vmul.f32 %v892, %v606
      %v925 = vmul.f32 %v893, %v608
      %v926 = vmul.f32 %v894, %v610
      %v927 = vmul.f32 %v895, %v612
      %v928 = vmul.f32 %v896, %v614
      %v929 = vmul.f32 %v897, %v616
      %v930 = vmul.f32 %v898, %v618
      %v931 = vmul.f32 %v899, %v620
      %v932 = vmul.f32 %v900, %v622
      %v933 = vmul.f32 %v901, %v624
      %v934 = vmul.f32 %v902, %v626
      %v935 = vmul.f32 %v903, %v628
      %v936 = vmul.f32 %v904, %v630
      %v937 = vmul.f32 %v905, %v632
      %v938 = vmul.f32 %v906, %v634
      %v939 = vmul.f32 %v907, %v636
      %v940 = vmul.f32 %v908, %v638
      %v941 = vmul.f32 %v909, %v640
      %v942 = vmul.f32 %v910, %v642
      %v943 = vmul.f32 %v911, %v644
      %v944 = vmul.f32 %v912, %v646
      %v945 = vmul.f32 %v913, %v648
      %v946 = vmul.f32 %v914, %v650
      %v947 = vmul.f32 %v915, %v652
      %v948 = vmul.f32 %v916, %v654
      %v949 = vmul.f32 %v917, %v656
      %v950 = vmul.f32 %v918, %v658
      %v951 = vmul.f32 %v919, %v660
      %v952 = vmul.f32 %v920, %v662
      %v953 = vmul.f32 %v921, %v664
      %v954 = vmul.f32 %v922, %v666
      %v955 = vsub.f32 0.0, %v507
      %v956 = vsub.f32 0.0, %v508
      %v957 = vsub.f32 0.0, %v509
      %v958 = vsub.f32 0.0, %v510
      %v959 = vsub.f32 0.0, %v511
      %v960 = vsub.f32 0.0, %v512
      %v961 = vsub.f32 0.0, %v513
      %v962 = vsub.f32 0.0, %v514
      %v963 = vsub.f32 0.0, %v515
      %v964 = vsub.f32 0.0, %v516
      %v965 = vsub.f32 0.0, %v517
      %v966 = vsub.f32 0.0, %v518
      %v967 = vsub.f32 0.0, %v519
      %v968 = vsub.f32 0.0, %v520
      %v969 = vsub.f32 0.0, %v521
      %v970 = vsub.f32 0.0, %v522
      %v971 = vsub.f32 0.0, %v523
      %v972 = vsub.f32 0.0, %v524
      %v973 = vsub.f32 0.0, %v525
      %v974 = vsub.f32 0.0, %v526
      %v975 = vsub.f32 0.0, %v527
      %v976 = vsub.f32 0.0, %v528
      %v977 = vsub.f32 0.0, %v529
      %v978 = vsub.f32 0.0, %v530
      %v979 = vsub.f32 0.0, %v531
      %v980 = vsub.f32 0.0, %v532
      %v981 = vsub.f32 0.0, %v533
      %v982 = vsub.f32 0.0, %v534
      %v983 = vsub.f32 0.0, %v535
      %v984 = vsub.f32 0.0, %v536
      %v985 = vsub.f32 0.0, %v537
      %v986 = vsub.f32 0.0, %v538
      %v987 = vmul.f32 %v955, %v507
      %v988 = vmul.f32 %v956, %v508
      %v989 = vmul.f32 %v957, %v509
      %v990 = vmul.f32 %v958, %v510
      %v991 = vmul.f32 %v959, %v511
      %v992 = vmul.f32 %v960, %v512
      %v993 = vmul.f32 %v961, %v513
      %v994 = vmul.f32 %v962, %v514
      %v995 = vmul.f32 %v963, %v515
      %v996 = vmul.f32 %v964, %v516
      %v997 = vmul.f32 %v965, %v517
      %v998 = vmul.f32 %v966, %v518
      %v999 = vmul.f32 %v967, %v519
      %v1000 = vmul.f32 %v968, %v520
      %v1001 = vmul.f32 %v969, %v521
      %v1002 = vmul.f32 %v970, %v522
      %v1003 = vmul.f32 %v971, %v523
      %v1004 = vmul.f32 %v972, %v524
      %v1005 = vmul.f32 %v973, %v525
      %v1006 = vmul.f32 %v974, %v526
      %v1007 = vmul.f32 %v975, %v527
      %v1008 = vmul.f32 %v976, %v528
      %v1009 = vmul.f32 %v977, %v529
      %v1010 = vmul.f32 %v978, %v530
      %v1011 = vmul.f32 %v979, %v531
      %v1012 = vmul.f32 %v980, %v532
      %v1013 = vmul.f32 %v981, %v533
      %v1014 = vmul.f32 %v982, %v534
      %v1015 = vmul.f32 %v983, %v535
      %v1016 = vmul.f32 %v984, %v536
      %v1017 = vmul.f32 %v985, %v537
      %v1018 = vmul.f32 %v986, %v538
      %v1019 = vmul.f32 %v987, 1.442695
      %v1020 = vpow.pop %v1019
      %v1021 = vmul.f32 %v988, 1.442695
      %v1022 = vpow.pop %v1021
      %v1023 = vmul.f32 %v989, 1.442695
      %v1024 = vpow.pop %v1023
      %v1025 = vmul.f32 %v990, 1.442695
      %v1026 = vpow.pop %v1025
      %v1027 = vmul.f32 %v991, 1.442695
      %v1028 = vpow.pop %v1027
      %v1029 = vmul.f32 %v992, 1.442695
      %v1030 = vpow.pop %v1029
      %v1031 = vmul.f32 %v993, 1.442695
      %v1032 = vpow.pop %v1031
      %v1033 = vmul.f32 %v994, 1.442695
      %v1034 = vpow.pop %v1033
      %v1035 = vmul.f32 %v995, 1.442695
      %v1036 = vpow.pop %v1035
      %v1037 = vmul.f32 %v996, 1.442695
      %v1038 = vpow.pop %v1037
      %v1039 = vmul.f32 %v997, 1.442695
      %v1040 = vpow.pop %v1039
      %v1041 = vmul.f32 %v998, 1.442695
      %v1042 = vpow.pop %v1041
      %v1043 = vmul.f32 %v999, 1.442695
      %v1044 = vpow.pop %v1043
      %v1045 = vmul.f32 %v1000, 1.442695
      %v1046 = vpow.pop %v1045
      %v1047 = vmul.f32 %v1001, 1.442695
      %v1048 = vpow.pop %v1047
      %v1049 = vmul.f32 %v1002, 1.442695
      %v1050 = vpow.pop %v1049
      %v1051 = vmul.f32 %v1003, 1.442695
      %v1052 = vpow.pop %v1051
      %v1053 = vmul.f32 %v1004, 1.442695
      %v1054 = vpow.pop %v1053
      %v1055 = vmul.f32 %v1005, 1.442695
      %v1056 = vpow.pop %v1055
      %v1057 = vmul.f32 %v1006, 1.442695
      %v1058 = vpow.pop %v1057
      %v1059 = vmul.f32 %v1007, 1.442695
      %v1060 = vpow.pop %v1059
      %v1061 = vmul.f32 %v1008, 1.442695
      %v1062 = vpow.pop %v1061
      %v1063 = vmul.f32 %v1009, 1.442695
      %v1064 = vpow.pop %v1063
      %v1065 = vmul.f32 %v1010, 1.442695
      %v1066 = vpow.pop %v1065
      %v1067 = vmul.f32 %v1011, 1.442695
      %v1068 = vpow.pop %v1067
      %v1069 = vmul.f32 %v1012, 1.442695
      %v1070 = vpow.pop %v1069
      %v1071 = vmul.f32 %v1013, 1.442695
      %v1072 = vpow.pop %v1071
      %v1073 = vmul.f32 %v1014, 1.442695
      %v1074 = vpow.pop %v1073
      %v1075 = vmul.f32 %v1015, 1.442695
      %v1076 = vpow.pop %v1075
      %v1077 = vmul.f32 %v1016, 1.442695
      %v1078 = vpow.pop %v1077
      %v1079 = vmul.f32 %v1017, 1.442695
      %v1080 = vpow.pop %v1079
      %v1081 = vmul.f32 %v1018, 1.442695
      %v1082 = vpow.pop %v1081
      %v1083 = vmul.f32 %v923, %v1020
      %v1084 = vmul.f32 %v924, %v1022
      %v1085 = vmul.f32 %v925, %v1024
      %v1086 = vmul.f32 %v926, %v1026
      %v1087 = vmul.f32 %v927, %v1028
      %v1088 = vmul.f32 %v928, %v1030
      %v1089 = vmul.f32 %v929, %v1032
      %v1090 = vmul.f32 %v930, %v1034
      %v1091 = vmul.f32 %v931, %v1036
      %v1092 = vmul.f32 %v932, %v1038
      %v1093 = vmul.f32 %v933, %v1040
      %v1094 = vmul.f32 %v934, %v1042
      %v1095 = vmul.f32 %v935, %v1044
      %v1096 = vmul.f32 %v936, %v1046
      %v1097 = vmul.f32 %v937, %v1048
      %v1098 = vmul.f32 %v938, %v1050
      %v1099 = vmul.f32 %v939, %v1052
      %v1100 = vmul.f32 %v940, %v1054
      %v1101 = vmul.f32 %v941, %v1056
      %v1102 = vmul.f32 %v942, %v1058
      %v1103 = vmul.f32 %v943, %v1060
      %v1104 = vmul.f32 %v944, %v1062
      %v1105 = vmul.f32 %v945, %v1064
      %v1106 = vmul.f32 %v946, %v1066
      %v1107 = vmul.f32 %v947, %v1068
      %v1108 = vmul.f32 %v948, %v1070
      %v1109 = vmul.f32 %v949, %v1072
      %v1110 = vmul.f32 %v950, %v1074
      %v1111 = vmul.f32 %v951, %v1076
      %v1112 = vmul.f32 %v952, %v1078
      %v1113 = vmul.f32 %v953, %v1080
      %v1114 = vmul.f32 %v954, %v1082
      %v1115 = vsub.f32 1.0, %v1083
      %v1116 = vsub.f32 1.0, %v1084
      %v1117 = vsub.f32 1.0, %v1085
      %v1118 = vsub.f32 1.0, %v1086
      %v1119 = vsub.f32 1.0, %v1087
      %v1120 = vsub.f32 1.0, %v1088
      %v1121 = vsub.f32 1.0, %v1089
      %v1122 = vsub.f32 1.0, %v1090
      %v1123 = vsub.f32 1.0, %v1091
      %v1124 = vsub.f32 1.0, %v1092
      %v1125 = vsub.f32 1.0, %v1093
      %v1126 = vsub.f32 1.0, %v1094
      %v1127 = vsub.f32 1.0, %v1095
      %v1128 = vsub.f32 1.0, %v1096
      %v1129 = vsub.f32 1.0, %v1097
      %v1130 = vsub.f32 1.0, %v1098
      %v1131 = vsub.f32 1.0, %v1099
      %v1132 = vsub.f32 1.0, %v1100
      %v1133 = vsub.f32 1.0, %v1101
      %v1134 = vsub.f32 1.0, %v1102
      %v1135 = vsub.f32 1.0, %v1103
      %v1136 = vsub.f32 1.0, %v1104
      %v1137 = vsub.f32 1.0, %v1105
      %v1138 = vsub.f32 1.0, %v1106
      %v1139 = vsub.f32 1.0, %v1107
      %v1140 = vsub.f32 1.0, %v1108
      %v1141 = vsub.f32 1.0, %v1109
      %v1142 = vsub.f32 1.0, %v1110
      %v1143 = vsub.f32 1.0, %v1111
      %v1144 = vsub.f32 1.0, %v1112
      %v1145 = vsub.f32 1.0, %v1113
      %v1146 = vsub.f32 1.0, %v1114
      %v1147 = vmul.f32 %v475, %v1115
      %v1148 = vmul.f32 %v476, %v1116
      %v1149 = vmul.f32 %v477, %v1117
      %v1150 = vmul.f32 %v478, %v1118
      %v1151 = vmul.f32 %v479, %v1119
      %v1152 = vmul.f32 %v480, %v1120
      %v1153 = vmul.f32 %v481, %v1121
      %v1154 = vmul.f32 %v482, %v1122
      %v1155 = vmul.f32 %v483, %v1123
      %v1156 = vmul.f32 %v484, %v1124
      %v1157 = vmul.f32 %v485, %v1125
      %v1158 = vmul.f32 %v486, %v1126
      %v1159 = vmul.f32 %v487, %v1127
      %v1160 = vmul.f32 %v488, %v1128
      %v1161 = vmul.f32 %v489, %v1129
      %v1162 = vmul.f32 %v490, %v1130
      %v1163 = vmul.f32 %v491, %v1131
      %v1164 = vmul.f32 %v492, %v1132
      %v1165 = vmul.f32 %v493, %v1133
      %v1166 = vmul.f32 %v494, %v1134
      %v1167 = vmul.f32 %v495, %v1135
      %v1168 = vmul.f32 %v496, %v1136
      %v1169 = vmul.f32 %v497, %v1137
      %v1170 = vmul.f32 %v498, %v1138
      %v1171 = vmul.f32 %v499, %v1139
      %v1172 = vmul.f32 %v500, %v1140
      %v1173 = vmul.f32 %v501, %v1141
      %v1174 = vmul.f32 %v502, %v1142
      %v1175 = vmul.f32 %v503, %v1143
      %v1176 = vmul.f32 %v504, %v1144
      %v1177 = vmul.f32 %v505, %v1145
      %v1178 = vmul.f32 %v506, %v1146
      %v1179 = vadd.f32 %v1147, 1.0
      %v1180 = vadd.f32 %v1148, 1.0
      %v1181 = vadd.f32 %v1149, 1.0
      %v1182 = vadd.f32 %v1150, 1.0
      %v1183 = vadd.f32 %v1151, 1.0
      %v1184 = vadd.f32 %v1152, 1.0
      %v1185 = vadd.f32 %v1153, 1.0
      %v1186 = vadd.f32 %v1154, 1.0
      %v1187 = vadd.f32 %v1155, 1.0
      %v1188 = vadd.f32 %v1156, 1.0
      %v1189 = vadd.f32 %v1157, 1.0
      %v1190 = vadd.f32 %v1158, 1.0
      %v1191 = vadd.f32 %v1159, 1.0
      %v1192 = vadd.f32 %v1160, 1.0
      %v1193 = vadd.f32 %v1161, 1.0
      %v1194 = vadd.f32 %v1162, 1.0
      %v1195 = vadd.f32 %v1163, 1.0
      %v1196 = vadd.f32 %v1164, 1.0
      %v1197 = vadd.f32 %v1165, 1.0
      %v1198 = vadd.f32 %v1166, 1.0
      %v1199 = vadd.f32 %v1167, 1.0
      %v1200 = vadd.f32 %v1168, 1.0
      %v1201 = vadd.f32 %v1169, 1.0
      %v1202 = vadd.f32 %v1170, 1.0
      %v1203 = vadd.f32 %v1171, 1.0
      %v1204 = vadd.f32 %v1172, 1.0
      %v1205 = vadd.f32 %v1173, 1.0
      %v1206 = vadd.f32 %v1174, 1.0
      %v1207 = vadd.f32 %v1175, 1.0
      %v1208 = vadd.f32 %v1176, 1.0
      %v1209 = vadd.f32 %v1177, 1.0
      %v1210 = vadd.f32 %v1178, 1.0
      %v1211 = vmul.f32 %v379, %v1179
      %v1212 = vmul.f32 %v380, %v1180
      %v1213 = vmul.f32 %v381, %v1181
      %v1214 = vmul.f32 %v382, %v1182
      %v1215 = vmul.f32 %v383, %v1183
      %v1216 = vmul.f32 %v384, %v1184
      %v1217 = vmul.f32 %v385, %v1185
      %v1218 = vmul.f32 %v386, %v1186
      %v1219 = vmul.f32 %v387, %v1187
      %v1220 = vmul.f32 %v388, %v1188
      %v1221 = vmul.f32 %v389, %v1189
      %v1222 = vmul.f32 %v390, %v1190
      %v1223 = vmul.f32 %v391, %v1191
      %v1224 = vmul.f32 %v392, %v1192
      %v1225 = vmul.f32 %v393, %v1193
      %v1226 = vmul.f32 %v394, %v1194
      %v1227 = vmul.f32 %v395, %v1195
      %v1228 = vmul.f32 %v396, %v1196
      %v1229 = vmul.f32 %v397, %v1197
      %v1230 = vmul.f32 %v398, %v1198
      %v1231 = vmul.f32 %v399, %v1199
      %v1232 = vmul.f32 %v400, %v1200
      %v1233 = vmul.f32 %v401, %v1201
      %v1234 = vmul.f32 %v402, %v1202
      %v1235 = vmul.f32 %v403, %v1203
      %v1236 = vmul.f32 %v404, %v1204
      %v1237 = vmul.f32 %v405, %v1205
      %v1238 = vmul.f32 %v406, %v1206
      %v1239 = vmul.f32 %v407, %v1207
      %v1240 = vmul.f32 %v408, %v1208
      %v1241 = vmul.f32 %v409, %v1209
      %v1242 = vmul.f32 %v410, %v1210
      %vm1243 = vcmask 60416
      %1244 = vst.msk [vmem:[#allocation2] sm:$0xf] %vm1243, 0
      %1245 = vst.msk [vmem:[#allocation2 + $0x4] sm:$0xf] %vm1243, 0
      %vm1246 = vcmask 57344
      %1247 = vst.msk [vmem:[#allocation2 + $0x8] sm:$0x1] %vm1246, 0
      %s1248 = scalar_lea.vmem [#allocation2], 204
      %1249 = vst.msk [vmem:[%s1248] sm:$0xf] %vm1243, 0
      %1250 = vst.msk [vmem:[%s1248 + $0x4] sm:$0xf] %vm1243, 0
      %1251 = vst.msk [vmem:[%s1248 + $0x8] sm:$0x1] %vm1246, 0
      %vm1252 = vcmask 57344
      %vm1253 = vsmask.f32 256
      %vm1254 = vmand %vm1252, %vm1253
      %v1255 = vld [vmem:[#allocation2] sm:$0x1]
      %v1256 = vsel %vm1254, 0, %v1255
      %1257 = vst [vmem:[#allocation2] sm:$0x1] %v1256
      %v1258 = vld [vmem:[#allocation2 + $0xc] sm:$0x1]
      %v1259 = vsel %vm1254, 0, %v1258
      %1260 = vst [vmem:[#allocation2 + $0xc] sm:$0x1] %v1259
      %v1261 = vld [vmem:[#allocation2 + $0x18] sm:$0x1]
      %v1262 = vsel %vm1254, 0, %v1261
      %1263 = vst [vmem:[#allocation2 + $0x18] sm:$0x1] %v1262
      %v1264 = vld [vmem:[#allocation2 + $0x24] sm:$0x1]
      %v1265 = vsel %vm1254, 0, %v1264
      %1266 = vst [vmem:[#allocation2 + $0x24] sm:$0x1] %v1265
      %v1267 = vld [vmem:[#allocation2 + $0x30] sm:$0x1]
      %v1268 = vsel %vm1254, 0, %v1267
      %1269 = vst [vmem:[#allocation2 + $0x30] sm:$0x1] %v1268
      %v1270 = vld [vmem:[#allocation2 + $0x3c] sm:$0x1]
      %v1271 = vsel %vm1254, 0, %v1270
      %1272 = vst [vmem:[#allocation2 + $0x3c] sm:$0x1] %v1271
      %v1273 = vld [vmem:[#allocation2 + $0x48] sm:$0x1]
      %v1274 = vsel %vm1254, 0, %v1273
      %1275 = vst [vmem:[#allocation2 + $0x48] sm:$0x1] %v1274
      %v1276 = vld [vmem:[#allocation2 + $0x54] sm:$0x1]
      %v1277 = vsel %vm1254, 0, %v1276
      %1278 = vst [vmem:[#allocation2 + $0x54] sm:$0x1] %v1277
      %v1279 = vld [vmem:[#allocation2 + $0x60] sm:$0x1]
      %v1280 = vsel %vm1254, 0, %v1279
      %1281 = vst [vmem:[#allocation2 + $0x60] sm:$0x1] %v1280
      %v1282 = vld [vmem:[#allocation2 + $0x6c] sm:$0x1]
      %v1283 = vsel %vm1254, 0, %v1282
      %1284 = vst [vmem:[#allocation2 + $0x6c] sm:$0x1] %v1283
      %v1285 = vld [vmem:[#allocation2 + $0x78] sm:$0x1]
      %v1286 = vsel %vm1254, 0, %v1285
      %1287 = vst [vmem:[#allocation2 + $0x78] sm:$0x1] %v1286
      %v1288 = vld [vmem:[#allocation2 + $0x84] sm:$0x1]
      %v1289 = vsel %vm1254, 0, %v1288
      %1290 = vst [vmem:[#allocation2 + $0x84] sm:$0x1] %v1289
      %v1291 = vld [vmem:[#allocation2 + $0x90] sm:$0x1]
      %v1292 = vsel %vm1254, 0, %v1291
      %1293 = vst [vmem:[#allocation2 + $0x90] sm:$0x1] %v1292
      %v1294 = vld [vmem:[#allocation2 + $0x9c] sm:$0x1]
      %v1295 = vsel %vm1254, 0, %v1294
      %1296 = vst [vmem:[#allocation2 + $0x9c] sm:$0x1] %v1295
      %v1297 = vld [vmem:[#allocation2 + $0xa8] sm:$0x1]
      %v1298 = vsel %vm1254, 0, %v1297
      %1299 = vst [vmem:[#allocation2 + $0xa8] sm:$0x1] %v1298
      %v1300 = vld [vmem:[#allocation2 + $0xb4] sm:$0x1]
      %v1301 = vsel %vm1254, 0, %v1300
      %1302 = vst [vmem:[#allocation2 + $0xb4] sm:$0x1] %v1301
      %v1303 = vld [vmem:[#allocation2 + $0xc0] sm:$0x1]
      %v1304 = vsel %vm1254, 0, %v1303
      %1305 = vst [vmem:[#allocation2 + $0xc0] sm:$0x1] %v1304
      %v1306 = vld [vmem:[#allocation2 + $0xcc] sm:$0x1]
      %v1307 = vsel %vm1254, 0, %v1306
      %1308 = vst [vmem:[#allocation2 + $0xcc] sm:$0x1] %v1307
      %vm1309 = vsmask.f32 7938
      %vm1310 = vmand %vm1252, %vm1309
      %v1311 = vld [vmem:[#allocation2 + $0x8] sm:$0x1]
      %v1312 = vsel %vm1310, 0, %v1311
      %1313 = vst [vmem:[#allocation2 + $0x8] sm:$0x1] %v1312
      %v1314 = vld [vmem:[#allocation2 + $0x14] sm:$0x1]
      %v1315 = vsel %vm1310, 0, %v1314
      %1316 = vst [vmem:[#allocation2 + $0x14] sm:$0x1] %v1315
      %v1317 = vld [vmem:[#allocation2 + $0x20] sm:$0x1]
      %v1318 = vsel %vm1310, 0, %v1317
      %1319 = vst [vmem:[#allocation2 + $0x20] sm:$0x1] %v1318
      %v1320 = vld [vmem:[#allocation2 + $0x2c] sm:$0x1]
      %v1321 = vsel %vm1310, 0, %v1320
      %1322 = vst [vmem:[#allocation2 + $0x2c] sm:$0x1] %v1321
      %v1323 = vld [vmem:[#allocation2 + $0x38] sm:$0x1]
      %v1324 = vsel %vm1310, 0, %v1323
      %1325 = vst [vmem:[#allocation2 + $0x38] sm:$0x1] %v1324
      %v1326 = vld [vmem:[#allocation2 + $0x44] sm:$0x1]
      %v1327 = vsel %vm1310, 0, %v1326
      %1328 = vst [vmem:[#allocation2 + $0x44] sm:$0x1] %v1327
      %v1329 = vld [vmem:[#allocation2 + $0x50] sm:$0x1]
      %v1330 = vsel %vm1310, 0, %v1329
      %1331 = vst [vmem:[#allocation2 + $0x50] sm:$0x1] %v1330
      %v1332 = vld [vmem:[#allocation2 + $0x5c] sm:$0x1]
      %v1333 = vsel %vm1310, 0, %v1332
      %1334 = vst [vmem:[#allocation2 + $0x5c] sm:$0x1] %v1333
      %v1335 = vld [vmem:[#allocation2 + $0x68] sm:$0x1]
      %v1336 = vsel %vm1310, 0, %v1335
      %1337 = vst [vmem:[#allocation2 + $0x68] sm:$0x1] %v1336
      %v1338 = vld [vmem:[#allocation2 + $0x74] sm:$0x1]
      %v1339 = vsel %vm1310, 0, %v1338
      %1340 = vst [vmem:[#allocation2 + $0x74] sm:$0x1] %v1339
      %v1341 = vld [vmem:[#allocation2 + $0x80] sm:$0x1]
      %v1342 = vsel %vm1310, 0, %v1341
      %1343 = vst [vmem:[#allocation2 + $0x80] sm:$0x1] %v1342
      %v1344 = vld [vmem:[#allocation2 + $0x8c] sm:$0x1]
      %v1345 = vsel %vm1310, 0, %v1344
      %1346 = vst [vmem:[#allocation2 + $0x8c] sm:$0x1] %v1345
      %v1347 = vld [vmem:[#allocation2 + $0x98] sm:$0x1]
      %v1348 = vsel %vm1310, 0, %v1347
      %1349 = vst [vmem:[#allocation2 + $0x98] sm:$0x1] %v1348
      %v1350 = vld [vmem:[#allocation2 + $0xa4] sm:$0x1]
      %v1351 = vsel %vm1310, 0, %v1350
      %1352 = vst [vmem:[#allocation2 + $0xa4] sm:$0x1] %v1351
      %v1353 = vld [vmem:[#allocation2 + $0xb0] sm:$0x1]
      %v1354 = vsel %vm1310, 0, %v1353
      %1355 = vst [vmem:[#allocation2 + $0xb0] sm:$0x1] %v1354
      %v1356 = vld [vmem:[#allocation2 + $0xbc] sm:$0x1]
      %v1357 = vsel %vm1310, 0, %v1356
      %1358 = vst [vmem:[#allocation2 + $0xbc] sm:$0x1] %v1357
      %v1359 = vld [vmem:[#allocation2 + $0xc8] sm:$0x1]
      %v1360 = vsel %vm1310, 0, %v1359
      %1361 = vst [vmem:[#allocation2 + $0xc8] sm:$0x1] %v1360
      %v1362 = vld [vmem:[#allocation2 + $0xd4] sm:$0x1]
      %v1363 = vsel %vm1310, 0, %v1362
      %1364 = vst [vmem:[#allocation2 + $0xd4] sm:$0x1] %v1363
      %v1365 = vpack.c.bf16 %v1212, %v1211
      %v1366 = vpack.c.bf16 %v1214, %v1213
      %v1367 = vpack.c.bf16 %v1216, %v1215
      %v1368 = vpack.c.bf16 %v1218, %v1217
      %v1369 = vpack.c.bf16 %v1220, %v1219
      %v1370 = vpack.c.bf16 %v1222, %v1221
      %v1371 = vpack.c.bf16 %v1224, %v1223
      %v1372 = vpack.c.bf16 %v1226, %v1225
      %v1373 = vpack.c.bf16 %v1228, %v1227
      %v1374 = vpack.c.bf16 %v1230, %v1229
      %v1375 = vpack.c.bf16 %v1232, %v1231
      %v1376 = vpack.c.bf16 %v1234, %v1233
      %v1377 = vpack.c.bf16 %v1236, %v1235
      %v1378 = vpack.c.bf16 %v1238, %v1237
      %v1379 = vpack.c.bf16 %v1240, %v1239
      %v1380 = vpack.c.bf16 %v1242, %v1241
      %v1397 = vunpack.c.l.b16 %v1365
      %v1398 = vunpack.c.h.b16 %v1365
      %v1399 = vunpack.c.l.b16 %v1366
      %v1400 = vunpack.c.h.b16 %v1366
      %v1401 = vunpack.c.l.b16 %v1367
      %v1402 = vunpack.c.h.b16 %v1367
      %v1403 = vunpack.c.l.b16 %v1368
      %v1404 = vunpack.c.h.b16 %v1368
      %v1405 = vunpack.c.l.b16 %v1369
      %v1406 = vunpack.c.h.b16 %v1369
      %v1407 = vunpack.c.l.b16 %v1370
      %v1408 = vunpack.c.h.b16 %v1370
      %v1409 = vunpack.c.l.b16 %v1371
      %v1410 = vunpack.c.h.b16 %v1371
      %v1411 = vunpack.c.l.b16 %v1372
      %v1412 = vunpack.c.h.b16 %v1372
      %v1413 = vunpack.c.l.b16 %v1373
      %v1414 = vunpack.c.h.b16 %v1373
      %v1415 = vunpack.c.l.b16 %v1374
      %v1416 = vunpack.c.h.b16 %v1374
      %v1417 = vunpack.c.l.b16 %v1375
      %v1418 = vunpack.c.h.b16 %v1375
      %v1419 = vunpack.c.l.b16 %v1376
      %v1420 = vunpack.c.h.b16 %v1376
      %v1421 = vunpack.c.l.b16 %v1377
      %v1422 = vunpack.c.h.b16 %v1377
      %v1423 = vunpack.c.l.b16 %v1378
      %v1424 = vunpack.c.h.b16 %v1378
      %v1425 = vunpack.c.l.b16 %v1379
      %v1426 = vunpack.c.h.b16 %v1379
      %v1427 = vunpack.c.l.b16 %v1380
      %v1428 = vunpack.c.h.b16 %v1380
      %v1429 = vpack.c.b16 %v1397, %v1397
      %v1430 = vpack.c.b16 %v1398, %v1398
      %v1431 = vpack.c.b16 %v1399, %v1399
      %v1432 = vpack.c.b16 %v1400, %v1400
      %v1433 = vpack.c.b16 %v1401, %v1401
      %v1434 = vpack.c.b16 %v1402, %v1402
      %v1435 = vpack.c.b16 %v1403, %v1403
      %v1436 = vpack.c.b16 %v1404, %v1404
      %v1437 = vpack.c.b16 %v1405, %v1405
      %v1438 = vpack.c.b16 %v1406, %v1406
      %v1439 = vpack.c.b16 %v1407, %v1407
      %v1440 = vpack.c.b16 %v1408, %v1408
      %v1441 = vpack.c.b16 %v1409, %v1409
      %v1442 = vpack.c.b16 %v1410, %v1410
      %v1443 = vpack.c.b16 %v1411, %v1411
      %v1444 = vpack.c.b16 %v1412, %v1412
      %v1445 = vpack.c.b16 %v1413, %v1413
      %v1446 = vpack.c.b16 %v1414, %v1414
      %v1447 = vpack.c.b16 %v1415, %v1415
      %v1448 = vpack.c.b16 %v1416, %v1416
      %v1449 = vpack.c.b16 %v1417, %v1417
      %v1450 = vpack.c.b16 %v1418, %v1418
      %v1451 = vpack.c.b16 %v1419, %v1419
      %v1452 = vpack.c.b16 %v1420, %v1420
      %v1453 = vpack.c.b16 %v1421, %v1421
      %v1454 = vpack.c.b16 %v1422, %v1422
      %v1455 = vpack.c.b16 %v1423, %v1423
      %v1456 = vpack.c.b16 %v1424, %v1424
      %v1457 = vpack.c.b16 %v1425, %v1425
      %v1458 = vpack.c.b16 %v1426, %v1426
      %v1459 = vpack.c.b16 %v1427, %v1427
      %v1460 = vpack.c.b16 %v1428, %v1428
      %vm1461 = vsmask.f32 4368
      %vm1462 = vmor %vm1253, %vm1461
      %v1464 = vshrl.u32 %v1429, 16
      %v1466 = vrot.slane %v1464, 7
      %v1467 = vshll.u32 %v1429, 16
      %v1469 = vor.u32 %v1466, %v1467
      %v1470 = vrot.slane %v1466, 4
      %v1472 = vshrl.u32 %v1430, 16
      %v1474 = vrot.slane %v1472, 7
      %v1475 = vshll.u32 %v1430, 16
      %v1477 = vor.u32 %v1474, %v1475
      %v1478 = vsel %vm1462, %v1470, %v1477
      %v1479 = vrot.slane %v1474, 4
      %v1481 = vshrl.u32 %v1431, 16
      %v1483 = vrot.slane %v1481, 7
      %v1484 = vshll.u32 %v1431, 16
      %v1486 = vor.u32 %v1483, %v1484
      %v1487 = vrot.slane %v1483, 4
      %v1489 = vshrl.u32 %v1432, 16
      %v1491 = vrot.slane %v1489, 7
      %v1492 = vshll.u32 %v1432, 16
      %v1494 = vor.u32 %v1491, %v1492
      %v1495 = vsel %vm1462, %v1487, %v1494
      %v1496 = vrot.slane %v1491, 4
      %v1498 = vshrl.u32 %v1433, 16
      %v1500 = vrot.slane %v1498, 7
      %v1501 = vshll.u32 %v1433, 16
      %v1503 = vor.u32 %v1500, %v1501
      %v1504 = vrot.slane %v1500, 4
      %v1506 = vshrl.u32 %v1434, 16
      %v1508 = vrot.slane %v1506, 7
      %v1509 = vshll.u32 %v1434, 16
      %v1511 = vor.u32 %v1508, %v1509
      %v1512 = vsel %vm1462, %v1504, %v1511
      %v1513 = vrot.slane %v1508, 4
      %v1515 = vshrl.u32 %v1435, 16
      %v1517 = vrot.slane %v1515, 7
      %v1518 = vshll.u32 %v1435, 16
      %v1520 = vor.u32 %v1517, %v1518
      %v1521 = vrot.slane %v1517, 4
      %v1523 = vshrl.u32 %v1436, 16
      %v1525 = vrot.slane %v1523, 7
      %v1526 = vshll.u32 %v1436, 16
      %v1528 = vor.u32 %v1525, %v1526
      %v1529 = vsel %vm1462, %v1521, %v1528
      %v1530 = vrot.slane %v1525, 4
      %v1532 = vshrl.u32 %v1437, 16
      %v1534 = vrot.slane %v1532, 7
      %v1535 = vshll.u32 %v1437, 16
      %v1537 = vor.u32 %v1534, %v1535
      %v1538 = vrot.slane %v1534, 4
      %v1540 = vshrl.u32 %v1438, 16
      %v1542 = vrot.slane %v1540, 7
      %v1543 = vshll.u32 %v1438, 16
      %v1545 = vor.u32 %v1542, %v1543
      %v1546 = vsel %vm1462, %v1538, %v1545
      %v1547 = vrot.slane %v1542, 4
      %v1549 = vshrl.u32 %v1439, 16
      %v1551 = vrot.slane %v1549, 7
      %v1552 = vshll.u32 %v1439, 16
      %v1554 = vor.u32 %v1551, %v1552
      %v1555 = vrot.slane %v1551, 4
      %v1557 = vshrl.u32 %v1440, 16
      %v1559 = vrot.slane %v1557, 7
      %v1560 = vshll.u32 %v1440, 16
      %v1562 = vor.u32 %v1559, %v1560
      %v1563 = vsel %vm1462, %v1555, %v1562
      %v1564 = vrot.slane %v1559, 4
      %v1566 = vshrl.u32 %v1441, 16
      %v1568 = vrot.slane %v1566, 7
      %v1569 = vshll.u32 %v1441, 16
      %v1571 = vor.u32 %v1568, %v1569
      %v1572 = vrot.slane %v1568, 4
      %v1574 = vshrl.u32 %v1442, 16
      %v1576 = vrot.slane %v1574, 7
      %v1577 = vshll.u32 %v1442, 16
      %v1579 = vor.u32 %v1576, %v1577
      %v1580 = vsel %vm1462, %v1572, %v1579
      %v1581 = vrot.slane %v1576, 4
      %v1583 = vshrl.u32 %v1443, 16
      %v1585 = vrot.slane %v1583, 7
      %v1586 = vshll.u32 %v1443, 16
      %v1588 = vor.u32 %v1585, %v1586
      %v1589 = vrot.slane %v1585, 4
      %v1591 = vshrl.u32 %v1444, 16
      %v1593 = vrot.slane %v1591, 7
      %v1594 = vshll.u32 %v1444, 16
      %v1596 = vor.u32 %v1593, %v1594
      %v1597 = vsel %vm1462, %v1589, %v1596
      %v1598 = vrot.slane %v1593, 4
      %v1600 = vshrl.u32 %v1445, 16
      %v1602 = vrot.slane %v1600, 7
      %v1603 = vshll.u32 %v1445, 16
      %v1605 = vor.u32 %v1602, %v1603
      %v1606 = vrot.slane %v1602, 4
      %v1608 = vshrl.u32 %v1446, 16
      %v1610 = vrot.slane %v1608, 7
      %v1611 = vshll.u32 %v1446, 16
      %v1613 = vor.u32 %v1610, %v1611
      %v1614 = vsel %vm1462, %v1606, %v1613
      %v1615 = vrot.slane %v1610, 4
      %v1617 = vshrl.u32 %v1447, 16
      %v1619 = vrot.slane %v1617, 7
      %v1620 = vshll.u32 %v1447, 16
      %v1622 = vor.u32 %v1619, %v1620
      %v1623 = vrot.slane %v1619, 4
      %v1625 = vshrl.u32 %v1448, 16
      %v1627 = vrot.slane %v1625, 7
      %v1628 = vshll.u32 %v1448, 16
      %v1630 = vor.u32 %v1627, %v1628
      %v1631 = vsel %vm1462, %v1623, %v1630
      %v1632 = vrot.slane %v1627, 4
      %v1634 = vshrl.u32 %v1449, 16
      %v1636 = vrot.slane %v1634, 7
      %v1637 = vshll.u32 %v1449, 16
      %v1639 = vor.u32 %v1636, %v1637
      %v1640 = vrot.slane %v1636, 4
      %v1642 = vshrl.u32 %v1450, 16
      %v1644 = vrot.slane %v1642, 7
      %v1645 = vshll.u32 %v1450, 16
      %v1647 = vor.u32 %v1644, %v1645
      %v1648 = vsel %vm1462, %v1640, %v1647
      %v1649 = vrot.slane %v1644, 4
      %v1651 = vshrl.u32 %v1451, 16
      %v1653 = vrot.slane %v1651, 7
      %v1654 = vshll.u32 %v1451, 16
      %v1656 = vor.u32 %v1653, %v1654
      %v1657 = vrot.slane %v1653, 4
      %v1659 = vshrl.u32 %v1452, 16
      %v1661 = vrot.slane %v1659, 7
      %v1662 = vshll.u32 %v1452, 16
      %v1664 = vor.u32 %v1661, %v1662
      %v1665 = vsel %vm1462, %v1657, %v1664
      %v1666 = vrot.slane %v1661, 4
      %v1668 = vshrl.u32 %v1453, 16
      %v1670 = vrot.slane %v1668, 7
      %v1671 = vshll.u32 %v1453, 16
      %v1673 = vor.u32 %v1670, %v1671
      %v1674 = vrot.slane %v1670, 4
      %v1676 = vshrl.u32 %v1454, 16
      %v1678 = vrot.slane %v1676, 7
      %v1679 = vshll.u32 %v1454, 16
      %v1681 = vor.u32 %v1678, %v1679
      %v1682 = vsel %vm1462, %v1674, %v1681
      %v1683 = vrot.slane %v1678, 4
      %v1685 = vshrl.u32 %v1455, 16
      %v1687 = vrot.slane %v1685, 7
      %v1688 = vshll.u32 %v1455, 16
      %v1690 = vor.u32 %v1687, %v1688
      %v1691 = vrot.slane %v1687, 4
      %v1693 = vshrl.u32 %v1456, 16
      %v1695 = vrot.slane %v1693, 7
      %v1696 = vshll.u32 %v1456, 16
      %v1698 = vor.u32 %v1695, %v1696
      %v1699 = vsel %vm1462, %v1691, %v1698
      %v1700 = vrot.slane %v1695, 4
      %v1702 = vshrl.u32 %v1457, 16
      %v1704 = vrot.slane %v1702, 7
      %v1705 = vshll.u32 %v1457, 16
      %v1707 = vor.u32 %v1704, %v1705
      %v1708 = vrot.slane %v1704, 4
      %v1710 = vshrl.u32 %v1458, 16
      %v1712 = vrot.slane %v1710, 7
      %v1713 = vshll.u32 %v1458, 16
      %v1715 = vor.u32 %v1712, %v1713
      %v1716 = vsel %vm1462, %v1708, %v1715
      %v1717 = vrot.slane %v1712, 4
      %v1719 = vshrl.u32 %v1459, 16
      %v1721 = vrot.slane %v1719, 7
      %v1722 = vshll.u32 %v1459, 16
      %v1724 = vor.u32 %v1721, %v1722
      %v1725 = vrot.slane %v1721, 4
      %v1727 = vshrl.u32 %v1460, 16
      %v1729 = vrot.slane %v1727, 7
      %v1730 = vshll.u32 %v1460, 16
      %v1732 = vor.u32 %v1729, %v1730
      %v1733 = vsel %vm1462, %v1725, %v1732
      %v1734 = vrot.slane %v1729, 4
      %s1783 = scalar_lea.vmem [#allocation2], 12
      %vm1784 = vcmask 60416
      %vm1785 = vmand %vm1784, %vm1309
      %v1786 = vld [vmem:[%s1783] sm:$0xf]
      %v1787 = vsel %vm1785, %v1469, %v1786
      %1788 = vst [vmem:[%s1783] sm:$0xf] %v1787
      %1789 = vst.msk [vmem:[%s1783 + $0x4] sm:$0xf] %vm1243, %v1478
      %v1790 = vld [vmem:[%s1783 + $0x8] sm:$0x1]
      %v1791 = vsel %vm1254, %v1479, %v1790
      %1792 = vst [vmem:[%s1783 + $0x8] sm:$0x1] %v1791
      %v1793 = vld [vmem:[%s1783 + $0xc] sm:$0xf]
      %v1794 = vsel %vm1785, %v1486, %v1793
      %1795 = vst [vmem:[%s1783 + $0xc] sm:$0xf] %v1794
      %1796 = vst.msk [vmem:[%s1783 + $0x10] sm:$0xf] %vm1243, %v1495
      %v1797 = vld [vmem:[%s1783 + $0x14] sm:$0x1]
      %v1798 = vsel %vm1254, %v1496, %v1797
      %1799 = vst [vmem:[%s1783 + $0x14] sm:$0x1] %v1798
      %v1800 = vld [vmem:[%s1783 + $0x18] sm:$0xf]
      %v1801 = vsel %vm1785, %v1503, %v1800
      %1802 = vst [vmem:[%s1783 + $0x18] sm:$0xf] %v1801
      %1803 = vst.msk [vmem:[%s1783 + $0x1c] sm:$0xf] %vm1243, %v1512
      %v1804 = vld [vmem:[%s1783 + $0x20] sm:$0x1]
      %v1805 = vsel %vm1254, %v1513, %v1804
      %1806 = vst [vmem:[%s1783 + $0x20] sm:$0x1] %v1805
      %v1807 = vld [vmem:[%s1783 + $0x24] sm:$0xf]
      %v1808 = vsel %vm1785, %v1520, %v1807
      %1809 = vst [vmem:[%s1783 + $0x24] sm:$0xf] %v1808
      %1810 = vst.msk [vmem:[%s1783 + $0x28] sm:$0xf] %vm1243, %v1529
      %v1811 = vld [vmem:[%s1783 + $0x2c] sm:$0x1]
      %v1812 = vsel %vm1254, %v1530, %v1811
      %1813 = vst [vmem:[%s1783 + $0x2c] sm:$0x1] %v1812
      %v1814 = vld [vmem:[%s1783 + $0x30] sm:$0xf]
      %v1815 = vsel %vm1785, %v1537, %v1814
      %1816 = vst [vmem:[%s1783 + $0x30] sm:$0xf] %v1815
      %1817 = vst.msk [vmem:[%s1783 + $0x34] sm:$0xf] %vm1243, %v1546
      %v1818 = vld [vmem:[%s1783 + $0x38] sm:$0x1]
      %v1819 = vsel %vm1254, %v1547, %v1818
      %1820 = vst [vmem:[%s1783 + $0x38] sm:$0x1] %v1819
      %v1821 = vld [vmem:[%s1783 + $0x3c] sm:$0xf]
      %v1822 = vsel %vm1785, %v1554, %v1821
      %1823 = vst [vmem:[%s1783 + $0x3c] sm:$0xf] %v1822
      %1824 = vst.msk [vmem:[%s1783 + $0x40] sm:$0xf] %vm1243, %v1563
      %v1825 = vld [vmem:[%s1783 + $0x44] sm:$0x1]
      %v1826 = vsel %vm1254, %v1564, %v1825
      %1827 = vst [vmem:[%s1783 + $0x44] sm:$0x1] %v1826
      %v1828 = vld [vmem:[%s1783 + $0x48] sm:$0xf]
      %v1829 = vsel %vm1785, %v1571, %v1828
      %1830 = vst [vmem:[%s1783 + $0x48] sm:$0xf] %v1829
      %1831 = vst.msk [vmem:[%s1783 + $0x4c] sm:$0xf] %vm1243, %v1580
      %v1832 = vld [vmem:[%s1783 + $0x50] sm:$0x1]
      %v1833 = vsel %vm1254, %v1581, %v1832
      %1834 = vst [vmem:[%s1783 + $0x50] sm:$0x1] %v1833
      %v1835 = vld [vmem:[%s1783 + $0x54] sm:$0xf]
      %v1836 = vsel %vm1785, %v1588, %v1835
      %1837 = vst [vmem:[%s1783 + $0x54] sm:$0xf] %v1836
      %1838 = vst.msk [vmem:[%s1783 + $0x58] sm:$0xf] %vm1243, %v1597
      %v1839 = vld [vmem:[%s1783 + $0x5c] sm:$0x1]
      %v1840 = vsel %vm1254, %v1598, %v1839
      %1841 = vst [vmem:[%s1783 + $0x5c] sm:$0x1] %v1840
      %v1842 = vld [vmem:[%s1783 + $0x60] sm:$0xf]
      %v1843 = vsel %vm1785, %v1605, %v1842
      %1844 = vst [vmem:[%s1783 + $0x60] sm:$0xf] %v1843
      %1845 = vst.msk [vmem:[%s1783 + $0x64] sm:$0xf] %vm1243, %v1614
      %v1846 = vld [vmem:[%s1783 + $0x68] sm:$0x1]
      %v1847 = vsel %vm1254, %v1615, %v1846
      %1848 = vst [vmem:[%s1783 + $0x68] sm:$0x1] %v1847
      %v1849 = vld [vmem:[%s1783 + $0x6c] sm:$0xf]
      %v1850 = vsel %vm1785, %v1622, %v1849
      %1851 = vst [vmem:[%s1783 + $0x6c] sm:$0xf] %v1850
      %1852 = vst.msk [vmem:[%s1783 + $0x70] sm:$0xf] %vm1243, %v1631
      %v1853 = vld [vmem:[%s1783 + $0x74] sm:$0x1]
      %v1854 = vsel %vm1254, %v1632, %v1853
      %1855 = vst [vmem:[%s1783 + $0x74] sm:$0x1] %v1854
      %v1856 = vld [vmem:[%s1783 + $0x78] sm:$0xf]
      %v1857 = vsel %vm1785, %v1639, %v1856
      %1858 = vst [vmem:[%s1783 + $0x78] sm:$0xf] %v1857
      %1859 = vst.msk [vmem:[%s1783 + $0x7c] sm:$0xf] %vm1243, %v1648
      %v1860 = vld [vmem:[%s1783 + $0x80] sm:$0x1]
      %v1861 = vsel %vm1254, %v1649, %v1860
      %1862 = vst [vmem:[%s1783 + $0x80] sm:$0x1] %v1861
      %v1863 = vld [vmem:[%s1783 + $0x84] sm:$0xf]
      %v1864 = vsel %vm1785, %v1656, %v1863
      %1865 = vst [vmem:[%s1783 + $0x84] sm:$0xf] %v1864
      %1866 = vst.msk [vmem:[%s1783 + $0x88] sm:$0xf] %vm1243, %v1665
      %v1867 = vld [vmem:[%s1783 + $0x8c] sm:$0x1]
      %v1868 = vsel %vm1254, %v1666, %v1867
      %1869 = vst [vmem:[%s1783 + $0x8c] sm:$0x1] %v1868
      %v1870 = vld [vmem:[%s1783 + $0x90] sm:$0xf]
      %v1871 = vsel %vm1785, %v1673, %v1870
      %1872 = vst [vmem:[%s1783 + $0x90] sm:$0xf] %v1871
      %1873 = vst.msk [vmem:[%s1783 + $0x94] sm:$0xf] %vm1243, %v1682
      %v1874 = vld [vmem:[%s1783 + $0x98] sm:$0x1]
      %v1875 = vsel %vm1254, %v1683, %v1874
      %1876 = vst [vmem:[%s1783 + $0x98] sm:$0x1] %v1875
      %v1877 = vld [vmem:[%s1783 + $0x9c] sm:$0xf]
      %v1878 = vsel %vm1785, %v1690, %v1877
      %1879 = vst [vmem:[%s1783 + $0x9c] sm:$0xf] %v1878
      %1880 = vst.msk [vmem:[%s1783 + $0xa0] sm:$0xf] %vm1243, %v1699
      %v1881 = vld [vmem:[%s1783 + $0xa4] sm:$0x1]
      %v1882 = vsel %vm1254, %v1700, %v1881
      %1883 = vst [vmem:[%s1783 + $0xa4] sm:$0x1] %v1882
      %v1884 = vld [vmem:[%s1783 + $0xa8] sm:$0xf]
      %v1885 = vsel %vm1785, %v1707, %v1884
      %1886 = vst [vmem:[%s1783 + $0xa8] sm:$0xf] %v1885
      %1887 = vst.msk [vmem:[%s1783 + $0xac] sm:$0xf] %vm1243, %v1716
      %v1888 = vld [vmem:[%s1783 + $0xb0] sm:$0x1]
      %v1889 = vsel %vm1254, %v1717, %v1888
      %1890 = vst [vmem:[%s1783 + $0xb0] sm:$0x1] %v1889
      %v1891 = vld [vmem:[%s1783 + $0xb4] sm:$0xf]
      %v1892 = vsel %vm1785, %v1724, %v1891
      %1893 = vst [vmem:[%s1783 + $0xb4] sm:$0xf] %v1892
      %1894 = vst.msk [vmem:[%s1783 + $0xb8] sm:$0xf] %vm1243, %v1733
      %v1895 = vld [vmem:[%s1783 + $0xbc] sm:$0x1]
      %v1896 = vsel %vm1254, %v1734, %v1895
      %1897 = vst [vmem:[%s1783 + $0xbc] sm:$0x1] %v1896
      %v1898 = vld [vmem:[#allocation2] sm:$0xf]
      %v1899 = vld [vmem:[#allocation2 + $0x4] sm:$0xf]
      %v1900 = vld [vmem:[#allocation2 + $0xc] sm:$0xf]
      %v1901 = vld [vmem:[#allocation2 + $0x10] sm:$0xf]
      %v1902 = vld [vmem:[#allocation2 + $0x18] sm:$0xf]
      %v1903 = vld [vmem:[#allocation2 + $0x1c] sm:$0xf]
      %v1904 = vld [vmem:[#allocation2 + $0x24] sm:$0xf]
      %v1905 = vld [vmem:[#allocation2 + $0x28] sm:$0xf]
      %v1906 = vld [vmem:[#allocation2 + $0x30] sm:$0xf]
      %v1907 = vld [vmem:[#allocation2 + $0x34] sm:$0xf]
      %v1908 = vld [vmem:[#allocation2 + $0x3c] sm:$0xf]
      %v1909 = vld [vmem:[#allocation2 + $0x40] sm:$0xf]
      %v1910 = vld [vmem:[#allocation2 + $0x48] sm:$0xf]
      %v1911 = vld [vmem:[#allocation2 + $0x4c] sm:$0xf]
      %v1912 = vld [vmem:[#allocation2 + $0x54] sm:$0xf]
      %v1913 = vld [vmem:[#allocation2 + $0x58] sm:$0xf]
      %v1914 = vld [vmem:[#allocation2 + $0x60] sm:$0xf]
      %v1915 = vld [vmem:[#allocation2 + $0x64] sm:$0xf]
      %v1916 = vld [vmem:[#allocation2 + $0x6c] sm:$0xf]
      %v1917 = vld [vmem:[#allocation2 + $0x70] sm:$0xf]
      %v1918 = vld [vmem:[#allocation2 + $0x78] sm:$0xf]
      %v1919 = vld [vmem:[#allocation2 + $0x7c] sm:$0xf]
      %v1920 = vld [vmem:[#allocation2 + $0x84] sm:$0xf]
      %v1921 = vld [vmem:[#allocation2 + $0x88] sm:$0xf]
      %v1922 = vld [vmem:[#allocation2 + $0x90] sm:$0xf]
      %v1923 = vld [vmem:[#allocation2 + $0x94] sm:$0xf]
      %v1924 = vld [vmem:[#allocation2 + $0x9c] sm:$0xf]
      %v1925 = vld [vmem:[#allocation2 + $0xa0] sm:$0xf]
      %v1926 = vld [vmem:[#allocation2 + $0xa8] sm:$0xf]
      %v1927 = vld [vmem:[#allocation2 + $0xac] sm:$0xf]
      %v1928 = vld [vmem:[#allocation2 + $0xb4] sm:$0xf]
      %v1929 = vld [vmem:[#allocation2 + $0xb8] sm:$0xf]
      %v1930 = vld [vmem:[%s3] sm:$0xf]
      %v1931 = vld [vmem:[#allocation2 + $0x8] sm:$0x1]
      %v1932 = vld [vmem:[#allocation2 + $0x14] sm:$0x1]
      %v1933 = vld [vmem:[#allocation2 + $0x20] sm:$0x1]
      %v1934 = vld [vmem:[#allocation2 + $0x2c] sm:$0x1]
      %v1935 = vld [vmem:[#allocation2 + $0x38] sm:$0x1]
      %v1936 = vld [vmem:[#allocation2 + $0x44] sm:$0x1]
      %v1937 = vld [vmem:[#allocation2 + $0x50] sm:$0x1]
      %v1938 = vld [vmem:[#allocation2 + $0x5c] sm:$0x1]
      %v1939 = vld [vmem:[#allocation2 + $0x68] sm:$0x1]
      %v1940 = vld [vmem:[#allocation2 + $0x74] sm:$0x1]
      %v1941 = vld [vmem:[#allocation2 + $0x80] sm:$0x1]
      %v1942 = vld [vmem:[#allocation2 + $0x8c] sm:$0x1]
      %v1943 = vld [vmem:[#allocation2 + $0x98] sm:$0x1]
      %v1944 = vld [vmem:[#allocation2 + $0xa4] sm:$0x1]
      %v1945 = vld [vmem:[#allocation2 + $0xb0] sm:$0x1]
      %v1946 = vld [vmem:[#allocation2 + $0xbc] sm:$0x1]
      %vm1947 = vsmask.f32 3328
      %vm1948 = vsmask.f32 7440
      %vm1949 = vmor %vm1947, %vm1948
      %v1951 = vshrl.u32 %v1898, 16
      %v1953 = vrot.slane %v1951, 4
      %v1954 = vshll.u32 %v1898, 16
      %v1956 = vrot.slane %v1954, 5
      %v1957 = vor.u32 %v1953, %v1956
      %v1958 = vrot.slane %v1957, 4
      %v1960 = vshll.u32 %v1899, 16
      %v1962 = vrot.slane %v1960, 5
      %v1963 = vsel %vm1949, %v1958, %v1962
      %v1964 = vshrl.u32 %v1899, 16
      %v1966 = vrot.slane %v1964, 4
      %v1967 = vor.u32 %v1966, %v1962
      %v1968 = vrot.slane %v1967, 4
      %v1970 = vshll.u32 %v1931, 16
      %v1972 = vrot.slane %v1970, 5
      %v1973 = vsel %vm1949, %v1968, %v1972
      %v1975 = vshrl.u32 %v1900, 16
      %v1977 = vrot.slane %v1975, 4
      %v1978 = vshll.u32 %v1900, 16
      %v1980 = vrot.slane %v1978, 5
      %v1981 = vor.u32 %v1977, %v1980
      %v1982 = vrot.slane %v1981, 4
      %v1984 = vshll.u32 %v1901, 16
      %v1986 = vrot.slane %v1984, 5
      %v1987 = vsel %vm1949, %v1982, %v1986
      %v1988 = vshrl.u32 %v1901, 16
      %v1990 = vrot.slane %v1988, 4
      %v1991 = vor.u32 %v1990, %v1986
      %v1992 = vrot.slane %v1991, 4
      %v1994 = vshll.u32 %v1932, 16
      %v1996 = vrot.slane %v1994, 5
      %v1997 = vsel %vm1949, %v1992, %v1996
      %v1999 = vshrl.u32 %v1902, 16
      %v2001 = vrot.slane %v1999, 4
      %v2002 = vshll.u32 %v1902, 16
      %v2004 = vrot.slane %v2002, 5
      %v2005 = vor.u32 %v2001, %v2004
      %v2006 = vrot.slane %v2005, 4
      %v2008 = vshll.u32 %v1903, 16
      %v2010 = vrot.slane %v2008, 5
      %v2011 = vsel %vm1949, %v2006, %v2010
      %v2012 = vshrl.u32 %v1903, 16
      %v2014 = vrot.slane %v2012, 4
      %v2015 = vor.u32 %v2014, %v2010
      %v2016 = vrot.slane %v2015, 4
      %v2018 = vshll.u32 %v1933, 16
      %v2020 = vrot.slane %v2018, 5
      %v2021 = vsel %vm1949, %v2016, %v2020
      %v2023 = vshrl.u32 %v1904, 16
      %v2025 = vrot.slane %v2023, 4
      %v2026 = vshll.u32 %v1904, 16
      %v2028 = vrot.slane %v2026, 5
      %v2029 = vor.u32 %v2025, %v2028
      %v2030 = vrot.slane %v2029, 4
      %v2032 = vshll.u32 %v1905, 16
      %v2034 = vrot.slane %v2032, 5
      %v2035 = vsel %vm1949, %v2030, %v2034
      %v2036 = vshrl.u32 %v1905, 16
      %v2038 = vrot.slane %v2036, 4
      %v2039 = vor.u32 %v2038, %v2034
      %v2040 = vrot.slane %v2039, 4
      %v2042 = vshll.u32 %v1934, 16
      %v2044 = vrot.slane %v2042, 5
      %v2045 = vsel %vm1949, %v2040, %v2044
      %v2047 = vshrl.u32 %v1906, 16
      %v2049 = vrot.slane %v2047, 4
      %v2050 = vshll.u32 %v1906, 16
      %v2052 = vrot.slane %v2050, 5
      %v2053 = vor.u32 %v2049, %v2052
      %v2054 = vrot.slane %v2053, 4
      %v2056 = vshll.u32 %v1907, 16
      %v2058 = vrot.slane %v2056, 5
      %v2059 = vsel %vm1949, %v2054, %v2058
      %v2060 = vshrl.u32 %v1907, 16
      %v2062 = vrot.slane %v2060, 4
      %v2063 = vor.u32 %v2062, %v2058
      %v2064 = vrot.slane %v2063, 4
      %v2066 = vshll.u32 %v1935, 16
      %v2068 = vrot.slane %v2066, 5
      %v2069 = vsel %vm1949, %v2064, %v2068
      %v2071 = vshrl.u32 %v1908, 16
      %v2073 = vrot.slane %v2071, 4
      %v2074 = vshll.u32 %v1908, 16
      %v2076 = vrot.slane %v2074, 5
      %v2077 = vor.u32 %v2073, %v2076
      %v2078 = vrot.slane %v2077, 4
      %v2080 = vshll.u32 %v1909, 16
      %v2082 = vrot.slane %v2080, 5
      %v2083 = vsel %vm1949, %v2078, %v2082
      %v2084 = vshrl.u32 %v1909, 16
      %v2086 = vrot.slane %v2084, 4
      %v2087 = vor.u32 %v2086, %v2082
      %v2088 = vrot.slane %v2087, 4
      %v2090 = vshll.u32 %v1936, 16
      %v2092 = vrot.slane %v2090, 5
      %v2093 = vsel %vm1949, %v2088, %v2092
      %v2095 = vshrl.u32 %v1910, 16
      %v2097 = vrot.slane %v2095, 4
      %v2098 = vshll.u32 %v1910, 16
      %v2100 = vrot.slane %v2098, 5
      %v2101 = vor.u32 %v2097, %v2100
      %v2102 = vrot.slane %v2101, 4
      %v2104 = vshll.u32 %v1911, 16
      %v2106 = vrot.slane %v2104, 5
      %v2107 = vsel %vm1949, %v2102, %v2106
      %v2108 = vshrl.u32 %v1911, 16
      %v2110 = vrot.slane %v2108, 4
      %v2111 = vor.u32 %v2110, %v2106
      %v2112 = vrot.slane %v2111, 4
      %v2114 = vshll.u32 %v1937, 16
      %v2116 = vrot.slane %v2114, 5
      %v2117 = vsel %vm1949, %v2112, %v2116
      %v2119 = vshrl.u32 %v1912, 16
      %v2121 = vrot.slane %v2119, 4
      %v2122 = vshll.u32 %v1912, 16
      %v2124 = vrot.slane %v2122, 5
      %v2125 = vor.u32 %v2121, %v2124
      %v2126 = vrot.slane %v2125, 4
      %v2128 = vshll.u32 %v1913, 16
      %v2130 = vrot.slane %v2128, 5
      %v2131 = vsel %vm1949, %v2126, %v2130
      %v2132 = vshrl.u32 %v1913, 16
      %v2134 = vrot.slane %v2132, 4
      %v2135 = vor.u32 %v2134, %v2130
      %v2136 = vrot.slane %v2135, 4
      %v2138 = vshll.u32 %v1938, 16
      %v2140 = vrot.slane %v2138, 5
      %v2141 = vsel %vm1949, %v2136, %v2140
      %v2143 = vshrl.u32 %v1914, 16
      %v2145 = vrot.slane %v2143, 4
      %v2146 = vshll.u32 %v1914, 16
      %v2148 = vrot.slane %v2146, 5
      %v2149 = vor.u32 %v2145, %v2148
      %v2150 = vrot.slane %v2149, 4
      %v2152 = vshll.u32 %v1915, 16
      %v2154 = vrot.slane %v2152, 5
      %v2155 = vsel %vm1949, %v2150, %v2154
      %v2156 = vshrl.u32 %v1915, 16
      %v2158 = vrot.slane %v2156, 4
      %v2159 = vor.u32 %v2158, %v2154
      %v2160 = vrot.slane %v2159, 4
      %v2162 = vshll.u32 %v1939, 16
      %v2164 = vrot.slane %v2162, 5
      %v2165 = vsel %vm1949, %v2160, %v2164
      %v2167 = vshrl.u32 %v1916, 16
      %v2169 = vrot.slane %v2167, 4
      %v2170 = vshll.u32 %v1916, 16
      %v2172 = vrot.slane %v2170, 5
      %v2173 = vor.u32 %v2169, %v2172
      %v2174 = vrot.slane %v2173, 4
      %v2176 = vshll.u32 %v1917, 16
      %v2178 = vrot.slane %v2176, 5
      %v2179 = vsel %vm1949, %v2174, %v2178
      %v2180 = vshrl.u32 %v1917, 16
      %v2182 = vrot.slane %v2180, 4
      %v2183 = vor.u32 %v2182, %v2178
      %v2184 = vrot.slane %v2183, 4
      %v2186 = vshll.u32 %v1940, 16
      %v2188 = vrot.slane %v2186, 5
      %v2189 = vsel %vm1949, %v2184, %v2188
      %v2191 = vshrl.u32 %v1918, 16
      %v2193 = vrot.slane %v2191, 4
      %v2194 = vshll.u32 %v1918, 16
      %v2196 = vrot.slane %v2194, 5
      %v2197 = vor.u32 %v2193, %v2196
      %v2198 = vrot.slane %v2197, 4
      %v2200 = vshll.u32 %v1919, 16
      %v2202 = vrot.slane %v2200, 5
      %v2203 = vsel %vm1949, %v2198, %v2202
      %v2204 = vshrl.u32 %v1919, 16
      %v2206 = vrot.slane %v2204, 4
      %v2207 = vor.u32 %v2206, %v2202
      %v2208 = vrot.slane %v2207, 4
      %v2210 = vshll.u32 %v1941, 16
      %v2212 = vrot.slane %v2210, 5
      %v2213 = vsel %vm1949, %v2208, %v2212
      %v2215 = vshrl.u32 %v1920, 16
      %v2217 = vrot.slane %v2215, 4
      %v2218 = vshll.u32 %v1920, 16
      %v2220 = vrot.slane %v2218, 5
      %v2221 = vor.u32 %v2217, %v2220
      %v2222 = vrot.slane %v2221, 4
      %v2224 = vshll.u32 %v1921, 16
      %v2226 = vrot.slane %v2224, 5
      %v2227 = vsel %vm1949, %v2222, %v2226
      %v2228 = vshrl.u32 %v1921, 16
      %v2230 = vrot.slane %v2228, 4
      %v2231 = vor.u32 %v2230, %v2226
      %v2232 = vrot.slane %v2231, 4
      %v2234 = vshll.u32 %v1942, 16
      %v2236 = vrot.slane %v2234, 5
      %v2237 = vsel %vm1949, %v2232, %v2236
      %v2239 = vshrl.u32 %v1922, 16
      %v2241 = vrot.slane %v2239, 4
      %v2242 = vshll.u32 %v1922, 16
      %v2244 = vrot.slane %v2242, 5
      %v2245 = vor.u32 %v2241, %v2244
      %v2246 = vrot.slane %v2245, 4
      %v2248 = vshll.u32 %v1923, 16
      %v2250 = vrot.slane %v2248, 5
      %v2251 = vsel %vm1949, %v2246, %v2250
      %v2252 = vshrl.u32 %v1923, 16
      %v2254 = vrot.slane %v2252, 4
      %v2255 = vor.u32 %v2254, %v2250
      %v2256 = vrot.slane %v2255, 4
      %v2258 = vshll.u32 %v1943, 16
      %v2260 = vrot.slane %v2258, 5
      %v2261 = vsel %vm1949, %v2256, %v2260
      %v2263 = vshrl.u32 %v1924, 16
      %v2265 = vrot.slane %v2263, 4
      %v2266 = vshll.u32 %v1924, 16
      %v2268 = vrot.slane %v2266, 5
      %v2269 = vor.u32 %v2265, %v2268
      %v2270 = vrot.slane %v2269, 4
      %v2272 = vshll.u32 %v1925, 16
      %v2274 = vrot.slane %v2272, 5
      %v2275 = vsel %vm1949, %v2270, %v2274
      %v2276 = vshrl.u32 %v1925, 16
      %v2278 = vrot.slane %v2276, 4
      %v2279 = vor.u32 %v2278, %v2274
      %v2280 = vrot.slane %v2279, 4
      %v2282 = vshll.u32 %v1944, 16
      %v2284 = vrot.slane %v2282, 5
      %v2285 = vsel %vm1949, %v2280, %v2284
      %v2287 = vshrl.u32 %v1926, 16
      %v2289 = vrot.slane %v2287, 4
      %v2290 = vshll.u32 %v1926, 16
      %v2292 = vrot.slane %v2290, 5
      %v2293 = vor.u32 %v2289, %v2292
      %v2294 = vrot.slane %v2293, 4
      %v2296 = vshll.u32 %v1927, 16
      %v2298 = vrot.slane %v2296, 5
      %v2299 = vsel %vm1949, %v2294, %v2298
      %v2300 = vshrl.u32 %v1927, 16
      %v2302 = vrot.slane %v2300, 4
      %v2303 = vor.u32 %v2302, %v2298
      %v2304 = vrot.slane %v2303, 4
      %v2306 = vshll.u32 %v1945, 16
      %v2308 = vrot.slane %v2306, 5
      %v2309 = vsel %vm1949, %v2304, %v2308
      %v2311 = vshrl.u32 %v1928, 16
      %v2313 = vrot.slane %v2311, 4
      %v2314 = vshll.u32 %v1928, 16
      %v2316 = vrot.slane %v2314, 5
      %v2317 = vor.u32 %v2313, %v2316
      %v2318 = vrot.slane %v2317, 4
      %v2320 = vshll.u32 %v1929, 16
      %v2322 = vrot.slane %v2320, 5
      %v2323 = vsel %vm1949, %v2318, %v2322
      %v2324 = vshrl.u32 %v1929, 16
      %v2326 = vrot.slane %v2324, 4
      %v2327 = vor.u32 %v2326, %v2322
      %v2328 = vrot.slane %v2327, 4
      %v2330 = vshll.u32 %v1946, 16
      %v2332 = vrot.slane %v2330, 5
      %v2333 = vsel %vm1949, %v2328, %v2332
      %s2334 = scalar_lea.vmem %s3, 4
      %v2335 = vld [vmem:[%s2334] sm:$0xf]
      %v2336 = vunpack.c.l.b16 %v1963
      %v2337 = vunpack.c.l.b16 %v1973
      %v2338 = vunpack.c.l.b16 %v1987
      %v2339 = vunpack.c.l.b16 %v1997
      %v2340 = vunpack.c.l.b16 %v2011
      %v2341 = vunpack.c.l.b16 %v2021
      %v2342 = vunpack.c.l.b16 %v2035
      %v2343 = vunpack.c.l.b16 %v2045
      %v2344 = vunpack.c.l.b16 %v2059
      %v2345 = vunpack.c.l.b16 %v2069
      %v2346 = vunpack.c.l.b16 %v2083
      %v2347 = vunpack.c.l.b16 %v2093
      %v2348 = vunpack.c.l.b16 %v2107
      %v2349 = vunpack.c.l.b16 %v2117
      %v2350 = vunpack.c.l.b16 %v2131
      %v2351 = vunpack.c.l.b16 %v2141
      %v2352 = vunpack.c.l.b16 %v2155
      %v2353 = vunpack.c.l.b16 %v2165
      %v2354 = vunpack.c.l.b16 %v2179
      %v2355 = vunpack.c.l.b16 %v2189
      %v2356 = vunpack.c.l.b16 %v2203
      %v2357 = vunpack.c.l.b16 %v2213
      %v2358 = vunpack.c.l.b16 %v2227
      %v2359 = vunpack.c.l.b16 %v2237
      %v2360 = vunpack.c.l.b16 %v2251
      %v2361 = vunpack.c.l.b16 %v2261
      %v2362 = vunpack.c.l.b16 %v2275
      %v2363 = vunpack.c.l.b16 %v2285
      %v2364 = vunpack.c.l.b16 %v2299
      %v2365 = vunpack.c.l.b16 %v2309
      %v2366 = vunpack.c.l.b16 %v2323
      %v2367 = vunpack.c.l.b16 %v2333
      %v2368 = vpack.c.b16 %v2337, %v2336
      %v2369 = vpack.c.b16 %v2339, %v2338
      %v2370 = vpack.c.b16 %v2341, %v2340
      %v2371 = vpack.c.b16 %v2343, %v2342
      %v2372 = vpack.c.b16 %v2345, %v2344
      %v2373 = vpack.c.b16 %v2347, %v2346
      %v2374 = vpack.c.b16 %v2349, %v2348
      %v2375 = vpack.c.b16 %v2351, %v2350
      %v2376 = vpack.c.b16 %v2353, %v2352
      %v2377 = vpack.c.b16 %v2355, %v2354
      %v2378 = vpack.c.b16 %v2357, %v2356
      %v2379 = vpack.c.b16 %v2359, %v2358
      %v2380 = vpack.c.b16 %v2361, %v2360
      %v2381 = vpack.c.b16 %v2363, %v2362
      %v2382 = vpack.c.b16 %v2365, %v2364
      %v2383 = vpack.c.b16 %v2367, %v2366
      %vm2384 = vcmask 64512
      %v2386 = vsel %vm2384, %v2368, 0
      %v2389 = vsel %vm2384, %v2369, 0
      %v2392 = vsel %vm2384, %v2370, 0
      %v2395 = vsel %vm2384, %v2371, 0
      %v2398 = vsel %vm2384, %v2372, 0
      %v2401 = vsel %vm2384, %v2373, 0
      %v2404 = vsel %vm2384, %v2374, 0
      %v2407 = vsel %vm2384, %v2375, 0
      %v2410 = vsel %vm2384, %v2376, 0
      %v2413 = vsel %vm2384, %v2377, 0
      %v2416 = vsel %vm2384, %v2378, 0
      %v2419 = vsel %vm2384, %v2379, 0
      %v2422 = vsel %vm2384, %v2380, 0
      %v2425 = vsel %vm2384, %v2381, 0
      %v2428 = vsel %vm2384, %v2382, 0
      %v2431 = vsel %vm2384, %v2383, 0
      %vm2433 = vcmask 1043456
      %v2435 = vsel %vm2433, %v2335, 0
      %2437 = vmatprep.subr.bf16.mxu0 0
      %2438 = vmatpush1.bf16.msra.mxu0 0
      %2439 = vmatprep.subr.bf16.mxu0 0
      %2440 = vmatpush1.bf16.msra.mxu0 0
      %2441 = vmatprep.subr.bf16.mxu0 0
      %2442 = vmatpush1.bf16.msra.mxu0 0
      %2443 = vmatprep.subr.bf16.mxu0 0
      %2444 = vmatpush1.bf16.msra.mxu0 0
      %2445 = vmatprep.subr.bf16.mxu0 0
      %2446 = vmatpush1.bf16.msra.mxu0 0
      %2447 = vmatprep.subr.bf16.mxu0 0
      %2448 = vmatpush1.bf16.msra.mxu0 0
      %2449 = vmatprep.subr.bf16.mxu0 0
      %2450 = vmatpush1.bf16.msra.mxu0 0
      %2451 = vmatprep.subr.bf16.mxu0 0
      %2452 = vmatpush1.bf16.msra.mxu0 %v2435
      %2453 = vmatprep.subr.bf16.mxu0 0
      %2454 = vmatpush2.bf16.msra.mxu0 0
      %2455 = vmatprep.subr.bf16.mxu0 0
      %2456 = vmatpush2.bf16.msra.mxu0 0
      %2457 = vmatprep.subr.bf16.mxu0 0
      %2458 = vmatpush2.bf16.msra.mxu0 0
      %2459 = vmatprep.subr.bf16.mxu0 0
      %2460 = vmatpush2.bf16.msra.mxu0 0
      %2461 = vmatprep.subr.bf16.mxu0 0
      %2462 = vmatpush2.bf16.msra.mxu0 0
      %2463 = vmatprep.subr.bf16.mxu0 0
      %2464 = vmatpush2.bf16.msra.mxu0 0
      %2465 = vmatprep.subr.bf16.mxu0 0
      %2466 = vmatpush2.bf16.msra.mxu0 0
      %2467 = vmatprep.subr.bf16.mxu0 0
      %2468 = vmatpush2.bf16.msra.mxu0 0
      %2469 = vmatprep.mubr.bf16.mxu0 0
      %2470 = vmatmul.mubr.bf16.gmra.mxu0 %v2386
      %v2471 = vpop.f32.mrf.mxu0
      %v2472 = vadd.f32 0.0, %v2471
      %v2473 = vpop.f32.mrf.mxu0
      %v2474 = vpop.f32.mrf.mxu0
      %v2475 = vadd.f32 0.0, %v2474
      %v2476 = vpop.f32.mrf.mxu0
      %2477 = vmatprep.mubr.bf16.mxu0 0
      %2478 = vmatmul.mubr.bf16.gmra.mxu0 %v2389
      %v2479 = vpop.f32.mrf.mxu0
      %v2480 = vadd.f32 0.0, %v2479
      %v2481 = vpop.f32.mrf.mxu0
      %v2482 = vpop.f32.mrf.mxu0
      %v2483 = vadd.f32 0.0, %v2482
      %v2484 = vpop.f32.mrf.mxu0
      %2485 = vmatprep.mubr.bf16.mxu0 0
      %2486 = vmatmul.mubr.bf16.gmra.mxu0 %v2392
      %v2487 = vpop.f32.mrf.mxu0
      %v2488 = vadd.f32 0.0, %v2487
      %v2489 = vpop.f32.mrf.mxu0
      %v2490 = vpop.f32.mrf.mxu0
      %v2491 = vadd.f32 0.0, %v2490
      %v2492 = vpop.f32.mrf.mxu0
      %2493 = vmatprep.mubr.bf16.mxu0 0
      %2494 = vmatmul.mubr.bf16.gmra.mxu0 %v2395
      %v2495 = vpop.f32.mrf.mxu0
      %v2496 = vadd.f32 0.0, %v2495
      %v2497 = vpop.f32.mrf.mxu0
      %v2498 = vpop.f32.mrf.mxu0
      %v2499 = vadd.f32 0.0, %v2498
      %v2500 = vpop.f32.mrf.mxu0
      %2501 = vmatprep.mubr.bf16.mxu0 0
      %2502 = vmatmul.mubr.bf16.gmra.mxu0 %v2398
      %v2503 = vpop.f32.mrf.mxu0
      %v2504 = vadd.f32 0.0, %v2503
      %v2505 = vpop.f32.mrf.mxu0
      %v2506 = vpop.f32.mrf.mxu0
      %v2507 = vadd.f32 0.0, %v2506
      %v2508 = vpop.f32.mrf.mxu0
      %2509 = vmatprep.mubr.bf16.mxu0 0
      %2510 = vmatmul.mubr.bf16.gmra.mxu0 %v2401
      %v2511 = vpop.f32.mrf.mxu0
      %v2512 = vadd.f32 0.0, %v2511
      %v2513 = vpop.f32.mrf.mxu0
      %v2514 = vpop.f32.mrf.mxu0
      %v2515 = vadd.f32 0.0, %v2514
      %v2516 = vpop.f32.mrf.mxu0
      %2517 = vmatprep.mubr.bf16.mxu0 0
      %2518 = vmatmul.mubr.bf16.gmra.mxu0 %v2404
      %v2519 = vpop.f32.mrf.mxu0
      %v2520 = vadd.f32 0.0, %v2519
      %v2521 = vpop.f32.mrf.mxu0
      %v2522 = vpop.f32.mrf.mxu0
      %v2523 = vadd.f32 0.0, %v2522
      %v2524 = vpop.f32.mrf.mxu0
      %2525 = vmatprep.mubr.bf16.mxu0 0
      %2526 = vmatmul.mubr.bf16.gmra.mxu0 %v2407
      %v2527 = vpop.f32.mrf.mxu0
      %v2528 = vadd.f32 0.0, %v2527
      %v2529 = vpop.f32.mrf.mxu0
      %v2530 = vpop.f32.mrf.mxu0
      %v2531 = vadd.f32 0.0, %v2530
      %v2532 = vpop.f32.mrf.mxu0
      %2533 = vmatprep.mubr.bf16.mxu0 0
      %2534 = vmatmul.mubr.bf16.gmra.mxu0 %v2410
      %v2535 = vpop.f32.mrf.mxu0
      %v2536 = vadd.f32 0.0, %v2535
      %v2537 = vpop.f32.mrf.mxu0
      %v2538 = vpop.f32.mrf.mxu0
      %v2539 = vadd.f32 0.0, %v2538
      %v2540 = vpop.f32.mrf.mxu0
      %2541 = vmatprep.mubr.bf16.mxu0 0
      %2542 = vmatmul.mubr.bf16.gmra.mxu0 %v2413
      %v2543 = vpop.f32.mrf.mxu0
      %v2544 = vadd.f32 0.0, %v2543
      %v2545 = vpop.f32.mrf.mxu0
      %v2546 = vpop.f32.mrf.mxu0
      %v2547 = vadd.f32 0.0, %v2546
      %v2548 = vpop.f32.mrf.mxu0
      %2549 = vmatprep.mubr.bf16.mxu0 0
      %2550 = vmatmul.mubr.bf16.gmra.mxu0 %v2416
      %v2551 = vpop.f32.mrf.mxu0
      %v2552 = vadd.f32 0.0, %v2551
      %v2553 = vpop.f32.mrf.mxu0
      %v2554 = vpop.f32.mrf.mxu0
      %v2555 = vadd.f32 0.0, %v2554
      %v2556 = vpop.f32.mrf.mxu0
      %2557 = vmatprep.mubr.bf16.mxu0 0
      %2558 = vmatmul.mubr.bf16.gmra.mxu0 %v2419
      %v2559 = vpop.f32.mrf.mxu0
      %v2560 = vadd.f32 0.0, %v2559
      %v2561 = vpop.f32.mrf.mxu0
      %v2562 = vpop.f32.mrf.mxu0
      %v2563 = vadd.f32 0.0, %v2562
      %v2564 = vpop.f32.mrf.mxu0
      %2565 = vmatprep.mubr.bf16.mxu0 0
      %2566 = vmatmul.mubr.bf16.gmra.mxu0 %v2422
      %v2567 = vpop.f32.mrf.mxu0
      %v2568 = vadd.f32 0.0, %v2567
      %v2569 = vpop.f32.mrf.mxu0
      %v2570 = vpop.f32.mrf.mxu0
      %v2571 = vadd.f32 0.0, %v2570
      %v2572 = vpop.f32.mrf.mxu0
      %2573 = vmatprep.mubr.bf16.mxu0 0
      %2574 = vmatmul.mubr.bf16.gmra.mxu0 %v2425
      %v2575 = vpop.f32.mrf.mxu0
      %v2576 = vadd.f32 0.0, %v2575
      %v2577 = vpop.f32.mrf.mxu0
      %v2578 = vpop.f32.mrf.mxu0
      %v2579 = vadd.f32 0.0, %v2578
      %v2580 = vpop.f32.mrf.mxu0
      %2581 = vmatprep.mubr.bf16.mxu0 0
      %2582 = vmatmul.mubr.bf16.gmra.mxu0 %v2428
      %v2583 = vpop.f32.mrf.mxu0
      %v2584 = vadd.f32 0.0, %v2583
      %v2585 = vpop.f32.mrf.mxu0
      %v2586 = vpop.f32.mrf.mxu0
      %v2587 = vadd.f32 0.0, %v2586
      %v2588 = vpop.f32.mrf.mxu0
      %2589 = vmatprep.mubr.bf16.mxu0 0
      %2590 = vmatmul.mubr.bf16.gmra.mxu0 %v2431
      %v2591 = vpop.f32.mrf.mxu0
      %v2592 = vadd.f32 0.0, %v2591
      %v2593 = vpop.f32.mrf.mxu0
      %v2594 = vpop.f32.mrf.mxu0
      %v2595 = vadd.f32 0.0, %v2594
      %v2596 = vpop.f32.mrf.mxu0
      %2597 = vdwg.mxu0
      %v2630 = vunpack.c.l.b16 %v1898
      %v2631 = vunpack.c.l.b16 %v1899
      %v2632 = vunpack.c.l.b16 %v1900
      %v2633 = vunpack.c.l.b16 %v1901
      %v2634 = vunpack.c.l.b16 %v1902
      %v2635 = vunpack.c.l.b16 %v1903
      %v2636 = vunpack.c.l.b16 %v1904
      %v2637 = vunpack.c.l.b16 %v1905
      %v2638 = vunpack.c.l.b16 %v1906
      %v2639 = vunpack.c.l.b16 %v1907
      %v2640 = vunpack.c.l.b16 %v1908
      %v2641 = vunpack.c.l.b16 %v1909
      %v2642 = vunpack.c.l.b16 %v1910
      %v2643 = vunpack.c.l.b16 %v1911
      %v2644 = vunpack.c.l.b16 %v1912
      %v2645 = vunpack.c.l.b16 %v1913
      %v2646 = vunpack.c.l.b16 %v1914
      %v2647 = vunpack.c.l.b16 %v1915
      %v2648 = vunpack.c.l.b16 %v1916
      %v2649 = vunpack.c.l.b16 %v1917
      %v2650 = vunpack.c.l.b16 %v1918
      %v2651 = vunpack.c.l.b16 %v1919
      %v2652 = vunpack.c.l.b16 %v1920
      %v2653 = vunpack.c.l.b16 %v1921
      %v2654 = vunpack.c.l.b16 %v1922
      %v2655 = vunpack.c.l.b16 %v1923
      %v2656 = vunpack.c.l.b16 %v1924
      %v2657 = vunpack.c.l.b16 %v1925
      %v2658 = vunpack.c.l.b16 %v1926
      %v2659 = vunpack.c.l.b16 %v1927
      %v2660 = vunpack.c.l.b16 %v1928
      %v2661 = vunpack.c.l.b16 %v1929
      %v2662 = vpack.c.b16 %v2631, %v2630
      %v2663 = vpack.c.b16 %v2633, %v2632
      %v2664 = vpack.c.b16 %v2635, %v2634
      %v2665 = vpack.c.b16 %v2637, %v2636
      %v2666 = vpack.c.b16 %v2639, %v2638
      %v2667 = vpack.c.b16 %v2641, %v2640
      %v2668 = vpack.c.b16 %v2643, %v2642
      %v2669 = vpack.c.b16 %v2645, %v2644
      %v2670 = vpack.c.b16 %v2647, %v2646
      %v2671 = vpack.c.b16 %v2649, %v2648
      %v2672 = vpack.c.b16 %v2651, %v2650
      %v2673 = vpack.c.b16 %v2653, %v2652
      %v2674 = vpack.c.b16 %v2655, %v2654
      %v2675 = vpack.c.b16 %v2657, %v2656
      %v2676 = vpack.c.b16 %v2659, %v2658
      %v2677 = vpack.c.b16 %v2661, %v2660
      %v2679 = vsel %vm2384, %v2662, 0
      %v2682 = vsel %vm2384, %v2663, 0
      %v2685 = vsel %vm2384, %v2664, 0
      %v2688 = vsel %vm2384, %v2665, 0
      %v2691 = vsel %vm2384, %v2666, 0
      %v2694 = vsel %vm2384, %v2667, 0
      %v2697 = vsel %vm2384, %v2668, 0
      %v2700 = vsel %vm2384, %v2669, 0
      %v2703 = vsel %vm2384, %v2670, 0
      %v2706 = vsel %vm2384, %v2671, 0
      %v2709 = vsel %vm2384, %v2672, 0
      %v2712 = vsel %vm2384, %v2673, 0
      %v2715 = vsel %vm2384, %v2674, 0
      %v2718 = vsel %vm2384, %v2675, 0
      %v2721 = vsel %vm2384, %v2676, 0
      %v2724 = vsel %vm2384, %v2677, 0
      %v2727 = vsel %vm2433, %v1930, 0
      %2729 = vmatprep.subr.bf16.mxu0 0
      %2730 = vmatpush1.bf16.msra.mxu0 0
      %2731 = vmatprep.subr.bf16.mxu0 0
      %2732 = vmatpush1.bf16.msra.mxu0 0
      %2733 = vmatprep.subr.bf16.mxu0 0
      %2734 = vmatpush1.bf16.msra.mxu0 0
      %2735 = vmatprep.subr.bf16.mxu0 0
      %2736 = vmatpush1.bf16.msra.mxu0 0
      %2737 = vmatprep.subr.bf16.mxu0 0
      %2738 = vmatpush1.bf16.msra.mxu0 0
      %2739 = vmatprep.subr.bf16.mxu0 0
      %2740 = vmatpush1.bf16.msra.mxu0 0
      %2741 = vmatprep.subr.bf16.mxu0 0
      %2742 = vmatpush1.bf16.msra.mxu0 0
      %2743 = vmatprep.subr.bf16.mxu0 0
      %2744 = vmatpush1.bf16.msra.mxu0 %v2727
      %2745 = vmatprep.subr.bf16.mxu0 0
      %2746 = vmatpush2.bf16.msra.mxu0 0
      %2747 = vmatprep.subr.bf16.mxu0 0
      %2748 = vmatpush2.bf16.msra.mxu0 0
      %2749 = vmatprep.subr.bf16.mxu0 0
      %2750 = vmatpush2.bf16.msra.mxu0 0
      %2751 = vmatprep.subr.bf16.mxu0 0
      %2752 = vmatpush2.bf16.msra.mxu0 0
      %2753 = vmatprep.subr.bf16.mxu0 0
      %2754 = vmatpush2.bf16.msra.mxu0 0
      %2755 = vmatprep.subr.bf16.mxu0 0
      %2756 = vmatpush2.bf16.msra.mxu0 0
      %2757 = vmatprep.subr.bf16.mxu0 0
      %2758 = vmatpush2.bf16.msra.mxu0 0
      %2759 = vmatprep.subr.bf16.mxu0 0
      %2760 = vmatpush2.bf16.msra.mxu0 0
      %2761 = vmatprep.mubr.bf16.mxu0 0
      %2762 = vmatmul.mubr.bf16.gmra.mxu0 %v2679
      %v2763 = vpop.f32.mrf.mxu0
      %v2764 = vadd.f32 %v2472, %v2763
      %v2765 = vpop.f32.mrf.mxu0
      %v2766 = vpop.f32.mrf.mxu0
      %v2767 = vadd.f32 %v2475, %v2766
      %v2768 = vpop.f32.mrf.mxu0
      %2769 = vmatprep.mubr.bf16.mxu0 0
      %2770 = vmatmul.mubr.bf16.gmra.mxu0 %v2682
      %v2771 = vpop.f32.mrf.mxu0
      %v2772 = vadd.f32 %v2480, %v2771
      %v2773 = vpop.f32.mrf.mxu0
      %v2774 = vpop.f32.mrf.mxu0
      %v2775 = vadd.f32 %v2483, %v2774
      %v2776 = vpop.f32.mrf.mxu0
      %2777 = vmatprep.mubr.bf16.mxu0 0
      %2778 = vmatmul.mubr.bf16.gmra.mxu0 %v2685
      %v2779 = vpop.f32.mrf.mxu0
      %v2780 = vadd.f32 %v2488, %v2779
      %v2781 = vpop.f32.mrf.mxu0
      %v2782 = vpop.f32.mrf.mxu0
      %v2783 = vadd.f32 %v2491, %v2782
      %v2784 = vpop.f32.mrf.mxu0
      %2785 = vmatprep.mubr.bf16.mxu0 0
      %2786 = vmatmul.mubr.bf16.gmra.mxu0 %v2688
      %v2787 = vpop.f32.mrf.mxu0
      %v2788 = vadd.f32 %v2496, %v2787
      %v2789 = vpop.f32.mrf.mxu0
      %v2790 = vpop.f32.mrf.mxu0
      %v2791 = vadd.f32 %v2499, %v2790
      %v2792 = vpop.f32.mrf.mxu0
      %2793 = vmatprep.mubr.bf16.mxu0 0
      %2794 = vmatmul.mubr.bf16.gmra.mxu0 %v2691
      %v2795 = vpop.f32.mrf.mxu0
      %v2796 = vadd.f32 %v2504, %v2795
      %v2797 = vpop.f32.mrf.mxu0
      %v2798 = vpop.f32.mrf.mxu0
      %v2799 = vadd.f32 %v2507, %v2798
      %v2800 = vpop.f32.mrf.mxu0
      %2801 = vmatprep.mubr.bf16.mxu0 0
      %2802 = vmatmul.mubr.bf16.gmra.mxu0 %v2694
      %v2803 = vpop.f32.mrf.mxu0
      %v2804 = vadd.f32 %v2512, %v2803
      %v2805 = vpop.f32.mrf.mxu0
      %v2806 = vpop.f32.mrf.mxu0
      %v2807 = vadd.f32 %v2515, %v2806
      %v2808 = vpop.f32.mrf.mxu0
      %2809 = vmatprep.mubr.bf16.mxu0 0
      %2810 = vmatmul.mubr.bf16.gmra.mxu0 %v2697
      %v2811 = vpop.f32.mrf.mxu0
      %v2812 = vadd.f32 %v2520, %v2811
      %v2813 = vpop.f32.mrf.mxu0
      %v2814 = vpop.f32.mrf.mxu0
      %v2815 = vadd.f32 %v2523, %v2814
      %v2816 = vpop.f32.mrf.mxu0
      %2817 = vmatprep.mubr.bf16.mxu0 0
      %2818 = vmatmul.mubr.bf16.gmra.mxu0 %v2700
      %v2819 = vpop.f32.mrf.mxu0
      %v2820 = vadd.f32 %v2528, %v2819
      %v2821 = vpop.f32.mrf.mxu0
      %v2822 = vpop.f32.mrf.mxu0
      %v2823 = vadd.f32 %v2531, %v2822
      %v2824 = vpop.f32.mrf.mxu0
      %2825 = vmatprep.mubr.bf16.mxu0 0
      %2826 = vmatmul.mubr.bf16.gmra.mxu0 %v2703
      %v2827 = vpop.f32.mrf.mxu0
      %v2828 = vadd.f32 %v2536, %v2827
      %v2829 = vpop.f32.mrf.mxu0
      %v2830 = vpop.f32.mrf.mxu0
      %v2831 = vadd.f32 %v2539, %v2830
      %v2832 = vpop.f32.mrf.mxu0
      %2833 = vmatprep.mubr.bf16.mxu0 0
      %2834 = vmatmul.mubr.bf16.gmra.mxu0 %v2706
      %v2835 = vpop.f32.mrf.mxu0
      %v2836 = vadd.f32 %v2544, %v2835
      %v2837 = vpop.f32.mrf.mxu0
      %v2838 = vpop.f32.mrf.mxu0
      %v2839 = vadd.f32 %v2547, %v2838
      %v2840 = vpop.f32.mrf.mxu0
      %2841 = vmatprep.mubr.bf16.mxu0 0
      %2842 = vmatmul.mubr.bf16.gmra.mxu0 %v2709
      %v2843 = vpop.f32.mrf.mxu0
      %v2844 = vadd.f32 %v2552, %v2843
      %v2845 = vpop.f32.mrf.mxu0
      %v2846 = vpop.f32.mrf.mxu0
      %v2847 = vadd.f32 %v2555, %v2846
      %v2848 = vpop.f32.mrf.mxu0
      %2849 = vmatprep.mubr.bf16.mxu0 0
      %2850 = vmatmul.mubr.bf16.gmra.mxu0 %v2712
      %v2851 = vpop.f32.mrf.mxu0
      %v2852 = vadd.f32 %v2560, %v2851
      %v2853 = vpop.f32.mrf.mxu0
      %v2854 = vpop.f32.mrf.mxu0
      %v2855 = vadd.f32 %v2563, %v2854
      %v2856 = vpop.f32.mrf.mxu0
      %2857 = vmatprep.mubr.bf16.mxu0 0
      %2858 = vmatmul.mubr.bf16.gmra.mxu0 %v2715
      %v2859 = vpop.f32.mrf.mxu0
      %v2860 = vadd.f32 %v2568, %v2859
      %v2861 = vpop.f32.mrf.mxu0
      %v2862 = vpop.f32.mrf.mxu0
      %v2863 = vadd.f32 %v2571, %v2862
      %v2864 = vpop.f32.mrf.mxu0
      %2865 = vmatprep.mubr.bf16.mxu0 0
      %2866 = vmatmul.mubr.bf16.gmra.mxu0 %v2718
      %v2867 = vpop.f32.mrf.mxu0
      %v2868 = vadd.f32 %v2576, %v2867
      %v2869 = vpop.f32.mrf.mxu0
      %v2870 = vpop.f32.mrf.mxu0
      %v2871 = vadd.f32 %v2579, %v2870
      %v2872 = vpop.f32.mrf.mxu0
      %2873 = vmatprep.mubr.bf16.mxu0 0
      %2874 = vmatmul.mubr.bf16.gmra.mxu0 %v2721
      %v2875 = vpop.f32.mrf.mxu0
      %v2876 = vadd.f32 %v2584, %v2875
      %v2877 = vpop.f32.mrf.mxu0
      %v2878 = vpop.f32.mrf.mxu0
      %v2879 = vadd.f32 %v2587, %v2878
      %v2880 = vpop.f32.mrf.mxu0
      %2881 = vmatprep.mubr.bf16.mxu0 0
      %2882 = vmatmul.mubr.bf16.gmra.mxu0 %v2724
      %v2883 = vpop.f32.mrf.mxu0
      %v2884 = vadd.f32 %v2592, %v2883
      %v2885 = vpop.f32.mrf.mxu0
      %v2886 = vpop.f32.mrf.mxu0
      %v2887 = vadd.f32 %v2595, %v2886
      %v2888 = vpop.f32.mrf.mxu0
      %2889 = vdwg.mxu0
      %v2890 = vld [vmem:[#allocation2] sm:$0xe]
      %v2891 = vld [vmem:[#allocation2 + $0xc] sm:$0xe]
      %v2892 = vld [vmem:[#allocation2 + $0x18] sm:$0xe]
      %v2893 = vld [vmem:[#allocation2 + $0x24] sm:$0xe]
      %v2894 = vld [vmem:[#allocation2 + $0x30] sm:$0xe]
      %v2895 = vld [vmem:[#allocation2 + $0x3c] sm:$0xe]
      %v2896 = vld [vmem:[#allocation2 + $0x48] sm:$0xe]
      %v2897 = vld [vmem:[#allocation2 + $0x54] sm:$0xe]
      %v2898 = vld [vmem:[#allocation2 + $0x60] sm:$0xe]
      %v2899 = vld [vmem:[#allocation2 + $0x6c] sm:$0xe]
      %v2900 = vld [vmem:[#allocation2 + $0x78] sm:$0xe]
      %v2901 = vld [vmem:[#allocation2 + $0x84] sm:$0xe]
      %v2902 = vld [vmem:[#allocation2 + $0x90] sm:$0xe]
      %v2903 = vld [vmem:[#allocation2 + $0x9c] sm:$0xe]
      %v2904 = vld [vmem:[#allocation2 + $0xa8] sm:$0xe]
      %v2905 = vld [vmem:[#allocation2 + $0xb4] sm:$0xe]
      %vm2938 = vcmask 1042432
      %vm2939 = vcmask 1046532
      %vm2940 = vmor %vm2938, %vm2939
      %v2941 = vrot.slane %v2890, 5
      %v2942 = vrot.slane %v2941, 4
      %v2943 = vrot.slane %v1899, 5
      %v2944 = vsel %vm2940, %v2942, %v2943
      %v2945 = vrot.slane %v2943, 4
      %v2946 = vrot.slane %v1931, 5
      %v2947 = vsel %vm2940, %v2945, %v2946
      %v2948 = vrot.slane %v2891, 5
      %v2949 = vrot.slane %v2948, 4
      %v2950 = vrot.slane %v1901, 5
      %v2951 = vsel %vm2940, %v2949, %v2950
      %v2952 = vrot.slane %v2950, 4
      %v2953 = vrot.slane %v1932, 5
      %v2954 = vsel %vm2940, %v2952, %v2953
      %v2955 = vrot.slane %v2892, 5
      %v2956 = vrot.slane %v2955, 4
      %v2957 = vrot.slane %v1903, 5
      %v2958 = vsel %vm2940, %v2956, %v2957
      %v2959 = vrot.slane %v2957, 4
      %v2960 = vrot.slane %v1933, 5
      %v2961 = vsel %vm2940, %v2959, %v2960
      %v2962 = vrot.slane %v2893, 5
      %v2963 = vrot.slane %v2962, 4
      %v2964 = vrot.slane %v1905, 5
      %v2965 = vsel %vm2940, %v2963, %v2964
      %v2966 = vrot.slane %v2964, 4
      %v2967 = vrot.slane %v1934, 5
      %v2968 = vsel %vm2940, %v2966, %v2967
      %v2969 = vrot.slane %v2894, 5
      %v2970 = vrot.slane %v2969, 4
      %v2971 = vrot.slane %v1907, 5
      %v2972 = vsel %vm2940, %v2970, %v2971
      %v2973 = vrot.slane %v2971, 4
      %v2974 = vrot.slane %v1935, 5
      %v2975 = vsel %vm2940, %v2973, %v2974
      %v2976 = vrot.slane %v2895, 5
      %v2977 = vrot.slane %v2976, 4
      %v2978 = vrot.slane %v1909, 5
      %v2979 = vsel %vm2940, %v2977, %v2978
      %v2980 = vrot.slane %v2978, 4
      %v2981 = vrot.slane %v1936, 5
      %v2982 = vsel %vm2940, %v2980, %v2981
      %v2983 = vrot.slane %v2896, 5
      %v2984 = vrot.slane %v2983, 4
      %v2985 = vrot.slane %v1911, 5
      %v2986 = vsel %vm2940, %v2984, %v2985
      %v2987 = vrot.slane %v2985, 4
      %v2988 = vrot.slane %v1937, 5
      %v2989 = vsel %vm2940, %v2987, %v2988
      %v2990 = vrot.slane %v2897, 5
      %v2991 = vrot.slane %v2990, 4
      %v2992 = vrot.slane %v1913, 5
      %v2993 = vsel %vm2940, %v2991, %v2992
      %v2994 = vrot.slane %v2992, 4
      %v2995 = vrot.slane %v1938, 5
      %v2996 = vsel %vm2940, %v2994, %v2995
      %v2997 = vrot.slane %v2898, 5
      %v2998 = vrot.slane %v2997, 4
      %v2999 = vrot.slane %v1915, 5
      %v3000 = vsel %vm2940, %v2998, %v2999
      %v3001 = vrot.slane %v2999, 4
      %v3002 = vrot.slane %v1939, 5
      %v3003 = vsel %vm2940, %v3001, %v3002
      %v3004 = vrot.slane %v2899, 5
      %v3005 = vrot.slane %v3004, 4
      %v3006 = vrot.slane %v1917, 5
      %v3007 = vsel %vm2940, %v3005, %v3006
      %v3008 = vrot.slane %v3006, 4
      %v3009 = vrot.slane %v1940, 5
      %v3010 = vsel %vm2940, %v3008, %v3009
      %v3011 = vrot.slane %v2900, 5
      %v3012 = vrot.slane %v3011, 4
      %v3013 = vrot.slane %v1919, 5
      %v3014 = vsel %vm2940, %v3012, %v3013
      %v3015 = vrot.slane %v3013, 4
      %v3016 = vrot.slane %v1941, 5
      %v3017 = vsel %vm2940, %v3015, %v3016
      %v3018 = vrot.slane %v2901, 5
      %v3019 = vrot.slane %v3018, 4
      %v3020 = vrot.slane %v1921, 5
      %v3021 = vsel %vm2940, %v3019, %v3020
      %v3022 = vrot.slane %v3020, 4
      %v3023 = vrot.slane %v1942, 5
      %v3024 = vsel %vm2940, %v3022, %v3023
      %v3025 = vrot.slane %v2902, 5
      %v3026 = vrot.slane %v3025, 4
      %v3027 = vrot.slane %v1923, 5
      %v3028 = vsel %vm2940, %v3026, %v3027
      %v3029 = vrot.slane %v3027, 4
      %v3030 = vrot.slane %v1943, 5
      %v3031 = vsel %vm2940, %v3029, %v3030
      %v3032 = vrot.slane %v2903, 5
      %v3033 = vrot.slane %v3032, 4
      %v3034 = vrot.slane %v1925, 5
      %v3035 = vsel %vm2940, %v3033, %v3034
      %v3036 = vrot.slane %v3034, 4
      %v3037 = vrot.slane %v1944, 5
      %v3038 = vsel %vm2940, %v3036, %v3037
      %v3039 = vrot.slane %v2904, 5
      %v3040 = vrot.slane %v3039, 4
      %v3041 = vrot.slane %v1927, 5
      %v3042 = vsel %vm2940, %v3040, %v3041
      %v3043 = vrot.slane %v3041, 4
      %v3044 = vrot.slane %v1945, 5
      %v3045 = vsel %vm2940, %v3043, %v3044
      %v3046 = vrot.slane %v2905, 5
      %v3047 = vrot.slane %v3046, 4
      %v3048 = vrot.slane %v1929, 5
      %v3049 = vsel %vm2940, %v3047, %v3048
      %v3050 = vrot.slane %v3048, 4
      %v3051 = vrot.slane %v1946, 5
      %v3052 = vsel %vm2940, %v3050, %v3051
      %s3053 = scalar_lea.vmem %s3, 8
      %v3054 = vld [vmem:[%s3053] sm:$0xf]
      %v3055 = vunpack.c.l.b16 %v2944
      %v3056 = vunpack.c.l.b16 %v2947
      %v3057 = vunpack.c.l.b16 %v2951
      %v3058 = vunpack.c.l.b16 %v2954
      %v3059 = vunpack.c.l.b16 %v2958
      %v3060 = vunpack.c.l.b16 %v2961
      %v3061 = vunpack.c.l.b16 %v2965
      %v3062 = vunpack.c.l.b16 %v2968
      %v3063 = vunpack.c.l.b16 %v2972
      %v3064 = vunpack.c.l.b16 %v2975
      %v3065 = vunpack.c.l.b16 %v2979
      %v3066 = vunpack.c.l.b16 %v2982
      %v3067 = vunpack.c.l.b16 %v2986
      %v3068 = vunpack.c.l.b16 %v2989
      %v3069 = vunpack.c.l.b16 %v2993
      %v3070 = vunpack.c.l.b16 %v2996
      %v3071 = vunpack.c.l.b16 %v3000
      %v3072 = vunpack.c.l.b16 %v3003
      %v3073 = vunpack.c.l.b16 %v3007
      %v3074 = vunpack.c.l.b16 %v3010
      %v3075 = vunpack.c.l.b16 %v3014
      %v3076 = vunpack.c.l.b16 %v3017
      %v3077 = vunpack.c.l.b16 %v3021
      %v3078 = vunpack.c.l.b16 %v3024
      %v3079 = vunpack.c.l.b16 %v3028
      %v3080 = vunpack.c.l.b16 %v3031
      %v3081 = vunpack.c.l.b16 %v3035
      %v3082 = vunpack.c.l.b16 %v3038
      %v3083 = vunpack.c.l.b16 %v3042
      %v3084 = vunpack.c.l.b16 %v3045
      %v3085 = vunpack.c.l.b16 %v3049
      %v3086 = vunpack.c.l.b16 %v3052
      %v3087 = vpack.c.b16 %v3056, %v3055
      %v3088 = vpack.c.b16 %v3058, %v3057
      %v3089 = vpack.c.b16 %v3060, %v3059
      %v3090 = vpack.c.b16 %v3062, %v3061
      %v3091 = vpack.c.b16 %v3064, %v3063
      %v3092 = vpack.c.b16 %v3066, %v3065
      %v3093 = vpack.c.b16 %v3068, %v3067
      %v3094 = vpack.c.b16 %v3070, %v3069
      %v3095 = vpack.c.b16 %v3072, %v3071
      %v3096 = vpack.c.b16 %v3074, %v3073
      %v3097 = vpack.c.b16 %v3076, %v3075
      %v3098 = vpack.c.b16 %v3078, %v3077
      %v3099 = vpack.c.b16 %v3080, %v3079
      %v3100 = vpack.c.b16 %v3082, %v3081
      %v3101 = vpack.c.b16 %v3084, %v3083
      %v3102 = vpack.c.b16 %v3086, %v3085
      %v3104 = vsel %vm2384, %v3087, 0
      %v3107 = vsel %vm2384, %v3088, 0
      %v3110 = vsel %vm2384, %v3089, 0
      %v3113 = vsel %vm2384, %v3090, 0
      %v3116 = vsel %vm2384, %v3091, 0
      %v3119 = vsel %vm2384, %v3092, 0
      %v3122 = vsel %vm2384, %v3093, 0
      %v3125 = vsel %vm2384, %v3094, 0
      %v3128 = vsel %vm2384, %v3095, 0
      %v3131 = vsel %vm2384, %v3096, 0
      %v3134 = vsel %vm2384, %v3097, 0
      %v3137 = vsel %vm2384, %v3098, 0
      %v3140 = vsel %vm2384, %v3099, 0
      %v3143 = vsel %vm2384, %v3100, 0
      %v3146 = vsel %vm2384, %v3101, 0
      %v3149 = vsel %vm2384, %v3102, 0
      %v3152 = vsel %vm2433, %v3054, 0
      %3154 = vmatprep.subr.bf16.mxu0 0
      %3155 = vmatpush1.bf16.msra.mxu0 0
      %3156 = vmatprep.subr.bf16.mxu0 0
      %3157 = vmatpush1.bf16.msra.mxu0 0
      %3158 = vmatprep.subr.bf16.mxu0 0
      %3159 = vmatpush1.bf16.msra.mxu0 0
      %3160 = vmatprep.subr.bf16.mxu0 0
      %3161 = vmatpush1.bf16.msra.mxu0 0
      %3162 = vmatprep.subr.bf16.mxu0 0
      %3163 = vmatpush1.bf16.msra.mxu0 0
      %3164 = vmatprep.subr.bf16.mxu0 0
      %3165 = vmatpush1.bf16.msra.mxu0 0
      %3166 = vmatprep.subr.bf16.mxu0 0
      %3167 = vmatpush1.bf16.msra.mxu0 0
      %3168 = vmatprep.subr.bf16.mxu0 0
      %3169 = vmatpush1.bf16.msra.mxu0 %v3152
      %3170 = vmatprep.subr.bf16.mxu0 0
      %3171 = vmatpush2.bf16.msra.mxu0 0
      %3172 = vmatprep.subr.bf16.mxu0 0
      %3173 = vmatpush2.bf16.msra.mxu0 0
      %3174 = vmatprep.subr.bf16.mxu0 0
      %3175 = vmatpush2.bf16.msra.mxu0 0
      %3176 = vmatprep.subr.bf16.mxu0 0
      %3177 = vmatpush2.bf16.msra.mxu0 0
      %3178 = vmatprep.subr.bf16.mxu0 0
      %3179 = vmatpush2.bf16.msra.mxu0 0
      %3180 = vmatprep.subr.bf16.mxu0 0
      %3181 = vmatpush2.bf16.msra.mxu0 0
      %3182 = vmatprep.subr.bf16.mxu0 0
      %3183 = vmatpush2.bf16.msra.mxu0 0
      %3184 = vmatprep.subr.bf16.mxu0 0
      %3185 = vmatpush2.bf16.msra.mxu0 0
      %3186 = vmatprep.mubr.bf16.mxu0 0
      %3187 = vmatmul.mubr.bf16.gmra.mxu0 %v3104
      %v3188 = vpop.f32.mrf.mxu0
      %v3189 = vadd.f32 0.0, %v3188
      %v3190 = vpop.f32.mrf.mxu0
      %v3191 = vpop.f32.mrf.mxu0
      %v3192 = vadd.f32 0.0, %v3191
      %v3193 = vpop.f32.mrf.mxu0
      %3194 = vmatprep.mubr.bf16.mxu0 0
      %3195 = vmatmul.mubr.bf16.gmra.mxu0 %v3107
      %v3196 = vpop.f32.mrf.mxu0
      %v3197 = vadd.f32 0.0, %v3196
      %v3198 = vpop.f32.mrf.mxu0
      %v3199 = vpop.f32.mrf.mxu0
      %v3200 = vadd.f32 0.0, %v3199
      %v3201 = vpop.f32.mrf.mxu0
      %3202 = vmatprep.mubr.bf16.mxu0 0
      %3203 = vmatmul.mubr.bf16.gmra.mxu0 %v3110
      %v3204 = vpop.f32.mrf.mxu0
      %v3205 = vadd.f32 0.0, %v3204
      %v3206 = vpop.f32.mrf.mxu0
      %v3207 = vpop.f32.mrf.mxu0
      %v3208 = vadd.f32 0.0, %v3207
      %v3209 = vpop.f32.mrf.mxu0
      %3210 = vmatprep.mubr.bf16.mxu0 0
      %3211 = vmatmul.mubr.bf16.gmra.mxu0 %v3113
      %v3212 = vpop.f32.mrf.mxu0
      %v3213 = vadd.f32 0.0, %v3212
      %v3214 = vpop.f32.mrf.mxu0
      %v3215 = vpop.f32.mrf.mxu0
      %v3216 = vadd.f32 0.0, %v3215
      %v3217 = vpop.f32.mrf.mxu0
      %3218 = vmatprep.mubr.bf16.mxu0 0
      %3219 = vmatmul.mubr.bf16.gmra.mxu0 %v3116
      %v3220 = vpop.f32.mrf.mxu0
      %v3221 = vadd.f32 0.0, %v3220
      %v3222 = vpop.f32.mrf.mxu0
      %v3223 = vpop.f32.mrf.mxu0
      %v3224 = vadd.f32 0.0, %v3223
      %v3225 = vpop.f32.mrf.mxu0
      %3226 = vmatprep.mubr.bf16.mxu0 0
      %3227 = vmatmul.mubr.bf16.gmra.mxu0 %v3119
      %v3228 = vpop.f32.mrf.mxu0
      %v3229 = vadd.f32 0.0, %v3228
      %v3230 = vpop.f32.mrf.mxu0
      %v3231 = vpop.f32.mrf.mxu0
      %v3232 = vadd.f32 0.0, %v3231
      %v3233 = vpop.f32.mrf.mxu0
      %3234 = vmatprep.mubr.bf16.mxu0 0
      %3235 = vmatmul.mubr.bf16.gmra.mxu0 %v3122
      %v3236 = vpop.f32.mrf.mxu0
      %v3237 = vadd.f32 0.0, %v3236
      %v3238 = vpop.f32.mrf.mxu0
      %v3239 = vpop.f32.mrf.mxu0
      %v3240 = vadd.f32 0.0, %v3239
      %v3241 = vpop.f32.mrf.mxu0
      %3242 = vmatprep.mubr.bf16.mxu0 0
      %3243 = vmatmul.mubr.bf16.gmra.mxu0 %v3125
      %v3244 = vpop.f32.mrf.mxu0
      %v3245 = vadd.f32 0.0, %v3244
      %v3246 = vpop.f32.mrf.mxu0
      %v3247 = vpop.f32.mrf.mxu0
      %v3248 = vadd.f32 0.0, %v3247
      %v3249 = vpop.f32.mrf.mxu0
      %3250 = vmatprep.mubr.bf16.mxu0 0
      %3251 = vmatmul.mubr.bf16.gmra.mxu0 %v3128
      %v3252 = vpop.f32.mrf.mxu0
      %v3253 = vadd.f32 0.0, %v3252
      %v3254 = vpop.f32.mrf.mxu0
      %v3255 = vpop.f32.mrf.mxu0
      %v3256 = vadd.f32 0.0, %v3255
      %v3257 = vpop.f32.mrf.mxu0
      %3258 = vmatprep.mubr.bf16.mxu0 0
      %3259 = vmatmul.mubr.bf16.gmra.mxu0 %v3131
      %v3260 = vpop.f32.mrf.mxu0
      %v3261 = vadd.f32 0.0, %v3260
      %v3262 = vpop.f32.mrf.mxu0
      %v3263 = vpop.f32.mrf.mxu0
      %v3264 = vadd.f32 0.0, %v3263
      %v3265 = vpop.f32.mrf.mxu0
      %3266 = vmatprep.mubr.bf16.mxu0 0
      %3267 = vmatmul.mubr.bf16.gmra.mxu0 %v3134
      %v3268 = vpop.f32.mrf.mxu0
      %v3269 = vadd.f32 0.0, %v3268
      %v3270 = vpop.f32.mrf.mxu0
      %v3271 = vpop.f32.mrf.mxu0
      %v3272 = vadd.f32 0.0, %v3271
      %v3273 = vpop.f32.mrf.mxu0
      %3274 = vmatprep.mubr.bf16.mxu0 0
      %3275 = vmatmul.mubr.bf16.gmra.mxu0 %v3137
      %v3276 = vpop.f32.mrf.mxu0
      %v3277 = vadd.f32 0.0, %v3276
      %v3278 = vpop.f32.mrf.mxu0
      %v3279 = vpop.f32.mrf.mxu0
      %v3280 = vadd.f32 0.0, %v3279
      %v3281 = vpop.f32.mrf.mxu0
      %3282 = vmatprep.mubr.bf16.mxu0 0
      %3283 = vmatmul.mubr.bf16.gmra.mxu0 %v3140
      %v3284 = vpop.f32.mrf.mxu0
      %v3285 = vadd.f32 0.0, %v3284
      %v3286 = vpop.f32.mrf.mxu0
      %v3287 = vpop.f32.mrf.mxu0
      %v3288 = vadd.f32 0.0, %v3287
      %v3289 = vpop.f32.mrf.mxu0
      %3290 = vmatprep.mubr.bf16.mxu0 0
      %3291 = vmatmul.mubr.bf16.gmra.mxu0 %v3143
      %v3292 = vpop.f32.mrf.mxu0
      %v3293 = vadd.f32 0.0, %v3292
      %v3294 = vpop.f32.mrf.mxu0
      %v3295 = vpop.f32.mrf.mxu0
      %v3296 = vadd.f32 0.0, %v3295
      %v3297 = vpop.f32.mrf.mxu0
      %3298 = vmatprep.mubr.bf16.mxu0 0
      %3299 = vmatmul.mubr.bf16.gmra.mxu0 %v3146
      %v3300 = vpop.f32.mrf.mxu0
      %v3301 = vadd.f32 0.0, %v3300
      %v3302 = vpop.f32.mrf.mxu0
      %v3303 = vpop.f32.mrf.mxu0
      %v3304 = vadd.f32 0.0, %v3303
      %v3305 = vpop.f32.mrf.mxu0
      %3306 = vmatprep.mubr.bf16.mxu0 0
      %3307 = vmatmul.mubr.bf16.gmra.mxu0 %v3149
      %v3308 = vpop.f32.mrf.mxu0
      %v3309 = vadd.f32 0.0, %v3308
      %v3310 = vpop.f32.mrf.mxu0
      %v3311 = vpop.f32.mrf.mxu0
      %v3312 = vadd.f32 0.0, %v3311
      %v3313 = vpop.f32.mrf.mxu0
      %3314 = vdwg.mxu0
      %v3315 = vadd.f32 %v2764, %v3189
      %v3316 = vadd.f32 %v2767, %v3192
      %v3317 = vadd.f32 %v2772, %v3197
      %v3318 = vadd.f32 %v2775, %v3200
      %v3319 = vadd.f32 %v2780, %v3205
      %v3320 = vadd.f32 %v2783, %v3208
      %v3321 = vadd.f32 %v2788, %v3213
      %v3322 = vadd.f32 %v2791, %v3216
      %v3323 = vadd.f32 %v2796, %v3221
      %v3324 = vadd.f32 %v2799, %v3224
      %v3325 = vadd.f32 %v2804, %v3229
      %v3326 = vadd.f32 %v2807, %v3232
      %v3327 = vadd.f32 %v2812, %v3237
      %v3328 = vadd.f32 %v2815, %v3240
      %v3329 = vadd.f32 %v2820, %v3245
      %v3330 = vadd.f32 %v2823, %v3248
      %v3331 = vadd.f32 %v2828, %v3253
      %v3332 = vadd.f32 %v2831, %v3256
      %v3333 = vadd.f32 %v2836, %v3261
      %v3334 = vadd.f32 %v2839, %v3264
      %v3335 = vadd.f32 %v2844, %v3269
      %v3336 = vadd.f32 %v2847, %v3272
      %v3337 = vadd.f32 %v2852, %v3277
      %v3338 = vadd.f32 %v2855, %v3280
      %v3339 = vadd.f32 %v2860, %v3285
      %v3340 = vadd.f32 %v2863, %v3288
      %v3341 = vadd.f32 %v2868, %v3293
      %v3342 = vadd.f32 %v2871, %v3296
      %v3343 = vadd.f32 %v2876, %v3301
      %v3344 = vadd.f32 %v2879, %v3304
      %v3345 = vadd.f32 %v2884, %v3309
      %v3346 = vadd.f32 %v2887, %v3312
      %v3347 = vld [vmem:[%s1783] sm:$0xf]
      %v3348 = vld [vmem:[%s1783 + $0x4] sm:$0xf]
      %v3349 = vld [vmem:[%s1783 + $0xc] sm:$0xf]
      %v3350 = vld [vmem:[%s1783 + $0x10] sm:$0xf]
      %v3351 = vld [vmem:[%s1783 + $0x18] sm:$0xf]
      %v3352 = vld [vmem:[%s1783 + $0x1c] sm:$0xf]
      %v3353 = vld [vmem:[%s1783 + $0x24] sm:$0xf]
      %v3354 = vld [vmem:[%s1783 + $0x28] sm:$0xf]
      %v3355 = vld [vmem:[%s1783 + $0x30] sm:$0xf]
      %v3356 = vld [vmem:[%s1783 + $0x34] sm:$0xf]
      %v3357 = vld [vmem:[%s1783 + $0x3c] sm:$0xf]
      %v3358 = vld [vmem:[%s1783 + $0x40] sm:$0xf]
      %v3359 = vld [vmem:[%s1783 + $0x48] sm:$0xf]
      %v3360 = vld [vmem:[%s1783 + $0x4c] sm:$0xf]
      %v3361 = vld [vmem:[%s1783 + $0x54] sm:$0xf]
      %v3362 = vld [vmem:[%s1783 + $0x58] sm:$0xf]
      %v3363 = vld [vmem:[%s1783 + $0x60] sm:$0xf]
      %v3364 = vld [vmem:[%s1783 + $0x64] sm:$0xf]
      %v3365 = vld [vmem:[%s1783 + $0x6c] sm:$0xf]
      %v3366 = vld [vmem:[%s1783 + $0x70] sm:$0xf]
      %v3367 = vld [vmem:[%s1783 + $0x78] sm:$0xf]
      %v3368 = vld [vmem:[%s1783 + $0x7c] sm:$0xf]
      %v3369 = vld [vmem:[%s1783 + $0x84] sm:$0xf]
      %v3370 = vld [vmem:[%s1783 + $0x88] sm:$0xf]
      %v3371 = vld [vmem:[%s1783 + $0x90] sm:$0xf]
      %v3372 = vld [vmem:[%s1783 + $0x94] sm:$0xf]
      %v3373 = vld [vmem:[%s1783 + $0x9c] sm:$0xf]
      %v3374 = vld [vmem:[%s1783 + $0xa0] sm:$0xf]
      %v3375 = vld [vmem:[%s1783 + $0xa8] sm:$0xf]
      %v3376 = vld [vmem:[%s1783 + $0xac] sm:$0xf]
      %v3377 = vld [vmem:[%s1783 + $0xb4] sm:$0xf]
      %v3378 = vld [vmem:[%s1783 + $0xb8] sm:$0xf]
      %s3379 = scalar_lea.vmem %s3, 12
      %v3380 = vld [vmem:[%s3379] sm:$0xf]
      %v3413 = vunpack.c.l.b16 %v3347
      %v3414 = vunpack.c.l.b16 %v3348
      %v3415 = vunpack.c.l.b16 %v3349
      %v3416 = vunpack.c.l.b16 %v3350
      %v3417 = vunpack.c.l.b16 %v3351
      %v3418 = vunpack.c.l.b16 %v3352
      %v3419 = vunpack.c.l.b16 %v3353
      %v3420 = vunpack.c.l.b16 %v3354
      %v3421 = vunpack.c.l.b16 %v3355
      %v3422 = vunpack.c.l.b16 %v3356
      %v3423 = vunpack.c.l.b16 %v3357
      %v3424 = vunpack.c.l.b16 %v3358
      %v3425 = vunpack.c.l.b16 %v3359
      %v3426 = vunpack.c.l.b16 %v3360
      %v3427 = vunpack.c.l.b16 %v3361
      %v3428 = vunpack.c.l.b16 %v3362
      %v3429 = vunpack.c.l.b16 %v3363
      %v3430 = vunpack.c.l.b16 %v3364
      %v3431 = vunpack.c.l.b16 %v3365
      %v3432 = vunpack.c.l.b16 %v3366
      %v3433 = vunpack.c.l.b16 %v3367
      %v3434 = vunpack.c.l.b16 %v3368
      %v3435 = vunpack.c.l.b16 %v3369
      %v3436 = vunpack.c.l.b16 %v3370
      %v3437 = vunpack.c.l.b16 %v3371
      %v3438 = vunpack.c.l.b16 %v3372
      %v3439 = vunpack.c.l.b16 %v3373
      %v3440 = vunpack.c.l.b16 %v3374
      %v3441 = vunpack.c.l.b16 %v3375
      %v3442 = vunpack.c.l.b16 %v3376
      %v3443 = vunpack.c.l.b16 %v3377
      %v3444 = vunpack.c.l.b16 %v3378
      %v3445 = vpack.c.b16 %v3414, %v3413
      %v3446 = vpack.c.b16 %v3416, %v3415
      %v3447 = vpack.c.b16 %v3418, %v3417
      %v3448 = vpack.c.b16 %v3420, %v3419
      %v3449 = vpack.c.b16 %v3422, %v3421
      %v3450 = vpack.c.b16 %v3424, %v3423
      %v3451 = vpack.c.b16 %v3426, %v3425
      %v3452 = vpack.c.b16 %v3428, %v3427
      %v3453 = vpack.c.b16 %v3430, %v3429
      %v3454 = vpack.c.b16 %v3432, %v3431
      %v3455 = vpack.c.b16 %v3434, %v3433
      %v3456 = vpack.c.b16 %v3436, %v3435
      %v3457 = vpack.c.b16 %v3438, %v3437
      %v3458 = vpack.c.b16 %v3440, %v3439
      %v3459 = vpack.c.b16 %v3442, %v3441
      %v3460 = vpack.c.b16 %v3444, %v3443
      %v3462 = vsel %vm2384, %v3445, 0
      %v3465 = vsel %vm2384, %v3446, 0
      %v3468 = vsel %vm2384, %v3447, 0
      %v3471 = vsel %vm2384, %v3448, 0
      %v3474 = vsel %vm2384, %v3449, 0
      %v3477 = vsel %vm2384, %v3450, 0
      %v3480 = vsel %vm2384, %v3451, 0
      %v3483 = vsel %vm2384, %v3452, 0
      %v3486 = vsel %vm2384, %v3453, 0
      %v3489 = vsel %vm2384, %v3454, 0
      %v3492 = vsel %vm2384, %v3455, 0
      %v3495 = vsel %vm2384, %v3456, 0
      %v3498 = vsel %vm2384, %v3457, 0
      %v3501 = vsel %vm2384, %v3458, 0
      %v3504 = vsel %vm2384, %v3459, 0
      %v3507 = vsel %vm2384, %v3460, 0
      %v3510 = vsel %vm2433, %v3380, 0
      %3512 = vmatprep.subr.bf16.mxu0 0
      %3513 = vmatpush1.bf16.msra.mxu0 0
      %3514 = vmatprep.subr.bf16.mxu0 0
      %3515 = vmatpush1.bf16.msra.mxu0 0
      %3516 = vmatprep.subr.bf16.mxu0 0
      %3517 = vmatpush1.bf16.msra.mxu0 0
      %3518 = vmatprep.subr.bf16.mxu0 0
      %3519 = vmatpush1.bf16.msra.mxu0 0
      %3520 = vmatprep.subr.bf16.mxu0 0
      %3521 = vmatpush1.bf16.msra.mxu0 0
      %3522 = vmatprep.subr.bf16.mxu0 0
      %3523 = vmatpush1.bf16.msra.mxu0 0
      %3524 = vmatprep.subr.bf16.mxu0 0
      %3525 = vmatpush1.bf16.msra.mxu0 0
      %3526 = vmatprep.subr.bf16.mxu0 0
      %3527 = vmatpush1.bf16.msra.mxu0 %v3510
      %3528 = vmatprep.subr.bf16.mxu0 0
      %3529 = vmatpush2.bf16.msra.mxu0 0
      %3530 = vmatprep.subr.bf16.mxu0 0
      %3531 = vmatpush2.bf16.msra.mxu0 0
      %3532 = vmatprep.subr.bf16.mxu0 0
      %3533 = vmatpush2.bf16.msra.mxu0 0
      %3534 = vmatprep.subr.bf16.mxu0 0
      %3535 = vmatpush2.bf16.msra.mxu0 0
      %3536 = vmatprep.subr.bf16.mxu0 0
      %3537 = vmatpush2.bf16.msra.mxu0 0
      %3538 = vmatprep.subr.bf16.mxu0 0
      %3539 = vmatpush2.bf16.msra.mxu0 0
      %3540 = vmatprep.subr.bf16.mxu0 0
      %3541 = vmatpush2.bf16.msra.mxu0 0
      %3542 = vmatprep.subr.bf16.mxu0 0
      %3543 = vmatpush2.bf16.msra.mxu0 0
      %3544 = vmatprep.mubr.bf16.mxu0 0
      %3545 = vmatmul.mubr.bf16.gmra.mxu0 %v3462
      %v3546 = vpop.f32.mrf.mxu0
      %v3547 = vadd.f32 0.0, %v3546
      %v3548 = vpop.f32.mrf.mxu0
      %v3549 = vpop.f32.mrf.mxu0
      %v3550 = vadd.f32 0.0, %v3549
      %v3551 = vpop.f32.mrf.mxu0
      %3552 = vmatprep.mubr.bf16.mxu0 0
      %3553 = vmatmul.mubr.bf16.gmra.mxu0 %v3465
      %v3554 = vpop.f32.mrf.mxu0
      %v3555 = vadd.f32 0.0, %v3554
      %v3556 = vpop.f32.mrf.mxu0
      %v3557 = vpop.f32.mrf.mxu0
      %v3558 = vadd.f32 0.0, %v3557
      %v3559 = vpop.f32.mrf.mxu0
      %3560 = vmatprep.mubr.bf16.mxu0 0
      %3561 = vmatmul.mubr.bf16.gmra.mxu0 %v3468
      %v3562 = vpop.f32.mrf.mxu0
      %v3563 = vadd.f32 0.0, %v3562
      %v3564 = vpop.f32.mrf.mxu0
      %v3565 = vpop.f32.mrf.mxu0
      %v3566 = vadd.f32 0.0, %v3565
      %v3567 = vpop.f32.mrf.mxu0
      %3568 = vmatprep.mubr.bf16.mxu0 0
      %3569 = vmatmul.mubr.bf16.gmra.mxu0 %v3471
      %v3570 = vpop.f32.mrf.mxu0
      %v3571 = vadd.f32 0.0, %v3570
      %v3572 = vpop.f32.mrf.mxu0
      %v3573 = vpop.f32.mrf.mxu0
      %v3574 = vadd.f32 0.0, %v3573
      %v3575 = vpop.f32.mrf.mxu0
      %3576 = vmatprep.mubr.bf16.mxu0 0
      %3577 = vmatmul.mubr.bf16.gmra.mxu0 %v3474
      %v3578 = vpop.f32.mrf.mxu0
      %v3579 = vadd.f32 0.0, %v3578
      %v3580 = vpop.f32.mrf.mxu0
      %v3581 = vpop.f32.mrf.mxu0
      %v3582 = vadd.f32 0.0, %v3581
      %v3583 = vpop.f32.mrf.mxu0
      %3584 = vmatprep.mubr.bf16.mxu0 0
      %3585 = vmatmul.mubr.bf16.gmra.mxu0 %v3477
      %v3586 = vpop.f32.mrf.mxu0
      %v3587 = vadd.f32 0.0, %v3586
      %v3588 = vpop.f32.mrf.mxu0
      %v3589 = vpop.f32.mrf.mxu0
      %v3590 = vadd.f32 0.0, %v3589
      %v3591 = vpop.f32.mrf.mxu0
      %3592 = vmatprep.mubr.bf16.mxu0 0
      %3593 = vmatmul.mubr.bf16.gmra.mxu0 %v3480
      %v3594 = vpop.f32.mrf.mxu0
      %v3595 = vadd.f32 0.0, %v3594
      %v3596 = vpop.f32.mrf.mxu0
      %v3597 = vpop.f32.mrf.mxu0
      %v3598 = vadd.f32 0.0, %v3597
      %v3599 = vpop.f32.mrf.mxu0
      %3600 = vmatprep.mubr.bf16.mxu0 0
      %3601 = vmatmul.mubr.bf16.gmra.mxu0 %v3483
      %v3602 = vpop.f32.mrf.mxu0
      %v3603 = vadd.f32 0.0, %v3602
      %v3604 = vpop.f32.mrf.mxu0
      %v3605 = vpop.f32.mrf.mxu0
      %v3606 = vadd.f32 0.0, %v3605
      %v3607 = vpop.f32.mrf.mxu0
      %3608 = vmatprep.mubr.bf16.mxu0 0
      %3609 = vmatmul.mubr.bf16.gmra.mxu0 %v3486
      %v3610 = vpop.f32.mrf.mxu0
      %v3611 = vadd.f32 0.0, %v3610
      %v3612 = vpop.f32.mrf.mxu0
      %v3613 = vpop.f32.mrf.mxu0
      %v3614 = vadd.f32 0.0, %v3613
      %v3615 = vpop.f32.mrf.mxu0
      %3616 = vmatprep.mubr.bf16.mxu0 0
      %3617 = vmatmul.mubr.bf16.gmra.mxu0 %v3489
      %v3618 = vpop.f32.mrf.mxu0
      %v3619 = vadd.f32 0.0, %v3618
      %v3620 = vpop.f32.mrf.mxu0
      %v3621 = vpop.f32.mrf.mxu0
      %v3622 = vadd.f32 0.0, %v3621
      %v3623 = vpop.f32.mrf.mxu0
      %3624 = vmatprep.mubr.bf16.mxu0 0
      %3625 = vmatmul.mubr.bf16.gmra.mxu0 %v3492
      %v3626 = vpop.f32.mrf.mxu0
      %v3627 = vadd.f32 0.0, %v3626
      %v3628 = vpop.f32.mrf.mxu0
      %v3629 = vpop.f32.mrf.mxu0
      %v3630 = vadd.f32 0.0, %v3629
      %v3631 = vpop.f32.mrf.mxu0
      %3632 = vmatprep.mubr.bf16.mxu0 0
      %3633 = vmatmul.mubr.bf16.gmra.mxu0 %v3495
      %v3634 = vpop.f32.mrf.mxu0
      %v3635 = vadd.f32 0.0, %v3634
      %v3636 = vpop.f32.mrf.mxu0
      %v3637 = vpop.f32.mrf.mxu0
      %v3638 = vadd.f32 0.0, %v3637
      %v3639 = vpop.f32.mrf.mxu0
      %3640 = vmatprep.mubr.bf16.mxu0 0
      %3641 = vmatmul.mubr.bf16.gmra.mxu0 %v3498
      %v3642 = vpop.f32.mrf.mxu0
      %v3643 = vadd.f32 0.0, %v3642
      %v3644 = vpop.f32.mrf.mxu0
      %v3645 = vpop.f32.mrf.mxu0
      %v3646 = vadd.f32 0.0, %v3645
      %v3647 = vpop.f32.mrf.mxu0
      %3648 = vmatprep.mubr.bf16.mxu0 0
      %3649 = vmatmul.mubr.bf16.gmra.mxu0 %v3501
      %v3650 = vpop.f32.mrf.mxu0
      %v3651 = vadd.f32 0.0, %v3650
      %v3652 = vpop.f32.mrf.mxu0
      %v3653 = vpop.f32.mrf.mxu0
      %v3654 = vadd.f32 0.0, %v3653
      %v3655 = vpop.f32.mrf.mxu0
      %3656 = vmatprep.mubr.bf16.mxu0 0
      %3657 = vmatmul.mubr.bf16.gmra.mxu0 %v3504
      %v3658 = vpop.f32.mrf.mxu0
      %v3659 = vadd.f32 0.0, %v3658
      %v3660 = vpop.f32.mrf.mxu0
      %v3661 = vpop.f32.mrf.mxu0
      %v3662 = vadd.f32 0.0, %v3661
      %v3663 = vpop.f32.mrf.mxu0
      %3664 = vmatprep.mubr.bf16.mxu0 0
      %3665 = vmatmul.mubr.bf16.gmra.mxu0 %v3507
      %v3666 = vpop.f32.mrf.mxu0
      %v3667 = vadd.f32 0.0, %v3666
      %v3668 = vpop.f32.mrf.mxu0
      %v3669 = vpop.f32.mrf.mxu0
      %v3670 = vadd.f32 0.0, %v3669
      %v3671 = vpop.f32.mrf.mxu0
      %3672 = vdwg.mxu0
      %v3673 = vadd.f32 %v3315, %v3547
      %v3674 = vadd.f32 %v3316, %v3550
      %v3675 = vadd.f32 %v3317, %v3555
      %v3676 = vadd.f32 %v3318, %v3558
      %v3677 = vadd.f32 %v3319, %v3563
      %v3678 = vadd.f32 %v3320, %v3566
      %v3679 = vadd.f32 %v3321, %v3571
      %v3680 = vadd.f32 %v3322, %v3574
      %v3681 = vadd.f32 %v3323, %v3579
      %v3682 = vadd.f32 %v3324, %v3582
      %v3683 = vadd.f32 %v3325, %v3587
      %v3684 = vadd.f32 %v3326, %v3590
      %v3685 = vadd.f32 %v3327, %v3595
      %v3686 = vadd.f32 %v3328, %v3598
      %v3687 = vadd.f32 %v3329, %v3603
      %v3688 = vadd.f32 %v3330, %v3606
      %v3689 = vadd.f32 %v3331, %v3611
      %v3690 = vadd.f32 %v3332, %v3614
      %v3691 = vadd.f32 %v3333, %v3619
      %v3692 = vadd.f32 %v3334, %v3622
      %v3693 = vadd.f32 %v3335, %v3627
      %v3694 = vadd.f32 %v3336, %v3630
      %v3695 = vadd.f32 %v3337, %v3635
      %v3696 = vadd.f32 %v3338, %v3638
      %v3697 = vadd.f32 %v3339, %v3643
      %v3698 = vadd.f32 %v3340, %v3646
      %v3699 = vadd.f32 %v3341, %v3651
      %v3700 = vadd.f32 %v3342, %v3654
      %v3701 = vadd.f32 %v3343, %v3659
      %v3702 = vadd.f32 %v3344, %v3662
      %v3703 = vadd.f32 %v3345, %v3667
      %v3704 = vadd.f32 %v3346, %v3670
      %v3705 = vld [vmem:[%s1783] sm:$0xf]
      %v3706 = vld [vmem:[%s1783 + $0x4] sm:$0xf]
      %v3707 = vld [vmem:[%s1783 + $0x8] sm:$0x1]
      %v3708 = vld [vmem:[%s1783 + $0xc] sm:$0xf]
      %v3709 = vld [vmem:[%s1783 + $0x10] sm:$0xf]
      %v3710 = vld [vmem:[%s1783 + $0x14] sm:$0x1]
      %v3711 = vld [vmem:[%s1783 + $0x18] sm:$0xf]
      %v3712 = vld [vmem:[%s1783 + $0x1c] sm:$0xf]
      %v3713 = vld [vmem:[%s1783 + $0x20] sm:$0x1]
      %v3714 = vld [vmem:[%s1783 + $0x24] sm:$0xf]
      %v3715 = vld [vmem:[%s1783 + $0x28] sm:$0xf]
      %v3716 = vld [vmem:[%s1783 + $0x2c] sm:$0x1]
      %v3717 = vld [vmem:[%s1783 + $0x30] sm:$0xf]
      %v3718 = vld [vmem:[%s1783 + $0x34] sm:$0xf]
      %v3719 = vld [vmem:[%s1783 + $0x38] sm:$0x1]
      %v3720 = vld [vmem:[%s1783 + $0x3c] sm:$0xf]
      %v3721 = vld [vmem:[%s1783 + $0x40] sm:$0xf]
      %v3722 = vld [vmem:[%s1783 + $0x44] sm:$0x1]
      %v3723 = vld [vmem:[%s1783 + $0x48] sm:$0xf]
      %v3724 = vld [vmem:[%s1783 + $0x4c] sm:$0xf]
      %v3725 = vld [vmem:[%s1783 + $0x50] sm:$0x1]
      %v3726 = vld [vmem:[%s1783 + $0x54] sm:$0xf]
      %v3727 = vld [vmem:[%s1783 + $0x58] sm:$0xf]
      %v3728 = vld [vmem:[%s1783 + $0x5c] sm:$0x1]
      %v3729 = vld [vmem:[%s1783 + $0x60] sm:$0xf]
      %v3730 = vld [vmem:[%s1783 + $0x64] sm:$0xf]
      %v3731 = vld [vmem:[%s1783 + $0x68] sm:$0x1]
      %v3732 = vld [vmem:[%s1783 + $0x6c] sm:$0xf]
      %v3733 = vld [vmem:[%s1783 + $0x70] sm:$0xf]
      %v3734 = vld [vmem:[%s1783 + $0x74] sm:$0x1]
      %v3735 = vld [vmem:[%s1783 + $0x78] sm:$0xf]
      %v3736 = vld [vmem:[%s1783 + $0x7c] sm:$0xf]
      %v3737 = vld [vmem:[%s1783 + $0x80] sm:$0x1]
      %v3738 = vld [vmem:[%s1783 + $0x84] sm:$0xf]
      %v3739 = vld [vmem:[%s1783 + $0x88] sm:$0xf]
      %v3740 = vld [vmem:[%s1783 + $0x8c] sm:$0x1]
      %v3741 = vld [vmem:[%s1783 + $0x90] sm:$0xf]
      %v3742 = vld [vmem:[%s1783 + $0x94] sm:$0xf]
      %v3743 = vld [vmem:[%s1783 + $0x98] sm:$0x1]
      %v3744 = vld [vmem:[%s1783 + $0x9c] sm:$0xf]
      %v3745 = vld [vmem:[%s1783 + $0xa0] sm:$0xf]
      %v3746 = vld [vmem:[%s1783 + $0xa4] sm:$0x1]
      %v3747 = vld [vmem:[%s1783 + $0xa8] sm:$0xf]
      %v3748 = vld [vmem:[%s1783 + $0xac] sm:$0xf]
      %v3749 = vld [vmem:[%s1783 + $0xb0] sm:$0x1]
      %v3750 = vld [vmem:[%s1783 + $0xb4] sm:$0xf]
      %v3751 = vld [vmem:[%s1783 + $0xb8] sm:$0xf]
      %v3752 = vld [vmem:[%s1783 + $0xbc] sm:$0x1]
      %v3754 = vshrl.u32 %v3705, 16
      %v3756 = vrot.slane %v3754, 4
      %v3757 = vshll.u32 %v3705, 16
      %v3759 = vrot.slane %v3757, 5
      %v3760 = vor.u32 %v3756, %v3759
      %v3761 = vrot.slane %v3760, 4
      %v3763 = vshll.u32 %v3706, 16
      %v3765 = vrot.slane %v3763, 5
      %v3766 = vsel %vm1949, %v3761, %v3765
      %v3767 = vshrl.u32 %v3706, 16
      %v3769 = vrot.slane %v3767, 4
      %v3770 = vor.u32 %v3769, %v3765
      %v3771 = vrot.slane %v3770, 4
      %v3773 = vshll.u32 %v3707, 16
      %v3775 = vrot.slane %v3773, 5
      %v3776 = vsel %vm1949, %v3771, %v3775
      %v3778 = vshrl.u32 %v3708, 16
      %v3780 = vrot.slane %v3778, 4
      %v3781 = vshll.u32 %v3708, 16
      %v3783 = vrot.slane %v3781, 5
      %v3784 = vor.u32 %v3780, %v3783
      %v3785 = vrot.slane %v3784, 4
      %v3787 = vshll.u32 %v3709, 16
      %v3789 = vrot.slane %v3787, 5
      %v3790 = vsel %vm1949, %v3785, %v3789
      %v3791 = vshrl.u32 %v3709, 16
      %v3793 = vrot.slane %v3791, 4
      %v3794 = vor.u32 %v3793, %v3789
      %v3795 = vrot.slane %v3794, 4
      %v3797 = vshll.u32 %v3710, 16
      %v3799 = vrot.slane %v3797, 5
      %v3800 = vsel %vm1949, %v3795, %v3799
      %v3802 = vshrl.u32 %v3711, 16
      %v3804 = vrot.slane %v3802, 4
      %v3805 = vshll.u32 %v3711, 16
      %v3807 = vrot.slane %v3805, 5
      %v3808 = vor.u32 %v3804, %v3807
      %v3809 = vrot.slane %v3808, 4
      %v3811 = vshll.u32 %v3712, 16
      %v3813 = vrot.slane %v3811, 5
      %v3814 = vsel %vm1949, %v3809, %v3813
      %v3815 = vshrl.u32 %v3712, 16
      %v3817 = vrot.slane %v3815, 4
      %v3818 = vor.u32 %v3817, %v3813
      %v3819 = vrot.slane %v3818, 4
      %v3821 = vshll.u32 %v3713, 16
      %v3823 = vrot.slane %v3821, 5
      %v3824 = vsel %vm1949, %v3819, %v3823
      %v3826 = vshrl.u32 %v3714, 16
      %v3828 = vrot.slane %v3826, 4
      %v3829 = vshll.u32 %v3714, 16
      %v3831 = vrot.slane %v3829, 5
      %v3832 = vor.u32 %v3828, %v3831
      %v3833 = vrot.slane %v3832, 4
      %v3835 = vshll.u32 %v3715, 16
      %v3837 = vrot.slane %v3835, 5
      %v3838 = vsel %vm1949, %v3833, %v3837
      %v3839 = vshrl.u32 %v3715, 16
      %v3841 = vrot.slane %v3839, 4
      %v3842 = vor.u32 %v3841, %v3837
      %v3843 = vrot.slane %v3842, 4
      %v3845 = vshll.u32 %v3716, 16
      %v3847 = vrot.slane %v3845, 5
      %v3848 = vsel %vm1949, %v3843, %v3847
      %v3850 = vshrl.u32 %v3717, 16
      %v3852 = vrot.slane %v3850, 4
      %v3853 = vshll.u32 %v3717, 16
      %v3855 = vrot.slane %v3853, 5
      %v3856 = vor.u32 %v3852, %v3855
      %v3857 = vrot.slane %v3856, 4
      %v3859 = vshll.u32 %v3718, 16
      %v3861 = vrot.slane %v3859, 5
      %v3862 = vsel %vm1949, %v3857, %v3861
      %v3863 = vshrl.u32 %v3718, 16
      %v3865 = vrot.slane %v3863, 4
      %v3866 = vor.u32 %v3865, %v3861
      %v3867 = vrot.slane %v3866, 4
      %v3869 = vshll.u32 %v3719, 16
      %v3871 = vrot.slane %v3869, 5
      %v3872 = vsel %vm1949, %v3867, %v3871
      %v3874 = vshrl.u32 %v3720, 16
      %v3876 = vrot.slane %v3874, 4
      %v3877 = vshll.u32 %v3720, 16
      %v3879 = vrot.slane %v3877, 5
      %v3880 = vor.u32 %v3876, %v3879
      %v3881 = vrot.slane %v3880, 4
      %v3883 = vshll.u32 %v3721, 16
      %v3885 = vrot.slane %v3883, 5
      %v3886 = vsel %vm1949, %v3881, %v3885
      %v3887 = vshrl.u32 %v3721, 16
      %v3889 = vrot.slane %v3887, 4
      %v3890 = vor.u32 %v3889, %v3885
      %v3891 = vrot.slane %v3890, 4
      %v3893 = vshll.u32 %v3722, 16
      %v3895 = vrot.slane %v3893, 5
      %v3896 = vsel %vm1949, %v3891, %v3895
      %v3898 = vshrl.u32 %v3723, 16
      %v3900 = vrot.slane %v3898, 4
      %v3901 = vshll.u32 %v3723, 16
      %v3903 = vrot.slane %v3901, 5
      %v3904 = vor.u32 %v3900, %v3903
      %v3905 = vrot.slane %v3904, 4
      %v3907 = vshll.u32 %v3724, 16
      %v3909 = vrot.slane %v3907, 5
      %v3910 = vsel %vm1949, %v3905, %v3909
      %v3911 = vshrl.u32 %v3724, 16
      %v3913 = vrot.slane %v3911, 4
      %v3914 = vor.u32 %v3913, %v3909
      %v3915 = vrot.slane %v3914, 4
      %v3917 = vshll.u32 %v3725, 16
      %v3919 = vrot.slane %v3917, 5
      %v3920 = vsel %vm1949, %v3915, %v3919
      %v3922 = vshrl.u32 %v3726, 16
      %v3924 = vrot.slane %v3922, 4
      %v3925 = vshll.u32 %v3726, 16
      %v3927 = vrot.slane %v3925, 5
      %v3928 = vor.u32 %v3924, %v3927
      %v3929 = vrot.slane %v3928, 4
      %v3931 = vshll.u32 %v3727, 16
      %v3933 = vrot.slane %v3931, 5
      %v3934 = vsel %vm1949, %v3929, %v3933
      %v3935 = vshrl.u32 %v3727, 16
      %v3937 = vrot.slane %v3935, 4
      %v3938 = vor.u32 %v3937, %v3933
      %v3939 = vrot.slane %v3938, 4
      %v3941 = vshll.u32 %v3728, 16
      %v3943 = vrot.slane %v3941, 5
      %v3944 = vsel %vm1949, %v3939, %v3943
      %v3946 = vshrl.u32 %v3729, 16
      %v3948 = vrot.slane %v3946, 4
      %v3949 = vshll.u32 %v3729, 16
      %v3951 = vrot.slane %v3949, 5
      %v3952 = vor.u32 %v3948, %v3951
      %v3953 = vrot.slane %v3952, 4
      %v3955 = vshll.u32 %v3730, 16
      %v3957 = vrot.slane %v3955, 5
      %v3958 = vsel %vm1949, %v3953, %v3957
      %v3959 = vshrl.u32 %v3730, 16
      %v3961 = vrot.slane %v3959, 4
      %v3962 = vor.u32 %v3961, %v3957
      %v3963 = vrot.slane %v3962, 4
      %v3965 = vshll.u32 %v3731, 16
      %v3967 = vrot.slane %v3965, 5
      %v3968 = vsel %vm1949, %v3963, %v3967
      %v3970 = vshrl.u32 %v3732, 16
      %v3972 = vrot.slane %v3970, 4
      %v3973 = vshll.u32 %v3732, 16
      %v3975 = vrot.slane %v3973, 5
      %v3976 = vor.u32 %v3972, %v3975
      %v3977 = vrot.slane %v3976, 4
      %v3979 = vshll.u32 %v3733, 16
      %v3981 = vrot.slane %v3979, 5
      %v3982 = vsel %vm1949, %v3977, %v3981
      %v3983 = vshrl.u32 %v3733, 16
      %v3985 = vrot.slane %v3983, 4
      %v3986 = vor.u32 %v3985, %v3981
      %v3987 = vrot.slane %v3986, 4
      %v3989 = vshll.u32 %v3734, 16
      %v3991 = vrot.slane %v3989, 5
      %v3992 = vsel %vm1949, %v3987, %v3991
      %v3994 = vshrl.u32 %v3735, 16
      %v3996 = vrot.slane %v3994, 4
      %v3997 = vshll.u32 %v3735, 16
      %v3999 = vrot.slane %v3997, 5
      %v4000 = vor.u32 %v3996, %v3999
      %v4001 = vrot.slane %v4000, 4
      %v4003 = vshll.u32 %v3736, 16
      %v4005 = vrot.slane %v4003, 5
      %v4006 = vsel %vm1949, %v4001, %v4005
      %v4007 = vshrl.u32 %v3736, 16
      %v4009 = vrot.slane %v4007, 4
      %v4010 = vor.u32 %v4009, %v4005
      %v4011 = vrot.slane %v4010, 4
      %v4013 = vshll.u32 %v3737, 16
      %v4015 = vrot.slane %v4013, 5
      %v4016 = vsel %vm1949, %v4011, %v4015
      %v4018 = vshrl.u32 %v3738, 16
      %v4020 = vrot.slane %v4018, 4
      %v4021 = vshll.u32 %v3738, 16
      %v4023 = vrot.slane %v4021, 5
      %v4024 = vor.u32 %v4020, %v4023
      %v4025 = vrot.slane %v4024, 4
      %v4027 = vshll.u32 %v3739, 16
      %v4029 = vrot.slane %v4027, 5
      %v4030 = vsel %vm1949, %v4025, %v4029
      %v4031 = vshrl.u32 %v3739, 16
      %v4033 = vrot.slane %v4031, 4
      %v4034 = vor.u32 %v4033, %v4029
      %v4035 = vrot.slane %v4034, 4
      %v4037 = vshll.u32 %v3740, 16
      %v4039 = vrot.slane %v4037, 5
      %v4040 = vsel %vm1949, %v4035, %v4039
      %v4042 = vshrl.u32 %v3741, 16
      %v4044 = vrot.slane %v4042, 4
      %v4045 = vshll.u32 %v3741, 16
      %v4047 = vrot.slane %v4045, 5
      %v4048 = vor.u32 %v4044, %v4047
      %v4049 = vrot.slane %v4048, 4
      %v4051 = vshll.u32 %v3742, 16
      %v4053 = vrot.slane %v4051, 5
      %v4054 = vsel %vm1949, %v4049, %v4053
      %v4055 = vshrl.u32 %v3742, 16
      %v4057 = vrot.slane %v4055, 4
      %v4058 = vor.u32 %v4057, %v4053
      %v4059 = vrot.slane %v4058, 4
      %v4061 = vshll.u32 %v3743, 16
      %v4063 = vrot.slane %v4061, 5
      %v4064 = vsel %vm1949, %v4059, %v4063
      %v4066 = vshrl.u32 %v3744, 16
      %v4068 = vrot.slane %v4066, 4
      %v4069 = vshll.u32 %v3744, 16
      %v4071 = vrot.slane %v4069, 5
      %v4072 = vor.u32 %v4068, %v4071
      %v4073 = vrot.slane %v4072, 4
      %v4075 = vshll.u32 %v3745, 16
      %v4077 = vrot.slane %v4075, 5
      %v4078 = vsel %vm1949, %v4073, %v4077
      %v4079 = vshrl.u32 %v3745, 16
      %v4081 = vrot.slane %v4079, 4
      %v4082 = vor.u32 %v4081, %v4077
      %v4083 = vrot.slane %v4082, 4
      %v4085 = vshll.u32 %v3746, 16
      %v4087 = vrot.slane %v4085, 5
      %v4088 = vsel %vm1949, %v4083, %v4087
      %v4090 = vshrl.u32 %v3747, 16
      %v4092 = vrot.slane %v4090, 4
      %v4093 = vshll.u32 %v3747, 16
      %v4095 = vrot.slane %v4093, 5
      %v4096 = vor.u32 %v4092, %v4095
      %v4097 = vrot.slane %v4096, 4
      %v4099 = vshll.u32 %v3748, 16
      %v4101 = vrot.slane %v4099, 5
      %v4102 = vsel %vm1949, %v4097, %v4101
      %v4103 = vshrl.u32 %v3748, 16
      %v4105 = vrot.slane %v4103, 4
      %v4106 = vor.u32 %v4105, %v4101
      %v4107 = vrot.slane %v4106, 4
      %v4109 = vshll.u32 %v3749, 16
      %v4111 = vrot.slane %v4109, 5
      %v4112 = vsel %vm1949, %v4107, %v4111
      %v4114 = vshrl.u32 %v3750, 16
      %v4116 = vrot.slane %v4114, 4
      %v4117 = vshll.u32 %v3750, 16
      %v4119 = vrot.slane %v4117, 5
      %v4120 = vor.u32 %v4116, %v4119
      %v4121 = vrot.slane %v4120, 4
      %v4123 = vshll.u32 %v3751, 16
      %v4125 = vrot.slane %v4123, 5
      %v4126 = vsel %vm1949, %v4121, %v4125
      %v4127 = vshrl.u32 %v3751, 16
      %v4129 = vrot.slane %v4127, 4
      %v4130 = vor.u32 %v4129, %v4125
      %v4131 = vrot.slane %v4130, 4
      %v4133 = vshll.u32 %v3752, 16
      %v4135 = vrot.slane %v4133, 5
      %v4136 = vsel %vm1949, %v4131, %v4135
      %s4137 = scalar_lea.vmem %s3, 16
      %v4138 = vld [vmem:[%s4137] sm:$0xf]
      %v4139 = vunpack.c.l.b16 %v3766
      %v4140 = vunpack.c.l.b16 %v3776
      %v4141 = vunpack.c.l.b16 %v3790
      %v4142 = vunpack.c.l.b16 %v3800
      %v4143 = vunpack.c.l.b16 %v3814
      %v4144 = vunpack.c.l.b16 %v3824
      %v4145 = vunpack.c.l.b16 %v3838
      %v4146 = vunpack.c.l.b16 %v3848
      %v4147 = vunpack.c.l.b16 %v3862
      %v4148 = vunpack.c.l.b16 %v3872
      %v4149 = vunpack.c.l.b16 %v3886
      %v4150 = vunpack.c.l.b16 %v3896
      %v4151 = vunpack.c.l.b16 %v3910
      %v4152 = vunpack.c.l.b16 %v3920
      %v4153 = vunpack.c.l.b16 %v3934
      %v4154 = vunpack.c.l.b16 %v3944
      %v4155 = vunpack.c.l.b16 %v3958
      %v4156 = vunpack.c.l.b16 %v3968
      %v4157 = vunpack.c.l.b16 %v3982
      %v4158 = vunpack.c.l.b16 %v3992
      %v4159 = vunpack.c.l.b16 %v4006
      %v4160 = vunpack.c.l.b16 %v4016
      %v4161 = vunpack.c.l.b16 %v4030
      %v4162 = vunpack.c.l.b16 %v4040
      %v4163 = vunpack.c.l.b16 %v4054
      %v4164 = vunpack.c.l.b16 %v4064
      %v4165 = vunpack.c.l.b16 %v4078
      %v4166 = vunpack.c.l.b16 %v4088
      %v4167 = vunpack.c.l.b16 %v4102
      %v4168 = vunpack.c.l.b16 %v4112
      %v4169 = vunpack.c.l.b16 %v4126
      %v4170 = vunpack.c.l.b16 %v4136
      %v4171 = vpack.c.b16 %v4140, %v4139
      %v4172 = vpack.c.b16 %v4142, %v4141
      %v4173 = vpack.c.b16 %v4144, %v4143
      %v4174 = vpack.c.b16 %v4146, %v4145
      %v4175 = vpack.c.b16 %v4148, %v4147
      %v4176 = vpack.c.b16 %v4150, %v4149
      %v4177 = vpack.c.b16 %v4152, %v4151
      %v4178 = vpack.c.b16 %v4154, %v4153
      %v4179 = vpack.c.b16 %v4156, %v4155
      %v4180 = vpack.c.b16 %v4158, %v4157
      %v4181 = vpack.c.b16 %v4160, %v4159
      %v4182 = vpack.c.b16 %v4162, %v4161
      %v4183 = vpack.c.b16 %v4164, %v4163
      %v4184 = vpack.c.b16 %v4166, %v4165
      %v4185 = vpack.c.b16 %v4168, %v4167
      %v4186 = vpack.c.b16 %v4170, %v4169
      %v4188 = vsel %vm2384, %v4171, 0
      %v4191 = vsel %vm2384, %v4172, 0
      %v4194 = vsel %vm2384, %v4173, 0
      %v4197 = vsel %vm2384, %v4174, 0
      %v4200 = vsel %vm2384, %v4175, 0
      %v4203 = vsel %vm2384, %v4176, 0
      %v4206 = vsel %vm2384, %v4177, 0
      %v4209 = vsel %vm2384, %v4178, 0
      %v4212 = vsel %vm2384, %v4179, 0
      %v4215 = vsel %vm2384, %v4180, 0
      %v4218 = vsel %vm2384, %v4181, 0
      %v4221 = vsel %vm2384, %v4182, 0
      %v4224 = vsel %vm2384, %v4183, 0
      %v4227 = vsel %vm2384, %v4184, 0
      %v4230 = vsel %vm2384, %v4185, 0
      %v4233 = vsel %vm2384, %v4186, 0
      %v4236 = vsel %vm2433, %v4138, 0
      %4238 = vmatprep.subr.bf16.mxu0 0
      %4239 = vmatpush1.bf16.msra.mxu0 0
      %4240 = vmatprep.subr.bf16.mxu0 0
      %4241 = vmatpush1.bf16.msra.mxu0 0
      %4242 = vmatprep.subr.bf16.mxu0 0
      %4243 = vmatpush1.bf16.msra.mxu0 0
      %4244 = vmatprep.subr.bf16.mxu0 0
      %4245 = vmatpush1.bf16.msra.mxu0 0
      %4246 = vmatprep.subr.bf16.mxu0 0
      %4247 = vmatpush1.bf16.msra.mxu0 0
      %4248 = vmatprep.subr.bf16.mxu0 0
      %4249 = vmatpush1.bf16.msra.mxu0 0
      %4250 = vmatprep.subr.bf16.mxu0 0
      %4251 = vmatpush1.bf16.msra.mxu0 0
      %4252 = vmatprep.subr.bf16.mxu0 0
      %4253 = vmatpush1.bf16.msra.mxu0 %v4236
      %4254 = vmatprep.subr.bf16.mxu0 0
      %4255 = vmatpush2.bf16.msra.mxu0 0
      %4256 = vmatprep.subr.bf16.mxu0 0
      %4257 = vmatpush2.bf16.msra.mxu0 0
      %4258 = vmatprep.subr.bf16.mxu0 0
      %4259 = vmatpush2.bf16.msra.mxu0 0
      %4260 = vmatprep.subr.bf16.mxu0 0
      %4261 = vmatpush2.bf16.msra.mxu0 0
      %4262 = vmatprep.subr.bf16.mxu0 0
      %4263 = vmatpush2.bf16.msra.mxu0 0
      %4264 = vmatprep.subr.bf16.mxu0 0
      %4265 = vmatpush2.bf16.msra.mxu0 0
      %4266 = vmatprep.subr.bf16.mxu0 0
      %4267 = vmatpush2.bf16.msra.mxu0 0
      %4268 = vmatprep.subr.bf16.mxu0 0
      %4269 = vmatpush2.bf16.msra.mxu0 0
      %4270 = vmatprep.mubr.bf16.mxu0 0
      %4271 = vmatmul.mubr.bf16.gmra.mxu0 %v4188
      %v4272 = vpop.f32.mrf.mxu0
      %v4273 = vadd.f32 0.0, %v4272
      %v4274 = vpop.f32.mrf.mxu0
      %v4275 = vpop.f32.mrf.mxu0
      %v4276 = vadd.f32 0.0, %v4275
      %v4277 = vpop.f32.mrf.mxu0
      %4278 = vmatprep.mubr.bf16.mxu0 0
      %4279 = vmatmul.mubr.bf16.gmra.mxu0 %v4191
      %v4280 = vpop.f32.mrf.mxu0
      %v4281 = vadd.f32 0.0, %v4280
      %v4282 = vpop.f32.mrf.mxu0
      %v4283 = vpop.f32.mrf.mxu0
      %v4284 = vadd.f32 0.0, %v4283
      %v4285 = vpop.f32.mrf.mxu0
      %4286 = vmatprep.mubr.bf16.mxu0 0
      %4287 = vmatmul.mubr.bf16.gmra.mxu0 %v4194
      %v4288 = vpop.f32.mrf.mxu0
      %v4289 = vadd.f32 0.0, %v4288
      %v4290 = vpop.f32.mrf.mxu0
      %v4291 = vpop.f32.mrf.mxu0
      %v4292 = vadd.f32 0.0, %v4291
      %v4293 = vpop.f32.mrf.mxu0
      %4294 = vmatprep.mubr.bf16.mxu0 0
      %4295 = vmatmul.mubr.bf16.gmra.mxu0 %v4197
      %v4296 = vpop.f32.mrf.mxu0
      %v4297 = vadd.f32 0.0, %v4296
      %v4298 = vpop.f32.mrf.mxu0
      %v4299 = vpop.f32.mrf.mxu0
      %v4300 = vadd.f32 0.0, %v4299
      %v4301 = vpop.f32.mrf.mxu0
      %4302 = vmatprep.mubr.bf16.mxu0 0
      %4303 = vmatmul.mubr.bf16.gmra.mxu0 %v4200
      %v4304 = vpop.f32.mrf.mxu0
      %v4305 = vadd.f32 0.0, %v4304
      %v4306 = vpop.f32.mrf.mxu0
      %v4307 = vpop.f32.mrf.mxu0
      %v4308 = vadd.f32 0.0, %v4307
      %v4309 = vpop.f32.mrf.mxu0
      %4310 = vmatprep.mubr.bf16.mxu0 0
      %4311 = vmatmul.mubr.bf16.gmra.mxu0 %v4203
      %v4312 = vpop.f32.mrf.mxu0
      %v4313 = vadd.f32 0.0, %v4312
      %v4314 = vpop.f32.mrf.mxu0
      %v4315 = vpop.f32.mrf.mxu0
      %v4316 = vadd.f32 0.0, %v4315
      %v4317 = vpop.f32.mrf.mxu0
      %4318 = vmatprep.mubr.bf16.mxu0 0
      %4319 = vmatmul.mubr.bf16.gmra.mxu0 %v4206
      %v4320 = vpop.f32.mrf.mxu0
      %v4321 = vadd.f32 0.0, %v4320
      %v4322 = vpop.f32.mrf.mxu0
      %v4323 = vpop.f32.mrf.mxu0
      %v4324 = vadd.f32 0.0, %v4323
      %v4325 = vpop.f32.mrf.mxu0
      %4326 = vmatprep.mubr.bf16.mxu0 0
      %4327 = vmatmul.mubr.bf16.gmra.mxu0 %v4209
      %v4328 = vpop.f32.mrf.mxu0
      %v4329 = vadd.f32 0.0, %v4328
      %v4330 = vpop.f32.mrf.mxu0
      %v4331 = vpop.f32.mrf.mxu0
      %v4332 = vadd.f32 0.0, %v4331
      %v4333 = vpop.f32.mrf.mxu0
      %4334 = vmatprep.mubr.bf16.mxu0 0
      %4335 = vmatmul.mubr.bf16.gmra.mxu0 %v4212
      %v4336 = vpop.f32.mrf.mxu0
      %v4337 = vadd.f32 0.0, %v4336
      %v4338 = vpop.f32.mrf.mxu0
      %v4339 = vpop.f32.mrf.mxu0
      %v4340 = vadd.f32 0.0, %v4339
      %v4341 = vpop.f32.mrf.mxu0
      %4342 = vmatprep.mubr.bf16.mxu0 0
      %4343 = vmatmul.mubr.bf16.gmra.mxu0 %v4215
      %v4344 = vpop.f32.mrf.mxu0
      %v4345 = vadd.f32 0.0, %v4344
      %v4346 = vpop.f32.mrf.mxu0
      %v4347 = vpop.f32.mrf.mxu0
      %v4348 = vadd.f32 0.0, %v4347
      %v4349 = vpop.f32.mrf.mxu0
      %4350 = vmatprep.mubr.bf16.mxu0 0
      %4351 = vmatmul.mubr.bf16.gmra.mxu0 %v4218
      %v4352 = vpop.f32.mrf.mxu0
      %v4353 = vadd.f32 0.0, %v4352
      %v4354 = vpop.f32.mrf.mxu0
      %v4355 = vpop.f32.mrf.mxu0
      %v4356 = vadd.f32 0.0, %v4355
      %v4357 = vpop.f32.mrf.mxu0
      %4358 = vmatprep.mubr.bf16.mxu0 0
      %4359 = vmatmul.mubr.bf16.gmra.mxu0 %v4221
      %v4360 = vpop.f32.mrf.mxu0
      %v4361 = vadd.f32 0.0, %v4360
      %v4362 = vpop.f32.mrf.mxu0
      %v4363 = vpop.f32.mrf.mxu0
      %v4364 = vadd.f32 0.0, %v4363
      %v4365 = vpop.f32.mrf.mxu0
      %4366 = vmatprep.mubr.bf16.mxu0 0
      %4367 = vmatmul.mubr.bf16.gmra.mxu0 %v4224
      %v4368 = vpop.f32.mrf.mxu0
      %v4369 = vadd.f32 0.0, %v4368
      %v4370 = vpop.f32.mrf.mxu0
      %v4371 = vpop.f32.mrf.mxu0
      %v4372 = vadd.f32 0.0, %v4371
      %v4373 = vpop.f32.mrf.mxu0
      %4374 = vmatprep.mubr.bf16.mxu0 0
      %4375 = vmatmul.mubr.bf16.gmra.mxu0 %v4227
      %v4376 = vpop.f32.mrf.mxu0
      %v4377 = vadd.f32 0.0, %v4376
      %v4378 = vpop.f32.mrf.mxu0
      %v4379 = vpop.f32.mrf.mxu0
      %v4380 = vadd.f32 0.0, %v4379
      %v4381 = vpop.f32.mrf.mxu0
      %4382 = vmatprep.mubr.bf16.mxu0 0
      %4383 = vmatmul.mubr.bf16.gmra.mxu0 %v4230
      %v4384 = vpop.f32.mrf.mxu0
      %v4385 = vadd.f32 0.0, %v4384
      %v4386 = vpop.f32.mrf.mxu0
      %v4387 = vpop.f32.mrf.mxu0
      %v4388 = vadd.f32 0.0, %v4387
      %v4389 = vpop.f32.mrf.mxu0
      %4390 = vmatprep.mubr.bf16.mxu0 0
      %4391 = vmatmul.mubr.bf16.gmra.mxu0 %v4233
      %v4392 = vpop.f32.mrf.mxu0
      %v4393 = vadd.f32 0.0, %v4392
      %v4394 = vpop.f32.mrf.mxu0
      %v4395 = vpop.f32.mrf.mxu0
      %v4396 = vadd.f32 0.0, %v4395
      %v4397 = vpop.f32.mrf.mxu0
      %4398 = vdwg.mxu0
      %v4399 = vadd.f32 %v3673, %v4273
      %v4400 = vadd.f32 %v3674, %v4276
      %v4401 = vadd.f32 %v3675, %v4281
      %v4402 = vadd.f32 %v3676, %v4284
      %v4403 = vadd.f32 %v3677, %v4289
      %v4404 = vadd.f32 %v3678, %v4292
      %v4405 = vadd.f32 %v3679, %v4297
      %v4406 = vadd.f32 %v3680, %v4300
      %v4407 = vadd.f32 %v3681, %v4305
      %v4408 = vadd.f32 %v3682, %v4308
      %v4409 = vadd.f32 %v3683, %v4313
      %v4410 = vadd.f32 %v3684, %v4316
      %v4411 = vadd.f32 %v3685, %v4321
      %v4412 = vadd.f32 %v3686, %v4324
      %v4413 = vadd.f32 %v3687, %v4329
      %v4414 = vadd.f32 %v3688, %v4332
      %v4415 = vadd.f32 %v3689, %v4337
      %v4416 = vadd.f32 %v3690, %v4340
      %v4417 = vadd.f32 %v3691, %v4345
      %v4418 = vadd.f32 %v3692, %v4348
      %v4419 = vadd.f32 %v3693, %v4353
      %v4420 = vadd.f32 %v3694, %v4356
      %v4421 = vadd.f32 %v3695, %v4361
      %v4422 = vadd.f32 %v3696, %v4364
      %v4423 = vadd.f32 %v3697, %v4369
      %v4424 = vadd.f32 %v3698, %v4372
      %v4425 = vadd.f32 %v3699, %v4377
      %v4426 = vadd.f32 %v3700, %v4380
      %v4427 = vadd.f32 %v3701, %v4385
      %v4428 = vadd.f32 %v3702, %v4388
      %v4429 = vadd.f32 %v3703, %v4393
      %v4430 = vadd.f32 %v3704, %v4396
      %v4431 = vld [vmem:[%s1783] sm:$0xe]
      %v4432 = vld [vmem:[%s1783 + $0xc] sm:$0xe]
      %v4433 = vld [vmem:[%s1783 + $0x18] sm:$0xe]
      %v4434 = vld [vmem:[%s1783 + $0x24] sm:$0xe]
      %v4435 = vld [vmem:[%s1783 + $0x30] sm:$0xe]
      %v4436 = vld [vmem:[%s1783 + $0x3c] sm:$0xe]
      %v4437 = vld [vmem:[%s1783 + $0x48] sm:$0xe]
      %v4438 = vld [vmem:[%s1783 + $0x54] sm:$0xe]
      %v4439 = vld [vmem:[%s1783 + $0x60] sm:$0xe]
      %v4440 = vld [vmem:[%s1783 + $0x6c] sm:$0xe]
      %v4441 = vld [vmem:[%s1783 + $0x78] sm:$0xe]
      %v4442 = vld [vmem:[%s1783 + $0x84] sm:$0xe]
      %v4443 = vld [vmem:[%s1783 + $0x90] sm:$0xe]
      %v4444 = vld [vmem:[%s1783 + $0x9c] sm:$0xe]
      %v4445 = vld [vmem:[%s1783 + $0xa8] sm:$0xe]
      %v4446 = vld [vmem:[%s1783 + $0xb4] sm:$0xe]
      %v4495 = vrot.slane %v4431, 5
      %v4496 = vrot.slane %v4495, 4
      %v4497 = vrot.slane %v3706, 5
      %v4498 = vsel %vm2940, %v4496, %v4497
      %v4499 = vrot.slane %v4497, 4
      %v4500 = vrot.slane %v3707, 5
      %v4501 = vsel %vm2940, %v4499, %v4500
      %v4502 = vrot.slane %v4432, 5
      %v4503 = vrot.slane %v4502, 4
      %v4504 = vrot.slane %v3709, 5
      %v4505 = vsel %vm2940, %v4503, %v4504
      %v4506 = vrot.slane %v4504, 4
      %v4507 = vrot.slane %v3710, 5
      %v4508 = vsel %vm2940, %v4506, %v4507
      %v4509 = vrot.slane %v4433, 5
      %v4510 = vrot.slane %v4509, 4
      %v4511 = vrot.slane %v3712, 5
      %v4512 = vsel %vm2940, %v4510, %v4511
      %v4513 = vrot.slane %v4511, 4
      %v4514 = vrot.slane %v3713, 5
      %v4515 = vsel %vm2940, %v4513, %v4514
      %v4516 = vrot.slane %v4434, 5
      %v4517 = vrot.slane %v4516, 4
      %v4518 = vrot.slane %v3715, 5
      %v4519 = vsel %vm2940, %v4517, %v4518
      %v4520 = vrot.slane %v4518, 4
      %v4521 = vrot.slane %v3716, 5
      %v4522 = vsel %vm2940, %v4520, %v4521
      %v4523 = vrot.slane %v4435, 5
      %v4524 = vrot.slane %v4523, 4
      %v4525 = vrot.slane %v3718, 5
      %v4526 = vsel %vm2940, %v4524, %v4525
      %v4527 = vrot.slane %v4525, 4
      %v4528 = vrot.slane %v3719, 5
      %v4529 = vsel %vm2940, %v4527, %v4528
      %v4530 = vrot.slane %v4436, 5
      %v4531 = vrot.slane %v4530, 4
      %v4532 = vrot.slane %v3721, 5
      %v4533 = vsel %vm2940, %v4531, %v4532
      %v4534 = vrot.slane %v4532, 4
      %v4535 = vrot.slane %v3722, 5
      %v4536 = vsel %vm2940, %v4534, %v4535
      %v4537 = vrot.slane %v4437, 5
      %v4538 = vrot.slane %v4537, 4
      %v4539 = vrot.slane %v3724, 5
      %v4540 = vsel %vm2940, %v4538, %v4539
      %v4541 = vrot.slane %v4539, 4
      %v4542 = vrot.slane %v3725, 5
      %v4543 = vsel %vm2940, %v4541, %v4542
      %v4544 = vrot.slane %v4438, 5
      %v4545 = vrot.slane %v4544, 4
      %v4546 = vrot.slane %v3727, 5
      %v4547 = vsel %vm2940, %v4545, %v4546
      %v4548 = vrot.slane %v4546, 4
      %v4549 = vrot.slane %v3728, 5
      %v4550 = vsel %vm2940, %v4548, %v4549
      %v4551 = vrot.slane %v4439, 5
      %v4552 = vrot.slane %v4551, 4
      %v4553 = vrot.slane %v3730, 5
      %v4554 = vsel %vm2940, %v4552, %v4553
      %v4555 = vrot.slane %v4553, 4
      %v4556 = vrot.slane %v3731, 5
      %v4557 = vsel %vm2940, %v4555, %v4556
      %v4558 = vrot.slane %v4440, 5
      %v4559 = vrot.slane %v4558, 4
      %v4560 = vrot.slane %v3733, 5
      %v4561 = vsel %vm2940, %v4559, %v4560
      %v4562 = vrot.slane %v4560, 4
      %v4563 = vrot.slane %v3734, 5
      %v4564 = vsel %vm2940, %v4562, %v4563
      %v4565 = vrot.slane %v4441, 5
      %v4566 = vrot.slane %v4565, 4
      %v4567 = vrot.slane %v3736, 5
      %v4568 = vsel %vm2940, %v4566, %v4567
      %v4569 = vrot.slane %v4567, 4
      %v4570 = vrot.slane %v3737, 5
      %v4571 = vsel %vm2940, %v4569, %v4570
      %v4572 = vrot.slane %v4442, 5
      %v4573 = vrot.slane %v4572, 4
      %v4574 = vrot.slane %v3739, 5
      %v4575 = vsel %vm2940, %v4573, %v4574
      %v4576 = vrot.slane %v4574, 4
      %v4577 = vrot.slane %v3740, 5
      %v4578 = vsel %vm2940, %v4576, %v4577
      %v4579 = vrot.slane %v4443, 5
      %v4580 = vrot.slane %v4579, 4
      %v4581 = vrot.slane %v3742, 5
      %v4582 = vsel %vm2940, %v4580, %v4581
      %v4583 = vrot.slane %v4581, 4
      %v4584 = vrot.slane %v3743, 5
      %v4585 = vsel %vm2940, %v4583, %v4584
      %v4586 = vrot.slane %v4444, 5
      %v4587 = vrot.slane %v4586, 4
      %v4588 = vrot.slane %v3745, 5
      %v4589 = vsel %vm2940, %v4587, %v4588
      %v4590 = vrot.slane %v4588, 4
      %v4591 = vrot.slane %v3746, 5
      %v4592 = vsel %vm2940, %v4590, %v4591
      %v4593 = vrot.slane %v4445, 5
      %v4594 = vrot.slane %v4593, 4
      %v4595 = vrot.slane %v3748, 5
      %v4596 = vsel %vm2940, %v4594, %v4595
      %v4597 = vrot.slane %v4595, 4
      %v4598 = vrot.slane %v3749, 5
      %v4599 = vsel %vm2940, %v4597, %v4598
      %v4600 = vrot.slane %v4446, 5
      %v4601 = vrot.slane %v4600, 4
      %v4602 = vrot.slane %v3751, 5
      %v4603 = vsel %vm2940, %v4601, %v4602
      %v4604 = vrot.slane %v4602, 4
      %v4605 = vrot.slane %v3752, 5
      %v4606 = vsel %vm2940, %v4604, %v4605
      %s4607 = scalar_lea.vmem %s3, 20
      %v4608 = vld [vmem:[%s4607] sm:$0xf]
      %v4609 = vunpack.c.l.b16 %v4498
      %v4610 = vunpack.c.l.b16 %v4501
      %v4611 = vunpack.c.l.b16 %v4505
      %v4612 = vunpack.c.l.b16 %v4508
      %v4613 = vunpack.c.l.b16 %v4512
      %v4614 = vunpack.c.l.b16 %v4515
      %v4615 = vunpack.c.l.b16 %v4519
      %v4616 = vunpack.c.l.b16 %v4522
      %v4617 = vunpack.c.l.b16 %v4526
      %v4618 = vunpack.c.l.b16 %v4529
      %v4619 = vunpack.c.l.b16 %v4533
      %v4620 = vunpack.c.l.b16 %v4536
      %v4621 = vunpack.c.l.b16 %v4540
      %v4622 = vunpack.c.l.b16 %v4543
      %v4623 = vunpack.c.l.b16 %v4547
      %v4624 = vunpack.c.l.b16 %v4550
      %v4625 = vunpack.c.l.b16 %v4554
      %v4626 = vunpack.c.l.b16 %v4557
      %v4627 = vunpack.c.l.b16 %v4561
      %v4628 = vunpack.c.l.b16 %v4564
      %v4629 = vunpack.c.l.b16 %v4568
      %v4630 = vunpack.c.l.b16 %v4571
      %v4631 = vunpack.c.l.b16 %v4575
      %v4632 = vunpack.c.l.b16 %v4578
      %v4633 = vunpack.c.l.b16 %v4582
      %v4634 = vunpack.c.l.b16 %v4585
      %v4635 = vunpack.c.l.b16 %v4589
      %v4636 = vunpack.c.l.b16 %v4592
      %v4637 = vunpack.c.l.b16 %v4596
      %v4638 = vunpack.c.l.b16 %v4599
      %v4639 = vunpack.c.l.b16 %v4603
      %v4640 = vunpack.c.l.b16 %v4606
      %v4641 = vpack.c.b16 %v4610, %v4609
      %v4642 = vpack.c.b16 %v4612, %v4611
      %v4643 = vpack.c.b16 %v4614, %v4613
      %v4644 = vpack.c.b16 %v4616, %v4615
      %v4645 = vpack.c.b16 %v4618, %v4617
      %v4646 = vpack.c.b16 %v4620, %v4619
      %v4647 = vpack.c.b16 %v4622, %v4621
      %v4648 = vpack.c.b16 %v4624, %v4623
      %v4649 = vpack.c.b16 %v4626, %v4625
      %v4650 = vpack.c.b16 %v4628, %v4627
      %v4651 = vpack.c.b16 %v4630, %v4629
      %v4652 = vpack.c.b16 %v4632, %v4631
      %v4653 = vpack.c.b16 %v4634, %v4633
      %v4654 = vpack.c.b16 %v4636, %v4635
      %v4655 = vpack.c.b16 %v4638, %v4637
      %v4656 = vpack.c.b16 %v4640, %v4639
      %v4658 = vsel %vm2384, %v4641, 0
      %v4661 = vsel %vm2384, %v4642, 0
      %v4664 = vsel %vm2384, %v4643, 0
      %v4667 = vsel %vm2384, %v4644, 0
      %v4670 = vsel %vm2384, %v4645, 0
      %v4673 = vsel %vm2384, %v4646, 0
      %v4676 = vsel %vm2384, %v4647, 0
      %v4679 = vsel %vm2384, %v4648, 0
      %v4682 = vsel %vm2384, %v4649, 0
      %v4685 = vsel %vm2384, %v4650, 0
      %v4688 = vsel %vm2384, %v4651, 0
      %v4691 = vsel %vm2384, %v4652, 0
      %v4694 = vsel %vm2384, %v4653, 0
      %v4697 = vsel %vm2384, %v4654, 0
      %v4700 = vsel %vm2384, %v4655, 0
      %v4703 = vsel %vm2384, %v4656, 0
      %v4706 = vsel %vm2433, %v4608, 0
      %4708 = vmatprep.subr.bf16.mxu0 0
      %4709 = vmatpush1.bf16.msra.mxu0 0
      %4710 = vmatprep.subr.bf16.mxu0 0
      %4711 = vmatpush1.bf16.msra.mxu0 0
      %4712 = vmatprep.subr.bf16.mxu0 0
      %4713 = vmatpush1.bf16.msra.mxu0 0
      %4714 = vmatprep.subr.bf16.mxu0 0
      %4715 = vmatpush1.bf16.msra.mxu0 0
      %4716 = vmatprep.subr.bf16.mxu0 0
      %4717 = vmatpush1.bf16.msra.mxu0 0
      %4718 = vmatprep.subr.bf16.mxu0 0
      %4719 = vmatpush1.bf16.msra.mxu0 0
      %4720 = vmatprep.subr.bf16.mxu0 0
      %4721 = vmatpush1.bf16.msra.mxu0 0
      %4722 = vmatprep.subr.bf16.mxu0 0
      %4723 = vmatpush1.bf16.msra.mxu0 %v4706
      %4724 = vmatprep.subr.bf16.mxu0 0
      %4725 = vmatpush2.bf16.msra.mxu0 0
      %4726 = vmatprep.subr.bf16.mxu0 0
      %4727 = vmatpush2.bf16.msra.mxu0 0
      %4728 = vmatprep.subr.bf16.mxu0 0
      %4729 = vmatpush2.bf16.msra.mxu0 0
      %4730 = vmatprep.subr.bf16.mxu0 0
      %4731 = vmatpush2.bf16.msra.mxu0 0
      %4732 = vmatprep.subr.bf16.mxu0 0
      %4733 = vmatpush2.bf16.msra.mxu0 0
      %4734 = vmatprep.subr.bf16.mxu0 0
      %4735 = vmatpush2.bf16.msra.mxu0 0
      %4736 = vmatprep.subr.bf16.mxu0 0
      %4737 = vmatpush2.bf16.msra.mxu0 0
      %4738 = vmatprep.subr.bf16.mxu0 0
      %4739 = vmatpush2.bf16.msra.mxu0 0
      %4740 = vmatprep.mubr.bf16.mxu0 0
      %4741 = vmatmul.mubr.bf16.gmra.mxu0 %v4658
      %v4742 = vpop.f32.mrf.mxu0
      %v4743 = vadd.f32 0.0, %v4742
      %v4744 = vpop.f32.mrf.mxu0
      %v4745 = vpop.f32.mrf.mxu0
      %v4746 = vadd.f32 0.0, %v4745
      %v4747 = vpop.f32.mrf.mxu0
      %4748 = vmatprep.mubr.bf16.mxu0 0
      %4749 = vmatmul.mubr.bf16.gmra.mxu0 %v4661
      %v4750 = vpop.f32.mrf.mxu0
      %v4751 = vadd.f32 0.0, %v4750
      %v4752 = vpop.f32.mrf.mxu0
      %v4753 = vpop.f32.mrf.mxu0
      %v4754 = vadd.f32 0.0, %v4753
      %v4755 = vpop.f32.mrf.mxu0
      %4756 = vmatprep.mubr.bf16.mxu0 0
      %4757 = vmatmul.mubr.bf16.gmra.mxu0 %v4664
      %v4758 = vpop.f32.mrf.mxu0
      %v4759 = vadd.f32 0.0, %v4758
      %v4760 = vpop.f32.mrf.mxu0
      %v4761 = vpop.f32.mrf.mxu0
      %v4762 = vadd.f32 0.0, %v4761
      %v4763 = vpop.f32.mrf.mxu0
      %4764 = vmatprep.mubr.bf16.mxu0 0
      %4765 = vmatmul.mubr.bf16.gmra.mxu0 %v4667
      %v4766 = vpop.f32.mrf.mxu0
      %v4767 = vadd.f32 0.0, %v4766
      %v4768 = vpop.f32.mrf.mxu0
      %v4769 = vpop.f32.mrf.mxu0
      %v4770 = vadd.f32 0.0, %v4769
      %v4771 = vpop.f32.mrf.mxu0
      %4772 = vmatprep.mubr.bf16.mxu0 0
      %4773 = vmatmul.mubr.bf16.gmra.mxu0 %v4670
      %v4774 = vpop.f32.mrf.mxu0
      %v4775 = vadd.f32 0.0, %v4774
      %v4776 = vpop.f32.mrf.mxu0
      %v4777 = vpop.f32.mrf.mxu0
      %v4778 = vadd.f32 0.0, %v4777
      %v4779 = vpop.f32.mrf.mxu0
      %4780 = vmatprep.mubr.bf16.mxu0 0
      %4781 = vmatmul.mubr.bf16.gmra.mxu0 %v4673
      %v4782 = vpop.f32.mrf.mxu0
      %v4783 = vadd.f32 0.0, %v4782
      %v4784 = vpop.f32.mrf.mxu0
      %v4785 = vpop.f32.mrf.mxu0
      %v4786 = vadd.f32 0.0, %v4785
      %v4787 = vpop.f32.mrf.mxu0
      %4788 = vmatprep.mubr.bf16.mxu0 0
      %4789 = vmatmul.mubr.bf16.gmra.mxu0 %v4676
      %v4790 = vpop.f32.mrf.mxu0
      %v4791 = vadd.f32 0.0, %v4790
      %v4792 = vpop.f32.mrf.mxu0
      %v4793 = vpop.f32.mrf.mxu0
      %v4794 = vadd.f32 0.0, %v4793
      %v4795 = vpop.f32.mrf.mxu0
      %4796 = vmatprep.mubr.bf16.mxu0 0
      %4797 = vmatmul.mubr.bf16.gmra.mxu0 %v4679
      %v4798 = vpop.f32.mrf.mxu0
      %v4799 = vadd.f32 0.0, %v4798
      %v4800 = vpop.f32.mrf.mxu0
      %v4801 = vpop.f32.mrf.mxu0
      %v4802 = vadd.f32 0.0, %v4801
      %v4803 = vpop.f32.mrf.mxu0
      %4804 = vmatprep.mubr.bf16.mxu0 0
      %4805 = vmatmul.mubr.bf16.gmra.mxu0 %v4682
      %v4806 = vpop.f32.mrf.mxu0
      %v4807 = vadd.f32 0.0, %v4806
      %v4808 = vpop.f32.mrf.mxu0
      %v4809 = vpop.f32.mrf.mxu0
      %v4810 = vadd.f32 0.0, %v4809
      %v4811 = vpop.f32.mrf.mxu0
      %4812 = vmatprep.mubr.bf16.mxu0 0
      %4813 = vmatmul.mubr.bf16.gmra.mxu0 %v4685
      %v4814 = vpop.f32.mrf.mxu0
      %v4815 = vadd.f32 0.0, %v4814
      %v4816 = vpop.f32.mrf.mxu0
      %v4817 = vpop.f32.mrf.mxu0
      %v4818 = vadd.f32 0.0, %v4817
      %v4819 = vpop.f32.mrf.mxu0
      %4820 = vmatprep.mubr.bf16.mxu0 0
      %4821 = vmatmul.mubr.bf16.gmra.mxu0 %v4688
      %v4822 = vpop.f32.mrf.mxu0
      %v4823 = vadd.f32 0.0, %v4822
      %v4824 = vpop.f32.mrf.mxu0
      %v4825 = vpop.f32.mrf.mxu0
      %v4826 = vadd.f32 0.0, %v4825
      %v4827 = vpop.f32.mrf.mxu0
      %4828 = vmatprep.mubr.bf16.mxu0 0
      %4829 = vmatmul.mubr.bf16.gmra.mxu0 %v4691
      %v4830 = vpop.f32.mrf.mxu0
      %v4831 = vadd.f32 0.0, %v4830
      %v4832 = vpop.f32.mrf.mxu0
      %v4833 = vpop.f32.mrf.mxu0
      %v4834 = vadd.f32 0.0, %v4833
      %v4835 = vpop.f32.mrf.mxu0
      %4836 = vmatprep.mubr.bf16.mxu0 0
      %4837 = vmatmul.mubr.bf16.gmra.mxu0 %v4694
      %v4838 = vpop.f32.mrf.mxu0
      %v4839 = vadd.f32 0.0, %v4838
      %v4840 = vpop.f32.mrf.mxu0
      %v4841 = vpop.f32.mrf.mxu0
      %v4842 = vadd.f32 0.0, %v4841
      %v4843 = vpop.f32.mrf.mxu0
      %4844 = vmatprep.mubr.bf16.mxu0 0
      %4845 = vmatmul.mubr.bf16.gmra.mxu0 %v4697
      %v4846 = vpop.f32.mrf.mxu0
      %v4847 = vadd.f32 0.0, %v4846
      %v4848 = vpop.f32.mrf.mxu0
      %v4849 = vpop.f32.mrf.mxu0
      %v4850 = vadd.f32 0.0, %v4849
      %v4851 = vpop.f32.mrf.mxu0
      %4852 = vmatprep.mubr.bf16.mxu0 0
      %4853 = vmatmul.mubr.bf16.gmra.mxu0 %v4700
      %v4854 = vpop.f32.mrf.mxu0
      %v4855 = vadd.f32 0.0, %v4854
      %v4856 = vpop.f32.mrf.mxu0
      %v4857 = vpop.f32.mrf.mxu0
      %v4858 = vadd.f32 0.0, %v4857
      %v4859 = vpop.f32.mrf.mxu0
      %4860 = vmatprep.mubr.bf16.mxu0 0
      %4861 = vmatmul.mubr.bf16.gmra.mxu0 %v4703
      %v4862 = vpop.f32.mrf.mxu0
      %v4863 = vadd.f32 0.0, %v4862
      %v4864 = vpop.f32.mrf.mxu0
      %v4865 = vpop.f32.mrf.mxu0
      %v4866 = vadd.f32 0.0, %v4865
      %v4867 = vpop.f32.mrf.mxu0
      %4868 = vdwg.mxu0
      %v4869 = vadd.f32 %v4399, %v4743
      %v4870 = vadd.f32 %v4400, %v4746
      %v4871 = vadd.f32 %v4401, %v4751
      %v4872 = vadd.f32 %v4402, %v4754
      %v4873 = vadd.f32 %v4403, %v4759
      %v4874 = vadd.f32 %v4404, %v4762
      %v4875 = vadd.f32 %v4405, %v4767
      %v4876 = vadd.f32 %v4406, %v4770
      %v4877 = vadd.f32 %v4407, %v4775
      %v4878 = vadd.f32 %v4408, %v4778
      %v4879 = vadd.f32 %v4409, %v4783
      %v4880 = vadd.f32 %v4410, %v4786
      %v4881 = vadd.f32 %v4411, %v4791
      %v4882 = vadd.f32 %v4412, %v4794
      %v4883 = vadd.f32 %v4413, %v4799
      %v4884 = vadd.f32 %v4414, %v4802
      %v4885 = vadd.f32 %v4415, %v4807
      %v4886 = vadd.f32 %v4416, %v4810
      %v4887 = vadd.f32 %v4417, %v4815
      %v4888 = vadd.f32 %v4418, %v4818
      %v4889 = vadd.f32 %v4419, %v4823
      %v4890 = vadd.f32 %v4420, %v4826
      %v4891 = vadd.f32 %v4421, %v4831
      %v4892 = vadd.f32 %v4422, %v4834
      %v4893 = vadd.f32 %v4423, %v4839
      %v4894 = vadd.f32 %v4424, %v4842
      %v4895 = vadd.f32 %v4425, %v4847
      %v4896 = vadd.f32 %v4426, %v4850
      %v4897 = vadd.f32 %v4427, %v4855
      %v4898 = vadd.f32 %v4428, %v4858
      %v4899 = vadd.f32 %v4429, %v4863
      %v4900 = vadd.f32 %v4430, %v4866
      %s4901 = scalar_lea.vmem [#allocation2], 24
      %v4902 = vld [vmem:[%s4901] sm:$0xf]
      %v4903 = vld [vmem:[%s4901 + $0x4] sm:$0xf]
      %v4904 = vld [vmem:[%s4901 + $0xc] sm:$0xf]
      %v4905 = vld [vmem:[%s4901 + $0x10] sm:$0xf]
      %v4906 = vld [vmem:[%s4901 + $0x18] sm:$0xf]
      %v4907 = vld [vmem:[%s4901 + $0x1c] sm:$0xf]
      %v4908 = vld [vmem:[%s4901 + $0x24] sm:$0xf]
      %v4909 = vld [vmem:[%s4901 + $0x28] sm:$0xf]
      %v4910 = vld [vmem:[%s4901 + $0x30] sm:$0xf]
      %v4911 = vld [vmem:[%s4901 + $0x34] sm:$0xf]
      %v4912 = vld [vmem:[%s4901 + $0x3c] sm:$0xf]
      %v4913 = vld [vmem:[%s4901 + $0x40] sm:$0xf]
      %v4914 = vld [vmem:[%s4901 + $0x48] sm:$0xf]
      %v4915 = vld [vmem:[%s4901 + $0x4c] sm:$0xf]
      %v4916 = vld [vmem:[%s4901 + $0x54] sm:$0xf]
      %v4917 = vld [vmem:[%s4901 + $0x58] sm:$0xf]
      %v4918 = vld [vmem:[%s4901 + $0x60] sm:$0xf]
      %v4919 = vld [vmem:[%s4901 + $0x64] sm:$0xf]
      %v4920 = vld [vmem:[%s4901 + $0x6c] sm:$0xf]
      %v4921 = vld [vmem:[%s4901 + $0x70] sm:$0xf]
      %v4922 = vld [vmem:[%s4901 + $0x78] sm:$0xf]
      %v4923 = vld [vmem:[%s4901 + $0x7c] sm:$0xf]
      %v4924 = vld [vmem:[%s4901 + $0x84] sm:$0xf]
      %v4925 = vld [vmem:[%s4901 + $0x88] sm:$0xf]
      %v4926 = vld [vmem:[%s4901 + $0x90] sm:$0xf]
      %v4927 = vld [vmem:[%s4901 + $0x94] sm:$0xf]
      %v4928 = vld [vmem:[%s4901 + $0x9c] sm:$0xf]
      %v4929 = vld [vmem:[%s4901 + $0xa0] sm:$0xf]
      %v4930 = vld [vmem:[%s4901 + $0xa8] sm:$0xf]
      %v4931 = vld [vmem:[%s4901 + $0xac] sm:$0xf]
      %v4932 = vld [vmem:[%s4901 + $0xb4] sm:$0xf]
      %v4933 = vld [vmem:[%s4901 + $0xb8] sm:$0xf]
      %s4934 = scalar_lea.vmem %s3, 24
      %v4935 = vld [vmem:[%s4934] sm:$0xf]
      %v4968 = vunpack.c.l.b16 %v4902
      %v4969 = vunpack.c.l.b16 %v4903
      %v4970 = vunpack.c.l.b16 %v4904
      %v4971 = vunpack.c.l.b16 %v4905
      %v4972 = vunpack.c.l.b16 %v4906
      %v4973 = vunpack.c.l.b16 %v4907
      %v4974 = vunpack.c.l.b16 %v4908
      %v4975 = vunpack.c.l.b16 %v4909
      %v4976 = vunpack.c.l.b16 %v4910
      %v4977 = vunpack.c.l.b16 %v4911
      %v4978 = vunpack.c.l.b16 %v4912
      %v4979 = vunpack.c.l.b16 %v4913
      %v4980 = vunpack.c.l.b16 %v4914
      %v4981 = vunpack.c.l.b16 %v4915
      %v4982 = vunpack.c.l.b16 %v4916
      %v4983 = vunpack.c.l.b16 %v4917
      %v4984 = vunpack.c.l.b16 %v4918
      %v4985 = vunpack.c.l.b16 %v4919
      %v4986 = vunpack.c.l.b16 %v4920
      %v4987 = vunpack.c.l.b16 %v4921
      %v4988 = vunpack.c.l.b16 %v4922
      %v4989 = vunpack.c.l.b16 %v4923
      %v4990 = vunpack.c.l.b16 %v4924
      %v4991 = vunpack.c.l.b16 %v4925
      %v4992 = vunpack.c.l.b16 %v4926
      %v4993 = vunpack.c.l.b16 %v4927
      %v4994 = vunpack.c.l.b16 %v4928
      %v4995 = vunpack.c.l.b16 %v4929
      %v4996 = vunpack.c.l.b16 %v4930
      %v4997 = vunpack.c.l.b16 %v4931
      %v4998 = vunpack.c.l.b16 %v4932
      %v4999 = vunpack.c.l.b16 %v4933
      %v5000 = vpack.c.b16 %v4969, %v4968
      %v5001 = vpack.c.b16 %v4971, %v4970
      %v5002 = vpack.c.b16 %v4973, %v4972
      %v5003 = vpack.c.b16 %v4975, %v4974
      %v5004 = vpack.c.b16 %v4977, %v4976
      %v5005 = vpack.c.b16 %v4979, %v4978
      %v5006 = vpack.c.b16 %v4981, %v4980
      %v5007 = vpack.c.b16 %v4983, %v4982
      %v5008 = vpack.c.b16 %v4985, %v4984
      %v5009 = vpack.c.b16 %v4987, %v4986
      %v5010 = vpack.c.b16 %v4989, %v4988
      %v5011 = vpack.c.b16 %v4991, %v4990
      %v5012 = vpack.c.b16 %v4993, %v4992
      %v5013 = vpack.c.b16 %v4995, %v4994
      %v5014 = vpack.c.b16 %v4997, %v4996
      %v5015 = vpack.c.b16 %v4999, %v4998
      %v5017 = vsel %vm2384, %v5000, 0
      %v5020 = vsel %vm2384, %v5001, 0
      %v5023 = vsel %vm2384, %v5002, 0
      %v5026 = vsel %vm2384, %v5003, 0
      %v5029 = vsel %vm2384, %v5004, 0
      %v5032 = vsel %vm2384, %v5005, 0
      %v5035 = vsel %vm2384, %v5006, 0
      %v5038 = vsel %vm2384, %v5007, 0
      %v5041 = vsel %vm2384, %v5008, 0
      %v5044 = vsel %vm2384, %v5009, 0
      %v5047 = vsel %vm2384, %v5010, 0
      %v5050 = vsel %vm2384, %v5011, 0
      %v5053 = vsel %vm2384, %v5012, 0
      %v5056 = vsel %vm2384, %v5013, 0
      %v5059 = vsel %vm2384, %v5014, 0
      %v5062 = vsel %vm2384, %v5015, 0
      %v5065 = vsel %vm2433, %v4935, 0
      %5067 = vmatprep.subr.bf16.mxu0 0
      %5068 = vmatpush1.bf16.msra.mxu0 0
      %5069 = vmatprep.subr.bf16.mxu0 0
      %5070 = vmatpush1.bf16.msra.mxu0 0
      %5071 = vmatprep.subr.bf16.mxu0 0
      %5072 = vmatpush1.bf16.msra.mxu0 0
      %5073 = vmatprep.subr.bf16.mxu0 0
      %5074 = vmatpush1.bf16.msra.mxu0 0
      %5075 = vmatprep.subr.bf16.mxu0 0
      %5076 = vmatpush1.bf16.msra.mxu0 0
      %5077 = vmatprep.subr.bf16.mxu0 0
      %5078 = vmatpush1.bf16.msra.mxu0 0
      %5079 = vmatprep.subr.bf16.mxu0 0
      %5080 = vmatpush1.bf16.msra.mxu0 0
      %5081 = vmatprep.subr.bf16.mxu0 0
      %5082 = vmatpush1.bf16.msra.mxu0 %v5065
      %5083 = vmatprep.subr.bf16.mxu0 0
      %5084 = vmatpush2.bf16.msra.mxu0 0
      %5085 = vmatprep.subr.bf16.mxu0 0
      %5086 = vmatpush2.bf16.msra.mxu0 0
      %5087 = vmatprep.subr.bf16.mxu0 0
      %5088 = vmatpush2.bf16.msra.mxu0 0
      %5089 = vmatprep.subr.bf16.mxu0 0
      %5090 = vmatpush2.bf16.msra.mxu0 0
      %5091 = vmatprep.subr.bf16.mxu0 0
      %5092 = vmatpush2.bf16.msra.mxu0 0
      %5093 = vmatprep.subr.bf16.mxu0 0
      %5094 = vmatpush2.bf16.msra.mxu0 0
      %5095 = vmatprep.subr.bf16.mxu0 0
      %5096 = vmatpush2.bf16.msra.mxu0 0
      %5097 = vmatprep.subr.bf16.mxu0 0
      %5098 = vmatpush2.bf16.msra.mxu0 0
      %5099 = vmatprep.mubr.bf16.mxu0 0
      %5100 = vmatmul.mubr.bf16.gmra.mxu0 %v5017
      %v5101 = vpop.f32.mrf.mxu0
      %v5102 = vadd.f32 0.0, %v5101
      %v5103 = vpop.f32.mrf.mxu0
      %v5104 = vpop.f32.mrf.mxu0
      %v5105 = vadd.f32 0.0, %v5104
      %v5106 = vpop.f32.mrf.mxu0
      %5107 = vmatprep.mubr.bf16.mxu0 0
      %5108 = vmatmul.mubr.bf16.gmra.mxu0 %v5020
      %v5109 = vpop.f32.mrf.mxu0
      %v5110 = vadd.f32 0.0, %v5109
      %v5111 = vpop.f32.mrf.mxu0
      %v5112 = vpop.f32.mrf.mxu0
      %v5113 = vadd.f32 0.0, %v5112
      %v5114 = vpop.f32.mrf.mxu0
      %5115 = vmatprep.mubr.bf16.mxu0 0
      %5116 = vmatmul.mubr.bf16.gmra.mxu0 %v5023
      %v5117 = vpop.f32.mrf.mxu0
      %v5118 = vadd.f32 0.0, %v5117
      %v5119 = vpop.f32.mrf.mxu0
      %v5120 = vpop.f32.mrf.mxu0
      %v5121 = vadd.f32 0.0, %v5120
      %v5122 = vpop.f32.mrf.mxu0
      %5123 = vmatprep.mubr.bf16.mxu0 0
      %5124 = vmatmul.mubr.bf16.gmra.mxu0 %v5026
      %v5125 = vpop.f32.mrf.mxu0
      %v5126 = vadd.f32 0.0, %v5125
      %v5127 = vpop.f32.mrf.mxu0
      %v5128 = vpop.f32.mrf.mxu0
      %v5129 = vadd.f32 0.0, %v5128
      %v5130 = vpop.f32.mrf.mxu0
      %5131 = vmatprep.mubr.bf16.mxu0 0
      %5132 = vmatmul.mubr.bf16.gmra.mxu0 %v5029
      %v5133 = vpop.f32.mrf.mxu0
      %v5134 = vadd.f32 0.0, %v5133
      %v5135 = vpop.f32.mrf.mxu0
      %v5136 = vpop.f32.mrf.mxu0
      %v5137 = vadd.f32 0.0, %v5136
      %v5138 = vpop.f32.mrf.mxu0
      %5139 = vmatprep.mubr.bf16.mxu0 0
      %5140 = vmatmul.mubr.bf16.gmra.mxu0 %v5032
      %v5141 = vpop.f32.mrf.mxu0
      %v5142 = vadd.f32 0.0, %v5141
      %v5143 = vpop.f32.mrf.mxu0
      %v5144 = vpop.f32.mrf.mxu0
      %v5145 = vadd.f32 0.0, %v5144
      %v5146 = vpop.f32.mrf.mxu0
      %5147 = vmatprep.mubr.bf16.mxu0 0
      %5148 = vmatmul.mubr.bf16.gmra.mxu0 %v5035
      %v5149 = vpop.f32.mrf.mxu0
      %v5150 = vadd.f32 0.0, %v5149
      %v5151 = vpop.f32.mrf.mxu0
      %v5152 = vpop.f32.mrf.mxu0
      %v5153 = vadd.f32 0.0, %v5152
      %v5154 = vpop.f32.mrf.mxu0
      %5155 = vmatprep.mubr.bf16.mxu0 0
      %5156 = vmatmul.mubr.bf16.gmra.mxu0 %v5038
      %v5157 = vpop.f32.mrf.mxu0
      %v5158 = vadd.f32 0.0, %v5157
      %v5159 = vpop.f32.mrf.mxu0
      %v5160 = vpop.f32.mrf.mxu0
      %v5161 = vadd.f32 0.0, %v5160
      %v5162 = vpop.f32.mrf.mxu0
      %5163 = vmatprep.mubr.bf16.mxu0 0
      %5164 = vmatmul.mubr.bf16.gmra.mxu0 %v5041
      %v5165 = vpop.f32.mrf.mxu0
      %v5166 = vadd.f32 0.0, %v5165
      %v5167 = vpop.f32.mrf.mxu0
      %v5168 = vpop.f32.mrf.mxu0
      %v5169 = vadd.f32 0.0, %v5168
      %v5170 = vpop.f32.mrf.mxu0
      %5171 = vmatprep.mubr.bf16.mxu0 0
      %5172 = vmatmul.mubr.bf16.gmra.mxu0 %v5044
      %v5173 = vpop.f32.mrf.mxu0
      %v5174 = vadd.f32 0.0, %v5173
      %v5175 = vpop.f32.mrf.mxu0
      %v5176 = vpop.f32.mrf.mxu0
      %v5177 = vadd.f32 0.0, %v5176
      %v5178 = vpop.f32.mrf.mxu0
      %5179 = vmatprep.mubr.bf16.mxu0 0
      %5180 = vmatmul.mubr.bf16.gmra.mxu0 %v5047
      %v5181 = vpop.f32.mrf.mxu0
      %v5182 = vadd.f32 0.0, %v5181
      %v5183 = vpop.f32.mrf.mxu0
      %v5184 = vpop.f32.mrf.mxu0
      %v5185 = vadd.f32 0.0, %v5184
      %v5186 = vpop.f32.mrf.mxu0
      %5187 = vmatprep.mubr.bf16.mxu0 0
      %5188 = vmatmul.mubr.bf16.gmra.mxu0 %v5050
      %v5189 = vpop.f32.mrf.mxu0
      %v5190 = vadd.f32 0.0, %v5189
      %v5191 = vpop.f32.mrf.mxu0
      %v5192 = vpop.f32.mrf.mxu0
      %v5193 = vadd.f32 0.0, %v5192
      %v5194 = vpop.f32.mrf.mxu0
      %5195 = vmatprep.mubr.bf16.mxu0 0
      %5196 = vmatmul.mubr.bf16.gmra.mxu0 %v5053
      %v5197 = vpop.f32.mrf.mxu0
      %v5198 = vadd.f32 0.0, %v5197
      %v5199 = vpop.f32.mrf.mxu0
      %v5200 = vpop.f32.mrf.mxu0
      %v5201 = vadd.f32 0.0, %v5200
      %v5202 = vpop.f32.mrf.mxu0
      %5203 = vmatprep.mubr.bf16.mxu0 0
      %5204 = vmatmul.mubr.bf16.gmra.mxu0 %v5056
      %v5205 = vpop.f32.mrf.mxu0
      %v5206 = vadd.f32 0.0, %v5205
      %v5207 = vpop.f32.mrf.mxu0
      %v5208 = vpop.f32.mrf.mxu0
      %v5209 = vadd.f32 0.0, %v5208
      %v5210 = vpop.f32.mrf.mxu0
      %5211 = vmatprep.mubr.bf16.mxu0 0
      %5212 = vmatmul.mubr.bf16.gmra.mxu0 %v5059
      %v5213 = vpop.f32.mrf.mxu0
      %v5214 = vadd.f32 0.0, %v5213
      %v5215 = vpop.f32.mrf.mxu0
      %v5216 = vpop.f32.mrf.mxu0
      %v5217 = vadd.f32 0.0, %v5216
      %v5218 = vpop.f32.mrf.mxu0
      %5219 = vmatprep.mubr.bf16.mxu0 0
      %5220 = vmatmul.mubr.bf16.gmra.mxu0 %v5062
      %v5221 = vpop.f32.mrf.mxu0
      %v5222 = vadd.f32 0.0, %v5221
      %v5223 = vpop.f32.mrf.mxu0
      %v5224 = vpop.f32.mrf.mxu0
      %v5225 = vadd.f32 0.0, %v5224
      %v5226 = vpop.f32.mrf.mxu0
      %5227 = vdwg.mxu0
      %v5228 = vadd.f32 %v4869, %v5102
      %v5229 = vadd.f32 %v4870, %v5105
      %v5230 = vadd.f32 %v4871, %v5110
      %v5231 = vadd.f32 %v4872, %v5113
      %v5232 = vadd.f32 %v4873, %v5118
      %v5233 = vadd.f32 %v4874, %v5121
      %v5234 = vadd.f32 %v4875, %v5126
      %v5235 = vadd.f32 %v4876, %v5129
      %v5236 = vadd.f32 %v4877, %v5134
      %v5237 = vadd.f32 %v4878, %v5137
      %v5238 = vadd.f32 %v4879, %v5142
      %v5239 = vadd.f32 %v4880, %v5145
      %v5240 = vadd.f32 %v4881, %v5150
      %v5241 = vadd.f32 %v4882, %v5153
      %v5242 = vadd.f32 %v4883, %v5158
      %v5243 = vadd.f32 %v4884, %v5161
      %v5244 = vadd.f32 %v4885, %v5166
      %v5245 = vadd.f32 %v4886, %v5169
      %v5246 = vadd.f32 %v4887, %v5174
      %v5247 = vadd.f32 %v4888, %v5177
      %v5248 = vadd.f32 %v4889, %v5182
      %v5249 = vadd.f32 %v4890, %v5185
      %v5250 = vadd.f32 %v4891, %v5190
      %v5251 = vadd.f32 %v4892, %v5193
      %v5252 = vadd.f32 %v4893, %v5198
      %v5253 = vadd.f32 %v4894, %v5201
      %v5254 = vadd.f32 %v4895, %v5206
      %v5255 = vadd.f32 %v4896, %v5209
      %v5256 = vadd.f32 %v4897, %v5214
      %v5257 = vadd.f32 %v4898, %v5217
      %v5258 = vadd.f32 %v4899, %v5222
      %v5259 = vadd.f32 %v4900, %v5225
      %v5260 = vld [vmem:[%s4901] sm:$0xf]
      %v5261 = vld [vmem:[%s4901 + $0x4] sm:$0xf]
      %v5262 = vld [vmem:[%s4901 + $0x8] sm:$0x1]
      %v5263 = vld [vmem:[%s4901 + $0xc] sm:$0xf]
      %v5264 = vld [vmem:[%s4901 + $0x10] sm:$0xf]
      %v5265 = vld [vmem:[%s4901 + $0x14] sm:$0x1]
      %v5266 = vld [vmem:[%s4901 + $0x18] sm:$0xf]
      %v5267 = vld [vmem:[%s4901 + $0x1c] sm:$0xf]
      %v5268 = vld [vmem:[%s4901 + $0x20] sm:$0x1]
      %v5269 = vld [vmem:[%s4901 + $0x24] sm:$0xf]
      %v5270 = vld [vmem:[%s4901 + $0x28] sm:$0xf]
      %v5271 = vld [vmem:[%s4901 + $0x2c] sm:$0x1]
      %v5272 = vld [vmem:[%s4901 + $0x30] sm:$0xf]
      %v5273 = vld [vmem:[%s4901 + $0x34] sm:$0xf]
      %v5274 = vld [vmem:[%s4901 + $0x38] sm:$0x1]
      %v5275 = vld [vmem:[%s4901 + $0x3c] sm:$0xf]
      %v5276 = vld [vmem:[%s4901 + $0x40] sm:$0xf]
      %v5277 = vld [vmem:[%s4901 + $0x44] sm:$0x1]
      %v5278 = vld [vmem:[%s4901 + $0x48] sm:$0xf]
      %v5279 = vld [vmem:[%s4901 + $0x4c] sm:$0xf]
      %v5280 = vld [vmem:[%s4901 + $0x50] sm:$0x1]
      %v5281 = vld [vmem:[%s4901 + $0x54] sm:$0xf]
      %v5282 = vld [vmem:[%s4901 + $0x58] sm:$0xf]
      %v5283 = vld [vmem:[%s4901 + $0x5c] sm:$0x1]
      %v5284 = vld [vmem:[%s4901 + $0x60] sm:$0xf]
      %v5285 = vld [vmem:[%s4901 + $0x64] sm:$0xf]
      %v5286 = vld [vmem:[%s4901 + $0x68] sm:$0x1]
      %v5287 = vld [vmem:[%s4901 + $0x6c] sm:$0xf]
      %v5288 = vld [vmem:[%s4901 + $0x70] sm:$0xf]
      %v5289 = vld [vmem:[%s4901 + $0x74] sm:$0x1]
      %v5290 = vld [vmem:[%s4901 + $0x78] sm:$0xf]
      %v5291 = vld [vmem:[%s4901 + $0x7c] sm:$0xf]
      %v5292 = vld [vmem:[%s4901 + $0x80] sm:$0x1]
      %v5293 = vld [vmem:[%s4901 + $0x84] sm:$0xf]
      %v5294 = vld [vmem:[%s4901 + $0x88] sm:$0xf]
      %v5295 = vld [vmem:[%s4901 + $0x8c] sm:$0x1]
      %v5296 = vld [vmem:[%s4901 + $0x90] sm:$0xf]
      %v5297 = vld [vmem:[%s4901 + $0x94] sm:$0xf]
      %v5298 = vld [vmem:[%s4901 + $0x98] sm:$0x1]
      %v5299 = vld [vmem:[%s4901 + $0x9c] sm:$0xf]
      %v5300 = vld [vmem:[%s4901 + $0xa0] sm:$0xf]
      %v5301 = vld [vmem:[%s4901 + $0xa4] sm:$0x1]
      %v5302 = vld [vmem:[%s4901 + $0xa8] sm:$0xf]
      %v5303 = vld [vmem:[%s4901 + $0xac] sm:$0xf]
      %v5304 = vld [vmem:[%s4901 + $0xb0] sm:$0x1]
      %v5305 = vld [vmem:[%s4901 + $0xb4] sm:$0xf]
      %v5306 = vld [vmem:[%s4901 + $0xb8] sm:$0xf]
      %v5307 = vld [vmem:[%s4901 + $0xbc] sm:$0x1]
      %v5309 = vshrl.u32 %v5260, 16
      %v5311 = vrot.slane %v5309, 4
      %v5312 = vshll.u32 %v5260, 16
      %v5314 = vrot.slane %v5312, 5
      %v5315 = vor.u32 %v5311, %v5314
      %v5316 = vrot.slane %v5315, 4
      %v5318 = vshll.u32 %v5261, 16
      %v5320 = vrot.slane %v5318, 5
      %v5321 = vsel %vm1949, %v5316, %v5320
      %v5322 = vshrl.u32 %v5261, 16
      %v5324 = vrot.slane %v5322, 4
      %v5325 = vor.u32 %v5324, %v5320
      %v5326 = vrot.slane %v5325, 4
      %v5328 = vshll.u32 %v5262, 16
      %v5330 = vrot.slane %v5328, 5
      %v5331 = vsel %vm1949, %v5326, %v5330
      %v5333 = vshrl.u32 %v5263, 16
      %v5335 = vrot.slane %v5333, 4
      %v5336 = vshll.u32 %v5263, 16
      %v5338 = vrot.slane %v5336, 5
      %v5339 = vor.u32 %v5335, %v5338
      %v5340 = vrot.slane %v5339, 4
      %v5342 = vshll.u32 %v5264, 16
      %v5344 = vrot.slane %v5342, 5
      %v5345 = vsel %vm1949, %v5340, %v5344
      %v5346 = vshrl.u32 %v5264, 16
      %v5348 = vrot.slane %v5346, 4
      %v5349 = vor.u32 %v5348, %v5344
      %v5350 = vrot.slane %v5349, 4
      %v5352 = vshll.u32 %v5265, 16
      %v5354 = vrot.slane %v5352, 5
      %v5355 = vsel %vm1949, %v5350, %v5354
      %v5357 = vshrl.u32 %v5266, 16
      %v5359 = vrot.slane %v5357, 4
      %v5360 = vshll.u32 %v5266, 16
      %v5362 = vrot.slane %v5360, 5
      %v5363 = vor.u32 %v5359, %v5362
      %v5364 = vrot.slane %v5363, 4
      %v5366 = vshll.u32 %v5267, 16
      %v5368 = vrot.slane %v5366, 5
      %v5369 = vsel %vm1949, %v5364, %v5368
      %v5370 = vshrl.u32 %v5267, 16
      %v5372 = vrot.slane %v5370, 4
      %v5373 = vor.u32 %v5372, %v5368
      %v5374 = vrot.slane %v5373, 4
      %v5376 = vshll.u32 %v5268, 16
      %v5378 = vrot.slane %v5376, 5
      %v5379 = vsel %vm1949, %v5374, %v5378
      %v5381 = vshrl.u32 %v5269, 16
      %v5383 = vrot.slane %v5381, 4
      %v5384 = vshll.u32 %v5269, 16
      %v5386 = vrot.slane %v5384, 5
      %v5387 = vor.u32 %v5383, %v5386
      %v5388 = vrot.slane %v5387, 4
      %v5390 = vshll.u32 %v5270, 16
      %v5392 = vrot.slane %v5390, 5
      %v5393 = vsel %vm1949, %v5388, %v5392
      %v5394 = vshrl.u32 %v5270, 16
      %v5396 = vrot.slane %v5394, 4
      %v5397 = vor.u32 %v5396, %v5392
      %v5398 = vrot.slane %v5397, 4
      %v5400 = vshll.u32 %v5271, 16
      %v5402 = vrot.slane %v5400, 5
      %v5403 = vsel %vm1949, %v5398, %v5402
      %v5405 = vshrl.u32 %v5272, 16
      %v5407 = vrot.slane %v5405, 4
      %v5408 = vshll.u32 %v5272, 16
      %v5410 = vrot.slane %v5408, 5
      %v5411 = vor.u32 %v5407, %v5410
      %v5412 = vrot.slane %v5411, 4
      %v5414 = vshll.u32 %v5273, 16
      %v5416 = vrot.slane %v5414, 5
      %v5417 = vsel %vm1949, %v5412, %v5416
      %v5418 = vshrl.u32 %v5273, 16
      %v5420 = vrot.slane %v5418, 4
      %v5421 = vor.u32 %v5420, %v5416
      %v5422 = vrot.slane %v5421, 4
      %v5424 = vshll.u32 %v5274, 16
      %v5426 = vrot.slane %v5424, 5
      %v5427 = vsel %vm1949, %v5422, %v5426
      %v5429 = vshrl.u32 %v5275, 16
      %v5431 = vrot.slane %v5429, 4
      %v5432 = vshll.u32 %v5275, 16
      %v5434 = vrot.slane %v5432, 5
      %v5435 = vor.u32 %v5431, %v5434
      %v5436 = vrot.slane %v5435, 4
      %v5438 = vshll.u32 %v5276, 16
      %v5440 = vrot.slane %v5438, 5
      %v5441 = vsel %vm1949, %v5436, %v5440
      %v5442 = vshrl.u32 %v5276, 16
      %v5444 = vrot.slane %v5442, 4
      %v5445 = vor.u32 %v5444, %v5440
      %v5446 = vrot.slane %v5445, 4
      %v5448 = vshll.u32 %v5277, 16
      %v5450 = vrot.slane %v5448, 5
      %v5451 = vsel %vm1949, %v5446, %v5450
      %v5453 = vshrl.u32 %v5278, 16
      %v5455 = vrot.slane %v5453, 4
      %v5456 = vshll.u32 %v5278, 16
      %v5458 = vrot.slane %v5456, 5
      %v5459 = vor.u32 %v5455, %v5458
      %v5460 = vrot.slane %v5459, 4
      %v5462 = vshll.u32 %v5279, 16
      %v5464 = vrot.slane %v5462, 5
      %v5465 = vsel %vm1949, %v5460, %v5464
      %v5466 = vshrl.u32 %v5279, 16
      %v5468 = vrot.slane %v5466, 4
      %v5469 = vor.u32 %v5468, %v5464
      %v5470 = vrot.slane %v5469, 4
      %v5472 = vshll.u32 %v5280, 16
      %v5474 = vrot.slane %v5472, 5
      %v5475 = vsel %vm1949, %v5470, %v5474
      %v5477 = vshrl.u32 %v5281, 16
      %v5479 = vrot.slane %v5477, 4
      %v5480 = vshll.u32 %v5281, 16
      %v5482 = vrot.slane %v5480, 5
      %v5483 = vor.u32 %v5479, %v5482
      %v5484 = vrot.slane %v5483, 4
      %v5486 = vshll.u32 %v5282, 16
      %v5488 = vrot.slane %v5486, 5
      %v5489 = vsel %vm1949, %v5484, %v5488
      %v5490 = vshrl.u32 %v5282, 16
      %v5492 = vrot.slane %v5490, 4
      %v5493 = vor.u32 %v5492, %v5488
      %v5494 = vrot.slane %v5493, 4
      %v5496 = vshll.u32 %v5283, 16
      %v5498 = vrot.slane %v5496, 5
      %v5499 = vsel %vm1949, %v5494, %v5498
      %v5501 = vshrl.u32 %v5284, 16
      %v5503 = vrot.slane %v5501, 4
      %v5504 = vshll.u32 %v5284, 16
      %v5506 = vrot.slane %v5504, 5
      %v5507 = vor.u32 %v5503, %v5506
      %v5508 = vrot.slane %v5507, 4
      %v5510 = vshll.u32 %v5285, 16
      %v5512 = vrot.slane %v5510, 5
      %v5513 = vsel %vm1949, %v5508, %v5512
      %v5514 = vshrl.u32 %v5285, 16
      %v5516 = vrot.slane %v5514, 4
      %v5517 = vor.u32 %v5516, %v5512
      %v5518 = vrot.slane %v5517, 4
      %v5520 = vshll.u32 %v5286, 16
      %v5522 = vrot.slane %v5520, 5
      %v5523 = vsel %vm1949, %v5518, %v5522
      %v5525 = vshrl.u32 %v5287, 16
      %v5527 = vrot.slane %v5525, 4
      %v5528 = vshll.u32 %v5287, 16
      %v5530 = vrot.slane %v5528, 5
      %v5531 = vor.u32 %v5527, %v5530
      %v5532 = vrot.slane %v5531, 4
      %v5534 = vshll.u32 %v5288, 16
      %v5536 = vrot.slane %v5534, 5
      %v5537 = vsel %vm1949, %v5532, %v5536
      %v5538 = vshrl.u32 %v5288, 16
      %v5540 = vrot.slane %v5538, 4
      %v5541 = vor.u32 %v5540, %v5536
      %v5542 = vrot.slane %v5541, 4
      %v5544 = vshll.u32 %v5289, 16
      %v5546 = vrot.slane %v5544, 5
      %v5547 = vsel %vm1949, %v5542, %v5546
      %v5549 = vshrl.u32 %v5290, 16
      %v5551 = vrot.slane %v5549, 4
      %v5552 = vshll.u32 %v5290, 16
      %v5554 = vrot.slane %v5552, 5
      %v5555 = vor.u32 %v5551, %v5554
      %v5556 = vrot.slane %v5555, 4
      %v5558 = vshll.u32 %v5291, 16
      %v5560 = vrot.slane %v5558, 5
      %v5561 = vsel %vm1949, %v5556, %v5560
      %v5562 = vshrl.u32 %v5291, 16
      %v5564 = vrot.slane %v5562, 4
      %v5565 = vor.u32 %v5564, %v5560
      %v5566 = vrot.slane %v5565, 4
      %v5568 = vshll.u32 %v5292, 16
      %v5570 = vrot.slane %v5568, 5
      %v5571 = vsel %vm1949, %v5566, %v5570
      %v5573 = vshrl.u32 %v5293, 16
      %v5575 = vrot.slane %v5573, 4
      %v5576 = vshll.u32 %v5293, 16
      %v5578 = vrot.slane %v5576, 5
      %v5579 = vor.u32 %v5575, %v5578
      %v5580 = vrot.slane %v5579, 4
      %v5582 = vshll.u32 %v5294, 16
      %v5584 = vrot.slane %v5582, 5
      %v5585 = vsel %vm1949, %v5580, %v5584
      %v5586 = vshrl.u32 %v5294, 16
      %v5588 = vrot.slane %v5586, 4
      %v5589 = vor.u32 %v5588, %v5584
      %v5590 = vrot.slane %v5589, 4
      %v5592 = vshll.u32 %v5295, 16
      %v5594 = vrot.slane %v5592, 5
      %v5595 = vsel %vm1949, %v5590, %v5594
      %v5597 = vshrl.u32 %v5296, 16
      %v5599 = vrot.slane %v5597, 4
      %v5600 = vshll.u32 %v5296, 16
      %v5602 = vrot.slane %v5600, 5
      %v5603 = vor.u32 %v5599, %v5602
      %v5604 = vrot.slane %v5603, 4
      %v5606 = vshll.u32 %v5297, 16
      %v5608 = vrot.slane %v5606, 5
      %v5609 = vsel %vm1949, %v5604, %v5608
      %v5610 = vshrl.u32 %v5297, 16
      %v5612 = vrot.slane %v5610, 4
      %v5613 = vor.u32 %v5612, %v5608
      %v5614 = vrot.slane %v5613, 4
      %v5616 = vshll.u32 %v5298, 16
      %v5618 = vrot.slane %v5616, 5
      %v5619 = vsel %vm1949, %v5614, %v5618
      %v5621 = vshrl.u32 %v5299, 16
      %v5623 = vrot.slane %v5621, 4
      %v5624 = vshll.u32 %v5299, 16
      %v5626 = vrot.slane %v5624, 5
      %v5627 = vor.u32 %v5623, %v5626
      %v5628 = vrot.slane %v5627, 4
      %v5630 = vshll.u32 %v5300, 16
      %v5632 = vrot.slane %v5630, 5
      %v5633 = vsel %vm1949, %v5628, %v5632
      %v5634 = vshrl.u32 %v5300, 16
      %v5636 = vrot.slane %v5634, 4
      %v5637 = vor.u32 %v5636, %v5632
      %v5638 = vrot.slane %v5637, 4
      %v5640 = vshll.u32 %v5301, 16
      %v5642 = vrot.slane %v5640, 5
      %v5643 = vsel %vm1949, %v5638, %v5642
      %v5645 = vshrl.u32 %v5302, 16
      %v5647 = vrot.slane %v5645, 4
      %v5648 = vshll.u32 %v5302, 16
      %v5650 = vrot.slane %v5648, 5
      %v5651 = vor.u32 %v5647, %v5650
      %v5652 = vrot.slane %v5651, 4
      %v5654 = vshll.u32 %v5303, 16
      %v5656 = vrot.slane %v5654, 5
      %v5657 = vsel %vm1949, %v5652, %v5656
      %v5658 = vshrl.u32 %v5303, 16
      %v5660 = vrot.slane %v5658, 4
      %v5661 = vor.u32 %v5660, %v5656
      %v5662 = vrot.slane %v5661, 4
      %v5664 = vshll.u32 %v5304, 16
      %v5666 = vrot.slane %v5664, 5
      %v5667 = vsel %vm1949, %v5662, %v5666
      %v5669 = vshrl.u32 %v5305, 16
      %v5671 = vrot.slane %v5669, 4
      %v5672 = vshll.u32 %v5305, 16
      %v5674 = vrot.slane %v5672, 5
      %v5675 = vor.u32 %v5671, %v5674
      %v5676 = vrot.slane %v5675, 4
      %v5678 = vshll.u32 %v5306, 16
      %v5680 = vrot.slane %v5678, 5
      %v5681 = vsel %vm1949, %v5676, %v5680
      %v5682 = vshrl.u32 %v5306, 16
      %v5684 = vrot.slane %v5682, 4
      %v5685 = vor.u32 %v5684, %v5680
      %v5686 = vrot.slane %v5685, 4
      %v5688 = vshll.u32 %v5307, 16
      %v5690 = vrot.slane %v5688, 5
      %v5691 = vsel %vm1949, %v5686, %v5690
      %s5692 = scalar_lea.vmem %s3, 28
      %v5693 = vld [vmem:[%s5692] sm:$0xf]
      %v5694 = vunpack.c.l.b16 %v5321
      %v5695 = vunpack.c.l.b16 %v5331
      %v5696 = vunpack.c.l.b16 %v5345
      %v5697 = vunpack.c.l.b16 %v5355
      %v5698 = vunpack.c.l.b16 %v5369
      %v5699 = vunpack.c.l.b16 %v5379
      %v5700 = vunpack.c.l.b16 %v5393
      %v5701 = vunpack.c.l.b16 %v5403
      %v5702 = vunpack.c.l.b16 %v5417
      %v5703 = vunpack.c.l.b16 %v5427
      %v5704 = vunpack.c.l.b16 %v5441
      %v5705 = vunpack.c.l.b16 %v5451
      %v5706 = vunpack.c.l.b16 %v5465
      %v5707 = vunpack.c.l.b16 %v5475
      %v5708 = vunpack.c.l.b16 %v5489
      %v5709 = vunpack.c.l.b16 %v5499
      %v5710 = vunpack.c.l.b16 %v5513
      %v5711 = vunpack.c.l.b16 %v5523
      %v5712 = vunpack.c.l.b16 %v5537
      %v5713 = vunpack.c.l.b16 %v5547
      %v5714 = vunpack.c.l.b16 %v5561
      %v5715 = vunpack.c.l.b16 %v5571
      %v5716 = vunpack.c.l.b16 %v5585
      %v5717 = vunpack.c.l.b16 %v5595
      %v5718 = vunpack.c.l.b16 %v5609
      %v5719 = vunpack.c.l.b16 %v5619
      %v5720 = vunpack.c.l.b16 %v5633
      %v5721 = vunpack.c.l.b16 %v5643
      %v5722 = vunpack.c.l.b16 %v5657
      %v5723 = vunpack.c.l.b16 %v5667
      %v5724 = vunpack.c.l.b16 %v5681
      %v5725 = vunpack.c.l.b16 %v5691
      %v5726 = vpack.c.b16 %v5695, %v5694
      %v5727 = vpack.c.b16 %v5697, %v5696
      %v5728 = vpack.c.b16 %v5699, %v5698
      %v5729 = vpack.c.b16 %v5701, %v5700
      %v5730 = vpack.c.b16 %v5703, %v5702
      %v5731 = vpack.c.b16 %v5705, %v5704
      %v5732 = vpack.c.b16 %v5707, %v5706
      %v5733 = vpack.c.b16 %v5709, %v5708
      %v5734 = vpack.c.b16 %v5711, %v5710
      %v5735 = vpack.c.b16 %v5713, %v5712
      %v5736 = vpack.c.b16 %v5715, %v5714
      %v5737 = vpack.c.b16 %v5717, %v5716
      %v5738 = vpack.c.b16 %v5719, %v5718
      %v5739 = vpack.c.b16 %v5721, %v5720
      %v5740 = vpack.c.b16 %v5723, %v5722
      %v5741 = vpack.c.b16 %v5725, %v5724
      %v5743 = vsel %vm2384, %v5726, 0
      %v5746 = vsel %vm2384, %v5727, 0
      %v5749 = vsel %vm2384, %v5728, 0
      %v5752 = vsel %vm2384, %v5729, 0
      %v5755 = vsel %vm2384, %v5730, 0
      %v5758 = vsel %vm2384, %v5731, 0
      %v5761 = vsel %vm2384, %v5732, 0
      %v5764 = vsel %vm2384, %v5733, 0
      %v5767 = vsel %vm2384, %v5734, 0
      %v5770 = vsel %vm2384, %v5735, 0
      %v5773 = vsel %vm2384, %v5736, 0
      %v5776 = vsel %vm2384, %v5737, 0
      %v5779 = vsel %vm2384, %v5738, 0
      %v5782 = vsel %vm2384, %v5739, 0
      %v5785 = vsel %vm2384, %v5740, 0
      %v5788 = vsel %vm2384, %v5741, 0
      %v5791 = vsel %vm2433, %v5693, 0
      %5793 = vmatprep.subr.bf16.mxu0 0
      %5794 = vmatpush1.bf16.msra.mxu0 0
      %5795 = vmatprep.subr.bf16.mxu0 0
      %5796 = vmatpush1.bf16.msra.mxu0 0
      %5797 = vmatprep.subr.bf16.mxu0 0
      %5798 = vmatpush1.bf16.msra.mxu0 0
      %5799 = vmatprep.subr.bf16.mxu0 0
      %5800 = vmatpush1.bf16.msra.mxu0 0
      %5801 = vmatprep.subr.bf16.mxu0 0
      %5802 = vmatpush1.bf16.msra.mxu0 0
      %5803 = vmatprep.subr.bf16.mxu0 0
      %5804 = vmatpush1.bf16.msra.mxu0 0
      %5805 = vmatprep.subr.bf16.mxu0 0
      %5806 = vmatpush1.bf16.msra.mxu0 0
      %5807 = vmatprep.subr.bf16.mxu0 0
      %5808 = vmatpush1.bf16.msra.mxu0 %v5791
      %5809 = vmatprep.subr.bf16.mxu0 0
      %5810 = vmatpush2.bf16.msra.mxu0 0
      %5811 = vmatprep.subr.bf16.mxu0 0
      %5812 = vmatpush2.bf16.msra.mxu0 0
      %5813 = vmatprep.subr.bf16.mxu0 0
      %5814 = vmatpush2.bf16.msra.mxu0 0
      %5815 = vmatprep.subr.bf16.mxu0 0
      %5816 = vmatpush2.bf16.msra.mxu0 0
      %5817 = vmatprep.subr.bf16.mxu0 0
      %5818 = vmatpush2.bf16.msra.mxu0 0
      %5819 = vmatprep.subr.bf16.mxu0 0
      %5820 = vmatpush2.bf16.msra.mxu0 0
      %5821 = vmatprep.subr.bf16.mxu0 0
      %5822 = vmatpush2.bf16.msra.mxu0 0
      %5823 = vmatprep.subr.bf16.mxu0 0
      %5824 = vmatpush2.bf16.msra.mxu0 0
      %5825 = vmatprep.mubr.bf16.mxu0 0
      %5826 = vmatmul.mubr.bf16.gmra.mxu0 %v5743
      %v5827 = vpop.f32.mrf.mxu0
      %v5828 = vadd.f32 0.0, %v5827
      %v5829 = vpop.f32.mrf.mxu0
      %v5830 = vpop.f32.mrf.mxu0
      %v5831 = vadd.f32 0.0, %v5830
      %v5832 = vpop.f32.mrf.mxu0
      %5833 = vmatprep.mubr.bf16.mxu0 0
      %5834 = vmatmul.mubr.bf16.gmra.mxu0 %v5746
      %v5835 = vpop.f32.mrf.mxu0
      %v5836 = vadd.f32 0.0, %v5835
      %v5837 = vpop.f32.mrf.mxu0
      %v5838 = vpop.f32.mrf.mxu0
      %v5839 = vadd.f32 0.0, %v5838
      %v5840 = vpop.f32.mrf.mxu0
      %5841 = vmatprep.mubr.bf16.mxu0 0
      %5842 = vmatmul.mubr.bf16.gmra.mxu0 %v5749
      %v5843 = vpop.f32.mrf.mxu0
      %v5844 = vadd.f32 0.0, %v5843
      %v5845 = vpop.f32.mrf.mxu0
      %v5846 = vpop.f32.mrf.mxu0
      %v5847 = vadd.f32 0.0, %v5846
      %v5848 = vpop.f32.mrf.mxu0
      %5849 = vmatprep.mubr.bf16.mxu0 0
      %5850 = vmatmul.mubr.bf16.gmra.mxu0 %v5752
      %v5851 = vpop.f32.mrf.mxu0
      %v5852 = vadd.f32 0.0, %v5851
      %v5853 = vpop.f32.mrf.mxu0
      %v5854 = vpop.f32.mrf.mxu0
      %v5855 = vadd.f32 0.0, %v5854
      %v5856 = vpop.f32.mrf.mxu0
      %5857 = vmatprep.mubr.bf16.mxu0 0
      %5858 = vmatmul.mubr.bf16.gmra.mxu0 %v5755
      %v5859 = vpop.f32.mrf.mxu0
      %v5860 = vadd.f32 0.0, %v5859
      %v5861 = vpop.f32.mrf.mxu0
      %v5862 = vpop.f32.mrf.mxu0
      %v5863 = vadd.f32 0.0, %v5862
      %v5864 = vpop.f32.mrf.mxu0
      %5865 = vmatprep.mubr.bf16.mxu0 0
      %5866 = vmatmul.mubr.bf16.gmra.mxu0 %v5758
      %v5867 = vpop.f32.mrf.mxu0
      %v5868 = vadd.f32 0.0, %v5867
      %v5869 = vpop.f32.mrf.mxu0
      %v5870 = vpop.f32.mrf.mxu0
      %v5871 = vadd.f32 0.0, %v5870
      %v5872 = vpop.f32.mrf.mxu0
      %5873 = vmatprep.mubr.bf16.mxu0 0
      %5874 = vmatmul.mubr.bf16.gmra.mxu0 %v5761
      %v5875 = vpop.f32.mrf.mxu0
      %v5876 = vadd.f32 0.0, %v5875
      %v5877 = vpop.f32.mrf.mxu0
      %v5878 = vpop.f32.mrf.mxu0
      %v5879 = vadd.f32 0.0, %v5878
      %v5880 = vpop.f32.mrf.mxu0
      %5881 = vmatprep.mubr.bf16.mxu0 0
      %5882 = vmatmul.mubr.bf16.gmra.mxu0 %v5764
      %v5883 = vpop.f32.mrf.mxu0
      %v5884 = vadd.f32 0.0, %v5883
      %v5885 = vpop.f32.mrf.mxu0
      %v5886 = vpop.f32.mrf.mxu0
      %v5887 = vadd.f32 0.0, %v5886
      %v5888 = vpop.f32.mrf.mxu0
      %5889 = vmatprep.mubr.bf16.mxu0 0
      %5890 = vmatmul.mubr.bf16.gmra.mxu0 %v5767
      %v5891 = vpop.f32.mrf.mxu0
      %v5892 = vadd.f32 0.0, %v5891
      %v5893 = vpop.f32.mrf.mxu0
      %v5894 = vpop.f32.mrf.mxu0
      %v5895 = vadd.f32 0.0, %v5894
      %v5896 = vpop.f32.mrf.mxu0
      %5897 = vmatprep.mubr.bf16.mxu0 0
      %5898 = vmatmul.mubr.bf16.gmra.mxu0 %v5770
      %v5899 = vpop.f32.mrf.mxu0
      %v5900 = vadd.f32 0.0, %v5899
      %v5901 = vpop.f32.mrf.mxu0
      %v5902 = vpop.f32.mrf.mxu0
      %v5903 = vadd.f32 0.0, %v5902
      %v5904 = vpop.f32.mrf.mxu0
      %5905 = vmatprep.mubr.bf16.mxu0 0
      %5906 = vmatmul.mubr.bf16.gmra.mxu0 %v5773
      %v5907 = vpop.f32.mrf.mxu0
      %v5908 = vadd.f32 0.0, %v5907
      %v5909 = vpop.f32.mrf.mxu0
      %v5910 = vpop.f32.mrf.mxu0
      %v5911 = vadd.f32 0.0, %v5910
      %v5912 = vpop.f32.mrf.mxu0
      %5913 = vmatprep.mubr.bf16.mxu0 0
      %5914 = vmatmul.mubr.bf16.gmra.mxu0 %v5776
      %v5915 = vpop.f32.mrf.mxu0
      %v5916 = vadd.f32 0.0, %v5915
      %v5917 = vpop.f32.mrf.mxu0
      %v5918 = vpop.f32.mrf.mxu0
      %v5919 = vadd.f32 0.0, %v5918
      %v5920 = vpop.f32.mrf.mxu0
      %5921 = vmatprep.mubr.bf16.mxu0 0
      %5922 = vmatmul.mubr.bf16.gmra.mxu0 %v5779
      %v5923 = vpop.f32.mrf.mxu0
      %v5924 = vadd.f32 0.0, %v5923
      %v5925 = vpop.f32.mrf.mxu0
      %v5926 = vpop.f32.mrf.mxu0
      %v5927 = vadd.f32 0.0, %v5926
      %v5928 = vpop.f32.mrf.mxu0
      %5929 = vmatprep.mubr.bf16.mxu0 0
      %5930 = vmatmul.mubr.bf16.gmra.mxu0 %v5782
      %v5931 = vpop.f32.mrf.mxu0
      %v5932 = vadd.f32 0.0, %v5931
      %v5933 = vpop.f32.mrf.mxu0
      %v5934 = vpop.f32.mrf.mxu0
      %v5935 = vadd.f32 0.0, %v5934
      %v5936 = vpop.f32.mrf.mxu0
      %5937 = vmatprep.mubr.bf16.mxu0 0
      %5938 = vmatmul.mubr.bf16.gmra.mxu0 %v5785
      %v5939 = vpop.f32.mrf.mxu0
      %v5940 = vadd.f32 0.0, %v5939
      %v5941 = vpop.f32.mrf.mxu0
      %v5942 = vpop.f32.mrf.mxu0
      %v5943 = vadd.f32 0.0, %v5942
      %v5944 = vpop.f32.mrf.mxu0
      %5945 = vmatprep.mubr.bf16.mxu0 0
      %5946 = vmatmul.mubr.bf16.gmra.mxu0 %v5788
      %v5947 = vpop.f32.mrf.mxu0
      %v5948 = vadd.f32 0.0, %v5947
      %v5949 = vpop.f32.mrf.mxu0
      %v5950 = vpop.f32.mrf.mxu0
      %v5951 = vadd.f32 0.0, %v5950
      %v5952 = vpop.f32.mrf.mxu0
      %5953 = vdwg.mxu0
      %v5954 = vadd.f32 %v5228, %v5828
      %v5955 = vadd.f32 %v5229, %v5831
      %v5956 = vadd.f32 %v5230, %v5836
      %v5957 = vadd.f32 %v5231, %v5839
      %v5958 = vadd.f32 %v5232, %v5844
      %v5959 = vadd.f32 %v5233, %v5847
      %v5960 = vadd.f32 %v5234, %v5852
      %v5961 = vadd.f32 %v5235, %v5855
      %v5962 = vadd.f32 %v5236, %v5860
      %v5963 = vadd.f32 %v5237, %v5863
      %v5964 = vadd.f32 %v5238, %v5868
      %v5965 = vadd.f32 %v5239, %v5871
      %v5966 = vadd.f32 %v5240, %v5876
      %v5967 = vadd.f32 %v5241, %v5879
      %v5968 = vadd.f32 %v5242, %v5884
      %v5969 = vadd.f32 %v5243, %v5887
      %v5970 = vadd.f32 %v5244, %v5892
      %v5971 = vadd.f32 %v5245, %v5895
      %v5972 = vadd.f32 %v5246, %v5900
      %v5973 = vadd.f32 %v5247, %v5903
      %v5974 = vadd.f32 %v5248, %v5908
      %v5975 = vadd.f32 %v5249, %v5911
      %v5976 = vadd.f32 %v5250, %v5916
      %v5977 = vadd.f32 %v5251, %v5919
      %v5978 = vadd.f32 %v5252, %v5924
      %v5979 = vadd.f32 %v5253, %v5927
      %v5980 = vadd.f32 %v5254, %v5932
      %v5981 = vadd.f32 %v5255, %v5935
      %v5982 = vadd.f32 %v5256, %v5940
      %v5983 = vadd.f32 %v5257, %v5943
      %v5984 = vadd.f32 %v5258, %v5948
      %v5985 = vadd.f32 %v5259, %v5951
      %v5986 = vld [vmem:[%s4901] sm:$0xe]
      %v5987 = vld [vmem:[%s4901 + $0xc] sm:$0xe]
      %v5988 = vld [vmem:[%s4901 + $0x18] sm:$0xe]
      %v5989 = vld [vmem:[%s4901 + $0x24] sm:$0xe]
      %v5990 = vld [vmem:[%s4901 + $0x30] sm:$0xe]
      %v5991 = vld [vmem:[%s4901 + $0x3c] sm:$0xe]
      %v5992 = vld [vmem:[%s4901 + $0x48] sm:$0xe]
      %v5993 = vld [vmem:[%s4901 + $0x54] sm:$0xe]
      %v5994 = vld [vmem:[%s4901 + $0x60] sm:$0xe]
      %v5995 = vld [vmem:[%s4901 + $0x6c] sm:$0xe]
      %v5996 = vld [vmem:[%s4901 + $0x78] sm:$0xe]
      %v5997 = vld [vmem:[%s4901 + $0x84] sm:$0xe]
      %v5998 = vld [vmem:[%s4901 + $0x90] sm:$0xe]
      %v5999 = vld [vmem:[%s4901 + $0x9c] sm:$0xe]
      %v6000 = vld [vmem:[%s4901 + $0xa8] sm:$0xe]
      %v6001 = vld [vmem:[%s4901 + $0xb4] sm:$0xe]
      %v6050 = vrot.slane %v5986, 5
      %v6051 = vrot.slane %v6050, 4
      %v6052 = vrot.slane %v5261, 5
      %v6053 = vsel %vm2940, %v6051, %v6052
      %v6054 = vrot.slane %v6052, 4
      %v6055 = vrot.slane %v5262, 5
      %v6056 = vsel %vm2940, %v6054, %v6055
      %v6057 = vrot.slane %v5987, 5
      %v6058 = vrot.slane %v6057, 4
      %v6059 = vrot.slane %v5264, 5
      %v6060 = vsel %vm2940, %v6058, %v6059
      %v6061 = vrot.slane %v6059, 4
      %v6062 = vrot.slane %v5265, 5
      %v6063 = vsel %vm2940, %v6061, %v6062
      %v6064 = vrot.slane %v5988, 5
      %v6065 = vrot.slane %v6064, 4
      %v6066 = vrot.slane %v5267, 5
      %v6067 = vsel %vm2940, %v6065, %v6066
      %v6068 = vrot.slane %v6066, 4
      %v6069 = vrot.slane %v5268, 5
      %v6070 = vsel %vm2940, %v6068, %v6069
      %v6071 = vrot.slane %v5989, 5
      %v6072 = vrot.slane %v6071, 4
      %v6073 = vrot.slane %v5270, 5
      %v6074 = vsel %vm2940, %v6072, %v6073
      %v6075 = vrot.slane %v6073, 4
      %v6076 = vrot.slane %v5271, 5
      %v6077 = vsel %vm2940, %v6075, %v6076
      %v6078 = vrot.slane %v5990, 5
      %v6079 = vrot.slane %v6078, 4
      %v6080 = vrot.slane %v5273, 5
      %v6081 = vsel %vm2940, %v6079, %v6080
      %v6082 = vrot.slane %v6080, 4
      %v6083 = vrot.slane %v5274, 5
      %v6084 = vsel %vm2940, %v6082, %v6083
      %v6085 = vrot.slane %v5991, 5
      %v6086 = vrot.slane %v6085, 4
      %v6087 = vrot.slane %v5276, 5
      %v6088 = vsel %vm2940, %v6086, %v6087
      %v6089 = vrot.slane %v6087, 4
      %v6090 = vrot.slane %v5277, 5
      %v6091 = vsel %vm2940, %v6089, %v6090
      %v6092 = vrot.slane %v5992, 5
      %v6093 = vrot.slane %v6092, 4
      %v6094 = vrot.slane %v5279, 5
      %v6095 = vsel %vm2940, %v6093, %v6094
      %v6096 = vrot.slane %v6094, 4
      %v6097 = vrot.slane %v5280, 5
      %v6098 = vsel %vm2940, %v6096, %v6097
      %v6099 = vrot.slane %v5993, 5
      %v6100 = vrot.slane %v6099, 4
      %v6101 = vrot.slane %v5282, 5
      %v6102 = vsel %vm2940, %v6100, %v6101
      %v6103 = vrot.slane %v6101, 4
      %v6104 = vrot.slane %v5283, 5
      %v6105 = vsel %vm2940, %v6103, %v6104
      %v6106 = vrot.slane %v5994, 5
      %v6107 = vrot.slane %v6106, 4
      %v6108 = vrot.slane %v5285, 5
      %v6109 = vsel %vm2940, %v6107, %v6108
      %v6110 = vrot.slane %v6108, 4
      %v6111 = vrot.slane %v5286, 5
      %v6112 = vsel %vm2940, %v6110, %v6111
      %v6113 = vrot.slane %v5995, 5
      %v6114 = vrot.slane %v6113, 4
      %v6115 = vrot.slane %v5288, 5
      %v6116 = vsel %vm2940, %v6114, %v6115
      %v6117 = vrot.slane %v6115, 4
      %v6118 = vrot.slane %v5289, 5
      %v6119 = vsel %vm2940, %v6117, %v6118
      %v6120 = vrot.slane %v5996, 5
      %v6121 = vrot.slane %v6120, 4
      %v6122 = vrot.slane %v5291, 5
      %v6123 = vsel %vm2940, %v6121, %v6122
      %v6124 = vrot.slane %v6122, 4
      %v6125 = vrot.slane %v5292, 5
      %v6126 = vsel %vm2940, %v6124, %v6125
      %v6127 = vrot.slane %v5997, 5
      %v6128 = vrot.slane %v6127, 4
      %v6129 = vrot.slane %v5294, 5
      %v6130 = vsel %vm2940, %v6128, %v6129
      %v6131 = vrot.slane %v6129, 4
      %v6132 = vrot.slane %v5295, 5
      %v6133 = vsel %vm2940, %v6131, %v6132
      %v6134 = vrot.slane %v5998, 5
      %v6135 = vrot.slane %v6134, 4
      %v6136 = vrot.slane %v5297, 5
      %v6137 = vsel %vm2940, %v6135, %v6136
      %v6138 = vrot.slane %v6136, 4
      %v6139 = vrot.slane %v5298, 5
      %v6140 = vsel %vm2940, %v6138, %v6139
      %v6141 = vrot.slane %v5999, 5
      %v6142 = vrot.slane %v6141, 4
      %v6143 = vrot.slane %v5300, 5
      %v6144 = vsel %vm2940, %v6142, %v6143
      %v6145 = vrot.slane %v6143, 4
      %v6146 = vrot.slane %v5301, 5
      %v6147 = vsel %vm2940, %v6145, %v6146
      %v6148 = vrot.slane %v6000, 5
      %v6149 = vrot.slane %v6148, 4
      %v6150 = vrot.slane %v5303, 5
      %v6151 = vsel %vm2940, %v6149, %v6150
      %v6152 = vrot.slane %v6150, 4
      %v6153 = vrot.slane %v5304, 5
      %v6154 = vsel %vm2940, %v6152, %v6153
      %v6155 = vrot.slane %v6001, 5
      %v6156 = vrot.slane %v6155, 4
      %v6157 = vrot.slane %v5306, 5
      %v6158 = vsel %vm2940, %v6156, %v6157
      %v6159 = vrot.slane %v6157, 4
      %v6160 = vrot.slane %v5307, 5
      %v6161 = vsel %vm2940, %v6159, %v6160
      %s6162 = scalar_lea.vmem %s3, 32
      %v6163 = vld [vmem:[%s6162] sm:$0xf]
      %v6164 = vunpack.c.l.b16 %v6053
      %v6165 = vunpack.c.l.b16 %v6056
      %v6166 = vunpack.c.l.b16 %v6060
      %v6167 = vunpack.c.l.b16 %v6063
      %v6168 = vunpack.c.l.b16 %v6067
      %v6169 = vunpack.c.l.b16 %v6070
      %v6170 = vunpack.c.l.b16 %v6074
      %v6171 = vunpack.c.l.b16 %v6077
      %v6172 = vunpack.c.l.b16 %v6081
      %v6173 = vunpack.c.l.b16 %v6084
      %v6174 = vunpack.c.l.b16 %v6088
      %v6175 = vunpack.c.l.b16 %v6091
      %v6176 = vunpack.c.l.b16 %v6095
      %v6177 = vunpack.c.l.b16 %v6098
      %v6178 = vunpack.c.l.b16 %v6102
      %v6179 = vunpack.c.l.b16 %v6105
      %v6180 = vunpack.c.l.b16 %v6109
      %v6181 = vunpack.c.l.b16 %v6112
      %v6182 = vunpack.c.l.b16 %v6116
      %v6183 = vunpack.c.l.b16 %v6119
      %v6184 = vunpack.c.l.b16 %v6123
      %v6185 = vunpack.c.l.b16 %v6126
      %v6186 = vunpack.c.l.b16 %v6130
      %v6187 = vunpack.c.l.b16 %v6133
      %v6188 = vunpack.c.l.b16 %v6137
      %v6189 = vunpack.c.l.b16 %v6140
      %v6190 = vunpack.c.l.b16 %v6144
      %v6191 = vunpack.c.l.b16 %v6147
      %v6192 = vunpack.c.l.b16 %v6151
      %v6193 = vunpack.c.l.b16 %v6154
      %v6194 = vunpack.c.l.b16 %v6158
      %v6195 = vunpack.c.l.b16 %v6161
      %v6196 = vpack.c.b16 %v6165, %v6164
      %v6197 = vpack.c.b16 %v6167, %v6166
      %v6198 = vpack.c.b16 %v6169, %v6168
      %v6199 = vpack.c.b16 %v6171, %v6170
      %v6200 = vpack.c.b16 %v6173, %v6172
      %v6201 = vpack.c.b16 %v6175, %v6174
      %v6202 = vpack.c.b16 %v6177, %v6176
      %v6203 = vpack.c.b16 %v6179, %v6178
      %v6204 = vpack.c.b16 %v6181, %v6180
      %v6205 = vpack.c.b16 %v6183, %v6182
      %v6206 = vpack.c.b16 %v6185, %v6184
      %v6207 = vpack.c.b16 %v6187, %v6186
      %v6208 = vpack.c.b16 %v6189, %v6188
      %v6209 = vpack.c.b16 %v6191, %v6190
      %v6210 = vpack.c.b16 %v6193, %v6192
      %v6211 = vpack.c.b16 %v6195, %v6194
      %v6213 = vsel %vm2384, %v6196, 0
      %v6216 = vsel %vm2384, %v6197, 0
      %v6219 = vsel %vm2384, %v6198, 0
      %v6222 = vsel %vm2384, %v6199, 0
      %v6225 = vsel %vm2384, %v6200, 0
      %v6228 = vsel %vm2384, %v6201, 0
      %v6231 = vsel %vm2384, %v6202, 0
      %v6234 = vsel %vm2384, %v6203, 0
      %v6237 = vsel %vm2384, %v6204, 0
      %v6240 = vsel %vm2384, %v6205, 0
      %v6243 = vsel %vm2384, %v6206, 0
      %v6246 = vsel %vm2384, %v6207, 0
      %v6249 = vsel %vm2384, %v6208, 0
      %v6252 = vsel %vm2384, %v6209, 0
      %v6255 = vsel %vm2384, %v6210, 0
      %v6258 = vsel %vm2384, %v6211, 0
      %v6261 = vsel %vm2433, %v6163, 0
      %6263 = vmatprep.subr.bf16.mxu0 0
      %6264 = vmatpush1.bf16.msra.mxu0 0
      %6265 = vmatprep.subr.bf16.mxu0 0
      %6266 = vmatpush1.bf16.msra.mxu0 0
      %6267 = vmatprep.subr.bf16.mxu0 0
      %6268 = vmatpush1.bf16.msra.mxu0 0
      %6269 = vmatprep.subr.bf16.mxu0 0
      %6270 = vmatpush1.bf16.msra.mxu0 0
      %6271 = vmatprep.subr.bf16.mxu0 0
      %6272 = vmatpush1.bf16.msra.mxu0 0
      %6273 = vmatprep.subr.bf16.mxu0 0
      %6274 = vmatpush1.bf16.msra.mxu0 0
      %6275 = vmatprep.subr.bf16.mxu0 0
      %6276 = vmatpush1.bf16.msra.mxu0 0
      %6277 = vmatprep.subr.bf16.mxu0 0
      %6278 = vmatpush1.bf16.msra.mxu0 %v6261
      %6279 = vmatprep.subr.bf16.mxu0 0
      %6280 = vmatpush2.bf16.msra.mxu0 0
      %6281 = vmatprep.subr.bf16.mxu0 0
      %6282 = vmatpush2.bf16.msra.mxu0 0
      %6283 = vmatprep.subr.bf16.mxu0 0
      %6284 = vmatpush2.bf16.msra.mxu0 0
      %6285 = vmatprep.subr.bf16.mxu0 0
      %6286 = vmatpush2.bf16.msra.mxu0 0
      %6287 = vmatprep.subr.bf16.mxu0 0
      %6288 = vmatpush2.bf16.msra.mxu0 0
      %6289 = vmatprep.subr.bf16.mxu0 0
      %6290 = vmatpush2.bf16.msra.mxu0 0
      %6291 = vmatprep.subr.bf16.mxu0 0
      %6292 = vmatpush2.bf16.msra.mxu0 0
      %6293 = vmatprep.subr.bf16.mxu0 0
      %6294 = vmatpush2.bf16.msra.mxu0 0
      %6295 = vmatprep.mubr.bf16.mxu0 0
      %6296 = vmatmul.mubr.bf16.gmra.mxu0 %v6213
      %v6297 = vpop.f32.mrf.mxu0
      %v6298 = vadd.f32 0.0, %v6297
      %v6299 = vpop.f32.mrf.mxu0
      %v6300 = vpop.f32.mrf.mxu0
      %v6301 = vadd.f32 0.0, %v6300
      %v6302 = vpop.f32.mrf.mxu0
      %6303 = vmatprep.mubr.bf16.mxu0 0
      %6304 = vmatmul.mubr.bf16.gmra.mxu0 %v6216
      %v6305 = vpop.f32.mrf.mxu0
      %v6306 = vadd.f32 0.0, %v6305
      %v6307 = vpop.f32.mrf.mxu0
      %v6308 = vpop.f32.mrf.mxu0
      %v6309 = vadd.f32 0.0, %v6308
      %v6310 = vpop.f32.mrf.mxu0
      %6311 = vmatprep.mubr.bf16.mxu0 0
      %6312 = vmatmul.mubr.bf16.gmra.mxu0 %v6219
      %v6313 = vpop.f32.mrf.mxu0
      %v6314 = vadd.f32 0.0, %v6313
      %v6315 = vpop.f32.mrf.mxu0
      %v6316 = vpop.f32.mrf.mxu0
      %v6317 = vadd.f32 0.0, %v6316
      %v6318 = vpop.f32.mrf.mxu0
      %6319 = vmatprep.mubr.bf16.mxu0 0
      %6320 = vmatmul.mubr.bf16.gmra.mxu0 %v6222
      %v6321 = vpop.f32.mrf.mxu0
      %v6322 = vadd.f32 0.0, %v6321
      %v6323 = vpop.f32.mrf.mxu0
      %v6324 = vpop.f32.mrf.mxu0
      %v6325 = vadd.f32 0.0, %v6324
      %v6326 = vpop.f32.mrf.mxu0
      %6327 = vmatprep.mubr.bf16.mxu0 0
      %6328 = vmatmul.mubr.bf16.gmra.mxu0 %v6225
      %v6329 = vpop.f32.mrf.mxu0
      %v6330 = vadd.f32 0.0, %v6329
      %v6331 = vpop.f32.mrf.mxu0
      %v6332 = vpop.f32.mrf.mxu0
      %v6333 = vadd.f32 0.0, %v6332
      %v6334 = vpop.f32.mrf.mxu0
      %6335 = vmatprep.mubr.bf16.mxu0 0
      %6336 = vmatmul.mubr.bf16.gmra.mxu0 %v6228
      %v6337 = vpop.f32.mrf.mxu0
      %v6338 = vadd.f32 0.0, %v6337
      %v6339 = vpop.f32.mrf.mxu0
      %v6340 = vpop.f32.mrf.mxu0
      %v6341 = vadd.f32 0.0, %v6340
      %v6342 = vpop.f32.mrf.mxu0
      %6343 = vmatprep.mubr.bf16.mxu0 0
      %6344 = vmatmul.mubr.bf16.gmra.mxu0 %v6231
      %v6345 = vpop.f32.mrf.mxu0
      %v6346 = vadd.f32 0.0, %v6345
      %v6347 = vpop.f32.mrf.mxu0
      %v6348 = vpop.f32.mrf.mxu0
      %v6349 = vadd.f32 0.0, %v6348
      %v6350 = vpop.f32.mrf.mxu0
      %6351 = vmatprep.mubr.bf16.mxu0 0
      %6352 = vmatmul.mubr.bf16.gmra.mxu0 %v6234
      %v6353 = vpop.f32.mrf.mxu0
      %v6354 = vadd.f32 0.0, %v6353
      %v6355 = vpop.f32.mrf.mxu0
      %v6356 = vpop.f32.mrf.mxu0
      %v6357 = vadd.f32 0.0, %v6356
      %v6358 = vpop.f32.mrf.mxu0
      %6359 = vmatprep.mubr.bf16.mxu0 0
      %6360 = vmatmul.mubr.bf16.gmra.mxu0 %v6237
      %v6361 = vpop.f32.mrf.mxu0
      %v6362 = vadd.f32 0.0, %v6361
      %v6363 = vpop.f32.mrf.mxu0
      %v6364 = vpop.f32.mrf.mxu0
      %v6365 = vadd.f32 0.0, %v6364
      %v6366 = vpop.f32.mrf.mxu0
      %6367 = vmatprep.mubr.bf16.mxu0 0
      %6368 = vmatmul.mubr.bf16.gmra.mxu0 %v6240
      %v6369 = vpop.f32.mrf.mxu0
      %v6370 = vadd.f32 0.0, %v6369
      %v6371 = vpop.f32.mrf.mxu0
      %v6372 = vpop.f32.mrf.mxu0
      %v6373 = vadd.f32 0.0, %v6372
      %v6374 = vpop.f32.mrf.mxu0
      %6375 = vmatprep.mubr.bf16.mxu0 0
      %6376 = vmatmul.mubr.bf16.gmra.mxu0 %v6243
      %v6377 = vpop.f32.mrf.mxu0
      %v6378 = vadd.f32 0.0, %v6377
      %v6379 = vpop.f32.mrf.mxu0
      %v6380 = vpop.f32.mrf.mxu0
      %v6381 = vadd.f32 0.0, %v6380
      %v6382 = vpop.f32.mrf.mxu0
      %6383 = vmatprep.mubr.bf16.mxu0 0
      %6384 = vmatmul.mubr.bf16.gmra.mxu0 %v6246
      %v6385 = vpop.f32.mrf.mxu0
      %v6386 = vadd.f32 0.0, %v6385
      %v6387 = vpop.f32.mrf.mxu0
      %v6388 = vpop.f32.mrf.mxu0
      %v6389 = vadd.f32 0.0, %v6388
      %v6390 = vpop.f32.mrf.mxu0
      %6391 = vmatprep.mubr.bf16.mxu0 0
      %6392 = vmatmul.mubr.bf16.gmra.mxu0 %v6249
      %v6393 = vpop.f32.mrf.mxu0
      %v6394 = vadd.f32 0.0, %v6393
      %v6395 = vpop.f32.mrf.mxu0
      %v6396 = vpop.f32.mrf.mxu0
      %v6397 = vadd.f32 0.0, %v6396
      %v6398 = vpop.f32.mrf.mxu0
      %6399 = vmatprep.mubr.bf16.mxu0 0
      %6400 = vmatmul.mubr.bf16.gmra.mxu0 %v6252
      %v6401 = vpop.f32.mrf.mxu0
      %v6402 = vadd.f32 0.0, %v6401
      %v6403 = vpop.f32.mrf.mxu0
      %v6404 = vpop.f32.mrf.mxu0
      %v6405 = vadd.f32 0.0, %v6404
      %v6406 = vpop.f32.mrf.mxu0
      %6407 = vmatprep.mubr.bf16.mxu0 0
      %6408 = vmatmul.mubr.bf16.gmra.mxu0 %v6255
      %v6409 = vpop.f32.mrf.mxu0
      %v6410 = vadd.f32 0.0, %v6409
      %v6411 = vpop.f32.mrf.mxu0
      %v6412 = vpop.f32.mrf.mxu0
      %v6413 = vadd.f32 0.0, %v6412
      %v6414 = vpop.f32.mrf.mxu0
      %6415 = vmatprep.mubr.bf16.mxu0 0
      %6416 = vmatmul.mubr.bf16.gmra.mxu0 %v6258
      %v6417 = vpop.f32.mrf.mxu0
      %v6418 = vadd.f32 0.0, %v6417
      %v6419 = vpop.f32.mrf.mxu0
      %v6420 = vpop.f32.mrf.mxu0
      %v6421 = vadd.f32 0.0, %v6420
      %v6422 = vpop.f32.mrf.mxu0
      %6423 = vdwg.mxu0
      %v6424 = vadd.f32 %v5954, %v6298
      %v6425 = vadd.f32 %v5955, %v6301
      %v6426 = vadd.f32 %v5956, %v6306
      %v6427 = vadd.f32 %v5957, %v6309
      %v6428 = vadd.f32 %v5958, %v6314
      %v6429 = vadd.f32 %v5959, %v6317
      %v6430 = vadd.f32 %v5960, %v6322
      %v6431 = vadd.f32 %v5961, %v6325
      %v6432 = vadd.f32 %v5962, %v6330
      %v6433 = vadd.f32 %v5963, %v6333
      %v6434 = vadd.f32 %v5964, %v6338
      %v6435 = vadd.f32 %v5965, %v6341
      %v6436 = vadd.f32 %v5966, %v6346
      %v6437 = vadd.f32 %v5967, %v6349
      %v6438 = vadd.f32 %v5968, %v6354
      %v6439 = vadd.f32 %v5969, %v6357
      %v6440 = vadd.f32 %v5970, %v6362
      %v6441 = vadd.f32 %v5971, %v6365
      %v6442 = vadd.f32 %v5972, %v6370
      %v6443 = vadd.f32 %v5973, %v6373
      %v6444 = vadd.f32 %v5974, %v6378
      %v6445 = vadd.f32 %v5975, %v6381
      %v6446 = vadd.f32 %v5976, %v6386
      %v6447 = vadd.f32 %v5977, %v6389
      %v6448 = vadd.f32 %v5978, %v6394
      %v6449 = vadd.f32 %v5979, %v6397
      %v6450 = vadd.f32 %v5980, %v6402
      %v6451 = vadd.f32 %v5981, %v6405
      %v6452 = vadd.f32 %v5982, %v6410
      %v6453 = vadd.f32 %v5983, %v6413
      %v6454 = vadd.f32 %v5984, %v6418
      %v6455 = vadd.f32 %v5985, %v6421
      %v6456 = vsel %vm2384, %v6424, 0.0
      %v6457 = vsel %vm2384, %v6425, 0.0
      %v6458 = vadd.f32 %v6456, %v6457
      %v6459 = vsel %vm2384, %v6426, 0.0
      %v6460 = vadd.f32 %v6458, %v6459
      %v6461 = vsel %vm2384, %v6427, 0.0
      %v6462 = vadd.f32 %v6460, %v6461
      %v6463 = vsel %vm2384, %v6428, 0.0
      %v6464 = vadd.f32 %v6462, %v6463
      %v6465 = vsel %vm2384, %v6429, 0.0
      %v6466 = vadd.f32 %v6464, %v6465
      %v6467 = vsel %vm2384, %v6430, 0.0
      %v6468 = vadd.f32 %v6466, %v6467
      %v6469 = vsel %vm2384, %v6431, 0.0
      %v6470 = vadd.f32 %v6468, %v6469
      %v6471 = vsel %vm2384, %v6432, 0.0
      %v6472 = vadd.f32 %v6470, %v6471
      %v6473 = vsel %vm2384, %v6433, 0.0
      %v6474 = vadd.f32 %v6472, %v6473
      %v6475 = vsel %vm2384, %v6434, 0.0
      %v6476 = vadd.f32 %v6474, %v6475
      %v6477 = vsel %vm2384, %v6435, 0.0
      %v6478 = vadd.f32 %v6476, %v6477
      %v6479 = vsel %vm2384, %v6436, 0.0
      %v6480 = vadd.f32 %v6478, %v6479
      %v6481 = vsel %vm2384, %v6437, 0.0
      %v6482 = vadd.f32 %v6480, %v6481
      %v6483 = vsel %vm2384, %v6438, 0.0
      %v6484 = vadd.f32 %v6482, %v6483
      %v6485 = vsel %vm2384, %v6439, 0.0
      %v6486 = vadd.f32 %v6484, %v6485
      %v6487 = vsel %vm2384, %v6440, 0.0
      %v6488 = vadd.f32 %v6486, %v6487
      %v6489 = vsel %vm2384, %v6441, 0.0
      %v6490 = vadd.f32 %v6488, %v6489
      %v6491 = vsel %vm2384, %v6442, 0.0
      %v6492 = vadd.f32 %v6490, %v6491
      %v6493 = vsel %vm2384, %v6443, 0.0
      %v6494 = vadd.f32 %v6492, %v6493
      %v6495 = vsel %vm2384, %v6444, 0.0
      %v6496 = vadd.f32 %v6494, %v6495
      %v6497 = vsel %vm2384, %v6445, 0.0
      %v6498 = vadd.f32 %v6496, %v6497
      %v6499 = vsel %vm2384, %v6446, 0.0
      %v6500 = vadd.f32 %v6498, %v6499
      %v6501 = vsel %vm2384, %v6447, 0.0
      %v6502 = vadd.f32 %v6500, %v6501
      %v6503 = vsel %vm2384, %v6448, 0.0
      %v6504 = vadd.f32 %v6502, %v6503
      %v6505 = vsel %vm2384, %v6449, 0.0
      %v6506 = vadd.f32 %v6504, %v6505
      %v6507 = vsel %vm2384, %v6450, 0.0
      %v6508 = vadd.f32 %v6506, %v6507
      %v6509 = vsel %vm2384, %v6451, 0.0
      %v6510 = vadd.f32 %v6508, %v6509
      %v6511 = vsel %vm2384, %v6452, 0.0
      %v6512 = vadd.f32 %v6510, %v6511
      %v6513 = vsel %vm2384, %v6453, 0.0
      %v6514 = vadd.f32 %v6512, %v6513
      %v6515 = vsel %vm2384, %v6454, 0.0
      %v6516 = vadd.f32 %v6514, %v6515
      %v6517 = vsel %vm2384, %v6455, 0.0
      %v6518 = vadd.f32 %v6516, %v6517
      %v6519 = vrot.slane %v6518, 4
      %v6520 = vadd.f32 %v6518, %v6519
      %v6521 = vrot.slane %v6520, 2
      %v6522 = vadd.f32 %v6520, %v6521
      %v6523 = vrot.slane %v6522, 1
      %v6524 = vadd.f32 %v6522, %v6523
      %v6525 = vmul.f32 %v6424, %v6424
      %v6526 = vmul.f32 %v6425, %v6425
      %v6527 = vmul.f32 %v6426, %v6426
      %v6528 = vmul.f32 %v6427, %v6427
      %v6529 = vmul.f32 %v6428, %v6428
      %v6530 = vmul.f32 %v6429, %v6429
      %v6531 = vmul.f32 %v6430, %v6430
      %v6532 = vmul.f32 %v6431, %v6431
      %v6533 = vmul.f32 %v6432, %v6432
      %v6534 = vmul.f32 %v6433, %v6433
      %v6535 = vmul.f32 %v6434, %v6434
      %v6536 = vmul.f32 %v6435, %v6435
      %v6537 = vmul.f32 %v6436, %v6436
      %v6538 = vmul.f32 %v6437, %v6437
      %v6539 = vmul.f32 %v6438, %v6438
      %v6540 = vmul.f32 %v6439, %v6439
      %v6541 = vmul.f32 %v6440, %v6440
      %v6542 = vmul.f32 %v6441, %v6441
      %v6543 = vmul.f32 %v6442, %v6442
      %v6544 = vmul.f32 %v6443, %v6443
      %v6545 = vmul.f32 %v6444, %v6444
      %v6546 = vmul.f32 %v6445, %v6445
      %v6547 = vmul.f32 %v6446, %v6446
      %v6548 = vmul.f32 %v6447, %v6447
      %v6549 = vmul.f32 %v6448, %v6448
      %v6550 = vmul.f32 %v6449, %v6449
      %v6551 = vmul.f32 %v6450, %v6450
      %v6552 = vmul.f32 %v6451, %v6451
      %v6553 = vmul.f32 %v6452, %v6452
      %v6554 = vmul.f32 %v6453, %v6453
      %v6555 = vmul.f32 %v6454, %v6454
      %v6556 = vmul.f32 %v6455, %v6455
      %v6557 = vsel %vm2384, %v6525, 0.0
      %v6558 = vsel %vm2384, %v6526, 0.0
      %v6559 = vadd.f32 %v6557, %v6558
      %v6560 = vsel %vm2384, %v6527, 0.0
      %v6561 = vadd.f32 %v6559, %v6560
      %v6562 = vsel %vm2384, %v6528, 0.0
      %v6563 = vadd.f32 %v6561, %v6562
      %v6564 = vsel %vm2384, %v6529, 0.0
      %v6565 = vadd.f32 %v6563, %v6564
      %v6566 = vsel %vm2384, %v6530, 0.0
      %v6567 = vadd.f32 %v6565, %v6566
      %v6568 = vsel %vm2384, %v6531, 0.0
      %v6569 = vadd.f32 %v6567, %v6568
      %v6570 = vsel %vm2384, %v6532, 0.0
      %v6571 = vadd.f32 %v6569, %v6570
      %v6572 = vsel %vm2384, %v6533, 0.0
      %v6573 = vadd.f32 %v6571, %v6572
      %v6574 = vsel %vm2384, %v6534, 0.0
      %v6575 = vadd.f32 %v6573, %v6574
      %v6576 = vsel %vm2384, %v6535, 0.0
      %v6577 = vadd.f32 %v6575, %v6576
      %v6578 = vsel %vm2384, %v6536, 0.0
      %v6579 = vadd.f32 %v6577, %v6578
      %v6580 = vsel %vm2384, %v6537, 0.0
      %v6581 = vadd.f32 %v6579, %v6580
      %v6582 = vsel %vm2384, %v6538, 0.0
      %v6583 = vadd.f32 %v6581, %v6582
      %v6584 = vsel %vm2384, %v6539, 0.0
      %v6585 = vadd.f32 %v6583, %v6584
      %v6586 = vsel %vm2384, %v6540, 0.0
      %v6587 = vadd.f32 %v6585, %v6586
      %v6588 = vsel %vm2384, %v6541, 0.0
      %v6589 = vadd.f32 %v6587, %v6588
      %v6590 = vsel %vm2384, %v6542, 0.0
      %v6591 = vadd.f32 %v6589, %v6590
      %v6592 = vsel %vm2384, %v6543, 0.0
      %v6593 = vadd.f32 %v6591, %v6592
      %v6594 = vsel %vm2384, %v6544, 0.0
      %v6595 = vadd.f32 %v6593, %v6594
      %v6596 = vsel %vm2384, %v6545, 0.0
      %v6597 = vadd.f32 %v6595, %v6596
      %v6598 = vsel %vm2384, %v6546, 0.0
      %v6599 = vadd.f32 %v6597, %v6598
      %v6600 = vsel %vm2384, %v6547, 0.0
      %v6601 = vadd.f32 %v6599, %v6600
      %v6602 = vsel %vm2384, %v6548, 0.0
      %v6603 = vadd.f32 %v6601, %v6602
      %v6604 = vsel %vm2384, %v6549, 0.0
      %v6605 = vadd.f32 %v6603, %v6604
      %v6606 = vsel %vm2384, %v6550, 0.0
      %v6607 = vadd.f32 %v6605, %v6606
      %v6608 = vsel %vm2384, %v6551, 0.0
      %v6609 = vadd.f32 %v6607, %v6608
      %v6610 = vsel %vm2384, %v6552, 0.0
      %v6611 = vadd.f32 %v6609, %v6610
      %v6612 = vsel %vm2384, %v6553, 0.0
      %v6613 = vadd.f32 %v6611, %v6612
      %v6614 = vsel %vm2384, %v6554, 0.0
      %v6615 = vadd.f32 %v6613, %v6614
      %v6616 = vsel %vm2384, %v6555, 0.0
      %v6617 = vadd.f32 %v6615, %v6616
      %v6618 = vsel %vm2384, %v6556, 0.0
      %v6619 = vadd.f32 %v6617, %v6618
      %v6620 = vrot.slane %v6619, 4
      %v6621 = vadd.f32 %v6619, %v6620
      %v6622 = vrot.slane %v6621, 2
      %v6623 = vadd.f32 %v6621, %v6622
      %v6624 = vrot.slane %v6623, 1
      %v6625 = vadd.f32 %v6623, %v6624
      %vm6626 = vcmask 1040384
      %v6627 = vsel %vm6626, %v6524, %v6625
      %vm6628 = vcmask 58368
      %6629 = vst.msk [vmem:[%s235] sm:$0x3] %vm6628, %v6627
      %v6630 = vpack.c.bf16 %v6425, %v6424
      %v6631 = vpack.c.bf16 %v6427, %v6426
      %v6632 = vpack.c.bf16 %v6429, %v6428
      %v6633 = vpack.c.bf16 %v6431, %v6430
      %v6634 = vpack.c.bf16 %v6433, %v6432
      %v6635 = vpack.c.bf16 %v6435, %v6434
      %v6636 = vpack.c.bf16 %v6437, %v6436
      %v6637 = vpack.c.bf16 %v6439, %v6438
      %v6638 = vpack.c.bf16 %v6441, %v6440
      %v6639 = vpack.c.bf16 %v6443, %v6442
      %v6640 = vpack.c.bf16 %v6445, %v6444
      %v6641 = vpack.c.bf16 %v6447, %v6446
      %v6642 = vpack.c.bf16 %v6449, %v6448
      %v6643 = vpack.c.bf16 %v6451, %v6450
      %v6644 = vpack.c.bf16 %v6453, %v6452
      %v6645 = vpack.c.bf16 %v6455, %v6454
      %v6662 = vunpack.c.l.b16 %v6630
      %v6663 = vunpack.c.h.b16 %v6630
      %v6664 = vunpack.c.l.b16 %v6631
      %v6665 = vunpack.c.h.b16 %v6631
      %v6666 = vunpack.c.l.b16 %v6632
      %v6667 = vunpack.c.h.b16 %v6632
      %v6668 = vunpack.c.l.b16 %v6633
      %v6669 = vunpack.c.h.b16 %v6633
      %v6670 = vunpack.c.l.b16 %v6634
      %v6671 = vunpack.c.h.b16 %v6634
      %v6672 = vunpack.c.l.b16 %v6635
      %v6673 = vunpack.c.h.b16 %v6635
      %v6674 = vunpack.c.l.b16 %v6636
      %v6675 = vunpack.c.h.b16 %v6636
      %v6676 = vunpack.c.l.b16 %v6637
      %v6677 = vunpack.c.h.b16 %v6637
      %v6678 = vunpack.c.l.b16 %v6638
      %v6679 = vunpack.c.h.b16 %v6638
      %v6680 = vunpack.c.l.b16 %v6639
      %v6681 = vunpack.c.h.b16 %v6639
      %v6682 = vunpack.c.l.b16 %v6640
      %v6683 = vunpack.c.h.b16 %v6640
      %v6684 = vunpack.c.l.b16 %v6641
      %v6685 = vunpack.c.h.b16 %v6641
      %v6686 = vunpack.c.l.b16 %v6642
      %v6687 = vunpack.c.h.b16 %v6642
      %v6688 = vunpack.c.l.b16 %v6643
      %v6689 = vunpack.c.h.b16 %v6643
      %v6690 = vunpack.c.l.b16 %v6644
      %v6691 = vunpack.c.h.b16 %v6644
      %v6692 = vunpack.c.l.b16 %v6645
      %v6693 = vunpack.c.h.b16 %v6645
      %v6694 = vpack.c.b16 %v6662, %v6662
      %v6695 = vpack.c.b16 %v6663, %v6663
      %v6696 = vpack.c.b16 %v6664, %v6664
      %v6697 = vpack.c.b16 %v6665, %v6665
      %v6698 = vpack.c.b16 %v6666, %v6666
      %v6699 = vpack.c.b16 %v6667, %v6667
      %v6700 = vpack.c.b16 %v6668, %v6668
      %v6701 = vpack.c.b16 %v6669, %v6669
      %v6702 = vpack.c.b16 %v6670, %v6670
      %v6703 = vpack.c.b16 %v6671, %v6671
      %v6704 = vpack.c.b16 %v6672, %v6672
      %v6705 = vpack.c.b16 %v6673, %v6673
      %v6706 = vpack.c.b16 %v6674, %v6674
      %v6707 = vpack.c.b16 %v6675, %v6675
      %v6708 = vpack.c.b16 %v6676, %v6676
      %v6709 = vpack.c.b16 %v6677, %v6677
      %v6710 = vpack.c.b16 %v6678, %v6678
      %v6711 = vpack.c.b16 %v6679, %v6679
      %v6712 = vpack.c.b16 %v6680, %v6680
      %v6713 = vpack.c.b16 %v6681, %v6681
      %v6714 = vpack.c.b16 %v6682, %v6682
      %v6715 = vpack.c.b16 %v6683, %v6683
      %v6716 = vpack.c.b16 %v6684, %v6684
      %v6717 = vpack.c.b16 %v6685, %v6685
      %v6718 = vpack.c.b16 %v6686, %v6686
      %v6719 = vpack.c.b16 %v6687, %v6687
      %v6720 = vpack.c.b16 %v6688, %v6688
      %v6721 = vpack.c.b16 %v6689, %v6689
      %v6722 = vpack.c.b16 %v6690, %v6690
      %v6723 = vpack.c.b16 %v6691, %v6691
      %v6724 = vpack.c.b16 %v6692, %v6692
      %v6725 = vpack.c.b16 %v6693, %v6693
      %6758 = vst.msk [vmem:[%s231] sm:$0xf] %vm1243, %v6694
      %6759 = vst.msk [vmem:[%s231 + $0x4] sm:$0xf] %vm1243, %v6695
      %6760 = vst.msk [vmem:[%s231 + $0x8] sm:$0xf] %vm1243, %v6696
      %6761 = vst.msk [vmem:[%s231 + $0xc] sm:$0xf] %vm1243, %v6697
      %6762 = vst.msk [vmem:[%s231 + $0x10] sm:$0xf] %vm1243, %v6698
      %6763 = vst.msk [vmem:[%s231 + $0x14] sm:$0xf] %vm1243, %v6699
      %6764 = vst.msk [vmem:[%s231 + $0x18] sm:$0xf] %vm1243, %v6700
      %6765 = vst.msk [vmem:[%s231 + $0x1c] sm:$0xf] %vm1243, %v6701
      %6766 = vst.msk [vmem:[%s231 + $0x20] sm:$0xf] %vm1243, %v6702
      %6767 = vst.msk [vmem:[%s231 + $0x24] sm:$0xf] %vm1243, %v6703
      %6768 = vst.msk [vmem:[%s231 + $0x28] sm:$0xf] %vm1243, %v6704
      %6769 = vst.msk [vmem:[%s231 + $0x2c] sm:$0xf] %vm1243, %v6705
      %6770 = vst.msk [vmem:[%s231 + $0x30] sm:$0xf] %vm1243, %v6706
      %6771 = vst.msk [vmem:[%s231 + $0x34] sm:$0xf] %vm1243, %v6707
      %6772 = vst.msk [vmem:[%s231 + $0x38] sm:$0xf] %vm1243, %v6708
      %6773 = vst.msk [vmem:[%s231 + $0x3c] sm:$0xf] %vm1243, %v6709
      %6774 = vst.msk [vmem:[%s231 + $0x40] sm:$0xf] %vm1243, %v6710
      %6775 = vst.msk [vmem:[%s231 + $0x44] sm:$0xf] %vm1243, %v6711
      %6776 = vst.msk [vmem:[%s231 + $0x48] sm:$0xf] %vm1243, %v6712
      %6777 = vst.msk [vmem:[%s231 + $0x4c] sm:$0xf] %vm1243, %v6713
      %6778 = vst.msk [vmem:[%s231 + $0x50] sm:$0xf] %vm1243, %v6714
      %6779 = vst.msk [vmem:[%s231 + $0x54] sm:$0xf] %vm1243, %v6715
      %6780 = vst.msk [vmem:[%s231 + $0x58] sm:$0xf] %vm1243, %v6716
      %6781 = vst.msk [vmem:[%s231 + $0x5c] sm:$0xf] %vm1243, %v6717
      %6782 = vst.msk [vmem:[%s231 + $0x60] sm:$0xf] %vm1243, %v6718
      %6783 = vst.msk [vmem:[%s231 + $0x64] sm:$0xf] %vm1243, %v6719
      %6784 = vst.msk [vmem:[%s231 + $0x68] sm:$0xf] %vm1243, %v6720
      %6785 = vst.msk [vmem:[%s231 + $0x6c] sm:$0xf] %vm1243, %v6721
      %6786 = vst.msk [vmem:[%s231 + $0x70] sm:$0xf] %vm1243, %v6722
      %6787 = vst.msk [vmem:[%s231 + $0x74] sm:$0xf] %vm1243, %v6723
      %6788 = vst.msk [vmem:[%s231 + $0x78] sm:$0xf] %vm1243, %v6724
      %6789 = vst.msk [vmem:[%s231 + $0x7c] sm:$0xf] %vm1243, %v6725
      %p6790 = scmp.lt.s32.totalorder %s17, 1
      %s6791 = scalar_select %p6790, %s17, 1
      %s6792 = smul.addr %s6791, 32
      %s6793 = smul.addr %s6792, 4
      %s6794 = scalar_lea.vmem %s4, %s6793
      %p6795 = scmp.lt.s32.totalorder %s17, 1
      %s6796 = scalar_select %p6795, %s17, 1
      %s6797 = smul.addr %s6796, 2
      %s6798 = scalar_lea.vmem %s5, %s6797
      // Predicated region
      $region37: #{unet_down_forward.4} parent=35 // pred_check
        %p6799 = pneg %p124
      $region38: #{unet_down_forward.4} parent=35 // pred_check_branch
        %6801 = sbr.rel (%p6799) target = $region40
      $region39: #{unet_down_forward.4} parent=35 // pred_region
        _
      $region40: #{unet_down_forward.4} parent=35 // pred_fallthru
        _
      // Predicated region
      $region41: #{unet_down_forward.4} parent=35 // pred_check
        %p6802 = pneg %p150
      $region42: #{unet_down_forward.4} parent=35 // pred_check_branch
        %6804 = sbr.rel (%p6802) target = $region44
      $region43: #{unet_down_forward.4} parent=35 // pred_region
        _
      $region44: #{unet_down_forward.4} parent=35 // pred_fallthru
        _
    $region36: #{unet_down_forward.4} parent=5 // pred_fallthru
      _
    %p6805 = scmp.le.s32.totalorder 2, %s12
    // Predicated region
    $region45: #{unet_down_forward.4} parent=5 // pred_check
      %p6806 = pneg %p6805
    $region46: #{unet_down_forward.4} parent=5 // pred_check_branch
      %6808 = sbr.rel (%p6806) target = $region48
    $region47: #{unet_down_forward.4} parent=5 // pred_region
      %s6809 = ssub.s32 %s12, 2
      // Predicated region
      $region49: #{unet_down_forward.4} parent=47 // pred_check
        %p6810 = pneg %p130
      $region50: #{unet_down_forward.4} parent=47 // pred_check_branch
        %6812 = sbr.rel (%p6810) target = $region52
      $region51: #{unet_down_forward.4} parent=47 // pred_region
        %p6813 = scmp.lt.s32.totalorder %s18, 1
        %s6814 = scalar_select %p6813, %s18, 1
        %s6815 = smul.addr %s6814, 32
        %s6816 = smul.addr %s6815, 4
        %s6817 = scalar_lea.vmem %s4, %s6816
      $region52: #{unet_down_forward.4} parent=47 // pred_fallthru
        _
      // Predicated region
      $region53: #{unet_down_forward.4} parent=47 // pred_check
        %p6818 = pneg %p156
      $region54: #{unet_down_forward.4} parent=47 // pred_check_branch
        %6820 = sbr.rel (%p6818) target = $region56
      $region55: #{unet_down_forward.4} parent=47 // pred_region
        %p6821 = scmp.lt.s32.totalorder %s18, 1
        %s6822 = scalar_select %p6821, %s18, 1
        %s6823 = smul.addr %s6822, 2
        %s6824 = scalar_lea.vmem %s5, %s6823
      $region56: #{unet_down_forward.4} parent=47 // pred_fallthru
        _
    $region48: #{unet_down_forward.4} parent=5 // pred_fallthru
      _
  $region6: #{unet_down_forward.4} parent=0 // loop_footer
    %s16 = sadd.s32 1, %s12
  $region7: #{unet_down_forward.4} parent=0 // loop_footer_branch
    %11 = sbr.rel target = $region3
  $region8: #{unet_down_forward.4} parent=0 // loop_exit
    _

</llo_original>
